<compile_context>
chip_gen: v7x
topology: tpu7x:2x2x1
jax: 0.10.0
libtpu: 0.0.40
codegen_flags: <defaults>
</compile_context>

<pallas_src>
import functools
from typing import NamedTuple, Tuple

import numpy as np

import jax
import jax.numpy as jnp
from jax.experimental import pallas as pl
from jax.experimental.pallas import tpu as pltpu

LEAKY_SLOPE = 0.01          # PyTorch nn.LeakyReLU default
BN_EPS = 1e-5               # PyTorch BatchNorm1d default

PADS13 = (0, 1, 1)          # kernel (1, 3, 3)
PADS31 = (1, 0, 1)          # kernel (3, 1, 3)


# ----------------------------------------------------------------------------
# Static geometry of the padded-flat voxel layout
# ----------------------------------------------------------------------------
class _Geom(NamedTuple):
    Dp: int
    Hp: int
    Wp: int
    A: int      # (H+2)*(W+2)
    P: int      # (D+2)*(H+2)*(W+2), padded voxels per batch element
    L0: int     # B * P
    Q: int      # L0 rounded up to a multiple of tn (output positions computed)
    Lin: int    # Q + th (input flat length incl. halo tail)
    tn: int     # lane tile (output positions per grid step)
    th: int     # halo block width (multiple of 128, >= max tap offset)
    off13: Tuple[int, ...]
    off31: Tuple[int, ...]


def _geometry(B, D, H, W, tn_req):
    Dp, Hp, Wp = D + 2, H + 2, W + 2
    A = Hp * Wp
    P = Dp * A
    L0 = B * P
    off13 = tuple(dh * Wp + dw for dh in range(3) for dw in range(3))
    off31 = tuple(dd * A + dw for dd in range(3) for dw in range(3))
    max_off = max(off13 + off31)
    th = max(128, ((max_off + 127) // 128) * 128)
    tn = max(tn_req, th)
    tn = ((tn + th - 1) // th) * th          # tn is a multiple of th (and of 128)
    Q = ((L0 + tn - 1) // tn) * tn
    Lin = Q + th
    return _Geom(Dp, Hp, Wp, A, P, L0, Q, Lin, tn, th, off13, off31)


def _valid_mask(geom, pads, D, H, W):
    """1.0 at flat output positions that correspond to real voxels, else 0.0."""
    pd, ph, pw = pads
    q = np.arange(geom.Q, dtype=np.int64)
    r = q % geom.P
    d = r // geom.A
    r2 = r % geom.A
    h = r2 // geom.Wp
    w = r2 % geom.Wp
    ok = ((q < geom.L0)
          & (d >= 1 - pd) & (d < D + 1 - pd)
          & (h >= 1 - ph) & (h < H + 1 - ph)
          & (w >= 1 - pw) & (w < W + 1 - pw))
    return jnp.asarray(ok.astype(np.float32)[None, :])          # (1, Q)


# ----------------------------------------------------------------------------
# Fused multi-conv Pallas kernel:
#   in-VMEM im2col window (constant lane offsets) + tap matmuls (f32 acc)
#   + LeakyReLU + masked per-tile BatchNorm statistics, for N convs that may
#   share inputs (shared input => single HBM->VMEM stream per tile).
# ----------------------------------------------------------------------------
def _make_multi_conv_kernel(conv_specs, n_inputs, tn):
    """conv_specs: tuple of (input_idx, tap_offsets) per conv."""
    nconv = len(conv_specs)

    def kernel(*refs):
        w_refs = refs[0:nconv]
        xm_refs = refs[nconv:nconv + n_inputs]
        xh_refs = refs[nconv + n_inputs:nconv + 2 * n_inputs]
        m_refs = refs[nconv + 2 * n_inputs:2 * nconv + 2 * n_inputs]
        y_refs = refs[2 * nconv + 2 * n_inputs:3 * nconv + 2 * n_inputs]
        s_refs = refs[3 * nconv + 2 * n_inputs:4 * nconv + 2 * n_inputs]
        win_refs = refs[4 * nconv + 2 * n_inputs:4 * nconv + 3 * n_inputs]

        for inp in range(n_inputs):
            # Assemble the contiguous (tile + halo) window in VMEM once per
            # input; every conv that consumes this input reuses it.
            win = win_refs[inp]
            win[:, :tn] = xm_refs[inp][...]          # (Cin, tn)  bf16
            win[:, tn:] = xh_refs[inp][...]          # (Cin, th)  bf16

            for c in range(nconv):
                if conv_specs[c][0] != inp:
                    continue
                offs = conv_specs[c][1]

                # Conv as a sum of tap matmuls: (Cout,Cin) @ (Cin,tn), f32 acc.
                acc = jnp.dot(w_refs[c][0], win[:, offs[0]:offs[0] + tn],
                              preferred_element_type=jnp.float32)
                for t in range(1, len(offs)):
                    off = offs[t]
                    acc = acc + jnp.dot(w_refs[c][t], win[:, off:off + tn],
                                        preferred_element_type=jnp.float32)

                # LeakyReLU (slope 0.01), f32.
                y = jnp.where(acc >= 0, acc, LEAKY_SLOPE * acc)   # (Cout, tn)
                y_refs[c][...] = y

                # Masked per-tile batch-norm statistics (sum, sum of squares).
                m = m_refs[c][...]                                # (1, tn) f32
                ym = y * m
                s1 = jnp.sum(ym, axis=1, keepdims=True)           # (Cout, 1)
                s2 = jnp.sum(ym * y, axis=1, keepdims=True)       # (Cout, 1)
                s_refs[c][...] = jnp.concatenate([s1, s2], axis=1)[None]

    return kernel


def fused_convs(inputs, convs, geom):
    """Run several conv+LeakyReLU+BN-stat passes in one pallas_call.

    inputs: list of canonical padded-flat activations, each (Cin, Lin) bf16.
    convs:  list of dicts {w: (9,Cout,Cin) bf16, mask: (1,Q) f32,
                           offsets: tap offsets, input: index into `inputs`}.
    Returns: list of (y (Cout, Q) f32, stats (nblk, Cout, 2) f32) per conv.
    """
    cin = inputs[0].shape[0]
    cout = convs[0]["w"].shape[1]
    nconv = len(convs)
    n_inputs = len(inputs)
    ntaps = convs[0]["w"].shape[0]
    tn, th, Q, Lin = geom.tn, geom.th, geom.Q, geom.Lin
    nblk = Q // tn
    hstep = tn // th

    conv_specs = tuple((int(c["input"]), tuple(int(o) for o in c["offsets"]))
                       for c in convs)
    kernel = _make_multi_conv_kernel(conv_specs, n_inputs, tn)

    in_specs = (
        [pl.BlockSpec((ntaps, cout, cin), lambda i: (0, 0, 0))           # weights
         for _ in range(nconv)]
        + [pl.BlockSpec((cin, tn), lambda i: (0, i))                     # main tile
           for _ in range(n_inputs)]
        + [pl.BlockSpec((cin, th), lambda i: (0, (i + 1) * hstep))       # halo tile
           for _ in range(n_inputs)]
        + [pl.BlockSpec((1, tn), lambda i: (0, i))                       # valid mask
           for _ in range(nconv)]
    )
    out_shape = tuple(
        [jax.ShapeDtypeStruct((cout, Q), jnp.float32) for _ in range(nconv)]
        + [jax.ShapeDtypeStruct((nblk, cout, 2), jnp.float32) for _ in range(nconv)]
    )
    out_specs = tuple(
        [pl.BlockSpec((cout, tn), lambda i: (0, i)) for _ in range(nconv)]
        + [pl.BlockSpec((1, cout, 2), lambda i: (i, 0, 0)) for _ in range(nconv)]
    )
    scratch_shapes = [pltpu.VMEM((cin, tn + th), jnp.bfloat16)
                      for _ in range(n_inputs)]

    flops = sum(2 * geom.L0 * ntaps * cin * cout for _ in range(nconv))
    bytes_accessed = (n_inputs * cin * Lin * 2           # bf16 activations
                      + nconv * Q * 4                    # f32 masks
                      + nconv * ntaps * cout * cin * 2   # bf16 weights
                      + nconv * Q * cout * 4             # f32 conv outputs
                      + nconv * nblk * cout * 2 * 4)     # partial stats

    args = ([c["w"] for c in convs] + list(inputs) + list(inputs)
            + [c["mask"] for c in convs])

    outs = pl.pallas_call(
        kernel,
        out_shape=out_shape,
        grid_spec=pltpu.PrefetchScalarGridSpec(
            num_scalar_prefetch=0,
            grid=(nblk,),
            in_specs=in_specs,
            out_specs=out_specs,
            scratch_shapes=scratch_shapes,
        ),
        compiler_params=pltpu.CompilerParams(
            dimension_semantics=("parallel",),
            vmem_limit_bytes=32 * 1024 * 1024,
        ),
        cost_estimate=pl.CostEstimate(
            flops=flops, transcendentals=0, bytes_accessed=bytes_accessed),
    )(*args)

    ys = outs[:nconv]
    stats = outs[nconv:]
    return list(zip(ys, stats))


# ----------------------------------------------------------------------------
# JAX glue: layout plumbing, BN parameter math, BN-apply + relayout
# ----------------------------------------------------------------------------
def _to_padded_flat(x_ncdhw, geom):
    """(B, C, D, H, W) f32 -> canonical padded flat (C, Lin) bf16."""
    C = x_ncdhw.shape[1]
    xp = jnp.pad(x_ncdhw, ((0, 0), (0, 0), (1, 1), (1, 1), (1, 1)))
    xf = jnp.transpose(xp, (1, 0, 2, 3, 4)).reshape(C, geom.L0)
    xf = jnp.pad(xf, ((0, 0), (0, geom.Lin - geom.L0)))
    return xf.astype(jnp.bfloat16)


def _bn_params(stats, gamma, beta, n_real):
    """Training-mode BatchNorm1d: batch stats, biased variance."""
    s = jnp.sum(stats, axis=0)                                   # (Cout, 2)
    mean = s[:, 0] / n_real
    var = jnp.maximum(s[:, 1] / n_real - mean * mean, 0.0)
    scale = gamma * jax.lax.rsqrt(var + BN_EPS)
    shift = beta - mean * scale
    return scale, shift


def _bn_to_next_input(y, mask, pads, scale, shift, geom):
    """Apply BN to real voxels, re-zero padding, shift to canonical layout, bf16."""
    pd, ph, pw = pads
    delta = pd * geom.A + ph * geom.Wp + pw
    z = (y * scale[:, None] + shift[:, None]) * mask             # (Cout, Q) f32
    canon = jnp.pad(z, ((0, 0), (delta, 0)))[:, :geom.L0]        # canonical positions
    canon = jnp.pad(canon, ((0, 0), (0, geom.Lin - geom.L0)))
    return canon.astype(jnp.bfloat16)


def _bn_to_dense(y, pads, scale, shift, geom, B, D, H, W):
    """Apply BN and extract the real voxels back to dense (B, Cout, D, H, W)."""
    pd, ph, pw = pads
    cout = y.shape[0]
    z = y * scale[:, None] + shift[:, None]
    g = z[:, :geom.L0].reshape(cout, B, geom.Dp, geom.Hp, geom.Wp)
    g = g[:, :,
          1 - pd:geom.Dp - 1 - pd,
          1 - ph:geom.Hp - 1 - ph,
          1 - pw:geom.Wp - 1 - pw]                               # (Cout, B, D, H, W)
    return jnp.transpose(g, (1, 0, 2, 3, 4))


def _flatten_w_133(w):
    """(Cout, Cin, 1, 3, 3) -> (9, Cout, Cin) bf16, tap order (dh, dw)."""
    co, ci = w.shape[0], w.shape[1]
    wt = jnp.transpose(w[:, :, 0, :, :], (2, 3, 0, 1))           # (3, 3, Cout, Cin)
    return wt.reshape(9, co, ci).astype(jnp.bfloat16)


def _flatten_w_313(w):
    """(Cout, Cin, 3, 1, 3) -> (9, Cout, Cin) bf16, tap order (dd, dw)."""
    co, ci = w.shape[0], w.shape[1]
    wt = jnp.transpose(w[:, :, :, 0, :], (2, 3, 0, 1))           # (3, 3, Cout, Cin)
    return wt.reshape(9, co, ci).astype(jnp.bfloat16)


# ----------------------------------------------------------------------------
# ResContextBlock forward
# ----------------------------------------------------------------------------
def res_context_block(x_ncdhw, params, *, tn=1024):
    """x: (B, Cin, D, H, W) -> dense output (B, Cout, D, H, W)."""
    B, Cin, D, H, W = x_ncdhw.shape
    Cout = params["w1"].shape[0]
    geom = _geometry(B, D, H, W, tn)
    mask13 = _valid_mask(geom, PADS13, D, H, W)
    mask31 = _valid_mask(geom, PADS31, D, H, W)
    n_real = B * D * H * W

    x_flat = _to_padded_flat(x_ncdhw, geom)

    w1 = _flatten_w_133(params["w1"])
    w1_2 = _flatten_w_313(params["w1_2"])
    w2 = _flatten_w_313(params["w2"])
    w3 = _flatten_w_133(params["w3"])

    # ---- Stage 1 (fused, shared input x): conv1 (1x3x3) and conv2 (3x1x3)
    (y1, st1), (y3, st3) = fused_convs(
        [x_flat],
        [dict(w=w1, mask=mask13, offsets=geom.off13, input=0),
         dict(w=w2, mask=mask31, offsets=geom.off31, input=0)],
        geom)
    sc1, sh1 = _bn_params(st1, params["bn0_g"], params["bn0_b"], n_real)   # bn0
    sc3, sh3 = _bn_params(st3, params["bn1_g"], params["bn1_b"], n_real)   # bn1
    s1_in = _bn_to_next_input(y1, mask13, PADS13, sc1, sh1, geom)
    r1_in = _bn_to_next_input(y3, mask31, PADS31, sc3, sh3, geom)

    # ---- Stage 2 (fused, two inputs): conv1_2 (3x1x3) and conv3 (1x3x3)
    (y2, st2), (y4, st4) = fused_convs(
        [s1_in, r1_in],
        [dict(w=w1_2, mask=mask31, offsets=geom.off31, input=0),
         dict(w=w3, mask=mask13, offsets=geom.off13, input=1)],
        geom)
    sc2, sh2 = _bn_params(st2, params["bn0_2_g"], params["bn0_2_b"], n_real)  # bn0_2
    sc4, sh4 = _bn_params(st4, params["bn2_g"], params["bn2_b"], n_real)      # bn2
    shortcut = _bn_to_dense(y2, PADS31, sc2, sh2, geom, B, D, H, W)
    resA = _bn_to_dense(y4, PADS13, sc4, sh4, geom, B, D, H, W)

    return resA + shortcut


def init_params(key, in_filters, out_filters):
    ks = jax.random.split(key, 4)
    scale = 0.1
    return {
        # conv1x3: kernel (1, 3, 3); conv3x1: kernel (3, 1, 3); no bias.
        "w1":   scale * jax.random.normal(ks[0], (out_filters, in_filters, 1, 3, 3), jnp.float32),
        "w1_2": scale * jax.random.normal(ks[1], (out_filters, out_filters, 3, 1, 3), jnp.float32),
        "w2":   scale * jax.random.normal(ks[2], (out_filters, in_filters, 3, 1, 3), jnp.float32),
        "w3":   scale * jax.random.normal(ks[3], (out_filters, out_filters, 1, 3, 3), jnp.float32),
        # BatchNorm1d default init: weight=1, bias=0.
        "bn0_g": jnp.ones((out_filters,), jnp.float32),   "bn0_b": jnp.zeros((out_filters,), jnp.float32),
        "bn0_2_g": jnp.ones((out_filters,), jnp.float32), "bn0_2_b": jnp.zeros((out_filters,), jnp.float32),
        "bn1_g": jnp.ones((out_filters,), jnp.float32),   "bn1_b": jnp.zeros((out_filters,), jnp.float32),
        "bn2_g": jnp.ones((out_filters,), jnp.float32),   "bn2_b": jnp.zeros((out_filters,), jnp.float32),
    }


# ----------------------------------------------------------------------------
# Pure-JAX reference (dense conv + training-mode BN) for a correctness check
# ----------------------------------------------------------------------------
def _conv_ref(x, w, pads):
    return jax.lax.conv_general_dilated(
        x, w, window_strides=(1, 1, 1),
        padding=[(p, p) for p in pads],
        dimension_numbers=("NCDHW", "OIDHW", "NCDHW"),
        precision=jax.lax.Precision.HIGHEST)


def _bn_ref(y, gamma, beta):
    m = jnp.mean(y, axis=(0, 2, 3, 4))
    v = jnp.mean(y * y, axis=(0, 2, 3, 4)) - m * m
    sc = gamma * jax.lax.rsqrt(v + BN_EPS)
    sh = beta - m * sc
    return y * sc[None, :, None, None, None] + sh[None, :, None, None, None]


def _leaky(y):
    return jnp.where(y >= 0, y, LEAKY_SLOPE * y)


def res_context_block_ref(x, params):
    s = _conv_ref(x, params["w1"], PADS13)
    s = _bn_ref(_leaky(s), params["bn0_g"], params["bn0_b"])
    s = _conv_ref(s, params["w1_2"], PADS31)
    s = _bn_ref(_leaky(s), params["bn0_2_g"], params["bn0_2_b"])
    r = _conv_ref(x, params["w2"], PADS31)
    r = _bn_ref(_leaky(r), params["bn1_g"], params["bn1_b"])
    r = _conv_ref(r, params["w3"], PADS13)
    r = _bn_ref(_leaky(r), params["bn2_g"], params["bn2_b"])
    return r + s


if __name__ == "__main__":
    key = jax.random.PRNGKey(0)
    k_x, k_p = jax.random.split(key)

    B, Cin, Cout, D, H, W = 2, 4, 8, 8, 8, 8   # N = B*D*H*W = 1024 voxels
    x = jax.random.normal(k_x, (B, Cin, D, H, W), jnp.float32)
    params = init_params(k_p, Cin, Cout)

    fwd = jax.jit(functools.partial(res_context_block, tn=1024))
    out = fwd(x, params)
    jax.block_until_ready(out)

    assert out.shape == (B, Cout, D, H, W)
    assert bool(jnp.all(jnp.isfinite(out)))

    # Loose-tolerance correctness check vs a pure-JAX dense reference
    # (bf16 activation/weight streams introduce ~1% relative error).
    ref = res_context_block_ref(x, params)
    ok = bool(jnp.all(jnp.abs(out - ref) <= 0.1 + 0.1 * jnp.abs(ref)))
    assert ok, float(jnp.max(jnp.abs(out - ref)))

    print("KERNEL_OK")
</pallas_src>

<mosaic_0001>
module attributes {stable_mosaic.version = 11 : i64} {
  func.func @kernel(%arg0: i32, %arg1: memref<9x8x4xbf16, #tpu.memory_space<vmem>>, %arg2: memref<9x8x4xbf16, #tpu.memory_space<vmem>>, %arg3: memref<4x1024xbf16, #tpu.memory_space<vmem>>, %arg4: memref<4x256xbf16, #tpu.memory_space<vmem>>, %arg5: memref<1x1024xf32, #tpu.memory_space<vmem>>, %arg6: memref<1x1024xf32, #tpu.memory_space<vmem>>, %arg7: memref<8x1024xf32, #tpu.memory_space<vmem>>, %arg8: memref<8x1024xf32, #tpu.memory_space<vmem>>, %arg9: memref<1x8x2xf32, #tpu.memory_space<vmem>>, %arg10: memref<1x8x2xf32, #tpu.memory_space<vmem>>, %arg11: memref<4x1280xbf16, #tpu.memory_space<vmem>>) attributes {dimension_semantics = [#tpu.dimension_semantics<parallel>], iteration_bounds = array<i64: 2>, scalar_prefetch = 0 : i64, scratch_operands = 1 : i64, tpu.core_type = #tpu.core_type<tc>, window_params = [{pipeline_mode = #tpu.pipeline_mode<synchronous>, transform_indices = @transform_0, window_bounds = array<i64: 9, 8, 4>}, {pipeline_mode = #tpu.pipeline_mode<synchronous>, transform_indices = @transform_1, window_bounds = array<i64: 9, 8, 4>}, {transform_indices = @transform_2, window_bounds = array<i64: 4, 1024>}, {transform_indices = @transform_3, window_bounds = array<i64: 4, 256>}, {transform_indices = @transform_4, window_bounds = array<i64: 1, 1024>}, {transform_indices = @transform_5, window_bounds = array<i64: 1, 1024>}, {transform_indices = @transform_6, window_bounds = array<i64: 8, 1024>}, {transform_indices = @transform_7, window_bounds = array<i64: 8, 1024>}, {transform_indices = @transform_8, window_bounds = array<i64: 1, 8, 2>}, {transform_indices = @transform_9, window_bounds = array<i64: 1, 8, 2>}]} {
    %c0 = arith.constant 0 : index
    %c0_0 = arith.constant 0 : index
    %0 = vector.load %arg3[%c0, %c0_0] : memref<4x1024xbf16, #tpu.memory_space<vmem>>, vector<4x1024xbf16>
    %c0_1 = arith.constant 0 : index
    %c0_2 = arith.constant 0 : index
    %1 = vector.load %arg11[%c0_1, %c0_2] : memref<4x1280xbf16, #tpu.memory_space<vmem>>, vector<4x1024xbf16>
    tpu.vector_store %arg11[%c0_1, %c0_2], %0 {strides = array<i32>} : memref<4x1280xbf16, #tpu.memory_space<vmem>>, vector<4x1024xbf16>,
    %c0_3 = arith.constant 0 : index
    %c0_4 = arith.constant 0 : index
    %2 = vector.load %arg4[%c0_3, %c0_4] : memref<4x256xbf16, #tpu.memory_space<vmem>>, vector<4x256xbf16>
    %c0_5 = arith.constant 0 : index
    %c1024 = arith.constant 1024 : index
    %3 = vector.load %arg11[%c0_5, %c1024] : memref<4x1280xbf16, #tpu.memory_space<vmem>>, vector<4x256xbf16>
    tpu.vector_store %arg11[%c0_5, %c1024], %2 {strides = array<i32>} : memref<4x1280xbf16, #tpu.memory_space<vmem>>, vector<4x256xbf16>,
    %c0_6 = arith.constant 0 : index
    %c0_7 = arith.constant 0 : index
    %c0_8 = arith.constant 0 : index
    %4 = vector.load %arg1[%c0_6, %c0_7, %c0_8] : memref<9x8x4xbf16, #tpu.memory_space<vmem>>, vector<1x8x4xbf16>
    %5 = vector.shape_cast %4 : vector<1x8x4xbf16> to vector<8x4xbf16>
    %c0_9 = arith.constant 0 : index
    %c0_10 = arith.constant 0 : index
    %6 = vector.load %arg11[%c0_9, %c0_10] : memref<4x1280xbf16, #tpu.memory_space<vmem>>, vector<4x1024xbf16>
    %cst = arith.constant dense<0.000000e+00> : vector<8x1024xf32>
    %7 = tpu.matmul %5, %6, %cst {dimension_numbers = #tpu.dot_dimension_numbers<[1], [0], [0], [1], [0, 0, 1, 1], [], []>} : vector<8x4xbf16>, vector<4x1024xbf16>, vector<8x1024xf32> -> vector<8x1024xf32>
    %c1 = arith.constant 1 : index
    %c0_11 = arith.constant 0 : index
    %c0_12 = arith.constant 0 : index
    %8 = vector.load %arg1[%c1, %c0_11, %c0_12] : memref<9x8x4xbf16, #tpu.memory_space<vmem>>, vector<1x8x4xbf16>
    %9 = vector.shape_cast %8 : vector<1x8x4xbf16> to vector<8x4xbf16>
    %c0_13 = arith.constant 0 : index
    %c1_14 = arith.constant 1 : index
    %10 = vector.load %arg11[%c0_13, %c1_14] : memref<4x1280xbf16, #tpu.memory_space<vmem>>, vector<4x1024xbf16>
    %cst_15 = arith.constant dense<0.000000e+00> : vector<8x1024xf32>
    %11 = tpu.matmul %9, %10, %cst_15 {dimension_numbers = #tpu.dot_dimension_numbers<[1], [0], [0], [1], [0, 0, 1, 1], [], []>} : vector<8x4xbf16>, vector<4x1024xbf16>, vector<8x1024xf32> -> vector<8x1024xf32>
    %12 = arith.addf %7, %11 : vector<8x1024xf32>
    %c2 = arith.constant 2 : index
    %c0_16 = arith.constant 0 : index
    %c0_17 = arith.constant 0 : index
    %13 = vector.load %arg1[%c2, %c0_16, %c0_17] : memref<9x8x4xbf16, #tpu.memory_space<vmem>>, vector<1x8x4xbf16>
    %14 = vector.shape_cast %13 : vector<1x8x4xbf16> to vector<8x4xbf16>
    %c0_18 = arith.constant 0 : index
    %c2_19 = arith.constant 2 : index
    %15 = vector.load %arg11[%c0_18, %c2_19] : memref<4x1280xbf16, #tpu.memory_space<vmem>>, vector<4x1024xbf16>
    %cst_20 = arith.constant dense<0.000000e+00> : vector<8x1024xf32>
    %16 = tpu.matmul %14, %15, %cst_20 {dimension_numbers = #tpu.dot_dimension_numbers<[1], [0], [0], [1], [0, 0, 1, 1], [], []>} : vector<8x4xbf16>, vector<4x1024xbf16>, vector<8x1024xf32> -> vector<8x1024xf32>
    %17 = arith.addf %12, %16 : vector<8x1024xf32>
    %c3 = arith.constant 3 : index
    %c0_21 = arith.constant 0 : index
    %c0_22 = arith.constant 0 : index
    %18 = vector.load %arg1[%c3, %c0_21, %c0_22] : memref<9x8x4xbf16, #tpu.memory_space<vmem>>, vector<1x8x4xbf16>
    %19 = vector.shape_cast %18 : vector<1x8x4xbf16> to vector<8x4xbf16>
    %c0_23 = arith.constant 0 : index
    %c10 = arith.constant 10 : index
    %20 = vector.load %arg11[%c0_23, %c10] : memref<4x1280xbf16, #tpu.memory_space<vmem>>, vector<4x1024xbf16>
    %cst_24 = arith.constant dense<0.000000e+00> : vector<8x1024xf32>
    %21 = tpu.matmul %19, %20, %cst_24 {dimension_numbers = #tpu.dot_dimension_numbers<[1], [0], [0], [1], [0, 0, 1, 1], [], []>} : vector<8x4xbf16>, vector<4x1024xbf16>, vector<8x1024xf32> -> vector<8x1024xf32>
    %22 = arith.addf %17, %21 : vector<8x1024xf32>
    %c4 = arith.constant 4 : index
    %c0_25 = arith.constant 0 : index
    %c0_26 = arith.constant 0 : index
    %23 = vector.load %arg1[%c4, %c0_25, %c0_26] : memref<9x8x4xbf16, #tpu.memory_space<vmem>>, vector<1x8x4xbf16>
    %24 = vector.shape_cast %23 : vector<1x8x4xbf16> to vector<8x4xbf16>
    %c0_27 = arith.constant 0 : index
    %c11 = arith.constant 11 : index
    %25 = vector.load %arg11[%c0_27, %c11] : memref<4x1280xbf16, #tpu.memory_space<vmem>>, vector<4x1024xbf16>
    %cst_28 = arith.constant dense<0.000000e+00> : vector<8x1024xf32>
    %26 = tpu.matmul %24, %25, %cst_28 {dimension_numbers = #tpu.dot_dimension_numbers<[1], [0], [0], [1], [0, 0, 1, 1], [], []>} : vector<8x4xbf16>, vector<4x1024xbf16>, vector<8x1024xf32> -> vector<8x1024xf32>
    %27 = arith.addf %22, %26 : vector<8x1024xf32>
    %c5 = arith.constant 5 : index
    %c0_29 = arith.constant 0 : index
    %c0_30 = arith.constant 0 : index
    %28 = vector.load %arg1[%c5, %c0_29, %c0_30] : memref<9x8x4xbf16, #tpu.memory_space<vmem>>, vector<1x8x4xbf16>
    %29 = vector.shape_cast %28 : vector<1x8x4xbf16> to vector<8x4xbf16>
    %c0_31 = arith.constant 0 : index
    %c12 = arith.constant 12 : index
    %30 = vector.load %arg11[%c0_31, %c12] : memref<4x1280xbf16, #tpu.memory_space<vmem>>, vector<4x1024xbf16>
    %cst_32 = arith.constant dense<0.000000e+00> : vector<8x1024xf32>
    %31 = tpu.matmul %29, %30, %cst_32 {dimension_numbers = #tpu.dot_dimension_numbers<[1], [0], [0], [1], [0, 0, 1, 1], [], []>} : vector<8x4xbf16>, vector<4x1024xbf16>, vector<8x1024xf32> -> vector<8x1024xf32>
    %32 = arith.addf %27, %31 : vector<8x1024xf32>
    %c6 = arith.constant 6 : index
    %c0_33 = arith.constant 0 : index
    %c0_34 = arith.constant 0 : index
    %33 = vector.load %arg1[%c6, %c0_33, %c0_34] : memref<9x8x4xbf16, #tpu.memory_space<vmem>>, vector<1x8x4xbf16>
    %34 = vector.shape_cast %33 : vector<1x8x4xbf16> to vector<8x4xbf16>
    %c0_35 = arith.constant 0 : index
    %c20 = arith.constant 20 : index
    %35 = vector.load %arg11[%c0_35, %c20] : memref<4x1280xbf16, #tpu.memory_space<vmem>>, vector<4x1024xbf16>
    %cst_36 = arith.constant dense<0.000000e+00> : vector<8x1024xf32>
    %36 = tpu.matmul %34, %35, %cst_36 {dimension_numbers = #tpu.dot_dimension_numbers<[1], [0], [0], [1], [0, 0, 1, 1], [], []>} : vector<8x4xbf16>, vector<4x1024xbf16>, vector<8x1024xf32> -> vector<8x1024xf32>
    %37 = arith.addf %32, %36 : vector<8x1024xf32>
    %c7 = arith.constant 7 : index
    %c0_37 = arith.constant 0 : index
    %c0_38 = arith.constant 0 : index
    %38 = vector.load %arg1[%c7, %c0_37, %c0_38] : memref<9x8x4xbf16, #tpu.memory_space<vmem>>, vector<1x8x4xbf16>
    %39 = vector.shape_cast %38 : vector<1x8x4xbf16> to vector<8x4xbf16>
    %c0_39 = arith.constant 0 : index
    %c21 = arith.constant 21 : index
    %40 = vector.load %arg11[%c0_39, %c21] : memref<4x1280xbf16, #tpu.memory_space<vmem>>, vector<4x1024xbf16>
    %cst_40 = arith.constant dense<0.000000e+00> : vector<8x1024xf32>
    %41 = tpu.matmul %39, %40, %cst_40 {dimension_numbers = #tpu.dot_dimension_numbers<[1], [0], [0], [1], [0, 0, 1, 1], [], []>} : vector<8x4xbf16>, vector<4x1024xbf16>, vector<8x1024xf32> -> vector<8x1024xf32>
    %42 = arith.addf %37, %41 : vector<8x1024xf32>
    %c8 = arith.constant 8 : index
    %c0_41 = arith.constant 0 : index
    %c0_42 = arith.constant 0 : index
    %43 = vector.load %arg1[%c8, %c0_41, %c0_42] : memref<9x8x4xbf16, #tpu.memory_space<vmem>>, vector<1x8x4xbf16>
    %44 = vector.shape_cast %43 : vector<1x8x4xbf16> to vector<8x4xbf16>
    %c0_43 = arith.constant 0 : index
    %c22 = arith.constant 22 : index
    %45 = vector.load %arg11[%c0_43, %c22] : memref<4x1280xbf16, #tpu.memory_space<vmem>>, vector<4x1024xbf16>
    %cst_44 = arith.constant dense<0.000000e+00> : vector<8x1024xf32>
    %46 = tpu.matmul %44, %45, %cst_44 {dimension_numbers = #tpu.dot_dimension_numbers<[1], [0], [0], [1], [0, 0, 1, 1], [], []>} : vector<8x4xbf16>, vector<4x1024xbf16>, vector<8x1024xf32> -> vector<8x1024xf32>
    %47 = arith.addf %42, %46 : vector<8x1024xf32>
    %cst_45 = arith.constant 0.000000e+00 : f32
    %48 = vector.broadcast %cst_45 : f32 to vector<8x1024xf32>
    %49 = arith.cmpf oge, %47, %48 : vector<8x1024xf32>
    %cst_46 = arith.constant 0.00999999977 : f32
    %50 = vector.broadcast %cst_46 : f32 to vector<8x1024xf32>
    %51 = arith.mulf %50, %47 : vector<8x1024xf32>
    %52 = arith.select %49, %47, %51 : vector<8x1024xi1>, vector<8x1024xf32>
    %c0_47 = arith.constant 0 : index
    %c0_48 = arith.constant 0 : index
    %53 = vector.load %arg7[%c0_47, %c0_48] : memref<8x1024xf32, #tpu.memory_space<vmem>>, vector<8x1024xf32>
    tpu.vector_store %arg7[%c0_47, %c0_48], %52 {strides = array<i32>} : memref<8x1024xf32, #tpu.memory_space<vmem>>, vector<8x1024xf32>,
    %c0_49 = arith.constant 0 : index
    %c0_50 = arith.constant 0 : index
    %54 = vector.load %arg5[%c0_49, %c0_50] : memref<1x1024xf32, #tpu.memory_space<vmem>>, vector<1x1024xf32>
    %55 = vector.broadcast %54 : vector<1x1024xf32> to vector<8x1024xf32>
    %56 = arith.mulf %52, %55 : vector<8x1024xf32>
    %cst_51 = arith.constant dense<0.000000e+00> : vector<8xf32>
    %57 = vector.multi_reduction <add>, %56, %cst_51 [1] : vector<8x1024xf32> to vector<8xf32>
    %58 = vector.shape_cast %57 : vector<8xf32> to vector<8x1xf32>
    %59 = arith.mulf %56, %52 : vector<8x1024xf32>
    %cst_52 = arith.constant dense<0.000000e+00> : vector<8xf32>
    %60 = vector.multi_reduction <add>, %59, %cst_52 [1] : vector<8x1024xf32> to vector<8xf32>
    %61 = vector.shape_cast %60 : vector<8xf32> to vector<8x1xf32>
    %62 = tpu.concatenate %58, %61 in 1 : vector<8x1xf32>, vector<8x1xf32> -> vector<8x2xf32>
    %63 = vector.shape_cast %62 : vector<8x2xf32> to vector<1x8x2xf32>
    %c0_53 = arith.constant 0 : index
    %c0_54 = arith.constant 0 : index
    %c0_55 = arith.constant 0 : index
    %64 = vector.load %arg9[%c0_53, %c0_54, %c0_55] : memref<1x8x2xf32, #tpu.memory_space<vmem>>, vector<1x8x2xf32>
    tpu.vector_store %arg9[%c0_53, %c0_54, %c0_55], %63 {strides = array<i32>} : memref<1x8x2xf32, #tpu.memory_space<vmem>>, vector<1x8x2xf32>,
    %c0_56 = arith.constant 0 : index
    %c0_57 = arith.constant 0 : index
    %c0_58 = arith.constant 0 : index
    %65 = vector.load %arg2[%c0_56, %c0_57, %c0_58] : memref<9x8x4xbf16, #tpu.memory_space<vmem>>, vector<1x8x4xbf16>
    %66 = vector.shape_cast %65 : vector<1x8x4xbf16> to vector<8x4xbf16>
    %c0_59 = arith.constant 0 : index
    %c0_60 = arith.constant 0 : index
    %67 = vector.load %arg11[%c0_59, %c0_60] : memref<4x1280xbf16, #tpu.memory_space<vmem>>, vector<4x1024xbf16>
    %cst_61 = arith.constant dense<0.000000e+00> : vector<8x1024xf32>
    %68 = tpu.matmul %66, %67, %cst_61 {dimension_numbers = #tpu.dot_dimension_numbers<[1], [0], [0], [1], [0, 0, 1, 1], [], []>} : vector<8x4xbf16>, vector<4x1024xbf16>, vector<8x1024xf32> -> vector<8x1024xf32>
    %c1_62 = arith.constant 1 : index
    %c0_63 = arith.constant 0 : index
    %c0_64 = arith.constant 0 : index
    %69 = vector.load %arg2[%c1_62, %c0_63, %c0_64] : memref<9x8x4xbf16, #tpu.memory_space<vmem>>, vector<1x8x4xbf16>
    %70 = vector.shape_cast %69 : vector<1x8x4xbf16> to vector<8x4xbf16>
    %c0_65 = arith.constant 0 : index
    %c1_66 = arith.constant 1 : index
    %71 = vector.load %arg11[%c0_65, %c1_66] : memref<4x1280xbf16, #tpu.memory_space<vmem>>, vector<4x1024xbf16>
    %cst_67 = arith.constant dense<0.000000e+00> : vector<8x1024xf32>
    %72 = tpu.matmul %70, %71, %cst_67 {dimension_numbers = #tpu.dot_dimension_numbers<[1], [0], [0], [1], [0, 0, 1, 1], [], []>} : vector<8x4xbf16>, vector<4x1024xbf16>, vector<8x1024xf32> -> vector<8x1024xf32>
    %73 = arith.addf %68, %72 : vector<8x1024xf32>
    %c2_68 = arith.constant 2 : index
    %c0_69 = arith.constant 0 : index
    %c0_70 = arith.constant 0 : index
    %74 = vector.load %arg2[%c2_68, %c0_69, %c0_70] : memref<9x8x4xbf16, #tpu.memory_space<vmem>>, vector<1x8x4xbf16>
    %75 = vector.shape_cast %74 : vector<1x8x4xbf16> to vector<8x4xbf16>
    %c0_71 = arith.constant 0 : index
    %c2_72 = arith.constant 2 : index
    %76 = vector.load %arg11[%c0_71, %c2_72] : memref<4x1280xbf16, #tpu.memory_space<vmem>>, vector<4x1024xbf16>
    %cst_73 = arith.constant dense<0.000000e+00> : vector<8x1024xf32>
    %77 = tpu.matmul %75, %76, %cst_73 {dimension_numbers = #tpu.dot_dimension_numbers<[1], [0], [0], [1], [0, 0, 1, 1], [], []>} : vector<8x4xbf16>, vector<4x1024xbf16>, vector<8x1024xf32> -> vector<8x1024xf32>
    %78 = arith.addf %73, %77 : vector<8x1024xf32>
    %c3_74 = arith.constant 3 : index
    %c0_75 = arith.constant 0 : index
    %c0_76 = arith.constant 0 : index
    %79 = vector.load %arg2[%c3_74, %c0_75, %c0_76] : memref<9x8x4xbf16, #tpu.memory_space<vmem>>, vector<1x8x4xbf16>
    %80 = vector.shape_cast %79 : vector<1x8x4xbf16> to vector<8x4xbf16>
    %c0_77 = arith.constant 0 : index
    %c100 = arith.constant 100 : index
    %81 = vector.load %arg11[%c0_77, %c100] : memref<4x1280xbf16, #tpu.memory_space<vmem>>, vector<4x1024xbf16>
    %cst_78 = arith.constant dense<0.000000e+00> : vector<8x1024xf32>
    %82 = tpu.matmul %80, %81, %cst_78 {dimension_numbers = #tpu.dot_dimension_numbers<[1], [0], [0], [1], [0, 0, 1, 1], [], []>} : vector<8x4xbf16>, vector<4x1024xbf16>, vector<8x1024xf32> -> vector<8x1024xf32>
    %83 = arith.addf %78, %82 : vector<8x1024xf32>
    %c4_79 = arith.constant 4 : index
    %c0_80 = arith.constant 0 : index
    %c0_81 = arith.constant 0 : index
    %84 = vector.load %arg2[%c4_79, %c0_80, %c0_81] : memref<9x8x4xbf16, #tpu.memory_space<vmem>>, vector<1x8x4xbf16>
    %85 = vector.shape_cast %84 : vector<1x8x4xbf16> to vector<8x4xbf16>
    %c0_82 = arith.constant 0 : index
    %c101 = arith.constant 101 : index
    %86 = vector.load %arg11[%c0_82, %c101] : memref<4x1280xbf16, #tpu.memory_space<vmem>>, vector<4x1024xbf16>
    %cst_83 = arith.constant dense<0.000000e+00> : vector<8x1024xf32>
    %87 = tpu.matmul %85, %86, %cst_83 {dimension_numbers = #tpu.dot_dimension_numbers<[1], [0], [0], [1], [0, 0, 1, 1], [], []>} : vector<8x4xbf16>, vector<4x1024xbf16>, vector<8x1024xf32> -> vector<8x1024xf32>
    %88 = arith.addf %83, %87 : vector<8x1024xf32>
    %c5_84 = arith.constant 5 : index
    %c0_85 = arith.constant 0 : index
    %c0_86 = arith.constant 0 : index
    %89 = vector.load %arg2[%c5_84, %c0_85, %c0_86] : memref<9x8x4xbf16, #tpu.memory_space<vmem>>, vector<1x8x4xbf16>
    %90 = vector.shape_cast %89 : vector<1x8x4xbf16> to vector<8x4xbf16>
    %c0_87 = arith.constant 0 : index
    %c102 = arith.constant 102 : index
    %91 = vector.load %arg11[%c0_87, %c102] : memref<4x1280xbf16, #tpu.memory_space<vmem>>, vector<4x1024xbf16>
    %cst_88 = arith.constant dense<0.000000e+00> : vector<8x1024xf32>
    %92 = tpu.matmul %90, %91, %cst_88 {dimension_numbers = #tpu.dot_dimension_numbers<[1], [0], [0], [1], [0, 0, 1, 1], [], []>} : vector<8x4xbf16>, vector<4x1024xbf16>, vector<8x1024xf32> -> vector<8x1024xf32>
    %93 = arith.addf %88, %92 : vector<8x1024xf32>
    %c6_89 = arith.constant 6 : index
    %c0_90 = arith.constant 0 : index
    %c0_91 = arith.constant 0 : index
    %94 = vector.load %arg2[%c6_89, %c0_90, %c0_91] : memref<9x8x4xbf16, #tpu.memory_space<vmem>>, vector<1x8x4xbf16>
    %95 = vector.shape_cast %94 : vector<1x8x4xbf16> to vector<8x4xbf16>
    %c0_92 = arith.constant 0 : index
    %c200 = arith.constant 200 : index
    %96 = vector.load %arg11[%c0_92, %c200] : memref<4x1280xbf16, #tpu.memory_space<vmem>>, vector<4x1024xbf16>
    %cst_93 = arith.constant dense<0.000000e+00> : vector<8x1024xf32>
    %97 = tpu.matmul %95, %96, %cst_93 {dimension_numbers = #tpu.dot_dimension_numbers<[1], [0], [0], [1], [0, 0, 1, 1], [], []>} : vector<8x4xbf16>, vector<4x1024xbf16>, vector<8x1024xf32> -> vector<8x1024xf32>
    %98 = arith.addf %93, %97 : vector<8x1024xf32>
    %c7_94 = arith.constant 7 : index
    %c0_95 = arith.constant 0 : index
    %c0_96 = arith.constant 0 : index
    %99 = vector.load %arg2[%c7_94, %c0_95, %c0_96] : memref<9x8x4xbf16, #tpu.memory_space<vmem>>, vector<1x8x4xbf16>
    %100 = vector.shape_cast %99 : vector<1x8x4xbf16> to vector<8x4xbf16>
    %c0_97 = arith.constant 0 : index
    %c201 = arith.constant 201 : index
    %101 = vector.load %arg11[%c0_97, %c201] : memref<4x1280xbf16, #tpu.memory_space<vmem>>, vector<4x1024xbf16>
    %cst_98 = arith.constant dense<0.000000e+00> : vector<8x1024xf32>
    %102 = tpu.matmul %100, %101, %cst_98 {dimension_numbers = #tpu.dot_dimension_numbers<[1], [0], [0], [1], [0, 0, 1, 1], [], []>} : vector<8x4xbf16>, vector<4x1024xbf16>, vector<8x1024xf32> -> vector<8x1024xf32>
    %103 = arith.addf %98, %102 : vector<8x1024xf32>
    %c8_99 = arith.constant 8 : index
    %c0_100 = arith.constant 0 : index
    %c0_101 = arith.constant 0 : index
    %104 = vector.load %arg2[%c8_99, %c0_100, %c0_101] : memref<9x8x4xbf16, #tpu.memory_space<vmem>>, vector<1x8x4xbf16>
    %105 = vector.shape_cast %104 : vector<1x8x4xbf16> to vector<8x4xbf16>
    %c0_102 = arith.constant 0 : index
    %c202 = arith.constant 202 : index
    %106 = vector.load %arg11[%c0_102, %c202] : memref<4x1280xbf16, #tpu.memory_space<vmem>>, vector<4x1024xbf16>
    %cst_103 = arith.constant dense<0.000000e+00> : vector<8x1024xf32>
    %107 = tpu.matmul %105, %106, %cst_103 {dimension_numbers = #tpu.dot_dimension_numbers<[1], [0], [0], [1], [0, 0, 1, 1], [], []>} : vector<8x4xbf16>, vector<4x1024xbf16>, vector<8x1024xf32> -> vector<8x1024xf32>
    %108 = arith.addf %103, %107 : vector<8x1024xf32>
    %cst_104 = arith.constant 0.000000e+00 : f32
    %109 = vector.broadcast %cst_104 : f32 to vector<8x1024xf32>
    %110 = arith.cmpf oge, %108, %109 : vector<8x1024xf32>
    %cst_105 = arith.constant 0.00999999977 : f32
    %111 = vector.broadcast %cst_105 : f32 to vector<8x1024xf32>
    %112 = arith.mulf %111, %108 : vector<8x1024xf32>
    %113 = arith.select %110, %108, %112 : vector<8x1024xi1>, vector<8x1024xf32>
    %c0_106 = arith.constant 0 : index
    %c0_107 = arith.constant 0 : index
    %114 = vector.load %arg8[%c0_106, %c0_107] : memref<8x1024xf32, #tpu.memory_space<vmem>>, vector<8x1024xf32>
    tpu.vector_store %arg8[%c0_106, %c0_107], %113 {strides = array<i32>} : memref<8x1024xf32, #tpu.memory_space<vmem>>, vector<8x1024xf32>,
    %c0_108 = arith.constant 0 : index
    %c0_109 = arith.constant 0 : index
    %115 = vector.load %arg6[%c0_108, %c0_109] : memref<1x1024xf32, #tpu.memory_space<vmem>>, vector<1x1024xf32>
    %116 = vector.broadcast %115 : vector<1x1024xf32> to vector<8x1024xf32>
    %117 = arith.mulf %113, %116 : vector<8x1024xf32>
    %cst_110 = arith.constant dense<0.000000e+00> : vector<8xf32>
    %118 = vector.multi_reduction <add>, %117, %cst_110 [1] : vector<8x1024xf32> to vector<8xf32>
    %119 = vector.shape_cast %118 : vector<8xf32> to vector<8x1xf32>
    %120 = arith.mulf %117, %113 : vector<8x1024xf32>
    %cst_111 = arith.constant dense<0.000000e+00> : vector<8xf32>
    %121 = vector.multi_reduction <add>, %120, %cst_111 [1] : vector<8x1024xf32> to vector<8xf32>
    %122 = vector.shape_cast %121 : vector<8xf32> to vector<8x1xf32>
    %123 = tpu.concatenate %119, %122 in 1 : vector<8x1xf32>, vector<8x1xf32> -> vector<8x2xf32>
    %124 = vector.shape_cast %123 : vector<8x2xf32> to vector<1x8x2xf32>
    %c0_112 = arith.constant 0 : index
    %c0_113 = arith.constant 0 : index
    %c0_114 = arith.constant 0 : index
    %125 = vector.load %arg10[%c0_112, %c0_113, %c0_114] : memref<1x8x2xf32, #tpu.memory_space<vmem>>, vector<1x8x2xf32>
    tpu.vector_store %arg10[%c0_112, %c0_113, %c0_114], %124 {strides = array<i32>} : memref<1x8x2xf32, #tpu.memory_space<vmem>>, vector<1x8x2xf32>,
    return
  }
  func.func @transform_0(%arg0: i32) -> (i32, i32, i32) {
    %c0_i32 = arith.constant 0 : i32
    %c0_i32_0 = arith.constant 0 : i32
    %c0_i32_1 = arith.constant 0 : i32
    %c0_i32_2 = arith.constant 0 : i32
    return %c0_i32, %c0_i32_0, %c0_i32_1 : i32, i32, i32
  }
  func.func @transform_1(%arg0: i32) -> (i32, i32, i32) {
    %c0_i32 = arith.constant 0 : i32
    %c0_i32_0 = arith.constant 0 : i32
    %c0_i32_1 = arith.constant 0 : i32
    %c0_i32_2 = arith.constant 0 : i32
    return %c0_i32, %c0_i32_0, %c0_i32_1 : i32, i32, i32
  }
  func.func @transform_2(%arg0: i32) -> (i32, i32) {
    %c0_i32 = arith.constant 0 : i32
    %c0_i32_0 = arith.constant 0 : i32
    return %c0_i32, %arg0 : i32, i32
  }
  func.func @transform_3(%arg0: i32) -> (i32, i32) {
    %c1_i32 = arith.constant 1 : i32
    %0 = arith.addi %arg0, %c1_i32 : i32
    %c4_i32 = arith.constant 4 : i32
    %1 = arith.muli %0, %c4_i32 : i32
    %c0_i32 = arith.constant 0 : i32
    %c0_i32_0 = arith.constant 0 : i32
    return %c0_i32, %1 : i32, i32
  }
  func.func @transform_4(%arg0: i32) -> (i32, i32) {
    %c0_i32 = arith.constant 0 : i32
    %c0_i32_0 = arith.constant 0 : i32
    return %c0_i32, %arg0 : i32, i32
  }
  func.func @transform_5(%arg0: i32) -> (i32, i32) {
    %c0_i32 = arith.constant 0 : i32
    %c0_i32_0 = arith.constant 0 : i32
    return %c0_i32, %arg0 : i32, i32
  }
  func.func @transform_6(%arg0: i32) -> (i32, i32) {
    %c0_i32 = arith.constant 0 : i32
    %c0_i32_0 = arith.constant 0 : i32
    return %c0_i32, %arg0 : i32, i32
  }
  func.func @transform_7(%arg0: i32) -> (i32, i32) {
    %c0_i32 = arith.constant 0 : i32
    %c0_i32_0 = arith.constant 0 : i32
    return %c0_i32, %arg0 : i32, i32
  }
  func.func @transform_8(%arg0: i32) -> (i32, i32, i32) {
    %c0_i32 = arith.constant 0 : i32
    %c0_i32_0 = arith.constant 0 : i32
    %c0_i32_1 = arith.constant 0 : i32
    return %arg0, %c0_i32, %c0_i32_0 : i32, i32, i32
  }
  func.func @transform_9(%arg0: i32) -> (i32, i32, i32) {
    %c0_i32 = arith.constant 0 : i32
    %c0_i32_0 = arith.constant 0 : i32
    %c0_i32_1 = arith.constant 0 : i32
    return %arg0, %c0_i32, %c0_i32_0 : i32, i32, i32
  }
}

module attributes {stable_mosaic.version = 11 : i64} {
  func.func @kernel(%arg0: i32, %arg1: memref<9x8x8xbf16, #tpu.memory_space<vmem>>, %arg2: memref<9x8x8xbf16, #tpu.memory_space<vmem>>, %arg3: memref<8x1024xbf16, #tpu.memory_space<vmem>>, %arg4: memref<8x1024xbf16, #tpu.memory_space<vmem>>, %arg5: memref<8x256xbf16, #tpu.memory_space<vmem>>, %arg6: memref<8x256xbf16, #tpu.memory_space<vmem>>, %arg7: memref<1x1024xf32, #tpu.memory_space<vmem>>, %arg8: memref<1x1024xf32, #tpu.memory_space<vmem>>, %arg9: memref<8x1024xf32, #tpu.memory_space<vmem>>, %arg10: memref<8x1024xf32, #tpu.memory_space<vmem>>, %arg11: memref<1x8x2xf32, #tpu.memory_space<vmem>>, %arg12: memref<1x8x2xf32, #tpu.memory_space<vmem>>, %arg13: memref<8x1280xbf16, #tpu.memory_space<vmem>>, %arg14: memref<8x1280xbf16, #tpu.memory_space<vmem>>) attributes {dimension_semantics = [#tpu.dimension_semantics<parallel>], iteration_bounds = array<i64: 2>, scalar_prefetch = 0 : i64, scratch_operands = 2 : i64, tpu.core_type = #tpu.core_type<tc>, window_params = [{pipeline_mode = #tpu.pipeline_mode<synchronous>, transform_indices = @transform_0, window_bounds = array<i64: 9, 8, 8>}, {pipeline_mode = #tpu.pipeline_mode<synchronous>, transform_indices = @transform_1, window_bounds = array<i64: 9, 8, 8>}, {transform_indices = @transform_2, window_bounds = array<i64: 8, 1024>}, {transform_indices = @transform_3, window_bounds = array<i64: 8, 1024>}, {transform_indices = @transform_4, window_bounds = array<i64: 8, 256>}, {transform_indices = @transform_5, window_bounds = array<i64: 8, 256>}, {transform_indices = @transform_6, window_bounds = array<i64: 1, 1024>}, {transform_indices = @transform_7, window_bounds = array<i64: 1, 1024>}, {transform_indices = @transform_8, window_bounds = array<i64: 8, 1024>}, {transform_indices = @transform_9, window_bounds = array<i64: 8, 1024>}, {transform_indices = @transform_10, window_bounds = array<i64: 1, 8, 2>}, {transform_indices = @transform_11, window_bounds = array<i64: 1, 8, 2>}]} {
    %c0 = arith.constant 0 : index
    %c0_0 = arith.constant 0 : index
    %0 = vector.load %arg3[%c0, %c0_0] : memref<8x1024xbf16, #tpu.memory_space<vmem>>, vector<8x1024xbf16>
    %c0_1 = arith.constant 0 : index
    %c0_2 = arith.constant 0 : index
    %1 = vector.load %arg13[%c0_1, %c0_2] : memref<8x1280xbf16, #tpu.memory_space<vmem>>, vector<8x1024xbf16>
    tpu.vector_store %arg13[%c0_1, %c0_2], %0 {strides = array<i32>} : memref<8x1280xbf16, #tpu.memory_space<vmem>>, vector<8x1024xbf16>,
    %c0_3 = arith.constant 0 : index
    %c0_4 = arith.constant 0 : index
    %2 = vector.load %arg5[%c0_3, %c0_4] : memref<8x256xbf16, #tpu.memory_space<vmem>>, vector<8x256xbf16>
    %c0_5 = arith.constant 0 : index
    %c1024 = arith.constant 1024 : index
    %3 = vector.load %arg13[%c0_5, %c1024] : memref<8x1280xbf16, #tpu.memory_space<vmem>>, vector<8x256xbf16>
    tpu.vector_store %arg13[%c0_5, %c1024], %2 {strides = array<i32>} : memref<8x1280xbf16, #tpu.memory_space<vmem>>, vector<8x256xbf16>,
    %c0_6 = arith.constant 0 : index
    %c0_7 = arith.constant 0 : index
    %c0_8 = arith.constant 0 : index
    %4 = vector.load %arg1[%c0_6, %c0_7, %c0_8] : memref<9x8x8xbf16, #tpu.memory_space<vmem>>, vector<1x8x8xbf16>
    %5 = vector.shape_cast %4 : vector<1x8x8xbf16> to vector<8x8xbf16>
    %c0_9 = arith.constant 0 : index
    %c0_10 = arith.constant 0 : index
    %6 = vector.load %arg13[%c0_9, %c0_10] : memref<8x1280xbf16, #tpu.memory_space<vmem>>, vector<8x1024xbf16>
    %cst = arith.constant dense<0.000000e+00> : vector<8x1024xf32>
    %7 = tpu.matmul %5, %6, %cst {dimension_numbers = #tpu.dot_dimension_numbers<[1], [0], [0], [1], [0, 0, 1, 1], [], []>} : vector<8x8xbf16>, vector<8x1024xbf16>, vector<8x1024xf32> -> vector<8x1024xf32>
    %c1 = arith.constant 1 : index
    %c0_11 = arith.constant 0 : index
    %c0_12 = arith.constant 0 : index
    %8 = vector.load %arg1[%c1, %c0_11, %c0_12] : memref<9x8x8xbf16, #tpu.memory_space<vmem>>, vector<1x8x8xbf16>
    %9 = vector.shape_cast %8 : vector<1x8x8xbf16> to vector<8x8xbf16>
    %c0_13 = arith.constant 0 : index
    %c1_14 = arith.constant 1 : index
    %10 = vector.load %arg13[%c0_13, %c1_14] : memref<8x1280xbf16, #tpu.memory_space<vmem>>, vector<8x1024xbf16>
    %cst_15 = arith.constant dense<0.000000e+00> : vector<8x1024xf32>
    %11 = tpu.matmul %9, %10, %cst_15 {dimension_numbers = #tpu.dot_dimension_numbers<[1], [0], [0], [1], [0, 0, 1, 1], [], []>} : vector<8x8xbf16>, vector<8x1024xbf16>, vector<8x1024xf32> -> vector<8x1024xf32>
    %12 = arith.addf %7, %11 : vector<8x1024xf32>
    %c2 = arith.constant 2 : index
    %c0_16 = arith.constant 0 : index
    %c0_17 = arith.constant 0 : index
    %13 = vector.load %arg1[%c2, %c0_16, %c0_17] : memref<9x8x8xbf16, #tpu.memory_space<vmem>>, vector<1x8x8xbf16>
    %14 = vector.shape_cast %13 : vector<1x8x8xbf16> to vector<8x8xbf16>
    %c0_18 = arith.constant 0 : index
    %c2_19 = arith.constant 2 : index
    %15 = vector.load %arg13[%c0_18, %c2_19] : memref<8x1280xbf16, #tpu.memory_space<vmem>>, vector<8x1024xbf16>
    %cst_20 = arith.constant dense<0.000000e+00> : vector<8x1024xf32>
    %16 = tpu.matmul %14, %15, %cst_20 {dimension_numbers = #tpu.dot_dimension_numbers<[1], [0], [0], [1], [0, 0, 1, 1], [], []>} : vector<8x8xbf16>, vector<8x1024xbf16>, vector<8x1024xf32> -> vector<8x1024xf32>
    %17 = arith.addf %12, %16 : vector<8x1024xf32>
    %c3 = arith.constant 3 : index
    %c0_21 = arith.constant 0 : index
    %c0_22 = arith.constant 0 : index
    %18 = vector.load %arg1[%c3, %c0_21, %c0_22] : memref<9x8x8xbf16, #tpu.memory_space<vmem>>, vector<1x8x8xbf16>
    %19 = vector.shape_cast %18 : vector<1x8x8xbf16> to vector<8x8xbf16>
    %c0_23 = arith.constant 0 : index
    %c100 = arith.constant 100 : index
    %20 = vector.load %arg13[%c0_23, %c100] : memref<8x1280xbf16, #tpu.memory_space<vmem>>, vector<8x1024xbf16>
    %cst_24 = arith.constant dense<0.000000e+00> : vector<8x1024xf32>
    %21 = tpu.matmul %19, %20, %cst_24 {dimension_numbers = #tpu.dot_dimension_numbers<[1], [0], [0], [1], [0, 0, 1, 1], [], []>} : vector<8x8xbf16>, vector<8x1024xbf16>, vector<8x1024xf32> -> vector<8x1024xf32>
    %22 = arith.addf %17, %21 : vector<8x1024xf32>
    %c4 = arith.constant 4 : index
    %c0_25 = arith.constant 0 : index
    %c0_26 = arith.constant 0 : index
    %23 = vector.load %arg1[%c4, %c0_25, %c0_26] : memref<9x8x8xbf16, #tpu.memory_space<vmem>>, vector<1x8x8xbf16>
    %24 = vector.shape_cast %23 : vector<1x8x8xbf16> to vector<8x8xbf16>
    %c0_27 = arith.constant 0 : index
    %c101 = arith.constant 101 : index
    %25 = vector.load %arg13[%c0_27, %c101] : memref<8x1280xbf16, #tpu.memory_space<vmem>>, vector<8x1024xbf16>
    %cst_28 = arith.constant dense<0.000000e+00> : vector<8x1024xf32>
    %26 = tpu.matmul %24, %25, %cst_28 {dimension_numbers = #tpu.dot_dimension_numbers<[1], [0], [0], [1], [0, 0, 1, 1], [], []>} : vector<8x8xbf16>, vector<8x1024xbf16>, vector<8x1024xf32> -> vector<8x1024xf32>
    %27 = arith.addf %22, %26 : vector<8x1024xf32>
    %c5 = arith.constant 5 : index
    %c0_29 = arith.constant 0 : index
    %c0_30 = arith.constant 0 : index
    %28 = vector.load %arg1[%c5, %c0_29, %c0_30] : memref<9x8x8xbf16, #tpu.memory_space<vmem>>, vector<1x8x8xbf16>
    %29 = vector.shape_cast %28 : vector<1x8x8xbf16> to vector<8x8xbf16>
    %c0_31 = arith.constant 0 : index
    %c102 = arith.constant 102 : index
    %30 = vector.load %arg13[%c0_31, %c102] : memref<8x1280xbf16, #tpu.memory_space<vmem>>, vector<8x1024xbf16>
    %cst_32 = arith.constant dense<0.000000e+00> : vector<8x1024xf32>
    %31 = tpu.matmul %29, %30, %cst_32 {dimension_numbers = #tpu.dot_dimension_numbers<[1], [0], [0], [1], [0, 0, 1, 1], [], []>} : vector<8x8xbf16>, vector<8x1024xbf16>, vector<8x1024xf32> -> vector<8x1024xf32>
    %32 = arith.addf %27, %31 : vector<8x1024xf32>
    %c6 = arith.constant 6 : index
    %c0_33 = arith.constant 0 : index
    %c0_34 = arith.constant 0 : index
    %33 = vector.load %arg1[%c6, %c0_33, %c0_34] : memref<9x8x8xbf16, #tpu.memory_space<vmem>>, vector<1x8x8xbf16>
    %34 = vector.shape_cast %33 : vector<1x8x8xbf16> to vector<8x8xbf16>
    %c0_35 = arith.constant 0 : index
    %c200 = arith.constant 200 : index
    %35 = vector.load %arg13[%c0_35, %c200] : memref<8x1280xbf16, #tpu.memory_space<vmem>>, vector<8x1024xbf16>
    %cst_36 = arith.constant dense<0.000000e+00> : vector<8x1024xf32>
    %36 = tpu.matmul %34, %35, %cst_36 {dimension_numbers = #tpu.dot_dimension_numbers<[1], [0], [0], [1], [0, 0, 1, 1], [], []>} : vector<8x8xbf16>, vector<8x1024xbf16>, vector<8x1024xf32> -> vector<8x1024xf32>
    %37 = arith.addf %32, %36 : vector<8x1024xf32>
    %c7 = arith.constant 7 : index
    %c0_37 = arith.constant 0 : index
    %c0_38 = arith.constant 0 : index
    %38 = vector.load %arg1[%c7, %c0_37, %c0_38] : memref<9x8x8xbf16, #tpu.memory_space<vmem>>, vector<1x8x8xbf16>
    %39 = vector.shape_cast %38 : vector<1x8x8xbf16> to vector<8x8xbf16>
    %c0_39 = arith.constant 0 : index
    %c201 = arith.constant 201 : index
    %40 = vector.load %arg13[%c0_39, %c201] : memref<8x1280xbf16, #tpu.memory_space<vmem>>, vector<8x1024xbf16>
    %cst_40 = arith.constant dense<0.000000e+00> : vector<8x1024xf32>
    %41 = tpu.matmul %39, %40, %cst_40 {dimension_numbers = #tpu.dot_dimension_numbers<[1], [0], [0], [1], [0, 0, 1, 1], [], []>} : vector<8x8xbf16>, vector<8x1024xbf16>, vector<8x1024xf32> -> vector<8x1024xf32>
    %42 = arith.addf %37, %41 : vector<8x1024xf32>
    %c8 = arith.constant 8 : index
    %c0_41 = arith.constant 0 : index
    %c0_42 = arith.constant 0 : index
    %43 = vector.load %arg1[%c8, %c0_41, %c0_42] : memref<9x8x8xbf16, #tpu.memory_space<vmem>>, vector<1x8x8xbf16>
    %44 = vector.shape_cast %43 : vector<1x8x8xbf16> to vector<8x8xbf16>
    %c0_43 = arith.constant 0 : index
    %c202 = arith.constant 202 : index
    %45 = vector.load %arg13[%c0_43, %c202] : memref<8x1280xbf16, #tpu.memory_space<vmem>>, vector<8x1024xbf16>
    %cst_44 = arith.constant dense<0.000000e+00> : vector<8x1024xf32>
    %46 = tpu.matmul %44, %45, %cst_44 {dimension_numbers = #tpu.dot_dimension_numbers<[1], [0], [0], [1], [0, 0, 1, 1], [], []>} : vector<8x8xbf16>, vector<8x1024xbf16>, vector<8x1024xf32> -> vector<8x1024xf32>
    %47 = arith.addf %42, %46 : vector<8x1024xf32>
    %cst_45 = arith.constant 0.000000e+00 : f32
    %48 = vector.broadcast %cst_45 : f32 to vector<8x1024xf32>
    %49 = arith.cmpf oge, %47, %48 : vector<8x1024xf32>
    %cst_46 = arith.constant 0.00999999977 : f32
    %50 = vector.broadcast %cst_46 : f32 to vector<8x1024xf32>
    %51 = arith.mulf %50, %47 : vector<8x1024xf32>
    %52 = arith.select %49, %47, %51 : vector<8x1024xi1>, vector<8x1024xf32>
    %c0_47 = arith.constant 0 : index
    %c0_48 = arith.constant 0 : index
    %53 = vector.load %arg9[%c0_47, %c0_48] : memref<8x1024xf32, #tpu.memory_space<vmem>>, vector<8x1024xf32>
    tpu.vector_store %arg9[%c0_47, %c0_48], %52 {strides = array<i32>} : memref<8x1024xf32, #tpu.memory_space<vmem>>, vector<8x1024xf32>,
    %c0_49 = arith.constant 0 : index
    %c0_50 = arith.constant 0 : index
    %54 = vector.load %arg7[%c0_49, %c0_50] : memref<1x1024xf32, #tpu.memory_space<vmem>>, vector<1x1024xf32>
    %55 = vector.broadcast %54 : vector<1x1024xf32> to vector<8x1024xf32>
    %56 = arith.mulf %52, %55 : vector<8x1024xf32>
    %cst_51 = arith.constant dense<0.000000e+00> : vector<8xf32>
    %57 = vector.multi_reduction <add>, %56, %cst_51 [1] : vector<8x1024xf32> to vector<8xf32>
    %58 = vector.shape_cast %57 : vector<8xf32> to vector<8x1xf32>
    %59 = arith.mulf %56, %52 : vector<8x1024xf32>
    %cst_52 = arith.constant dense<0.000000e+00> : vector<8xf32>
    %60 = vector.multi_reduction <add>, %59, %cst_52 [1] : vector<8x1024xf32> to vector<8xf32>
    %61 = vector.shape_cast %60 : vector<8xf32> to vector<8x1xf32>
    %62 = tpu.concatenate %58, %61 in 1 : vector<8x1xf32>, vector<8x1xf32> -> vector<8x2xf32>
    %63 = vector.shape_cast %62 : vector<8x2xf32> to vector<1x8x2xf32>
    %c0_53 = arith.constant 0 : index
    %c0_54 = arith.constant 0 : index
    %c0_55 = arith.constant 0 : index
    %64 = vector.load %arg11[%c0_53, %c0_54, %c0_55] : memref<1x8x2xf32, #tpu.memory_space<vmem>>, vector<1x8x2xf32>
    tpu.vector_store %arg11[%c0_53, %c0_54, %c0_55], %63 {strides = array<i32>} : memref<1x8x2xf32, #tpu.memory_space<vmem>>, vector<1x8x2xf32>,
    %c0_56 = arith.constant 0 : index
    %c0_57 = arith.constant 0 : index
    %65 = vector.load %arg4[%c0_56, %c0_57] : memref<8x1024xbf16, #tpu.memory_space<vmem>>, vector<8x1024xbf16>
    %c0_58 = arith.constant 0 : index
    %c0_59 = arith.constant 0 : index
    %66 = vector.load %arg14[%c0_58, %c0_59] : memref<8x1280xbf16, #tpu.memory_space<vmem>>, vector<8x1024xbf16>
    tpu.vector_store %arg14[%c0_58, %c0_59], %65 {strides = array<i32>} : memref<8x1280xbf16, #tpu.memory_space<vmem>>, vector<8x1024xbf16>,
    %c0_60 = arith.constant 0 : index
    %c0_61 = arith.constant 0 : index
    %67 = vector.load %arg6[%c0_60, %c0_61] : memref<8x256xbf16, #tpu.memory_space<vmem>>, vector<8x256xbf16>
    %c0_62 = arith.constant 0 : index
    %c1024_63 = arith.constant 1024 : index
    %68 = vector.load %arg14[%c0_62, %c1024_63] : memref<8x1280xbf16, #tpu.memory_space<vmem>>, vector<8x256xbf16>
    tpu.vector_store %arg14[%c0_62, %c1024_63], %67 {strides = array<i32>} : memref<8x1280xbf16, #tpu.memory_space<vmem>>, vector<8x256xbf16>,
    %c0_64 = arith.constant 0 : index
    %c0_65 = arith.constant 0 : index
    %c0_66 = arith.constant 0 : index
    %69 = vector.load %arg2[%c0_64, %c0_65, %c0_66] : memref<9x8x8xbf16, #tpu.memory_space<vmem>>, vector<1x8x8xbf16>
    %70 = vector.shape_cast %69 : vector<1x8x8xbf16> to vector<8x8xbf16>
    %c0_67 = arith.constant 0 : index
    %c0_68 = arith.constant 0 : index
    %71 = vector.load %arg14[%c0_67, %c0_68] : memref<8x1280xbf16, #tpu.memory_space<vmem>>, vector<8x1024xbf16>
    %cst_69 = arith.constant dense<0.000000e+00> : vector<8x1024xf32>
    %72 = tpu.matmul %70, %71, %cst_69 {dimension_numbers = #tpu.dot_dimension_numbers<[1], [0], [0], [1], [0, 0, 1, 1], [], []>} : vector<8x8xbf16>, vector<8x1024xbf16>, vector<8x1024xf32> -> vector<8x1024xf32>
    %c1_70 = arith.constant 1 : index
    %c0_71 = arith.constant 0 : index
    %c0_72 = arith.constant 0 : index
    %73 = vector.load %arg2[%c1_70, %c0_71, %c0_72] : memref<9x8x8xbf16, #tpu.memory_space<vmem>>, vector<1x8x8xbf16>
    %74 = vector.shape_cast %73 : vector<1x8x8xbf16> to vector<8x8xbf16>
    %c0_73 = arith.constant 0 : index
    %c1_74 = arith.constant 1 : index
    %75 = vector.load %arg14[%c0_73, %c1_74] : memref<8x1280xbf16, #tpu.memory_space<vmem>>, vector<8x1024xbf16>
    %cst_75 = arith.constant dense<0.000000e+00> : vector<8x1024xf32>
    %76 = tpu.matmul %74, %75, %cst_75 {dimension_numbers = #tpu.dot_dimension_numbers<[1], [0], [0], [1], [0, 0, 1, 1], [], []>} : vector<8x8xbf16>, vector<8x1024xbf16>, vector<8x1024xf32> -> vector<8x1024xf32>
    %77 = arith.addf %72, %76 : vector<8x1024xf32>
    %c2_76 = arith.constant 2 : index
    %c0_77 = arith.constant 0 : index
    %c0_78 = arith.constant 0 : index
    %78 = vector.load %arg2[%c2_76, %c0_77, %c0_78] : memref<9x8x8xbf16, #tpu.memory_space<vmem>>, vector<1x8x8xbf16>
    %79 = vector.shape_cast %78 : vector<1x8x8xbf16> to vector<8x8xbf16>
    %c0_79 = arith.constant 0 : index
    %c2_80 = arith.constant 2 : index
    %80 = vector.load %arg14[%c0_79, %c2_80] : memref<8x1280xbf16, #tpu.memory_space<vmem>>, vector<8x1024xbf16>
    %cst_81 = arith.constant dense<0.000000e+00> : vector<8x1024xf32>
    %81 = tpu.matmul %79, %80, %cst_81 {dimension_numbers = #tpu.dot_dimension_numbers<[1], [0], [0], [1], [0, 0, 1, 1], [], []>} : vector<8x8xbf16>, vector<8x1024xbf16>, vector<8x1024xf32> -> vector<8x1024xf32>
    %82 = arith.addf %77, %81 : vector<8x1024xf32>
    %c3_82 = arith.constant 3 : index
    %c0_83 = arith.constant 0 : index
    %c0_84 = arith.constant 0 : index
    %83 = vector.load %arg2[%c3_82, %c0_83, %c0_84] : memref<9x8x8xbf16, #tpu.memory_space<vmem>>, vector<1x8x8xbf16>
    %84 = vector.shape_cast %83 : vector<1x8x8xbf16> to vector<8x8xbf16>
    %c0_85 = arith.constant 0 : index
    %c10 = arith.constant 10 : index
    %85 = vector.load %arg14[%c0_85, %c10] : memref<8x1280xbf16, #tpu.memory_space<vmem>>, vector<8x1024xbf16>
    %cst_86 = arith.constant dense<0.000000e+00> : vector<8x1024xf32>
    %86 = tpu.matmul %84, %85, %cst_86 {dimension_numbers = #tpu.dot_dimension_numbers<[1], [0], [0], [1], [0, 0, 1, 1], [], []>} : vector<8x8xbf16>, vector<8x1024xbf16>, vector<8x1024xf32> -> vector<8x1024xf32>
    %87 = arith.addf %82, %86 : vector<8x1024xf32>
    %c4_87 = arith.constant 4 : index
    %c0_88 = arith.constant 0 : index
    %c0_89 = arith.constant 0 : index
    %88 = vector.load %arg2[%c4_87, %c0_88, %c0_89] : memref<9x8x8xbf16, #tpu.memory_space<vmem>>, vector<1x8x8xbf16>
    %89 = vector.shape_cast %88 : vector<1x8x8xbf16> to vector<8x8xbf16>
    %c0_90 = arith.constant 0 : index
    %c11 = arith.constant 11 : index
    %90 = vector.load %arg14[%c0_90, %c11] : memref<8x1280xbf16, #tpu.memory_space<vmem>>, vector<8x1024xbf16>
    %cst_91 = arith.constant dense<0.000000e+00> : vector<8x1024xf32>
    %91 = tpu.matmul %89, %90, %cst_91 {dimension_numbers = #tpu.dot_dimension_numbers<[1], [0], [0], [1], [0, 0, 1, 1], [], []>} : vector<8x8xbf16>, vector<8x1024xbf16>, vector<8x1024xf32> -> vector<8x1024xf32>
    %92 = arith.addf %87, %91 : vector<8x1024xf32>
    %c5_92 = arith.constant 5 : index
    %c0_93 = arith.constant 0 : index
    %c0_94 = arith.constant 0 : index
    %93 = vector.load %arg2[%c5_92, %c0_93, %c0_94] : memref<9x8x8xbf16, #tpu.memory_space<vmem>>, vector<1x8x8xbf16>
    %94 = vector.shape_cast %93 : vector<1x8x8xbf16> to vector<8x8xbf16>
    %c0_95 = arith.constant 0 : index
    %c12 = arith.constant 12 : index
    %95 = vector.load %arg14[%c0_95, %c12] : memref<8x1280xbf16, #tpu.memory_space<vmem>>, vector<8x1024xbf16>
    %cst_96 = arith.constant dense<0.000000e+00> : vector<8x1024xf32>
    %96 = tpu.matmul %94, %95, %cst_96 {dimension_numbers = #tpu.dot_dimension_numbers<[1], [0], [0], [1], [0, 0, 1, 1], [], []>} : vector<8x8xbf16>, vector<8x1024xbf16>, vector<8x1024xf32> -> vector<8x1024xf32>
    %97 = arith.addf %92, %96 : vector<8x1024xf32>
    %c6_97 = arith.constant 6 : index
    %c0_98 = arith.constant 0 : index
    %c0_99 = arith.constant 0 : index
    %98 = vector.load %arg2[%c6_97, %c0_98, %c0_99] : memref<9x8x8xbf16, #tpu.memory_space<vmem>>, vector<1x8x8xbf16>
    %99 = vector.shape_cast %98 : vector<1x8x8xbf16> to vector<8x8xbf16>
    %c0_100 = arith.constant 0 : index
    %c20 = arith.constant 20 : index
    %100 = vector.load %arg14[%c0_100, %c20] : memref<8x1280xbf16, #tpu.memory_space<vmem>>, vector<8x1024xbf16>
    %cst_101 = arith.constant dense<0.000000e+00> : vector<8x1024xf32>
    %101 = tpu.matmul %99, %100, %cst_101 {dimension_numbers = #tpu.dot_dimension_numbers<[1], [0], [0], [1], [0, 0, 1, 1], [], []>} : vector<8x8xbf16>, vector<8x1024xbf16>, vector<8x1024xf32> -> vector<8x1024xf32>
    %102 = arith.addf %97, %101 : vector<8x1024xf32>
    %c7_102 = arith.constant 7 : index
    %c0_103 = arith.constant 0 : index
    %c0_104 = arith.constant 0 : index
    %103 = vector.load %arg2[%c7_102, %c0_103, %c0_104] : memref<9x8x8xbf16, #tpu.memory_space<vmem>>, vector<1x8x8xbf16>
    %104 = vector.shape_cast %103 : vector<1x8x8xbf16> to vector<8x8xbf16>
    %c0_105 = arith.constant 0 : index
    %c21 = arith.constant 21 : index
    %105 = vector.load %arg14[%c0_105, %c21] : memref<8x1280xbf16, #tpu.memory_space<vmem>>, vector<8x1024xbf16>
    %cst_106 = arith.constant dense<0.000000e+00> : vector<8x1024xf32>
    %106 = tpu.matmul %104, %105, %cst_106 {dimension_numbers = #tpu.dot_dimension_numbers<[1], [0], [0], [1], [0, 0, 1, 1], [], []>} : vector<8x8xbf16>, vector<8x1024xbf16>, vector<8x1024xf32> -> vector<8x1024xf32>
    %107 = arith.addf %102, %106 : vector<8x1024xf32>
    %c8_107 = arith.constant 8 : index
    %c0_108 = arith.constant 0 : index
    %c0_109 = arith.constant 0 : index
    %108 = vector.load %arg2[%c8_107, %c0_108, %c0_109] : memref<9x8x8xbf16, #tpu.memory_space<vmem>>, vector<1x8x8xbf16>
    %109 = vector.shape_cast %108 : vector<1x8x8xbf16> to vector<8x8xbf16>
    %c0_110 = arith.constant 0 : index
    %c22 = arith.constant 22 : index
    %110 = vector.load %arg14[%c0_110, %c22] : memref<8x1280xbf16, #tpu.memory_space<vmem>>, vector<8x1024xbf16>
    %cst_111 = arith.constant dense<0.000000e+00> : vector<8x1024xf32>
    %111 = tpu.matmul %109, %110, %cst_111 {dimension_numbers = #tpu.dot_dimension_numbers<[1], [0], [0], [1], [0, 0, 1, 1], [], []>} : vector<8x8xbf16>, vector<8x1024xbf16>, vector<8x1024xf32> -> vector<8x1024xf32>
    %112 = arith.addf %107, %111 : vector<8x1024xf32>
    %cst_112 = arith.constant 0.000000e+00 : f32
    %113 = vector.broadcast %cst_112 : f32 to vector<8x1024xf32>
    %114 = arith.cmpf oge, %112, %113 : vector<8x1024xf32>
    %cst_113 = arith.constant 0.00999999977 : f32
    %115 = vector.broadcast %cst_113 : f32 to vector<8x1024xf32>
    %116 = arith.mulf %115, %112 : vector<8x1024xf32>
    %117 = arith.select %114, %112, %116 : vector<8x1024xi1>, vector<8x1024xf32>
    %c0_114 = arith.constant 0 : index
    %c0_115 = arith.constant 0 : index
    %118 = vector.load %arg10[%c0_114, %c0_115] : memref<8x1024xf32, #tpu.memory_space<vmem>>, vector<8x1024xf32>
    tpu.vector_store %arg10[%c0_114, %c0_115], %117 {strides = array<i32>} : memref<8x1024xf32, #tpu.memory_space<vmem>>, vector<8x1024xf32>,
    %c0_116 = arith.constant 0 : index
    %c0_117 = arith.constant 0 : index
    %119 = vector.load %arg8[%c0_116, %c0_117] : memref<1x1024xf32, #tpu.memory_space<vmem>>, vector<1x1024xf32>
    %120 = vector.broadcast %119 : vector<1x1024xf32> to vector<8x1024xf32>
    %121 = arith.mulf %117, %120 : vector<8x1024xf32>
    %cst_118 = arith.constant dense<0.000000e+00> : vector<8xf32>
    %122 = vector.multi_reduction <add>, %121, %cst_118 [1] : vector<8x1024xf32> to vector<8xf32>
    %123 = vector.shape_cast %122 : vector<8xf32> to vector<8x1xf32>
    %124 = arith.mulf %121, %117 : vector<8x1024xf32>
    %cst_119 = arith.constant dense<0.000000e+00> : vector<8xf32>
    %125 = vector.multi_reduction <add>, %124, %cst_119 [1] : vector<8x1024xf32> to vector<8xf32>
    %126 = vector.shape_cast %125 : vector<8xf32> to vector<8x1xf32>
    %127 = tpu.concatenate %123, %126 in 1 : vector<8x1xf32>, vector<8x1xf32> -> vector<8x2xf32>
    %128 = vector.shape_cast %127 : vector<8x2xf32> to vector<1x8x2xf32>
    %c0_120 = arith.constant 0 : index
    %c0_121 = arith.constant 0 : index
    %c0_122 = arith.constant 0 : index
    %129 = vector.load %arg12[%c0_120, %c0_121, %c0_122] : memref<1x8x2xf32, #tpu.memory_space<vmem>>, vector<1x8x2xf32>
    tpu.vector_store %arg12[%c0_120, %c0_121, %c0_122], %128 {strides = array<i32>} : memref<1x8x2xf32, #tpu.memory_space<vmem>>, vector<1x8x2xf32>,
    return
  }
  func.func @transform_0(%arg0: i32) -> (i32, i32, i32) {
    %c0_i32 = arith.constant 0 : i32
    %c0_i32_0 = arith.constant 0 : i32
    %c0_i32_1 = arith.constant 0 : i32
    %c0_i32_2 = arith.constant 0 : i32
    return %c0_i32, %c0_i32_0, %c0_i32_1 : i32, i32, i32
  }
  func.func @transform_1(%arg0: i32) -> (i32, i32, i32) {
    %c0_i32 = arith.constant 0 : i32
    %c0_i32_0 = arith.constant 0 : i32
    %c0_i32_1 = arith.constant 0 : i32
    %c0_i32_2 = arith.constant 0 : i32
    return %c0_i32, %c0_i32_0, %c0_i32_1 : i32, i32, i32
  }
  func.func @transform_2(%arg0: i32) -> (i32, i32) {
    %c0_i32 = arith.constant 0 : i32
    %c0_i32_0 = arith.constant 0 : i32
    return %c0_i32, %arg0 : i32, i32
  }
  func.func @transform_3(%arg0: i32) -> (i32, i32) {
    %c0_i32 = arith.constant 0 : i32
    %c0_i32_0 = arith.constant 0 : i32
    return %c0_i32, %arg0 : i32, i32
  }
  func.func @transform_4(%arg0: i32) -> (i32, i32) {
    %c1_i32 = arith.constant 1 : i32
    %0 = arith.addi %arg0, %c1_i32 : i32
    %c4_i32 = arith.constant 4 : i32
    %1 = arith.muli %0, %c4_i32 : i32
    %c0_i32 = arith.constant 0 : i32
    %c0_i32_0 = arith.constant 0 : i32
    return %c0_i32, %1 : i32, i32
  }
  func.func @transform_5(%arg0: i32) -> (i32, i32) {
    %c1_i32 = arith.constant 1 : i32
    %0 = arith.addi %arg0, %c1_i32 : i32
    %c4_i32 = arith.constant 4 : i32
    %1 = arith.muli %0, %c4_i32 : i32
    %c0_i32 = arith.constant 0 : i32
    %c0_i32_0 = arith.constant 0 : i32
    return %c0_i32, %1 : i32, i32
  }
  func.func @transform_6(%arg0: i32) -> (i32, i32) {
    %c0_i32 = arith.constant 0 : i32
    %c0_i32_0 = arith.constant 0 : i32
    return %c0_i32, %arg0 : i32, i32
  }
  func.func @transform_7(%arg0: i32) -> (i32, i32) {
    %c0_i32 = arith.constant 0 : i32
    %c0_i32_0 = arith.constant 0 : i32
    return %c0_i32, %arg0 : i32, i32
  }
  func.func @transform_8(%arg0: i32) -> (i32, i32) {
    %c0_i32 = arith.constant 0 : i32
    %c0_i32_0 = arith.constant 0 : i32
    return %c0_i32, %arg0 : i32, i32
  }
  func.func @transform_9(%arg0: i32) -> (i32, i32) {
    %c0_i32 = arith.constant 0 : i32
    %c0_i32_0 = arith.constant 0 : i32
    return %c0_i32, %arg0 : i32, i32
  }
  func.func @transform_10(%arg0: i32) -> (i32, i32, i32) {
    %c0_i32 = arith.constant 0 : i32
    %c0_i32_0 = arith.constant 0 : i32
    %c0_i32_1 = arith.constant 0 : i32
    return %arg0, %c0_i32, %c0_i32_0 : i32, i32, i32
  }
  func.func @transform_11(%arg0: i32) -> (i32, i32, i32) {
    %c0_i32 = arith.constant 0 : i32
    %c0_i32_0 = arith.constant 0 : i32
    %c0_i32_1 = arith.constant 0 : i32
    return %arg0, %c0_i32, %c0_i32_0 : i32, i32, i32
  }
}

</mosaic_0001>

<llo_original>
// kernel: res_context_block.2
$region0: #{res_context_block.2}
  #allocation0 [shape = 'u32[]', space=smem, size = 0x4, offset = 0x4, fixed_abs, tag = 'smem constant byte address 0x4 - core index']
  #allocation1 [shape = 'u32[144,128]{1,0:T(1,128)}', space=vmem, size = 0x12000, scoped, tag = 'internal scratch']
  #allocation2 [shape = 'bf16[4,1280]{1,0:T(4,128)(2,1)}', space=vmem, size = 0x2800, scoped, tag = 'scratch operand']
  %s0 = inlined_call_operand.vmem [shape: bf16[9,8,4], index: 0, kind: input, shape index: {}]
  %s1 = inlined_call_operand.vmem [shape: bf16[9,8,4], index: 1, kind: input, shape index: {}]
  %s2 = inlined_call_operand.vmem [shape: bf16[4,2304], index: 2, kind: input, shape index: {}, may-alias: {2,3}]
  %s3 = inlined_call_operand.vmem [shape: bf16[4,2304], index: 3, kind: input, shape index: {}, may-alias: {2,3}]
  %s4 = inlined_call_operand.vmem [shape: f32[1,2048], index: 4, kind: input, shape index: {}]
  %s5 = inlined_call_operand.vmem [shape: f32[1,2048], index: 5, kind: input, shape index: {}]
  %s6 = inlined_call_operand.vmem [shape: f32[8,2048], index: 6, kind: output, shape index: {0}]
  %s7 = inlined_call_operand.vmem [shape: f32[8,2048], index: 7, kind: output, shape index: {1}]
  %s8 = inlined_call_operand.vmem [shape: f32[2,8,2], index: 8, kind: output, shape index: {2}]
  %s9 = inlined_call_operand.vmem [shape: f32[2,8,2], index: 9, kind: output, shape index: {3}]
  %10 = xla_tuple %s6, %s7, %s8, %s9
  %s11 = sld [smem:[#allocation0]]
  $region81: #{res_context_block.2} parent=0
    _
  %s13 = ssub.s32 1, %s11
  %s14 = scalar_select 0, %s13, %s11
  loop: start=0, step=1, limit=4
  $region2: #{res_context_block.2} parent=0 // loop_pre_header
    _
  $region3: #{res_context_block.2} parent=0 // loop_header
    %s16 = sphi 0, %s20
    %p17 = scmp.ge.s32.totalorder %s16, 4
    %s24 = sphi 0, %s24
    %s26 = sphi 0, %s24
    %s27 = sphi 0, %s26
    %s41 = sphi 0, %s27
    %s45 = sphi 0, %s45
    %s47 = sphi 0, %s45
    %s48 = sphi 0, %s47
    %s62 = sphi 0, %s48
    %s68 = sphi 0, %s70
    %s71 = sphi 0, %s68
    %s72 = sphi 0, %s71
    %s88 = sphi 0, %s72
    %s98 = sphi 0, %s100
    %s101 = sphi 0, %s98
    %s102 = sphi 0, %s101
    %s118 = sphi 0, %s102
    %s124 = sphi 0, %s126
    %s127 = sphi 0, %s124
    %s128 = sphi 0, %s127
    %s144 = sphi 0, %s128
    %s150 = sphi 0, %s152
    %s153 = sphi 0, %s150
    %s154 = sphi 0, %s153
    %s170 = sphi 0, %s154
    %s176 = sphi 0, %s178
    %s179 = sphi 0, %s176
    %s180 = sphi 0, %s179
    %s196 = sphi 0, %s180
    %s202 = sphi 0, %s204
    %s205 = sphi 0, %s202
    %s206 = sphi 0, %s205
    %s222 = sphi 0, %s206
    %s228 = sphi 0, %s230
    %s231 = sphi 0, %s228
    %s232 = sphi 0, %s231
    %s248 = sphi 0, %s232
    %s254 = sphi 0, %s256
    %s257 = sphi 0, %s254
    %s258 = sphi 0, %s257
    %s274 = sphi 0, %s258
  $region4: #{res_context_block.2} parent=0 // loop_header_branch
    %19 = sbr.rel (%p17) target = $region8
  $region5: #{res_context_block.2} parent=0 // loop_body
    %s21 = ssub.s32 %s16, 1
    %s22 = ssub.s32 %s16, 2
    %s23 = sadd.s32 %s16, 1
    %s25 = sadd.s32 %s24, 1
    %p28 = scmp.eq.s32.totalorder %s16, 1
    %p29 = scmp.ne.s32.totalorder %s24, %s26
    %p30 = scmp.eq.s32.totalorder %s16, 0
    %p31 = por %p29, %p30
    %p32 = scmp.ne.s32.totalorder %s24, %s26
    %p33 = scmp.eq.s32.totalorder %s21, 1
    %p34 = por %p32, %p33
    %p35 = scmp.ne.s32.totalorder %s26, %s27
    %p36 = scmp.eq.s32.totalorder %s21, 0
    %p37 = por %p35, %p36
    %p38 = scmp.ne.s32.totalorder %s26, %s27
    %p39 = scmp.eq.s32.totalorder %s22, 1
    %p40 = por %p38, %p39
    %p42 = scmp.ne.s32.totalorder %s27, %s41
    %p43 = scmp.eq.s32.totalorder %s22, 0
    %p44 = por %p42, %p43
    %s46 = sadd.s32 %s45, 1
    %p49 = scmp.eq.s32.totalorder %s16, 1
    %p50 = scmp.ne.s32.totalorder %s45, %s47
    %p51 = scmp.eq.s32.totalorder %s16, 0
    %p52 = por %p50, %p51
    %p53 = scmp.ne.s32.totalorder %s45, %s47
    %p54 = scmp.eq.s32.totalorder %s21, 1
    %p55 = por %p53, %p54
    %p56 = scmp.ne.s32.totalorder %s47, %s48
    %p57 = scmp.eq.s32.totalorder %s21, 0
    %p58 = por %p56, %p57
    %p59 = scmp.ne.s32.totalorder %s47, %s48
    %p60 = scmp.eq.s32.totalorder %s22, 1
    %p61 = por %p59, %p60
    %p63 = scmp.ne.s32.totalorder %s48, %s62
    %p64 = scmp.eq.s32.totalorder %s22, 0
    %p65 = por %p63, %p64
    %s66 = ssub.s32 %s16, %s23
    %p67 = scmp.eq.s32.totalorder %s66, 0
    %s69 = sadd.s32 %s68, 1
    %s70 = scalar_select %p67, %s68, %s69
    %p73 = pneg %p67
    %p74 = scmp.eq.s32.totalorder %s16, 1
    %p75 = por %p73, %p74
    %p76 = scmp.ne.s32.totalorder %s68, %s71
    %p77 = scmp.eq.s32.totalorder %s16, 0
    %p78 = por %p76, %p77
    %p79 = scmp.ne.s32.totalorder %s68, %s71
    %p80 = scmp.eq.s32.totalorder %s21, 1
    %p81 = por %p79, %p80
    %p82 = scmp.ne.s32.totalorder %s71, %s72
    %p83 = scmp.eq.s32.totalorder %s21, 0
    %p84 = por %p82, %p83
    %p85 = scmp.ne.s32.totalorder %s71, %s72
    %p86 = scmp.eq.s32.totalorder %s22, 1
    %p87 = por %p85, %p86
    %p89 = scmp.ne.s32.totalorder %s72, %s88
    %p90 = scmp.eq.s32.totalorder %s22, 0
    %p91 = por %p89, %p90
    %s92 = sadd.s32 %s16, 1
    %s93 = smul.u32 %s92, 4
    %s94 = sadd.s32 %s23, 1
    %s95 = smul.u32 %s94, 4
    %s96 = ssub.s32 %s93, %s95
    %p97 = scmp.eq.s32.totalorder %s96, 0
    %s99 = sadd.s32 %s98, 1
    %s100 = scalar_select %p97, %s98, %s99
    %p103 = pneg %p97
    %p104 = scmp.eq.s32.totalorder %s16, 1
    %p105 = por %p103, %p104
    %p106 = scmp.ne.s32.totalorder %s98, %s101
    %p107 = scmp.eq.s32.totalorder %s16, 0
    %p108 = por %p106, %p107
    %p109 = scmp.ne.s32.totalorder %s98, %s101
    %p110 = scmp.eq.s32.totalorder %s21, 1
    %p111 = por %p109, %p110
    %p112 = scmp.ne.s32.totalorder %s101, %s102
    %p113 = scmp.eq.s32.totalorder %s21, 0
    %p114 = por %p112, %p113
    %p115 = scmp.ne.s32.totalorder %s101, %s102
    %p116 = scmp.eq.s32.totalorder %s22, 1
    %p117 = por %p115, %p116
    %p119 = scmp.ne.s32.totalorder %s102, %s118
    %p120 = scmp.eq.s32.totalorder %s22, 0
    %p121 = por %p119, %p120
    %s122 = ssub.s32 %s16, %s23
    %p123 = scmp.eq.s32.totalorder %s122, 0
    %s125 = sadd.s32 %s124, 1
    %s126 = scalar_select %p123, %s124, %s125
    %p129 = pneg %p123
    %p130 = scmp.eq.s32.totalorder %s16, 1
    %p131 = por %p129, %p130
    %p132 = scmp.ne.s32.totalorder %s124, %s127
    %p133 = scmp.eq.s32.totalorder %s16, 0
    %p134 = por %p132, %p133
    %p135 = scmp.ne.s32.totalorder %s124, %s127
    %p136 = scmp.eq.s32.totalorder %s21, 1
    %p137 = por %p135, %p136
    %p138 = scmp.ne.s32.totalorder %s127, %s128
    %p139 = scmp.eq.s32.totalorder %s21, 0
    %p140 = por %p138, %p139
    %p141 = scmp.ne.s32.totalorder %s127, %s128
    %p142 = scmp.eq.s32.totalorder %s22, 1
    %p143 = por %p141, %p142
    %p145 = scmp.ne.s32.totalorder %s128, %s144
    %p146 = scmp.eq.s32.totalorder %s22, 0
    %p147 = por %p145, %p146
    %s148 = ssub.s32 %s16, %s23
    %p149 = scmp.eq.s32.totalorder %s148, 0
    %s151 = sadd.s32 %s150, 1
    %s152 = scalar_select %p149, %s150, %s151
    %p155 = pneg %p149
    %p156 = scmp.eq.s32.totalorder %s16, 1
    %p157 = por %p155, %p156
    %p158 = scmp.ne.s32.totalorder %s150, %s153
    %p159 = scmp.eq.s32.totalorder %s16, 0
    %p160 = por %p158, %p159
    %p161 = scmp.ne.s32.totalorder %s150, %s153
    %p162 = scmp.eq.s32.totalorder %s21, 1
    %p163 = por %p161, %p162
    %p164 = scmp.ne.s32.totalorder %s153, %s154
    %p165 = scmp.eq.s32.totalorder %s21, 0
    %p166 = por %p164, %p165
    %p167 = scmp.ne.s32.totalorder %s153, %s154
    %p168 = scmp.eq.s32.totalorder %s22, 1
    %p169 = por %p167, %p168
    %p171 = scmp.ne.s32.totalorder %s154, %s170
    %p172 = scmp.eq.s32.totalorder %s22, 0
    %p173 = por %p171, %p172
    %s174 = ssub.s32 %s16, %s23
    %p175 = scmp.eq.s32.totalorder %s174, 0
    %s177 = sadd.s32 %s176, 1
    %s178 = scalar_select %p175, %s176, %s177
    %p181 = pneg %p175
    %p182 = scmp.eq.s32.totalorder %s16, 1
    %p183 = por %p181, %p182
    %p184 = scmp.ne.s32.totalorder %s176, %s179
    %p185 = scmp.eq.s32.totalorder %s16, 0
    %p186 = por %p184, %p185
    %p187 = scmp.ne.s32.totalorder %s176, %s179
    %p188 = scmp.eq.s32.totalorder %s21, 1
    %p189 = por %p187, %p188
    %p190 = scmp.ne.s32.totalorder %s179, %s180
    %p191 = scmp.eq.s32.totalorder %s21, 0
    %p192 = por %p190, %p191
    %p193 = scmp.ne.s32.totalorder %s179, %s180
    %p194 = scmp.eq.s32.totalorder %s22, 1
    %p195 = por %p193, %p194
    %p197 = scmp.ne.s32.totalorder %s180, %s196
    %p198 = scmp.eq.s32.totalorder %s22, 0
    %p199 = por %p197, %p198
    %s200 = ssub.s32 %s16, %s23
    %p201 = scmp.eq.s32.totalorder %s200, 0
    %s203 = sadd.s32 %s202, 1
    %s204 = scalar_select %p201, %s202, %s203
    %p207 = pneg %p201
    %p208 = scmp.eq.s32.totalorder %s16, 1
    %p209 = por %p207, %p208
    %p210 = scmp.ne.s32.totalorder %s202, %s205
    %p211 = scmp.eq.s32.totalorder %s16, 0
    %p212 = por %p210, %p211
    %p213 = scmp.ne.s32.totalorder %s202, %s205
    %p214 = scmp.eq.s32.totalorder %s21, 1
    %p215 = por %p213, %p214
    %p216 = scmp.ne.s32.totalorder %s205, %s206
    %p217 = scmp.eq.s32.totalorder %s21, 0
    %p218 = por %p216, %p217
    %p219 = scmp.ne.s32.totalorder %s205, %s206
    %p220 = scmp.eq.s32.totalorder %s22, 1
    %p221 = por %p219, %p220
    %p223 = scmp.ne.s32.totalorder %s206, %s222
    %p224 = scmp.eq.s32.totalorder %s22, 0
    %p225 = por %p223, %p224
    %s226 = ssub.s32 %s16, %s23
    %p227 = scmp.eq.s32.totalorder %s226, 0
    %s229 = sadd.s32 %s228, 1
    %s230 = scalar_select %p227, %s228, %s229
    %p233 = pneg %p227
    %p234 = scmp.eq.s32.totalorder %s16, 1
    %p235 = por %p233, %p234
    %p236 = scmp.ne.s32.totalorder %s228, %s231
    %p237 = scmp.eq.s32.totalorder %s16, 0
    %p238 = por %p236, %p237
    %p239 = scmp.ne.s32.totalorder %s228, %s231
    %p240 = scmp.eq.s32.totalorder %s21, 1
    %p241 = por %p239, %p240
    %p242 = scmp.ne.s32.totalorder %s231, %s232
    %p243 = scmp.eq.s32.totalorder %s21, 0
    %p244 = por %p242, %p243
    %p245 = scmp.ne.s32.totalorder %s231, %s232
    %p246 = scmp.eq.s32.totalorder %s22, 1
    %p247 = por %p245, %p246
    %p249 = scmp.ne.s32.totalorder %s232, %s248
    %p250 = scmp.eq.s32.totalorder %s22, 0
    %p251 = por %p249, %p250
    %s252 = ssub.s32 %s16, %s23
    %p253 = scmp.eq.s32.totalorder %s252, 0
    %s255 = sadd.s32 %s254, 1
    %s256 = scalar_select %p253, %s254, %s255
    %p259 = pneg %p253
    %p260 = scmp.eq.s32.totalorder %s16, 1
    %p261 = por %p259, %p260
    %p262 = scmp.ne.s32.totalorder %s254, %s257
    %p263 = scmp.eq.s32.totalorder %s16, 0
    %p264 = por %p262, %p263
    %p265 = scmp.ne.s32.totalorder %s254, %s257
    %p266 = scmp.eq.s32.totalorder %s21, 1
    %p267 = por %p265, %p266
    %p268 = scmp.ne.s32.totalorder %s257, %s258
    %p269 = scmp.eq.s32.totalorder %s21, 0
    %p270 = por %p268, %p269
    %p271 = scmp.ne.s32.totalorder %s257, %s258
    %p272 = scmp.eq.s32.totalorder %s22, 1
    %p273 = por %p271, %p272
    %p275 = scmp.ne.s32.totalorder %s258, %s274
    %p276 = scmp.eq.s32.totalorder %s22, 0
    %p277 = por %p275, %p276
    %p278 = scmp.le.s32.totalorder 1, %s16
    %p279 = scmp.lt.s32.totalorder %s16, 3
    %p280 = pnand %p278, %p279
    %p281 = pneg %p280
    // Predicated region
    $region9: #{res_context_block.2} parent=5 // pred_check
      _
    $region10: #{res_context_block.2} parent=5 // pred_check_branch
      %283 = sbr.rel (%p280) target = $region12
    $region11: #{res_context_block.2} parent=5 // pred_region
      %s284 = ssub.s32 %s16, 1
      // Predicated region
      $region13: #{res_context_block.2} parent=11 // pred_check
        %p285 = pneg %p37
      $region14: #{res_context_block.2} parent=11 // pred_check_branch
        %287 = sbr.rel (%p285) target = $region16
      $region15: #{res_context_block.2} parent=11 // pred_region
        _
      $region16: #{res_context_block.2} parent=11 // pred_fallthru
        _
      // Predicated region
      $region17: #{res_context_block.2} parent=11 // pred_check
        %p288 = pneg %p58
      $region18: #{res_context_block.2} parent=11 // pred_check_branch
        %290 = sbr.rel (%p288) target = $region20
      $region19: #{res_context_block.2} parent=11 // pred_region
        _
      $region20: #{res_context_block.2} parent=11 // pred_fallthru
        _
    $region12: #{res_context_block.2} parent=5 // pred_fallthru
      _
    %p291 = scmp.lt.s32.totalorder %s16, 2
    // Predicated region
    $region21: #{res_context_block.2} parent=5 // pred_check
      %p292 = pneg %p291
    $region22: #{res_context_block.2} parent=5 // pred_check_branch
      %294 = sbr.rel (%p292) target = $region24
    $region23: #{res_context_block.2} parent=5 // pred_region
      // Predicated region
      $region25: #{res_context_block.2} parent=23 // pred_check
        %p295 = pneg %p78
      $region26: #{res_context_block.2} parent=23 // pred_check_branch
        %297 = sbr.rel (%p295) target = $region28
      $region27: #{res_context_block.2} parent=23 // pred_region
        %s298 = smul.u32 8, %s16
        %s299 = ssub.s32 18, %s298
        %p300 = scmp.lt.s32.totalorder %s299, 8
        %s301 = scalar_select %p300, %s299, 8
        %s302 = smul.u32 32, %s301
        %p303 = scmp.lt.s32.totalorder %s298, 17
        %s304 = scalar_select %p303, %s298, 17
        %s305 = smul.addr %s304, 2
        %s306 = scalar_lea.vmem %s2, %s305
        %s307 = smul.u32 8, %s16
        %s308 = ssub.s32 18, %s307
        %p309 = scmp.lt.s32.totalorder %s308, 8
        %s310 = scalar_select %p309, %s308, 8
        %s311 = smul.u32 32, %s310
      $region28: #{res_context_block.2} parent=23 // pred_fallthru
        _
      // Predicated region
      $region29: #{res_context_block.2} parent=23 // pred_check
        %p312 = pneg %p108
      $region30: #{res_context_block.2} parent=23 // pred_check_branch
        %314 = sbr.rel (%p312) target = $region32
      $region31: #{res_context_block.2} parent=23 // pred_region
        %s315 = sadd.s32 %s16, 1
        %s316 = smul.u32 %s315, 4
        %s317 = smul.u32 2, %s316
        %p318 = scmp.lt.s32.totalorder %s317, 17
        %s319 = scalar_select %p318, %s317, 17
        %s320 = smul.addr %s319, 2
        %s321 = scalar_lea.vmem %s3, %s320
        %s322 = sadd.s32 %s16, 1
        %s323 = smul.u32 %s322, 4
        %s324 = smul.u32 2, %s323
      $region32: #{res_context_block.2} parent=23 // pred_fallthru
        _
      // Predicated region
      $region33: #{res_context_block.2} parent=23 // pred_check
        %p325 = pneg %p134
      $region34: #{res_context_block.2} parent=23 // pred_check_branch
        %327 = sbr.rel (%p325) target = $region36
      $region35: #{res_context_block.2} parent=23 // pred_region
        %s328 = smul.u32 8, %s16
        %p329 = scmp.lt.s32.totalorder %s328, 15
        %s330 = scalar_select %p329, %s328, 15
        %s331 = scalar_lea.vmem %s4, %s330
        %s332 = smul.u32 8, %s16
      $region36: #{res_context_block.2} parent=23 // pred_fallthru
        _
      // Predicated region
      $region37: #{res_context_block.2} parent=23 // pred_check
        %p333 = pneg %p160
      $region38: #{res_context_block.2} parent=23 // pred_check_branch
        %335 = sbr.rel (%p333) target = $region40
      $region39: #{res_context_block.2} parent=23 // pred_region
        %s336 = smul.u32 8, %s16
        %p337 = scmp.lt.s32.totalorder %s336, 15
        %s338 = scalar_select %p337, %s336, 15
        %s339 = scalar_lea.vmem %s5, %s338
        %s340 = smul.u32 8, %s16
      $region40: #{res_context_block.2} parent=23 // pred_fallthru
        _
    $region24: #{res_context_block.2} parent=5 // pred_fallthru
      _
    %p341 = scmp.le.s32.totalorder 1, %s16
    %p342 = scmp.lt.s32.totalorder %s16, 3
    %p343 = pnand %p341, %p342
    %p344 = pneg %p343
    // Predicated region
    $region41: #{res_context_block.2} parent=5 // pred_check
      _
    $region42: #{res_context_block.2} parent=5 // pred_check_branch
      %346 = sbr.rel (%p343) target = $region44
    $region43: #{res_context_block.2} parent=5 // pred_region
      %s347 = ssub.s32 %s16, 1
      %p348 = pneg %p37
      %p349 = pneg %p34
      %p350 = pneg %p58
      %p351 = pneg %p55
      %s352 = smul.u32 8, %s21
      %s353 = ssub.s32 18, %s352
      %p354 = scmp.lt.s32.totalorder %s353, 8
      %s355 = scalar_select %p354, %s353, 8
      %s356 = smul.u32 32, %s355
      %p357 = scmp.lt.s32.totalorder %s352, 17
      %s358 = scalar_select %p357, %s352, 17
      %s359 = smul.addr %s358, 2
      %s360 = scalar_lea.vmem %s2, %s359
      %p361 = pneg %p84
      %p362 = pneg %p81
      %s363 = sadd.s32 %s21, 1
      %s364 = smul.u32 %s363, 4
      %s365 = smul.u32 2, %s364
      %p366 = scmp.lt.s32.totalorder %s365, 17
      %s367 = scalar_select %p366, %s365, 17
      %s368 = smul.addr %s367, 2
      %s369 = scalar_lea.vmem %s3, %s368
      %p370 = pneg %p114
      %p371 = pneg %p111
      %s372 = smul.u32 8, %s21
      %p373 = scmp.lt.s32.totalorder %s372, 15
      %s374 = scalar_select %p373, %s372, 15
      %s375 = scalar_lea.vmem %s4, %s374
      %p376 = pneg %p140
      %p377 = pneg %p137
      %s378 = smul.u32 8, %s21
      %p379 = scmp.lt.s32.totalorder %s378, 15
      %s380 = scalar_select %p379, %s378, 15
      %s381 = scalar_lea.vmem %s5, %s380
      %p382 = pneg %p166
      %p383 = pneg %p163
      %p384 = pneg %p192
      %p385 = pneg %p189
      %s386 = smul.u32 8, %s21
      %p387 = scmp.lt.s32.totalorder %s386, 15
      %s388 = scalar_select %p387, %s386, 15
      %s389 = smul.addr %s388, 8
      %s390 = scalar_lea.vmem %s6, %s389
      %p391 = pneg %p218
      %p392 = pneg %p215
      %s393 = smul.u32 8, %s21
      %p394 = scmp.lt.s32.totalorder %s393, 15
      %s395 = scalar_select %p394, %s393, 15
      %s396 = smul.addr %s395, 8
      %s397 = scalar_lea.vmem %s7, %s396
      %p398 = pneg %p244
      %p399 = pneg %p241
      %p400 = scmp.lt.s32.totalorder %s21, 1
      %s401 = scalar_select %p400, %s21, 1
      %s402 = smul.addr %s401, 8
      %s403 = scalar_lea.vmem %s8, %s402
      %p404 = pneg %p270
      %p405 = pneg %p267
      %p406 = scmp.lt.s32.totalorder %s21, 1
      %s407 = scalar_select %p406, %s21, 1
      %s408 = smul.addr %s407, 8
      %s409 = scalar_lea.vmem %s9, %s408
      %s410 = smul.u32 8, %s21
      %s411 = ssub.s32 18, %s410
      %p412 = scmp.lt.s32.totalorder %s411, 8
      %s413 = scalar_select %p412, %s411, 8
      %s414 = smul.u32 32, %s413
      %p415 = scmp.lt.s32.totalorder %s410, 17
      %s416 = scalar_select %p415, %s410, 17
      %s417 = smul.addr %s416, 2
      %s418 = scalar_lea.vmem %s2, %s417
      %s419 = smul.u32 8, %s21
      %s420 = ssub.s32 18, %s419
      %p421 = scmp.lt.s32.totalorder %s420, 8
      %s422 = scalar_select %p421, %s420, 8
      %s423 = smul.u32 32, %s422
      %s424 = sadd.s32 %s21, 1
      %s425 = smul.u32 %s424, 4
      %s426 = smul.u32 2, %s425
      %p427 = scmp.lt.s32.totalorder %s426, 17
      %s428 = scalar_select %p427, %s426, 17
      %s429 = smul.addr %s428, 2
      %s430 = scalar_lea.vmem %s3, %s429
      %s431 = sadd.s32 %s21, 1
      %s432 = smul.u32 %s431, 4
      %s433 = smul.u32 2, %s432
      %s434 = smul.u32 8, %s21
      %p435 = scmp.lt.s32.totalorder %s434, 15
      %s436 = scalar_select %p435, %s434, 15
      %s437 = scalar_lea.vmem %s4, %s436
      %s438 = smul.u32 8, %s21
      %s439 = smul.u32 8, %s21
      %p440 = scmp.lt.s32.totalorder %s439, 15
      %s441 = scalar_select %p440, %s439, 15
      %s442 = scalar_lea.vmem %s5, %s441
      %s443 = smul.u32 8, %s21
      %s444 = smul.u32 8, %s21
      %p445 = scmp.lt.s32.totalorder %s444, 15
      %s446 = scalar_select %p445, %s444, 15
      %s447 = smul.addr %s446, 8
      %s448 = scalar_lea.vmem %s6, %s447
      %s449 = smul.u32 8, %s21
      %s450 = smul.u32 8, %s21
      %p451 = scmp.lt.s32.totalorder %s450, 15
      %s452 = scalar_select %p451, %s450, 15
      %s453 = smul.addr %s452, 8
      %s454 = scalar_lea.vmem %s7, %s453
      %s455 = smul.u32 8, %s21
      %p456 = scmp.lt.s32.totalorder %s21, 1
      %s457 = scalar_select %p456, %s21, 1
      %s458 = smul.addr %s457, 8
      %s459 = scalar_lea.vmem %s8, %s458
      %p460 = scmp.lt.s32.totalorder %s21, 1
      %s461 = scalar_select %p460, %s21, 1
      %s462 = smul.addr %s461, 8
      %s463 = scalar_lea.vmem %s9, %s462
      %v465 = vld [vmem:[%s418] sm:$0xff]
      %v466 = vld [vmem:[%s418 + $0x8] sm:$0xff]
      %467 = vst [vmem:[#allocation2] sm:$0xff] %v465
      %468 = vst [vmem:[#allocation2 + $0x8] sm:$0xff] %v466
      %v469 = vld [vmem:[%s430] sm:$0xf]
      %470 = vst [vmem:[#allocation2 + $0x10] sm:$0xf] %v469
      %v471 = vld [vmem:[%s0] sm:$0xf]
      %v472 = vld [vmem:[#allocation2] sm:$0xff]
      %v473 = vld [vmem:[#allocation2 + $0x8] sm:$0xff]
      %s474 = scalar_lea.vmem %s0, 4
      %v475 = vld [vmem:[%s474] sm:$0xf]
      %v476 = vld [vmem:[#allocation2 + $0x10] sm:$0x3]
      %v480 = vcombine.high %v472, %v472
      %v482 = vunpack.c.l.s4 1983009808
      %v483 = vunpack.c.0.s8 %v482
      %v484 = vlaneseq
      %v485 = vshrl.u32 %v484, 7
      %v486 = vsub.s32 %v483, %v485
      %v487 = vrot.slane %v472, %v486
      %v489 = vunpack.c.l.s4 1983009808
      %v490 = vunpack.c.0.s8 %v489
      %v491 = vlaneseq
      %v492 = vshrl.u32 %v491, 7
      %v493 = vsub.s32 %v490, %v492
      %v494 = vrot.slane %v480, %v493
      %v495 = vcombine.high %v487, %v487
      %v496 = vcombine.high %v494, %v494
      %v497 = vcombine.high %v473, %v473
      %v499 = vunpack.c.l.s4 1983009808
      %v500 = vunpack.c.0.s8 %v499
      %v501 = vlaneseq
      %v502 = vshrl.u32 %v501, 7
      %v503 = vsub.s32 %v500, %v502
      %v504 = vrot.slane %v473, %v503
      %v506 = vunpack.c.l.s4 1983009808
      %v507 = vunpack.c.0.s8 %v506
      %v508 = vlaneseq
      %v509 = vshrl.u32 %v508, 7
      %v510 = vsub.s32 %v507, %v509
      %v511 = vrot.slane %v497, %v510
      %v512 = vcombine.high %v504, %v504
      %v513 = vcombine.high %v511, %v511
      %v515 = vunpack.c.l.s4 1983009808
      %v516 = vunpack.c.0.s8 %v515
      %v517 = vlaneseq
      %v518 = vshrl.u32 %v517, 7
      %v519 = vsub.s32 %v516, %v518
      %v520 = vrot.slane %v476, %v519
      %521 = vrot.lane.b32.xlu0 %v487, 127
      %v522 = vpop.permute.xlu0 %521
      %523 = vrot.lane.b32.xlu0 %v495, 127
      %v524 = vpop.permute.xlu0 %523
      %525 = vrot.lane.b32.xlu0 %v494, 127
      %v526 = vpop.permute.xlu0 %525
      %527 = vrot.lane.b32.xlu0 %v496, 127
      %v528 = vpop.permute.xlu0 %527
      %529 = vrot.lane.b32.xlu0 %v504, 127
      %v530 = vpop.permute.xlu0 %529
      %531 = vrot.lane.b32.xlu0 %v512, 127
      %v532 = vpop.permute.xlu0 %531
      %533 = vrot.lane.b32.xlu0 %v511, 127
      %v534 = vpop.permute.xlu0 %533
      %535 = vrot.lane.b32.xlu0 %v513, 127
      %v536 = vpop.permute.xlu0 %535
      %537 = vrot.lane.b32.xlu0 %v520, 127
      %v538 = vpop.permute.xlu0 %537
      %vm539 = vcmask 1039360
      %v540 = vsel %vm539, %v522, %v524
      %v541 = vsel %vm539, %v524, %v526
      %v542 = vsel %vm539, %v526, %v528
      %v543 = vsel %vm539, %v528, %v530
      %v544 = vsel %vm539, %v530, %v532
      %v545 = vsel %vm539, %v532, %v534
      %v546 = vsel %vm539, %v534, %v536
      %v547 = vsel %vm539, %v536, %v538
      %vm548 = vcmask 31744
      %v550 = vsel %vm548, %v475, 0
      %vm552 = vcmask 1041408
      %v554 = vsel %vm552, %v540, 0
      %v557 = vsel %vm552, %v541, 0
      %v560 = vsel %vm552, %v542, 0
      %v563 = vsel %vm552, %v543, 0
      %v566 = vsel %vm552, %v544, 0
      %v569 = vsel %vm552, %v545, 0
      %v572 = vsel %vm552, %v546, 0
      %v575 = vsel %vm552, %v547, 0
      %577 = vmatprep.subr.bf16.mxu0 %v557
      %578 = vmatpush1.bf16.msra.mxu0 %v554
      %579 = vmatprep.subr.bf16.mxu0 0
      %580 = vmatpush1.bf16.msra.mxu0 0
      %581 = vmatprep.subr.bf16.mxu0 0
      %582 = vmatpush1.bf16.msra.mxu0 0
      %583 = vmatprep.subr.bf16.mxu0 0
      %584 = vmatpush1.bf16.msra.mxu0 0
      %585 = vmatprep.subr.bf16.mxu0 0
      %586 = vmatpush1.bf16.msra.mxu0 0
      %587 = vmatprep.subr.bf16.mxu0 0
      %588 = vmatpush1.bf16.msra.mxu0 0
      %589 = vmatprep.subr.bf16.mxu0 0
      %590 = vmatpush1.bf16.msra.mxu0 0
      %591 = vmatprep.subr.bf16.mxu0 0
      %592 = vmatpush1.bf16.msra.mxu0 0
      %593 = vmatprep.subr.bf16.mxu0 0
      %594 = vmatpush1.bf16.msra.mxu0 0
      %595 = vmatprep.subr.bf16.mxu0 0
      %596 = vmatpush1.bf16.msra.mxu0 0
      %597 = vmatprep.subr.bf16.mxu0 0
      %598 = vmatpush1.bf16.msra.mxu0 0
      %599 = vmatprep.subr.bf16.mxu0 0
      %600 = vmatpush1.bf16.msra.mxu0 0
      %601 = vmatprep.subr.bf16.mxu0 0
      %602 = vmatpush1.bf16.msra.mxu0 0
      %603 = vmatprep.subr.bf16.mxu0 0
      %604 = vmatpush1.bf16.msra.mxu0 0
      %605 = vmatprep.subr.bf16.mxu0 0
      %606 = vmatpush1.bf16.msra.mxu0 0
      %607 = vmatprep.subr.bf16.mxu0 0
      %608 = vmatpush1.bf16.msra.mxu0 0
      %609 = vmatprep.mubr.bf16.mxu0 0
      %610 = vmatmul.mubr.bf16.gmra.mrb[0].mxu0 %v550
      %v611 = vpop.f32.mrb[0].mxu0
      %v612 = vadd.f32 0.0, %v611
      %v613 = vpop.f32.mrb[0].mxu0
      %v614 = vadd.f32 0.0, %v613
      %v615 = vpop.f32.mrb[0].mxu0
      %v616 = vpop.f32.mrb[0].mxu0
      %617 = vdwg.mxu0
      %618 = vmatprep.subr.bf16.mxu0 %v563
      %619 = vmatpush1.bf16.msra.mxu0 %v560
      %620 = vmatprep.subr.bf16.mxu0 0
      %621 = vmatpush1.bf16.msra.mxu0 0
      %622 = vmatprep.subr.bf16.mxu0 0
      %623 = vmatpush1.bf16.msra.mxu0 0
      %624 = vmatprep.subr.bf16.mxu0 0
      %625 = vmatpush1.bf16.msra.mxu0 0
      %626 = vmatprep.subr.bf16.mxu0 0
      %627 = vmatpush1.bf16.msra.mxu0 0
      %628 = vmatprep.subr.bf16.mxu0 0
      %629 = vmatpush1.bf16.msra.mxu0 0
      %630 = vmatprep.subr.bf16.mxu0 0
      %631 = vmatpush1.bf16.msra.mxu0 0
      %632 = vmatprep.subr.bf16.mxu0 0
      %633 = vmatpush1.bf16.msra.mxu0 0
      %634 = vmatprep.subr.bf16.mxu0 0
      %635 = vmatpush1.bf16.msra.mxu0 0
      %636 = vmatprep.subr.bf16.mxu0 0
      %637 = vmatpush1.bf16.msra.mxu0 0
      %638 = vmatprep.subr.bf16.mxu0 0
      %639 = vmatpush1.bf16.msra.mxu0 0
      %640 = vmatprep.subr.bf16.mxu0 0
      %641 = vmatpush1.bf16.msra.mxu0 0
      %642 = vmatprep.subr.bf16.mxu0 0
      %643 = vmatpush1.bf16.msra.mxu0 0
      %644 = vmatprep.subr.bf16.mxu0 0
      %645 = vmatpush1.bf16.msra.mxu0 0
      %646 = vmatprep.subr.bf16.mxu0 0
      %647 = vmatpush1.bf16.msra.mxu0 0
      %648 = vmatprep.subr.bf16.mxu0 0
      %649 = vmatpush1.bf16.msra.mxu0 0
      %650 = vmatprep.mubr.bf16.mxu0 0
      %651 = vmatmul.mubr.bf16.gmra.mrb[0].mxu0 %v550
      %v652 = vpop.f32.mrb[0].mxu0
      %v653 = vadd.f32 0.0, %v652
      %v654 = vpop.f32.mrb[0].mxu0
      %v655 = vadd.f32 0.0, %v654
      %v656 = vpop.f32.mrb[0].mxu0
      %v657 = vpop.f32.mrb[0].mxu0
      %658 = vdwg.mxu0
      %659 = vmatprep.subr.bf16.mxu0 %v569
      %660 = vmatpush1.bf16.msra.mxu0 %v566
      %661 = vmatprep.subr.bf16.mxu0 0
      %662 = vmatpush1.bf16.msra.mxu0 0
      %663 = vmatprep.subr.bf16.mxu0 0
      %664 = vmatpush1.bf16.msra.mxu0 0
      %665 = vmatprep.subr.bf16.mxu0 0
      %666 = vmatpush1.bf16.msra.mxu0 0
      %667 = vmatprep.subr.bf16.mxu0 0
      %668 = vmatpush1.bf16.msra.mxu0 0
      %669 = vmatprep.subr.bf16.mxu0 0
      %670 = vmatpush1.bf16.msra.mxu0 0
      %671 = vmatprep.subr.bf16.mxu0 0
      %672 = vmatpush1.bf16.msra.mxu0 0
      %673 = vmatprep.subr.bf16.mxu0 0
      %674 = vmatpush1.bf16.msra.mxu0 0
      %675 = vmatprep.subr.bf16.mxu0 0
      %676 = vmatpush1.bf16.msra.mxu0 0
      %677 = vmatprep.subr.bf16.mxu0 0
      %678 = vmatpush1.bf16.msra.mxu0 0
      %679 = vmatprep.subr.bf16.mxu0 0
      %680 = vmatpush1.bf16.msra.mxu0 0
      %681 = vmatprep.subr.bf16.mxu0 0
      %682 = vmatpush1.bf16.msra.mxu0 0
      %683 = vmatprep.subr.bf16.mxu0 0
      %684 = vmatpush1.bf16.msra.mxu0 0
      %685 = vmatprep.subr.bf16.mxu0 0
      %686 = vmatpush1.bf16.msra.mxu0 0
      %687 = vmatprep.subr.bf16.mxu0 0
      %688 = vmatpush1.bf16.msra.mxu0 0
      %689 = vmatprep.subr.bf16.mxu0 0
      %690 = vmatpush1.bf16.msra.mxu0 0
      %691 = vmatprep.mubr.bf16.mxu0 0
      %692 = vmatmul.mubr.bf16.gmra.mrb[0].mxu0 %v550
      %v693 = vpop.f32.mrb[0].mxu0
      %v694 = vadd.f32 0.0, %v693
      %v695 = vpop.f32.mrb[0].mxu0
      %v696 = vadd.f32 0.0, %v695
      %v697 = vpop.f32.mrb[0].mxu0
      %v698 = vpop.f32.mrb[0].mxu0
      %699 = vdwg.mxu0
      %700 = vmatprep.subr.bf16.mxu0 %v575
      %701 = vmatpush1.bf16.msra.mxu0 %v572
      %702 = vmatprep.subr.bf16.mxu0 0
      %703 = vmatpush1.bf16.msra.mxu0 0
      %704 = vmatprep.subr.bf16.mxu0 0
      %705 = vmatpush1.bf16.msra.mxu0 0
      %706 = vmatprep.subr.bf16.mxu0 0
      %707 = vmatpush1.bf16.msra.mxu0 0
      %708 = vmatprep.subr.bf16.mxu0 0
      %709 = vmatpush1.bf16.msra.mxu0 0
      %710 = vmatprep.subr.bf16.mxu0 0
      %711 = vmatpush1.bf16.msra.mxu0 0
      %712 = vmatprep.subr.bf16.mxu0 0
      %713 = vmatpush1.bf16.msra.mxu0 0
      %714 = vmatprep.subr.bf16.mxu0 0
      %715 = vmatpush1.bf16.msra.mxu0 0
      %716 = vmatprep.subr.bf16.mxu0 0
      %717 = vmatpush1.bf16.msra.mxu0 0
      %718 = vmatprep.subr.bf16.mxu0 0
      %719 = vmatpush1.bf16.msra.mxu0 0
      %720 = vmatprep.subr.bf16.mxu0 0
      %721 = vmatpush1.bf16.msra.mxu0 0
      %722 = vmatprep.subr.bf16.mxu0 0
      %723 = vmatpush1.bf16.msra.mxu0 0
      %724 = vmatprep.subr.bf16.mxu0 0
      %725 = vmatpush1.bf16.msra.mxu0 0
      %726 = vmatprep.subr.bf16.mxu0 0
      %727 = vmatpush1.bf16.msra.mxu0 0
      %728 = vmatprep.subr.bf16.mxu0 0
      %729 = vmatpush1.bf16.msra.mxu0 0
      %730 = vmatprep.subr.bf16.mxu0 0
      %731 = vmatpush1.bf16.msra.mxu0 0
      %732 = vmatprep.mubr.bf16.mxu0 0
      %733 = vmatmul.mubr.bf16.gmra.mrb[0].mxu0 %v550
      %v734 = vpop.f32.mrb[0].mxu0
      %v735 = vadd.f32 0.0, %v734
      %v736 = vpop.f32.mrb[0].mxu0
      %v737 = vadd.f32 0.0, %v736
      %v738 = vpop.f32.mrb[0].mxu0
      %v739 = vpop.f32.mrb[0].mxu0
      %740 = vdwg.mxu0
      %v742 = vsel %vm548, %v471, 0
      %v745 = vsel %vm552, %v487, 0
      %v748 = vsel %vm552, %v495, 0
      %v751 = vsel %vm552, %v494, 0
      %v754 = vsel %vm552, %v496, 0
      %v757 = vsel %vm552, %v504, 0
      %v760 = vsel %vm552, %v512, 0
      %v763 = vsel %vm552, %v511, 0
      %v766 = vsel %vm552, %v513, 0
      %768 = vmatprep.subr.bf16.mxu0 %v748
      %769 = vmatpush1.bf16.msra.mxu0 %v745
      %770 = vmatprep.subr.bf16.mxu0 0
      %771 = vmatpush1.bf16.msra.mxu0 0
      %772 = vmatprep.subr.bf16.mxu0 0
      %773 = vmatpush1.bf16.msra.mxu0 0
      %774 = vmatprep.subr.bf16.mxu0 0
      %775 = vmatpush1.bf16.msra.mxu0 0
      %776 = vmatprep.subr.bf16.mxu0 0
      %777 = vmatpush1.bf16.msra.mxu0 0
      %778 = vmatprep.subr.bf16.mxu0 0
      %779 = vmatpush1.bf16.msra.mxu0 0
      %780 = vmatprep.subr.bf16.mxu0 0
      %781 = vmatpush1.bf16.msra.mxu0 0
      %782 = vmatprep.subr.bf16.mxu0 0
      %783 = vmatpush1.bf16.msra.mxu0 0
      %784 = vmatprep.subr.bf16.mxu0 0
      %785 = vmatpush1.bf16.msra.mxu0 0
      %786 = vmatprep.subr.bf16.mxu0 0
      %787 = vmatpush1.bf16.msra.mxu0 0
      %788 = vmatprep.subr.bf16.mxu0 0
      %789 = vmatpush1.bf16.msra.mxu0 0
      %790 = vmatprep.subr.bf16.mxu0 0
      %791 = vmatpush1.bf16.msra.mxu0 0
      %792 = vmatprep.subr.bf16.mxu0 0
      %793 = vmatpush1.bf16.msra.mxu0 0
      %794 = vmatprep.subr.bf16.mxu0 0
      %795 = vmatpush1.bf16.msra.mxu0 0
      %796 = vmatprep.subr.bf16.mxu0 0
      %797 = vmatpush1.bf16.msra.mxu0 0
      %798 = vmatprep.subr.bf16.mxu0 0
      %799 = vmatpush1.bf16.msra.mxu0 0
      %800 = vmatprep.mubr.bf16.mxu0 0
      %801 = vmatmul.mubr.bf16.gmra.mrb[0].mxu0 %v742
      %v802 = vpop.f32.mrb[0].mxu0
      %v803 = vadd.f32 %v612, %v802
      %v804 = vpop.f32.mrb[0].mxu0
      %v805 = vadd.f32 %v614, %v804
      %v806 = vpop.f32.mrb[0].mxu0
      %v807 = vpop.f32.mrb[0].mxu0
      %808 = vdwg.mxu0
      %809 = vmatprep.subr.bf16.mxu0 %v754
      %810 = vmatpush1.bf16.msra.mxu0 %v751
      %811 = vmatprep.subr.bf16.mxu0 0
      %812 = vmatpush1.bf16.msra.mxu0 0
      %813 = vmatprep.subr.bf16.mxu0 0
      %814 = vmatpush1.bf16.msra.mxu0 0
      %815 = vmatprep.subr.bf16.mxu0 0
      %816 = vmatpush1.bf16.msra.mxu0 0
      %817 = vmatprep.subr.bf16.mxu0 0
      %818 = vmatpush1.bf16.msra.mxu0 0
      %819 = vmatprep.subr.bf16.mxu0 0
      %820 = vmatpush1.bf16.msra.mxu0 0
      %821 = vmatprep.subr.bf16.mxu0 0
      %822 = vmatpush1.bf16.msra.mxu0 0
      %823 = vmatprep.subr.bf16.mxu0 0
      %824 = vmatpush1.bf16.msra.mxu0 0
      %825 = vmatprep.subr.bf16.mxu0 0
      %826 = vmatpush1.bf16.msra.mxu0 0
      %827 = vmatprep.subr.bf16.mxu0 0
      %828 = vmatpush1.bf16.msra.mxu0 0
      %829 = vmatprep.subr.bf16.mxu0 0
      %830 = vmatpush1.bf16.msra.mxu0 0
      %831 = vmatprep.subr.bf16.mxu0 0
      %832 = vmatpush1.bf16.msra.mxu0 0
      %833 = vmatprep.subr.bf16.mxu0 0
      %834 = vmatpush1.bf16.msra.mxu0 0
      %835 = vmatprep.subr.bf16.mxu0 0
      %836 = vmatpush1.bf16.msra.mxu0 0
      %837 = vmatprep.subr.bf16.mxu0 0
      %838 = vmatpush1.bf16.msra.mxu0 0
      %839 = vmatprep.subr.bf16.mxu0 0
      %840 = vmatpush1.bf16.msra.mxu0 0
      %841 = vmatprep.mubr.bf16.mxu0 0
      %842 = vmatmul.mubr.bf16.gmra.mrb[0].mxu0 %v742
      %v843 = vpop.f32.mrb[0].mxu0
      %v844 = vadd.f32 %v653, %v843
      %v845 = vpop.f32.mrb[0].mxu0
      %v846 = vadd.f32 %v655, %v845
      %v847 = vpop.f32.mrb[0].mxu0
      %v848 = vpop.f32.mrb[0].mxu0
      %849 = vdwg.mxu0
      %850 = vmatprep.subr.bf16.mxu0 %v760
      %851 = vmatpush1.bf16.msra.mxu0 %v757
      %852 = vmatprep.subr.bf16.mxu0 0
      %853 = vmatpush1.bf16.msra.mxu0 0
      %854 = vmatprep.subr.bf16.mxu0 0
      %855 = vmatpush1.bf16.msra.mxu0 0
      %856 = vmatprep.subr.bf16.mxu0 0
      %857 = vmatpush1.bf16.msra.mxu0 0
      %858 = vmatprep.subr.bf16.mxu0 0
      %859 = vmatpush1.bf16.msra.mxu0 0
      %860 = vmatprep.subr.bf16.mxu0 0
      %861 = vmatpush1.bf16.msra.mxu0 0
      %862 = vmatprep.subr.bf16.mxu0 0
      %863 = vmatpush1.bf16.msra.mxu0 0
      %864 = vmatprep.subr.bf16.mxu0 0
      %865 = vmatpush1.bf16.msra.mxu0 0
      %866 = vmatprep.subr.bf16.mxu0 0
      %867 = vmatpush1.bf16.msra.mxu0 0
      %868 = vmatprep.subr.bf16.mxu0 0
      %869 = vmatpush1.bf16.msra.mxu0 0
      %870 = vmatprep.subr.bf16.mxu0 0
      %871 = vmatpush1.bf16.msra.mxu0 0
      %872 = vmatprep.subr.bf16.mxu0 0
      %873 = vmatpush1.bf16.msra.mxu0 0
      %874 = vmatprep.subr.bf16.mxu0 0
      %875 = vmatpush1.bf16.msra.mxu0 0
      %876 = vmatprep.subr.bf16.mxu0 0
      %877 = vmatpush1.bf16.msra.mxu0 0
      %878 = vmatprep.subr.bf16.mxu0 0
      %879 = vmatpush1.bf16.msra.mxu0 0
      %880 = vmatprep.subr.bf16.mxu0 0
      %881 = vmatpush1.bf16.msra.mxu0 0
      %882 = vmatprep.mubr.bf16.mxu0 0
      %883 = vmatmul.mubr.bf16.gmra.mrb[0].mxu0 %v742
      %v884 = vpop.f32.mrb[0].mxu0
      %v885 = vadd.f32 %v694, %v884
      %v886 = vpop.f32.mrb[0].mxu0
      %v887 = vadd.f32 %v696, %v886
      %v888 = vpop.f32.mrb[0].mxu0
      %v889 = vpop.f32.mrb[0].mxu0
      %890 = vdwg.mxu0
      %891 = vmatprep.subr.bf16.mxu0 %v766
      %892 = vmatpush1.bf16.msra.mxu0 %v763
      %893 = vmatprep.subr.bf16.mxu0 0
      %894 = vmatpush1.bf16.msra.mxu0 0
      %895 = vmatprep.subr.bf16.mxu0 0
      %896 = vmatpush1.bf16.msra.mxu0 0
      %897 = vmatprep.subr.bf16.mxu0 0
      %898 = vmatpush1.bf16.msra.mxu0 0
      %899 = vmatprep.subr.bf16.mxu0 0
      %900 = vmatpush1.bf16.msra.mxu0 0
      %901 = vmatprep.subr.bf16.mxu0 0
      %902 = vmatpush1.bf16.msra.mxu0 0
      %903 = vmatprep.subr.bf16.mxu0 0
      %904 = vmatpush1.bf16.msra.mxu0 0
      %905 = vmatprep.subr.bf16.mxu0 0
      %906 = vmatpush1.bf16.msra.mxu0 0
      %907 = vmatprep.subr.bf16.mxu0 0
      %908 = vmatpush1.bf16.msra.mxu0 0
      %909 = vmatprep.subr.bf16.mxu0 0
      %910 = vmatpush1.bf16.msra.mxu0 0
      %911 = vmatprep.subr.bf16.mxu0 0
      %912 = vmatpush1.bf16.msra.mxu0 0
      %913 = vmatprep.subr.bf16.mxu0 0
      %914 = vmatpush1.bf16.msra.mxu0 0
      %915 = vmatprep.subr.bf16.mxu0 0
      %916 = vmatpush1.bf16.msra.mxu0 0
      %917 = vmatprep.subr.bf16.mxu0 0
      %918 = vmatpush1.bf16.msra.mxu0 0
      %919 = vmatprep.subr.bf16.mxu0 0
      %920 = vmatpush1.bf16.msra.mxu0 0
      %921 = vmatprep.subr.bf16.mxu0 0
      %922 = vmatpush1.bf16.msra.mxu0 0
      %923 = vmatprep.mubr.bf16.mxu0 0
      %924 = vmatmul.mubr.bf16.gmra.mrb[0].mxu0 %v742
      %v925 = vpop.f32.mrb[0].mxu0
      %v926 = vadd.f32 %v735, %v925
      %v927 = vpop.f32.mrb[0].mxu0
      %v928 = vadd.f32 %v737, %v927
      %v929 = vpop.f32.mrb[0].mxu0
      %v930 = vpop.f32.mrb[0].mxu0
      %931 = vdwg.mxu0
      %s932 = scalar_lea.vmem %s0, 8
      %v933 = vld [vmem:[%s932] sm:$0xf]
      %v934 = vld [vmem:[#allocation2] sm:$0xff]
      %v935 = vld [vmem:[#allocation2 + $0x8] sm:$0xff]
      %v936 = vld [vmem:[#allocation2 + $0x10] sm:$0x3]
      %v940 = vcombine.high %v934, %v934
      %v942 = vunpack.c.l.s4 1983009808
      %v943 = vunpack.c.0.s8 %v942
      %v944 = vlaneseq
      %v945 = vshrl.u32 %v944, 7
      %v946 = vsub.s32 %v943, %v945
      %v947 = vrot.slane %v934, %v946
      %v949 = vunpack.c.l.s4 1983009808
      %v950 = vunpack.c.0.s8 %v949
      %v951 = vlaneseq
      %v952 = vshrl.u32 %v951, 7
      %v953 = vsub.s32 %v950, %v952
      %v954 = vrot.slane %v940, %v953
      %v955 = vcombine.high %v947, %v947
      %v956 = vcombine.high %v954, %v954
      %v957 = vcombine.high %v935, %v935
      %v959 = vunpack.c.l.s4 1983009808
      %v960 = vunpack.c.0.s8 %v959
      %v961 = vlaneseq
      %v962 = vshrl.u32 %v961, 7
      %v963 = vsub.s32 %v960, %v962
      %v964 = vrot.slane %v935, %v963
      %v966 = vunpack.c.l.s4 1983009808
      %v967 = vunpack.c.0.s8 %v966
      %v968 = vlaneseq
      %v969 = vshrl.u32 %v968, 7
      %v970 = vsub.s32 %v967, %v969
      %v971 = vrot.slane %v957, %v970
      %v972 = vcombine.high %v964, %v964
      %v973 = vcombine.high %v971, %v971
      %v975 = vunpack.c.l.s4 1983009808
      %v976 = vunpack.c.0.s8 %v975
      %v977 = vlaneseq
      %v978 = vshrl.u32 %v977, 7
      %v979 = vsub.s32 %v976, %v978
      %v980 = vrot.slane %v936, %v979
      %981 = vrot.lane.b32.xlu0 %v947, 126
      %v982 = vpop.permute.xlu0 %981
      %983 = vrot.lane.b32.xlu0 %v955, 126
      %v984 = vpop.permute.xlu0 %983
      %985 = vrot.lane.b32.xlu0 %v954, 126
      %v986 = vpop.permute.xlu0 %985
      %987 = vrot.lane.b32.xlu0 %v956, 126
      %v988 = vpop.permute.xlu0 %987
      %989 = vrot.lane.b32.xlu0 %v964, 126
      %v990 = vpop.permute.xlu0 %989
      %991 = vrot.lane.b32.xlu0 %v972, 126
      %v992 = vpop.permute.xlu0 %991
      %993 = vrot.lane.b32.xlu0 %v971, 126
      %v994 = vpop.permute.xlu0 %993
      %995 = vrot.lane.b32.xlu0 %v973, 126
      %v996 = vpop.permute.xlu0 %995
      %997 = vrot.lane.b32.xlu0 %v980, 126
      %v998 = vpop.permute.xlu0 %997
      %vm999 = vcmask 1031168
      %v1000 = vsel %vm999, %v982, %v984
      %v1001 = vsel %vm999, %v984, %v986
      %v1002 = vsel %vm999, %v986, %v988
      %v1003 = vsel %vm999, %v988, %v990
      %v1004 = vsel %vm999, %v990, %v992
      %v1005 = vsel %vm999, %v992, %v994
      %v1006 = vsel %vm999, %v994, %v996
      %v1007 = vsel %vm999, %v996, %v998
      %v1009 = vsel %vm548, %v933, 0
      %v1012 = vsel %vm552, %v1000, 0
      %v1015 = vsel %vm552, %v1001, 0
      %v1018 = vsel %vm552, %v1002, 0
      %v1021 = vsel %vm552, %v1003, 0
      %v1024 = vsel %vm552, %v1004, 0
      %v1027 = vsel %vm552, %v1005, 0
      %v1030 = vsel %vm552, %v1006, 0
      %v1033 = vsel %vm552, %v1007, 0
      %1035 = vmatprep.subr.bf16.mxu0 %v1015
      %1036 = vmatpush1.bf16.msra.mxu0 %v1012
      %1037 = vmatprep.subr.bf16.mxu0 0
      %1038 = vmatpush1.bf16.msra.mxu0 0
      %1039 = vmatprep.subr.bf16.mxu0 0
      %1040 = vmatpush1.bf16.msra.mxu0 0
      %1041 = vmatprep.subr.bf16.mxu0 0
      %1042 = vmatpush1.bf16.msra.mxu0 0
      %1043 = vmatprep.subr.bf16.mxu0 0
      %1044 = vmatpush1.bf16.msra.mxu0 0
      %1045 = vmatprep.subr.bf16.mxu0 0
      %1046 = vmatpush1.bf16.msra.mxu0 0
      %1047 = vmatprep.subr.bf16.mxu0 0
      %1048 = vmatpush1.bf16.msra.mxu0 0
      %1049 = vmatprep.subr.bf16.mxu0 0
      %1050 = vmatpush1.bf16.msra.mxu0 0
      %1051 = vmatprep.subr.bf16.mxu0 0
      %1052 = vmatpush1.bf16.msra.mxu0 0
      %1053 = vmatprep.subr.bf16.mxu0 0
      %1054 = vmatpush1.bf16.msra.mxu0 0
      %1055 = vmatprep.subr.bf16.mxu0 0
      %1056 = vmatpush1.bf16.msra.mxu0 0
      %1057 = vmatprep.subr.bf16.mxu0 0
      %1058 = vmatpush1.bf16.msra.mxu0 0
      %1059 = vmatprep.subr.bf16.mxu0 0
      %1060 = vmatpush1.bf16.msra.mxu0 0
      %1061 = vmatprep.subr.bf16.mxu0 0
      %1062 = vmatpush1.bf16.msra.mxu0 0
      %1063 = vmatprep.subr.bf16.mxu0 0
      %1064 = vmatpush1.bf16.msra.mxu0 0
      %1065 = vmatprep.subr.bf16.mxu0 0
      %1066 = vmatpush1.bf16.msra.mxu0 0
      %1067 = vmatprep.mubr.bf16.mxu0 0
      %1068 = vmatmul.mubr.bf16.gmra.mrb[0].mxu0 %v1009
      %v1069 = vpop.f32.mrb[0].mxu0
      %v1070 = vadd.f32 0.0, %v1069
      %v1071 = vpop.f32.mrb[0].mxu0
      %v1072 = vadd.f32 0.0, %v1071
      %v1073 = vpop.f32.mrb[0].mxu0
      %v1074 = vpop.f32.mrb[0].mxu0
      %1075 = vdwg.mxu0
      %1076 = vmatprep.subr.bf16.mxu0 %v1021
      %1077 = vmatpush1.bf16.msra.mxu0 %v1018
      %1078 = vmatprep.subr.bf16.mxu0 0
      %1079 = vmatpush1.bf16.msra.mxu0 0
      %1080 = vmatprep.subr.bf16.mxu0 0
      %1081 = vmatpush1.bf16.msra.mxu0 0
      %1082 = vmatprep.subr.bf16.mxu0 0
      %1083 = vmatpush1.bf16.msra.mxu0 0
      %1084 = vmatprep.subr.bf16.mxu0 0
      %1085 = vmatpush1.bf16.msra.mxu0 0
      %1086 = vmatprep.subr.bf16.mxu0 0
      %1087 = vmatpush1.bf16.msra.mxu0 0
      %1088 = vmatprep.subr.bf16.mxu0 0
      %1089 = vmatpush1.bf16.msra.mxu0 0
      %1090 = vmatprep.subr.bf16.mxu0 0
      %1091 = vmatpush1.bf16.msra.mxu0 0
      %1092 = vmatprep.subr.bf16.mxu0 0
      %1093 = vmatpush1.bf16.msra.mxu0 0
      %1094 = vmatprep.subr.bf16.mxu0 0
      %1095 = vmatpush1.bf16.msra.mxu0 0
      %1096 = vmatprep.subr.bf16.mxu0 0
      %1097 = vmatpush1.bf16.msra.mxu0 0
      %1098 = vmatprep.subr.bf16.mxu0 0
      %1099 = vmatpush1.bf16.msra.mxu0 0
      %1100 = vmatprep.subr.bf16.mxu0 0
      %1101 = vmatpush1.bf16.msra.mxu0 0
      %1102 = vmatprep.subr.bf16.mxu0 0
      %1103 = vmatpush1.bf16.msra.mxu0 0
      %1104 = vmatprep.subr.bf16.mxu0 0
      %1105 = vmatpush1.bf16.msra.mxu0 0
      %1106 = vmatprep.subr.bf16.mxu0 0
      %1107 = vmatpush1.bf16.msra.mxu0 0
      %1108 = vmatprep.mubr.bf16.mxu0 0
      %1109 = vmatmul.mubr.bf16.gmra.mrb[0].mxu0 %v1009
      %v1110 = vpop.f32.mrb[0].mxu0
      %v1111 = vadd.f32 0.0, %v1110
      %v1112 = vpop.f32.mrb[0].mxu0
      %v1113 = vadd.f32 0.0, %v1112
      %v1114 = vpop.f32.mrb[0].mxu0
      %v1115 = vpop.f32.mrb[0].mxu0
      %1116 = vdwg.mxu0
      %1117 = vmatprep.subr.bf16.mxu0 %v1027
      %1118 = vmatpush1.bf16.msra.mxu0 %v1024
      %1119 = vmatprep.subr.bf16.mxu0 0
      %1120 = vmatpush1.bf16.msra.mxu0 0
      %1121 = vmatprep.subr.bf16.mxu0 0
      %1122 = vmatpush1.bf16.msra.mxu0 0
      %1123 = vmatprep.subr.bf16.mxu0 0
      %1124 = vmatpush1.bf16.msra.mxu0 0
      %1125 = vmatprep.subr.bf16.mxu0 0
      %1126 = vmatpush1.bf16.msra.mxu0 0
      %1127 = vmatprep.subr.bf16.mxu0 0
      %1128 = vmatpush1.bf16.msra.mxu0 0
      %1129 = vmatprep.subr.bf16.mxu0 0
      %1130 = vmatpush1.bf16.msra.mxu0 0
      %1131 = vmatprep.subr.bf16.mxu0 0
      %1132 = vmatpush1.bf16.msra.mxu0 0
      %1133 = vmatprep.subr.bf16.mxu0 0
      %1134 = vmatpush1.bf16.msra.mxu0 0
      %1135 = vmatprep.subr.bf16.mxu0 0
      %1136 = vmatpush1.bf16.msra.mxu0 0
      %1137 = vmatprep.subr.bf16.mxu0 0
      %1138 = vmatpush1.bf16.msra.mxu0 0
      %1139 = vmatprep.subr.bf16.mxu0 0
      %1140 = vmatpush1.bf16.msra.mxu0 0
      %1141 = vmatprep.subr.bf16.mxu0 0
      %1142 = vmatpush1.bf16.msra.mxu0 0
      %1143 = vmatprep.subr.bf16.mxu0 0
      %1144 = vmatpush1.bf16.msra.mxu0 0
      %1145 = vmatprep.subr.bf16.mxu0 0
      %1146 = vmatpush1.bf16.msra.mxu0 0
      %1147 = vmatprep.subr.bf16.mxu0 0
      %1148 = vmatpush1.bf16.msra.mxu0 0
      %1149 = vmatprep.mubr.bf16.mxu0 0
      %1150 = vmatmul.mubr.bf16.gmra.mrb[0].mxu0 %v1009
      %v1151 = vpop.f32.mrb[0].mxu0
      %v1152 = vadd.f32 0.0, %v1151
      %v1153 = vpop.f32.mrb[0].mxu0
      %v1154 = vadd.f32 0.0, %v1153
      %v1155 = vpop.f32.mrb[0].mxu0
      %v1156 = vpop.f32.mrb[0].mxu0
      %1157 = vdwg.mxu0
      %1158 = vmatprep.subr.bf16.mxu0 %v1033
      %1159 = vmatpush1.bf16.msra.mxu0 %v1030
      %1160 = vmatprep.subr.bf16.mxu0 0
      %1161 = vmatpush1.bf16.msra.mxu0 0
      %1162 = vmatprep.subr.bf16.mxu0 0
      %1163 = vmatpush1.bf16.msra.mxu0 0
      %1164 = vmatprep.subr.bf16.mxu0 0
      %1165 = vmatpush1.bf16.msra.mxu0 0
      %1166 = vmatprep.subr.bf16.mxu0 0
      %1167 = vmatpush1.bf16.msra.mxu0 0
      %1168 = vmatprep.subr.bf16.mxu0 0
      %1169 = vmatpush1.bf16.msra.mxu0 0
      %1170 = vmatprep.subr.bf16.mxu0 0
      %1171 = vmatpush1.bf16.msra.mxu0 0
      %1172 = vmatprep.subr.bf16.mxu0 0
      %1173 = vmatpush1.bf16.msra.mxu0 0
      %1174 = vmatprep.subr.bf16.mxu0 0
      %1175 = vmatpush1.bf16.msra.mxu0 0
      %1176 = vmatprep.subr.bf16.mxu0 0
      %1177 = vmatpush1.bf16.msra.mxu0 0
      %1178 = vmatprep.subr.bf16.mxu0 0
      %1179 = vmatpush1.bf16.msra.mxu0 0
      %1180 = vmatprep.subr.bf16.mxu0 0
      %1181 = vmatpush1.bf16.msra.mxu0 0
      %1182 = vmatprep.subr.bf16.mxu0 0
      %1183 = vmatpush1.bf16.msra.mxu0 0
      %1184 = vmatprep.subr.bf16.mxu0 0
      %1185 = vmatpush1.bf16.msra.mxu0 0
      %1186 = vmatprep.subr.bf16.mxu0 0
      %1187 = vmatpush1.bf16.msra.mxu0 0
      %1188 = vmatprep.subr.bf16.mxu0 0
      %1189 = vmatpush1.bf16.msra.mxu0 0
      %1190 = vmatprep.mubr.bf16.mxu0 0
      %1191 = vmatmul.mubr.bf16.gmra.mrb[0].mxu0 %v1009
      %v1192 = vpop.f32.mrb[0].mxu0
      %v1193 = vadd.f32 0.0, %v1192
      %v1194 = vpop.f32.mrb[0].mxu0
      %v1195 = vadd.f32 0.0, %v1194
      %v1196 = vpop.f32.mrb[0].mxu0
      %v1197 = vpop.f32.mrb[0].mxu0
      %1198 = vdwg.mxu0
      %v1199 = vadd.f32 %v803, %v1070
      %v1200 = vadd.f32 %v805, %v1072
      %v1201 = vadd.f32 %v844, %v1111
      %v1202 = vadd.f32 %v846, %v1113
      %v1203 = vadd.f32 %v885, %v1152
      %v1204 = vadd.f32 %v887, %v1154
      %v1205 = vadd.f32 %v926, %v1193
      %v1206 = vadd.f32 %v928, %v1195
      %s1207 = scalar_lea.vmem %s0, 12
      %v1208 = vld [vmem:[%s1207] sm:$0xf]
      %v1209 = vld [vmem:[#allocation2] sm:$0xff]
      %v1210 = vld [vmem:[#allocation2 + $0x8] sm:$0xff]
      %v1211 = vld [vmem:[#allocation2 + $0x10] sm:$0x3]
      %v1215 = vcombine.high %v1209, %v1209
      %v1217 = vunpack.c.l.s4 1983009808
      %v1218 = vunpack.c.0.s8 %v1217
      %v1219 = vlaneseq
      %v1220 = vshrl.u32 %v1219, 7
      %v1221 = vsub.s32 %v1218, %v1220
      %v1222 = vrot.slane %v1209, %v1221
      %v1224 = vunpack.c.l.s4 1983009808
      %v1225 = vunpack.c.0.s8 %v1224
      %v1226 = vlaneseq
      %v1227 = vshrl.u32 %v1226, 7
      %v1228 = vsub.s32 %v1225, %v1227
      %v1229 = vrot.slane %v1215, %v1228
      %v1230 = vcombine.high %v1222, %v1222
      %v1231 = vcombine.high %v1229, %v1229
      %v1232 = vcombine.high %v1210, %v1210
      %v1234 = vunpack.c.l.s4 1983009808
      %v1235 = vunpack.c.0.s8 %v1234
      %v1236 = vlaneseq
      %v1237 = vshrl.u32 %v1236, 7
      %v1238 = vsub.s32 %v1235, %v1237
      %v1239 = vrot.slane %v1210, %v1238
      %v1241 = vunpack.c.l.s4 1983009808
      %v1242 = vunpack.c.0.s8 %v1241
      %v1243 = vlaneseq
      %v1244 = vshrl.u32 %v1243, 7
      %v1245 = vsub.s32 %v1242, %v1244
      %v1246 = vrot.slane %v1232, %v1245
      %v1247 = vcombine.high %v1239, %v1239
      %v1248 = vcombine.high %v1246, %v1246
      %v1250 = vunpack.c.l.s4 1983009808
      %v1251 = vunpack.c.0.s8 %v1250
      %v1252 = vlaneseq
      %v1253 = vshrl.u32 %v1252, 7
      %v1254 = vsub.s32 %v1251, %v1253
      %v1255 = vrot.slane %v1211, %v1254
      %1256 = vrot.lane.b32.xlu0 %v1222, 118
      %v1257 = vpop.permute.xlu0 %1256
      %1258 = vrot.lane.b32.xlu0 %v1230, 118
      %v1259 = vpop.permute.xlu0 %1258
      %1260 = vrot.lane.b32.xlu0 %v1229, 118
      %v1261 = vpop.permute.xlu0 %1260
      %1262 = vrot.lane.b32.xlu0 %v1231, 118
      %v1263 = vpop.permute.xlu0 %1262
      %1264 = vrot.lane.b32.xlu0 %v1239, 118
      %v1265 = vpop.permute.xlu0 %1264
      %1266 = vrot.lane.b32.xlu0 %v1247, 118
      %v1267 = vpop.permute.xlu0 %1266
      %1268 = vrot.lane.b32.xlu0 %v1246, 118
      %v1269 = vpop.permute.xlu0 %1268
      %1270 = vrot.lane.b32.xlu0 %v1248, 118
      %v1271 = vpop.permute.xlu0 %1270
      %1272 = vrot.lane.b32.xlu0 %v1255, 118
      %v1273 = vpop.permute.xlu0 %1272
      %vm1274 = vcmask 965632
      %v1275 = vsel %vm1274, %v1257, %v1259
      %v1276 = vsel %vm1274, %v1259, %v1261
      %v1277 = vsel %vm1274, %v1261, %v1263
      %v1278 = vsel %vm1274, %v1263, %v1265
      %v1279 = vsel %vm1274, %v1265, %v1267
      %v1280 = vsel %vm1274, %v1267, %v1269
      %v1281 = vsel %vm1274, %v1269, %v1271
      %v1282 = vsel %vm1274, %v1271, %v1273
      %v1284 = vsel %vm548, %v1208, 0
      %v1287 = vsel %vm552, %v1275, 0
      %v1290 = vsel %vm552, %v1276, 0
      %v1293 = vsel %vm552, %v1277, 0
      %v1296 = vsel %vm552, %v1278, 0
      %v1299 = vsel %vm552, %v1279, 0
      %v1302 = vsel %vm552, %v1280, 0
      %v1305 = vsel %vm552, %v1281, 0
      %v1308 = vsel %vm552, %v1282, 0
      %1310 = vmatprep.subr.bf16.mxu0 %v1290
      %1311 = vmatpush1.bf16.msra.mxu0 %v1287
      %1312 = vmatprep.subr.bf16.mxu0 0
      %1313 = vmatpush1.bf16.msra.mxu0 0
      %1314 = vmatprep.subr.bf16.mxu0 0
      %1315 = vmatpush1.bf16.msra.mxu0 0
      %1316 = vmatprep.subr.bf16.mxu0 0
      %1317 = vmatpush1.bf16.msra.mxu0 0
      %1318 = vmatprep.subr.bf16.mxu0 0
      %1319 = vmatpush1.bf16.msra.mxu0 0
      %1320 = vmatprep.subr.bf16.mxu0 0
      %1321 = vmatpush1.bf16.msra.mxu0 0
      %1322 = vmatprep.subr.bf16.mxu0 0
      %1323 = vmatpush1.bf16.msra.mxu0 0
      %1324 = vmatprep.subr.bf16.mxu0 0
      %1325 = vmatpush1.bf16.msra.mxu0 0
      %1326 = vmatprep.subr.bf16.mxu0 0
      %1327 = vmatpush1.bf16.msra.mxu0 0
      %1328 = vmatprep.subr.bf16.mxu0 0
      %1329 = vmatpush1.bf16.msra.mxu0 0
      %1330 = vmatprep.subr.bf16.mxu0 0
      %1331 = vmatpush1.bf16.msra.mxu0 0
      %1332 = vmatprep.subr.bf16.mxu0 0
      %1333 = vmatpush1.bf16.msra.mxu0 0
      %1334 = vmatprep.subr.bf16.mxu0 0
      %1335 = vmatpush1.bf16.msra.mxu0 0
      %1336 = vmatprep.subr.bf16.mxu0 0
      %1337 = vmatpush1.bf16.msra.mxu0 0
      %1338 = vmatprep.subr.bf16.mxu0 0
      %1339 = vmatpush1.bf16.msra.mxu0 0
      %1340 = vmatprep.subr.bf16.mxu0 0
      %1341 = vmatpush1.bf16.msra.mxu0 0
      %1342 = vmatprep.mubr.bf16.mxu0 0
      %1343 = vmatmul.mubr.bf16.gmra.mrb[0].mxu0 %v1284
      %v1344 = vpop.f32.mrb[0].mxu0
      %v1345 = vadd.f32 0.0, %v1344
      %v1346 = vpop.f32.mrb[0].mxu0
      %v1347 = vadd.f32 0.0, %v1346
      %v1348 = vpop.f32.mrb[0].mxu0
      %v1349 = vpop.f32.mrb[0].mxu0
      %1350 = vdwg.mxu0
      %1351 = vmatprep.subr.bf16.mxu0 %v1296
      %1352 = vmatpush1.bf16.msra.mxu0 %v1293
      %1353 = vmatprep.subr.bf16.mxu0 0
      %1354 = vmatpush1.bf16.msra.mxu0 0
      %1355 = vmatprep.subr.bf16.mxu0 0
      %1356 = vmatpush1.bf16.msra.mxu0 0
      %1357 = vmatprep.subr.bf16.mxu0 0
      %1358 = vmatpush1.bf16.msra.mxu0 0
      %1359 = vmatprep.subr.bf16.mxu0 0
      %1360 = vmatpush1.bf16.msra.mxu0 0
      %1361 = vmatprep.subr.bf16.mxu0 0
      %1362 = vmatpush1.bf16.msra.mxu0 0
      %1363 = vmatprep.subr.bf16.mxu0 0
      %1364 = vmatpush1.bf16.msra.mxu0 0
      %1365 = vmatprep.subr.bf16.mxu0 0
      %1366 = vmatpush1.bf16.msra.mxu0 0
      %1367 = vmatprep.subr.bf16.mxu0 0
      %1368 = vmatpush1.bf16.msra.mxu0 0
      %1369 = vmatprep.subr.bf16.mxu0 0
      %1370 = vmatpush1.bf16.msra.mxu0 0
      %1371 = vmatprep.subr.bf16.mxu0 0
      %1372 = vmatpush1.bf16.msra.mxu0 0
      %1373 = vmatprep.subr.bf16.mxu0 0
      %1374 = vmatpush1.bf16.msra.mxu0 0
      %1375 = vmatprep.subr.bf16.mxu0 0
      %1376 = vmatpush1.bf16.msra.mxu0 0
      %1377 = vmatprep.subr.bf16.mxu0 0
      %1378 = vmatpush1.bf16.msra.mxu0 0
      %1379 = vmatprep.subr.bf16.mxu0 0
      %1380 = vmatpush1.bf16.msra.mxu0 0
      %1381 = vmatprep.subr.bf16.mxu0 0
      %1382 = vmatpush1.bf16.msra.mxu0 0
      %1383 = vmatprep.mubr.bf16.mxu0 0
      %1384 = vmatmul.mubr.bf16.gmra.mrb[0].mxu0 %v1284
      %v1385 = vpop.f32.mrb[0].mxu0
      %v1386 = vadd.f32 0.0, %v1385
      %v1387 = vpop.f32.mrb[0].mxu0
      %v1388 = vadd.f32 0.0, %v1387
      %v1389 = vpop.f32.mrb[0].mxu0
      %v1390 = vpop.f32.mrb[0].mxu0
      %1391 = vdwg.mxu0
      %1392 = vmatprep.subr.bf16.mxu0 %v1302
      %1393 = vmatpush1.bf16.msra.mxu0 %v1299
      %1394 = vmatprep.subr.bf16.mxu0 0
      %1395 = vmatpush1.bf16.msra.mxu0 0
      %1396 = vmatprep.subr.bf16.mxu0 0
      %1397 = vmatpush1.bf16.msra.mxu0 0
      %1398 = vmatprep.subr.bf16.mxu0 0
      %1399 = vmatpush1.bf16.msra.mxu0 0
      %1400 = vmatprep.subr.bf16.mxu0 0
      %1401 = vmatpush1.bf16.msra.mxu0 0
      %1402 = vmatprep.subr.bf16.mxu0 0
      %1403 = vmatpush1.bf16.msra.mxu0 0
      %1404 = vmatprep.subr.bf16.mxu0 0
      %1405 = vmatpush1.bf16.msra.mxu0 0
      %1406 = vmatprep.subr.bf16.mxu0 0
      %1407 = vmatpush1.bf16.msra.mxu0 0
      %1408 = vmatprep.subr.bf16.mxu0 0
      %1409 = vmatpush1.bf16.msra.mxu0 0
      %1410 = vmatprep.subr.bf16.mxu0 0
      %1411 = vmatpush1.bf16.msra.mxu0 0
      %1412 = vmatprep.subr.bf16.mxu0 0
      %1413 = vmatpush1.bf16.msra.mxu0 0
      %1414 = vmatprep.subr.bf16.mxu0 0
      %1415 = vmatpush1.bf16.msra.mxu0 0
      %1416 = vmatprep.subr.bf16.mxu0 0
      %1417 = vmatpush1.bf16.msra.mxu0 0
      %1418 = vmatprep.subr.bf16.mxu0 0
      %1419 = vmatpush1.bf16.msra.mxu0 0
      %1420 = vmatprep.subr.bf16.mxu0 0
      %1421 = vmatpush1.bf16.msra.mxu0 0
      %1422 = vmatprep.subr.bf16.mxu0 0
      %1423 = vmatpush1.bf16.msra.mxu0 0
      %1424 = vmatprep.mubr.bf16.mxu0 0
      %1425 = vmatmul.mubr.bf16.gmra.mrb[0].mxu0 %v1284
      %v1426 = vpop.f32.mrb[0].mxu0
      %v1427 = vadd.f32 0.0, %v1426
      %v1428 = vpop.f32.mrb[0].mxu0
      %v1429 = vadd.f32 0.0, %v1428
      %v1430 = vpop.f32.mrb[0].mxu0
      %v1431 = vpop.f32.mrb[0].mxu0
      %1432 = vdwg.mxu0
      %1433 = vmatprep.subr.bf16.mxu0 %v1308
      %1434 = vmatpush1.bf16.msra.mxu0 %v1305
      %1435 = vmatprep.subr.bf16.mxu0 0
      %1436 = vmatpush1.bf16.msra.mxu0 0
      %1437 = vmatprep.subr.bf16.mxu0 0
      %1438 = vmatpush1.bf16.msra.mxu0 0
      %1439 = vmatprep.subr.bf16.mxu0 0
      %1440 = vmatpush1.bf16.msra.mxu0 0
      %1441 = vmatprep.subr.bf16.mxu0 0
      %1442 = vmatpush1.bf16.msra.mxu0 0
      %1443 = vmatprep.subr.bf16.mxu0 0
      %1444 = vmatpush1.bf16.msra.mxu0 0
      %1445 = vmatprep.subr.bf16.mxu0 0
      %1446 = vmatpush1.bf16.msra.mxu0 0
      %1447 = vmatprep.subr.bf16.mxu0 0
      %1448 = vmatpush1.bf16.msra.mxu0 0
      %1449 = vmatprep.subr.bf16.mxu0 0
      %1450 = vmatpush1.bf16.msra.mxu0 0
      %1451 = vmatprep.subr.bf16.mxu0 0
      %1452 = vmatpush1.bf16.msra.mxu0 0
      %1453 = vmatprep.subr.bf16.mxu0 0
      %1454 = vmatpush1.bf16.msra.mxu0 0
      %1455 = vmatprep.subr.bf16.mxu0 0
      %1456 = vmatpush1.bf16.msra.mxu0 0
      %1457 = vmatprep.subr.bf16.mxu0 0
      %1458 = vmatpush1.bf16.msra.mxu0 0
      %1459 = vmatprep.subr.bf16.mxu0 0
      %1460 = vmatpush1.bf16.msra.mxu0 0
      %1461 = vmatprep.subr.bf16.mxu0 0
      %1462 = vmatpush1.bf16.msra.mxu0 0
      %1463 = vmatprep.subr.bf16.mxu0 0
      %1464 = vmatpush1.bf16.msra.mxu0 0
      %1465 = vmatprep.mubr.bf16.mxu0 0
      %1466 = vmatmul.mubr.bf16.gmra.mrb[0].mxu0 %v1284
      %v1467 = vpop.f32.mrb[0].mxu0
      %v1468 = vadd.f32 0.0, %v1467
      %v1469 = vpop.f32.mrb[0].mxu0
      %v1470 = vadd.f32 0.0, %v1469
      %v1471 = vpop.f32.mrb[0].mxu0
      %v1472 = vpop.f32.mrb[0].mxu0
      %1473 = vdwg.mxu0
      %v1474 = vadd.f32 %v1199, %v1345
      %v1475 = vadd.f32 %v1200, %v1347
      %v1476 = vadd.f32 %v1201, %v1386
      %v1477 = vadd.f32 %v1202, %v1388
      %v1478 = vadd.f32 %v1203, %v1427
      %v1479 = vadd.f32 %v1204, %v1429
      %v1480 = vadd.f32 %v1205, %v1468
      %v1481 = vadd.f32 %v1206, %v1470
      %s1482 = scalar_lea.vmem %s0, 16
      %v1483 = vld [vmem:[%s1482] sm:$0xf]
      %v1484 = vld [vmem:[#allocation2] sm:$0xff]
      %v1485 = vld [vmem:[#allocation2 + $0x8] sm:$0xff]
      %v1486 = vld [vmem:[#allocation2 + $0x10] sm:$0x3]
      %v1490 = vcombine.high %v1484, %v1484
      %v1492 = vunpack.c.l.s4 1983009808
      %v1493 = vunpack.c.0.s8 %v1492
      %v1494 = vlaneseq
      %v1495 = vshrl.u32 %v1494, 7
      %v1496 = vsub.s32 %v1493, %v1495
      %v1497 = vrot.slane %v1484, %v1496
      %v1499 = vunpack.c.l.s4 1983009808
      %v1500 = vunpack.c.0.s8 %v1499
      %v1501 = vlaneseq
      %v1502 = vshrl.u32 %v1501, 7
      %v1503 = vsub.s32 %v1500, %v1502
      %v1504 = vrot.slane %v1490, %v1503
      %v1505 = vcombine.high %v1497, %v1497
      %v1506 = vcombine.high %v1504, %v1504
      %v1507 = vcombine.high %v1485, %v1485
      %v1509 = vunpack.c.l.s4 1983009808
      %v1510 = vunpack.c.0.s8 %v1509
      %v1511 = vlaneseq
      %v1512 = vshrl.u32 %v1511, 7
      %v1513 = vsub.s32 %v1510, %v1512
      %v1514 = vrot.slane %v1485, %v1513
      %v1516 = vunpack.c.l.s4 1983009808
      %v1517 = vunpack.c.0.s8 %v1516
      %v1518 = vlaneseq
      %v1519 = vshrl.u32 %v1518, 7
      %v1520 = vsub.s32 %v1517, %v1519
      %v1521 = vrot.slane %v1507, %v1520
      %v1522 = vcombine.high %v1514, %v1514
      %v1523 = vcombine.high %v1521, %v1521
      %v1525 = vunpack.c.l.s4 1983009808
      %v1526 = vunpack.c.0.s8 %v1525
      %v1527 = vlaneseq
      %v1528 = vshrl.u32 %v1527, 7
      %v1529 = vsub.s32 %v1526, %v1528
      %v1530 = vrot.slane %v1486, %v1529
      %1531 = vrot.lane.b32.xlu0 %v1497, 117
      %v1532 = vpop.permute.xlu0 %1531
      %1533 = vrot.lane.b32.xlu0 %v1505, 117
      %v1534 = vpop.permute.xlu0 %1533
      %1535 = vrot.lane.b32.xlu0 %v1504, 117
      %v1536 = vpop.permute.xlu0 %1535
      %1537 = vrot.lane.b32.xlu0 %v1506, 117
      %v1538 = vpop.permute.xlu0 %1537
      %1539 = vrot.lane.b32.xlu0 %v1514, 117
      %v1540 = vpop.permute.xlu0 %1539
      %1541 = vrot.lane.b32.xlu0 %v1522, 117
      %v1542 = vpop.permute.xlu0 %1541
      %1543 = vrot.lane.b32.xlu0 %v1521, 117
      %v1544 = vpop.permute.xlu0 %1543
      %1545 = vrot.lane.b32.xlu0 %v1523, 117
      %v1546 = vpop.permute.xlu0 %1545
      %1547 = vrot.lane.b32.xlu0 %v1530, 117
      %v1548 = vpop.permute.xlu0 %1547
      %vm1549 = vcmask 957440
      %v1550 = vsel %vm1549, %v1532, %v1534
      %v1551 = vsel %vm1549, %v1534, %v1536
      %v1552 = vsel %vm1549, %v1536, %v1538
      %v1553 = vsel %vm1549, %v1538, %v1540
      %v1554 = vsel %vm1549, %v1540, %v1542
      %v1555 = vsel %vm1549, %v1542, %v1544
      %v1556 = vsel %vm1549, %v1544, %v1546
      %v1557 = vsel %vm1549, %v1546, %v1548
      %v1559 = vsel %vm548, %v1483, 0
      %v1562 = vsel %vm552, %v1550, 0
      %v1565 = vsel %vm552, %v1551, 0
      %v1568 = vsel %vm552, %v1552, 0
      %v1571 = vsel %vm552, %v1553, 0
      %v1574 = vsel %vm552, %v1554, 0
      %v1577 = vsel %vm552, %v1555, 0
      %v1580 = vsel %vm552, %v1556, 0
      %v1583 = vsel %vm552, %v1557, 0
      %1585 = vmatprep.subr.bf16.mxu0 %v1565
      %1586 = vmatpush1.bf16.msra.mxu0 %v1562
      %1587 = vmatprep.subr.bf16.mxu0 0
      %1588 = vmatpush1.bf16.msra.mxu0 0
      %1589 = vmatprep.subr.bf16.mxu0 0
      %1590 = vmatpush1.bf16.msra.mxu0 0
      %1591 = vmatprep.subr.bf16.mxu0 0
      %1592 = vmatpush1.bf16.msra.mxu0 0
      %1593 = vmatprep.subr.bf16.mxu0 0
      %1594 = vmatpush1.bf16.msra.mxu0 0
      %1595 = vmatprep.subr.bf16.mxu0 0
      %1596 = vmatpush1.bf16.msra.mxu0 0
      %1597 = vmatprep.subr.bf16.mxu0 0
      %1598 = vmatpush1.bf16.msra.mxu0 0
      %1599 = vmatprep.subr.bf16.mxu0 0
      %1600 = vmatpush1.bf16.msra.mxu0 0
      %1601 = vmatprep.subr.bf16.mxu0 0
      %1602 = vmatpush1.bf16.msra.mxu0 0
      %1603 = vmatprep.subr.bf16.mxu0 0
      %1604 = vmatpush1.bf16.msra.mxu0 0
      %1605 = vmatprep.subr.bf16.mxu0 0
      %1606 = vmatpush1.bf16.msra.mxu0 0
      %1607 = vmatprep.subr.bf16.mxu0 0
      %1608 = vmatpush1.bf16.msra.mxu0 0
      %1609 = vmatprep.subr.bf16.mxu0 0
      %1610 = vmatpush1.bf16.msra.mxu0 0
      %1611 = vmatprep.subr.bf16.mxu0 0
      %1612 = vmatpush1.bf16.msra.mxu0 0
      %1613 = vmatprep.subr.bf16.mxu0 0
      %1614 = vmatpush1.bf16.msra.mxu0 0
      %1615 = vmatprep.subr.bf16.mxu0 0
      %1616 = vmatpush1.bf16.msra.mxu0 0
      %1617 = vmatprep.mubr.bf16.mxu0 0
      %1618 = vmatmul.mubr.bf16.gmra.mrb[0].mxu0 %v1559
      %v1619 = vpop.f32.mrb[0].mxu0
      %v1620 = vadd.f32 0.0, %v1619
      %v1621 = vpop.f32.mrb[0].mxu0
      %v1622 = vadd.f32 0.0, %v1621
      %v1623 = vpop.f32.mrb[0].mxu0
      %v1624 = vpop.f32.mrb[0].mxu0
      %1625 = vdwg.mxu0
      %1626 = vmatprep.subr.bf16.mxu0 %v1571
      %1627 = vmatpush1.bf16.msra.mxu0 %v1568
      %1628 = vmatprep.subr.bf16.mxu0 0
      %1629 = vmatpush1.bf16.msra.mxu0 0
      %1630 = vmatprep.subr.bf16.mxu0 0
      %1631 = vmatpush1.bf16.msra.mxu0 0
      %1632 = vmatprep.subr.bf16.mxu0 0
      %1633 = vmatpush1.bf16.msra.mxu0 0
      %1634 = vmatprep.subr.bf16.mxu0 0
      %1635 = vmatpush1.bf16.msra.mxu0 0
      %1636 = vmatprep.subr.bf16.mxu0 0
      %1637 = vmatpush1.bf16.msra.mxu0 0
      %1638 = vmatprep.subr.bf16.mxu0 0
      %1639 = vmatpush1.bf16.msra.mxu0 0
      %1640 = vmatprep.subr.bf16.mxu0 0
      %1641 = vmatpush1.bf16.msra.mxu0 0
      %1642 = vmatprep.subr.bf16.mxu0 0
      %1643 = vmatpush1.bf16.msra.mxu0 0
      %1644 = vmatprep.subr.bf16.mxu0 0
      %1645 = vmatpush1.bf16.msra.mxu0 0
      %1646 = vmatprep.subr.bf16.mxu0 0
      %1647 = vmatpush1.bf16.msra.mxu0 0
      %1648 = vmatprep.subr.bf16.mxu0 0
      %1649 = vmatpush1.bf16.msra.mxu0 0
      %1650 = vmatprep.subr.bf16.mxu0 0
      %1651 = vmatpush1.bf16.msra.mxu0 0
      %1652 = vmatprep.subr.bf16.mxu0 0
      %1653 = vmatpush1.bf16.msra.mxu0 0
      %1654 = vmatprep.subr.bf16.mxu0 0
      %1655 = vmatpush1.bf16.msra.mxu0 0
      %1656 = vmatprep.subr.bf16.mxu0 0
      %1657 = vmatpush1.bf16.msra.mxu0 0
      %1658 = vmatprep.mubr.bf16.mxu0 0
      %1659 = vmatmul.mubr.bf16.gmra.mrb[0].mxu0 %v1559
      %v1660 = vpop.f32.mrb[0].mxu0
      %v1661 = vadd.f32 0.0, %v1660
      %v1662 = vpop.f32.mrb[0].mxu0
      %v1663 = vadd.f32 0.0, %v1662
      %v1664 = vpop.f32.mrb[0].mxu0
      %v1665 = vpop.f32.mrb[0].mxu0
      %1666 = vdwg.mxu0
      %1667 = vmatprep.subr.bf16.mxu0 %v1577
      %1668 = vmatpush1.bf16.msra.mxu0 %v1574
      %1669 = vmatprep.subr.bf16.mxu0 0
      %1670 = vmatpush1.bf16.msra.mxu0 0
      %1671 = vmatprep.subr.bf16.mxu0 0
      %1672 = vmatpush1.bf16.msra.mxu0 0
      %1673 = vmatprep.subr.bf16.mxu0 0
      %1674 = vmatpush1.bf16.msra.mxu0 0
      %1675 = vmatprep.subr.bf16.mxu0 0
      %1676 = vmatpush1.bf16.msra.mxu0 0
      %1677 = vmatprep.subr.bf16.mxu0 0
      %1678 = vmatpush1.bf16.msra.mxu0 0
      %1679 = vmatprep.subr.bf16.mxu0 0
      %1680 = vmatpush1.bf16.msra.mxu0 0
      %1681 = vmatprep.subr.bf16.mxu0 0
      %1682 = vmatpush1.bf16.msra.mxu0 0
      %1683 = vmatprep.subr.bf16.mxu0 0
      %1684 = vmatpush1.bf16.msra.mxu0 0
      %1685 = vmatprep.subr.bf16.mxu0 0
      %1686 = vmatpush1.bf16.msra.mxu0 0
      %1687 = vmatprep.subr.bf16.mxu0 0
      %1688 = vmatpush1.bf16.msra.mxu0 0
      %1689 = vmatprep.subr.bf16.mxu0 0
      %1690 = vmatpush1.bf16.msra.mxu0 0
      %1691 = vmatprep.subr.bf16.mxu0 0
      %1692 = vmatpush1.bf16.msra.mxu0 0
      %1693 = vmatprep.subr.bf16.mxu0 0
      %1694 = vmatpush1.bf16.msra.mxu0 0
      %1695 = vmatprep.subr.bf16.mxu0 0
      %1696 = vmatpush1.bf16.msra.mxu0 0
      %1697 = vmatprep.subr.bf16.mxu0 0
      %1698 = vmatpush1.bf16.msra.mxu0 0
      %1699 = vmatprep.mubr.bf16.mxu0 0
      %1700 = vmatmul.mubr.bf16.gmra.mrb[0].mxu0 %v1559
      %v1701 = vpop.f32.mrb[0].mxu0
      %v1702 = vadd.f32 0.0, %v1701
      %v1703 = vpop.f32.mrb[0].mxu0
      %v1704 = vadd.f32 0.0, %v1703
      %v1705 = vpop.f32.mrb[0].mxu0
      %v1706 = vpop.f32.mrb[0].mxu0
      %1707 = vdwg.mxu0
      %1708 = vmatprep.subr.bf16.mxu0 %v1583
      %1709 = vmatpush1.bf16.msra.mxu0 %v1580
      %1710 = vmatprep.subr.bf16.mxu0 0
      %1711 = vmatpush1.bf16.msra.mxu0 0
      %1712 = vmatprep.subr.bf16.mxu0 0
      %1713 = vmatpush1.bf16.msra.mxu0 0
      %1714 = vmatprep.subr.bf16.mxu0 0
      %1715 = vmatpush1.bf16.msra.mxu0 0
      %1716 = vmatprep.subr.bf16.mxu0 0
      %1717 = vmatpush1.bf16.msra.mxu0 0
      %1718 = vmatprep.subr.bf16.mxu0 0
      %1719 = vmatpush1.bf16.msra.mxu0 0
      %1720 = vmatprep.subr.bf16.mxu0 0
      %1721 = vmatpush1.bf16.msra.mxu0 0
      %1722 = vmatprep.subr.bf16.mxu0 0
      %1723 = vmatpush1.bf16.msra.mxu0 0
      %1724 = vmatprep.subr.bf16.mxu0 0
      %1725 = vmatpush1.bf16.msra.mxu0 0
      %1726 = vmatprep.subr.bf16.mxu0 0
      %1727 = vmatpush1.bf16.msra.mxu0 0
      %1728 = vmatprep.subr.bf16.mxu0 0
      %1729 = vmatpush1.bf16.msra.mxu0 0
      %1730 = vmatprep.subr.bf16.mxu0 0
      %1731 = vmatpush1.bf16.msra.mxu0 0
      %1732 = vmatprep.subr.bf16.mxu0 0
      %1733 = vmatpush1.bf16.msra.mxu0 0
      %1734 = vmatprep.subr.bf16.mxu0 0
      %1735 = vmatpush1.bf16.msra.mxu0 0
      %1736 = vmatprep.subr.bf16.mxu0 0
      %1737 = vmatpush1.bf16.msra.mxu0 0
      %1738 = vmatprep.subr.bf16.mxu0 0
      %1739 = vmatpush1.bf16.msra.mxu0 0
      %1740 = vmatprep.mubr.bf16.mxu0 0
      %1741 = vmatmul.mubr.bf16.gmra.mrb[0].mxu0 %v1559
      %v1742 = vpop.f32.mrb[0].mxu0
      %v1743 = vadd.f32 0.0, %v1742
      %v1744 = vpop.f32.mrb[0].mxu0
      %v1745 = vadd.f32 0.0, %v1744
      %v1746 = vpop.f32.mrb[0].mxu0
      %v1747 = vpop.f32.mrb[0].mxu0
      %1748 = vdwg.mxu0
      %v1749 = vadd.f32 %v1474, %v1620
      %v1750 = vadd.f32 %v1475, %v1622
      %v1751 = vadd.f32 %v1476, %v1661
      %v1752 = vadd.f32 %v1477, %v1663
      %v1753 = vadd.f32 %v1478, %v1702
      %v1754 = vadd.f32 %v1479, %v1704
      %v1755 = vadd.f32 %v1480, %v1743
      %v1756 = vadd.f32 %v1481, %v1745
      %s1757 = scalar_lea.vmem %s0, 20
      %v1758 = vld [vmem:[%s1757] sm:$0xf]
      %v1759 = vld [vmem:[#allocation2] sm:$0xff]
      %v1760 = vld [vmem:[#allocation2 + $0x8] sm:$0xff]
      %v1761 = vld [vmem:[#allocation2 + $0x10] sm:$0x3]
      %v1765 = vcombine.high %v1759, %v1759
      %v1767 = vunpack.c.l.s4 1983009808
      %v1768 = vunpack.c.0.s8 %v1767
      %v1769 = vlaneseq
      %v1770 = vshrl.u32 %v1769, 7
      %v1771 = vsub.s32 %v1768, %v1770
      %v1772 = vrot.slane %v1759, %v1771
      %v1774 = vunpack.c.l.s4 1983009808
      %v1775 = vunpack.c.0.s8 %v1774
      %v1776 = vlaneseq
      %v1777 = vshrl.u32 %v1776, 7
      %v1778 = vsub.s32 %v1775, %v1777
      %v1779 = vrot.slane %v1765, %v1778
      %v1780 = vcombine.high %v1772, %v1772
      %v1781 = vcombine.high %v1779, %v1779
      %v1782 = vcombine.high %v1760, %v1760
      %v1784 = vunpack.c.l.s4 1983009808
      %v1785 = vunpack.c.0.s8 %v1784
      %v1786 = vlaneseq
      %v1787 = vshrl.u32 %v1786, 7
      %v1788 = vsub.s32 %v1785, %v1787
      %v1789 = vrot.slane %v1760, %v1788
      %v1791 = vunpack.c.l.s4 1983009808
      %v1792 = vunpack.c.0.s8 %v1791
      %v1793 = vlaneseq
      %v1794 = vshrl.u32 %v1793, 7
      %v1795 = vsub.s32 %v1792, %v1794
      %v1796 = vrot.slane %v1782, %v1795
      %v1797 = vcombine.high %v1789, %v1789
      %v1798 = vcombine.high %v1796, %v1796
      %v1800 = vunpack.c.l.s4 1983009808
      %v1801 = vunpack.c.0.s8 %v1800
      %v1802 = vlaneseq
      %v1803 = vshrl.u32 %v1802, 7
      %v1804 = vsub.s32 %v1801, %v1803
      %v1805 = vrot.slane %v1761, %v1804
      %1806 = vrot.lane.b32.xlu0 %v1772, 116
      %v1807 = vpop.permute.xlu0 %1806
      %1808 = vrot.lane.b32.xlu0 %v1780, 116
      %v1809 = vpop.permute.xlu0 %1808
      %1810 = vrot.lane.b32.xlu0 %v1779, 116
      %v1811 = vpop.permute.xlu0 %1810
      %1812 = vrot.lane.b32.xlu0 %v1781, 116
      %v1813 = vpop.permute.xlu0 %1812
      %1814 = vrot.lane.b32.xlu0 %v1789, 116
      %v1815 = vpop.permute.xlu0 %1814
      %1816 = vrot.lane.b32.xlu0 %v1797, 116
      %v1817 = vpop.permute.xlu0 %1816
      %1818 = vrot.lane.b32.xlu0 %v1796, 116
      %v1819 = vpop.permute.xlu0 %1818
      %1820 = vrot.lane.b32.xlu0 %v1798, 116
      %v1821 = vpop.permute.xlu0 %1820
      %1822 = vrot.lane.b32.xlu0 %v1805, 116
      %v1823 = vpop.permute.xlu0 %1822
      %vm1824 = vcmask 949248
      %v1825 = vsel %vm1824, %v1807, %v1809
      %v1826 = vsel %vm1824, %v1809, %v1811
      %v1827 = vsel %vm1824, %v1811, %v1813
      %v1828 = vsel %vm1824, %v1813, %v1815
      %v1829 = vsel %vm1824, %v1815, %v1817
      %v1830 = vsel %vm1824, %v1817, %v1819
      %v1831 = vsel %vm1824, %v1819, %v1821
      %v1832 = vsel %vm1824, %v1821, %v1823
      %v1834 = vsel %vm548, %v1758, 0
      %v1837 = vsel %vm552, %v1825, 0
      %v1840 = vsel %vm552, %v1826, 0
      %v1843 = vsel %vm552, %v1827, 0
      %v1846 = vsel %vm552, %v1828, 0
      %v1849 = vsel %vm552, %v1829, 0
      %v1852 = vsel %vm552, %v1830, 0
      %v1855 = vsel %vm552, %v1831, 0
      %v1858 = vsel %vm552, %v1832, 0
      %1860 = vmatprep.subr.bf16.mxu0 %v1840
      %1861 = vmatpush1.bf16.msra.mxu0 %v1837
      %1862 = vmatprep.subr.bf16.mxu0 0
      %1863 = vmatpush1.bf16.msra.mxu0 0
      %1864 = vmatprep.subr.bf16.mxu0 0
      %1865 = vmatpush1.bf16.msra.mxu0 0
      %1866 = vmatprep.subr.bf16.mxu0 0
      %1867 = vmatpush1.bf16.msra.mxu0 0
      %1868 = vmatprep.subr.bf16.mxu0 0
      %1869 = vmatpush1.bf16.msra.mxu0 0
      %1870 = vmatprep.subr.bf16.mxu0 0
      %1871 = vmatpush1.bf16.msra.mxu0 0
      %1872 = vmatprep.subr.bf16.mxu0 0
      %1873 = vmatpush1.bf16.msra.mxu0 0
      %1874 = vmatprep.subr.bf16.mxu0 0
      %1875 = vmatpush1.bf16.msra.mxu0 0
      %1876 = vmatprep.subr.bf16.mxu0 0
      %1877 = vmatpush1.bf16.msra.mxu0 0
      %1878 = vmatprep.subr.bf16.mxu0 0
      %1879 = vmatpush1.bf16.msra.mxu0 0
      %1880 = vmatprep.subr.bf16.mxu0 0
      %1881 = vmatpush1.bf16.msra.mxu0 0
      %1882 = vmatprep.subr.bf16.mxu0 0
      %1883 = vmatpush1.bf16.msra.mxu0 0
      %1884 = vmatprep.subr.bf16.mxu0 0
      %1885 = vmatpush1.bf16.msra.mxu0 0
      %1886 = vmatprep.subr.bf16.mxu0 0
      %1887 = vmatpush1.bf16.msra.mxu0 0
      %1888 = vmatprep.subr.bf16.mxu0 0
      %1889 = vmatpush1.bf16.msra.mxu0 0
      %1890 = vmatprep.subr.bf16.mxu0 0
      %1891 = vmatpush1.bf16.msra.mxu0 0
      %1892 = vmatprep.mubr.bf16.mxu0 0
      %1893 = vmatmul.mubr.bf16.gmra.mrb[0].mxu0 %v1834
      %v1894 = vpop.f32.mrb[0].mxu0
      %v1895 = vadd.f32 0.0, %v1894
      %v1896 = vpop.f32.mrb[0].mxu0
      %v1897 = vadd.f32 0.0, %v1896
      %v1898 = vpop.f32.mrb[0].mxu0
      %v1899 = vpop.f32.mrb[0].mxu0
      %1900 = vdwg.mxu0
      %1901 = vmatprep.subr.bf16.mxu0 %v1846
      %1902 = vmatpush1.bf16.msra.mxu0 %v1843
      %1903 = vmatprep.subr.bf16.mxu0 0
      %1904 = vmatpush1.bf16.msra.mxu0 0
      %1905 = vmatprep.subr.bf16.mxu0 0
      %1906 = vmatpush1.bf16.msra.mxu0 0
      %1907 = vmatprep.subr.bf16.mxu0 0
      %1908 = vmatpush1.bf16.msra.mxu0 0
      %1909 = vmatprep.subr.bf16.mxu0 0
      %1910 = vmatpush1.bf16.msra.mxu0 0
      %1911 = vmatprep.subr.bf16.mxu0 0
      %1912 = vmatpush1.bf16.msra.mxu0 0
      %1913 = vmatprep.subr.bf16.mxu0 0
      %1914 = vmatpush1.bf16.msra.mxu0 0
      %1915 = vmatprep.subr.bf16.mxu0 0
      %1916 = vmatpush1.bf16.msra.mxu0 0
      %1917 = vmatprep.subr.bf16.mxu0 0
      %1918 = vmatpush1.bf16.msra.mxu0 0
      %1919 = vmatprep.subr.bf16.mxu0 0
      %1920 = vmatpush1.bf16.msra.mxu0 0
      %1921 = vmatprep.subr.bf16.mxu0 0
      %1922 = vmatpush1.bf16.msra.mxu0 0
      %1923 = vmatprep.subr.bf16.mxu0 0
      %1924 = vmatpush1.bf16.msra.mxu0 0
      %1925 = vmatprep.subr.bf16.mxu0 0
      %1926 = vmatpush1.bf16.msra.mxu0 0
      %1927 = vmatprep.subr.bf16.mxu0 0
      %1928 = vmatpush1.bf16.msra.mxu0 0
      %1929 = vmatprep.subr.bf16.mxu0 0
      %1930 = vmatpush1.bf16.msra.mxu0 0
      %1931 = vmatprep.subr.bf16.mxu0 0
      %1932 = vmatpush1.bf16.msra.mxu0 0
      %1933 = vmatprep.mubr.bf16.mxu0 0
      %1934 = vmatmul.mubr.bf16.gmra.mrb[0].mxu0 %v1834
      %v1935 = vpop.f32.mrb[0].mxu0
      %v1936 = vadd.f32 0.0, %v1935
      %v1937 = vpop.f32.mrb[0].mxu0
      %v1938 = vadd.f32 0.0, %v1937
      %v1939 = vpop.f32.mrb[0].mxu0
      %v1940 = vpop.f32.mrb[0].mxu0
      %1941 = vdwg.mxu0
      %1942 = vmatprep.subr.bf16.mxu0 %v1852
      %1943 = vmatpush1.bf16.msra.mxu0 %v1849
      %1944 = vmatprep.subr.bf16.mxu0 0
      %1945 = vmatpush1.bf16.msra.mxu0 0
      %1946 = vmatprep.subr.bf16.mxu0 0
      %1947 = vmatpush1.bf16.msra.mxu0 0
      %1948 = vmatprep.subr.bf16.mxu0 0
      %1949 = vmatpush1.bf16.msra.mxu0 0
      %1950 = vmatprep.subr.bf16.mxu0 0
      %1951 = vmatpush1.bf16.msra.mxu0 0
      %1952 = vmatprep.subr.bf16.mxu0 0
      %1953 = vmatpush1.bf16.msra.mxu0 0
      %1954 = vmatprep.subr.bf16.mxu0 0
      %1955 = vmatpush1.bf16.msra.mxu0 0
      %1956 = vmatprep.subr.bf16.mxu0 0
      %1957 = vmatpush1.bf16.msra.mxu0 0
      %1958 = vmatprep.subr.bf16.mxu0 0
      %1959 = vmatpush1.bf16.msra.mxu0 0
      %1960 = vmatprep.subr.bf16.mxu0 0
      %1961 = vmatpush1.bf16.msra.mxu0 0
      %1962 = vmatprep.subr.bf16.mxu0 0
      %1963 = vmatpush1.bf16.msra.mxu0 0
      %1964 = vmatprep.subr.bf16.mxu0 0
      %1965 = vmatpush1.bf16.msra.mxu0 0
      %1966 = vmatprep.subr.bf16.mxu0 0
      %1967 = vmatpush1.bf16.msra.mxu0 0
      %1968 = vmatprep.subr.bf16.mxu0 0
      %1969 = vmatpush1.bf16.msra.mxu0 0
      %1970 = vmatprep.subr.bf16.mxu0 0
      %1971 = vmatpush1.bf16.msra.mxu0 0
      %1972 = vmatprep.subr.bf16.mxu0 0
      %1973 = vmatpush1.bf16.msra.mxu0 0
      %1974 = vmatprep.mubr.bf16.mxu0 0
      %1975 = vmatmul.mubr.bf16.gmra.mrb[0].mxu0 %v1834
      %v1976 = vpop.f32.mrb[0].mxu0
      %v1977 = vadd.f32 0.0, %v1976
      %v1978 = vpop.f32.mrb[0].mxu0
      %v1979 = vadd.f32 0.0, %v1978
      %v1980 = vpop.f32.mrb[0].mxu0
      %v1981 = vpop.f32.mrb[0].mxu0
      %1982 = vdwg.mxu0
      %1983 = vmatprep.subr.bf16.mxu0 %v1858
      %1984 = vmatpush1.bf16.msra.mxu0 %v1855
      %1985 = vmatprep.subr.bf16.mxu0 0
      %1986 = vmatpush1.bf16.msra.mxu0 0
      %1987 = vmatprep.subr.bf16.mxu0 0
      %1988 = vmatpush1.bf16.msra.mxu0 0
      %1989 = vmatprep.subr.bf16.mxu0 0
      %1990 = vmatpush1.bf16.msra.mxu0 0
      %1991 = vmatprep.subr.bf16.mxu0 0
      %1992 = vmatpush1.bf16.msra.mxu0 0
      %1993 = vmatprep.subr.bf16.mxu0 0
      %1994 = vmatpush1.bf16.msra.mxu0 0
      %1995 = vmatprep.subr.bf16.mxu0 0
      %1996 = vmatpush1.bf16.msra.mxu0 0
      %1997 = vmatprep.subr.bf16.mxu0 0
      %1998 = vmatpush1.bf16.msra.mxu0 0
      %1999 = vmatprep.subr.bf16.mxu0 0
      %2000 = vmatpush1.bf16.msra.mxu0 0
      %2001 = vmatprep.subr.bf16.mxu0 0
      %2002 = vmatpush1.bf16.msra.mxu0 0
      %2003 = vmatprep.subr.bf16.mxu0 0
      %2004 = vmatpush1.bf16.msra.mxu0 0
      %2005 = vmatprep.subr.bf16.mxu0 0
      %2006 = vmatpush1.bf16.msra.mxu0 0
      %2007 = vmatprep.subr.bf16.mxu0 0
      %2008 = vmatpush1.bf16.msra.mxu0 0
      %2009 = vmatprep.subr.bf16.mxu0 0
      %2010 = vmatpush1.bf16.msra.mxu0 0
      %2011 = vmatprep.subr.bf16.mxu0 0
      %2012 = vmatpush1.bf16.msra.mxu0 0
      %2013 = vmatprep.subr.bf16.mxu0 0
      %2014 = vmatpush1.bf16.msra.mxu0 0
      %2015 = vmatprep.mubr.bf16.mxu0 0
      %2016 = vmatmul.mubr.bf16.gmra.mrb[0].mxu0 %v1834
      %v2017 = vpop.f32.mrb[0].mxu0
      %v2018 = vadd.f32 0.0, %v2017
      %v2019 = vpop.f32.mrb[0].mxu0
      %v2020 = vadd.f32 0.0, %v2019
      %v2021 = vpop.f32.mrb[0].mxu0
      %v2022 = vpop.f32.mrb[0].mxu0
      %2023 = vdwg.mxu0
      %v2024 = vadd.f32 %v1749, %v1895
      %v2025 = vadd.f32 %v1750, %v1897
      %v2026 = vadd.f32 %v1751, %v1936
      %v2027 = vadd.f32 %v1752, %v1938
      %v2028 = vadd.f32 %v1753, %v1977
      %v2029 = vadd.f32 %v1754, %v1979
      %v2030 = vadd.f32 %v1755, %v2018
      %v2031 = vadd.f32 %v1756, %v2020
      %s2032 = scalar_lea.vmem %s0, 24
      %v2033 = vld [vmem:[%s2032] sm:$0xf]
      %v2034 = vld [vmem:[#allocation2] sm:$0xff]
      %v2035 = vld [vmem:[#allocation2 + $0x8] sm:$0xff]
      %v2036 = vld [vmem:[#allocation2 + $0x10] sm:$0x3]
      %v2040 = vcombine.high %v2034, %v2034
      %v2042 = vunpack.c.l.s4 1983009808
      %v2043 = vunpack.c.0.s8 %v2042
      %v2044 = vlaneseq
      %v2045 = vshrl.u32 %v2044, 7
      %v2046 = vsub.s32 %v2043, %v2045
      %v2047 = vrot.slane %v2034, %v2046
      %v2049 = vunpack.c.l.s4 1983009808
      %v2050 = vunpack.c.0.s8 %v2049
      %v2051 = vlaneseq
      %v2052 = vshrl.u32 %v2051, 7
      %v2053 = vsub.s32 %v2050, %v2052
      %v2054 = vrot.slane %v2040, %v2053
      %v2055 = vcombine.high %v2047, %v2047
      %v2056 = vcombine.high %v2054, %v2054
      %v2057 = vcombine.high %v2035, %v2035
      %v2059 = vunpack.c.l.s4 1983009808
      %v2060 = vunpack.c.0.s8 %v2059
      %v2061 = vlaneseq
      %v2062 = vshrl.u32 %v2061, 7
      %v2063 = vsub.s32 %v2060, %v2062
      %v2064 = vrot.slane %v2035, %v2063
      %v2066 = vunpack.c.l.s4 1983009808
      %v2067 = vunpack.c.0.s8 %v2066
      %v2068 = vlaneseq
      %v2069 = vshrl.u32 %v2068, 7
      %v2070 = vsub.s32 %v2067, %v2069
      %v2071 = vrot.slane %v2057, %v2070
      %v2072 = vcombine.high %v2064, %v2064
      %v2073 = vcombine.high %v2071, %v2071
      %v2075 = vunpack.c.l.s4 1983009808
      %v2076 = vunpack.c.0.s8 %v2075
      %v2077 = vlaneseq
      %v2078 = vshrl.u32 %v2077, 7
      %v2079 = vsub.s32 %v2076, %v2078
      %v2080 = vrot.slane %v2036, %v2079
      %2081 = vrot.lane.b32.xlu0 %v2047, 108
      %v2082 = vpop.permute.xlu0 %2081
      %2083 = vrot.lane.b32.xlu0 %v2055, 108
      %v2084 = vpop.permute.xlu0 %2083
      %2085 = vrot.lane.b32.xlu0 %v2054, 108
      %v2086 = vpop.permute.xlu0 %2085
      %2087 = vrot.lane.b32.xlu0 %v2056, 108
      %v2088 = vpop.permute.xlu0 %2087
      %2089 = vrot.lane.b32.xlu0 %v2064, 108
      %v2090 = vpop.permute.xlu0 %2089
      %2091 = vrot.lane.b32.xlu0 %v2072, 108
      %v2092 = vpop.permute.xlu0 %2091
      %2093 = vrot.lane.b32.xlu0 %v2071, 108
      %v2094 = vpop.permute.xlu0 %2093
      %2095 = vrot.lane.b32.xlu0 %v2073, 108
      %v2096 = vpop.permute.xlu0 %2095
      %2097 = vrot.lane.b32.xlu0 %v2080, 108
      %v2098 = vpop.permute.xlu0 %2097
      %vm2099 = vcmask 883712
      %v2100 = vsel %vm2099, %v2082, %v2084
      %v2101 = vsel %vm2099, %v2084, %v2086
      %v2102 = vsel %vm2099, %v2086, %v2088
      %v2103 = vsel %vm2099, %v2088, %v2090
      %v2104 = vsel %vm2099, %v2090, %v2092
      %v2105 = vsel %vm2099, %v2092, %v2094
      %v2106 = vsel %vm2099, %v2094, %v2096
      %v2107 = vsel %vm2099, %v2096, %v2098
      %v2109 = vsel %vm548, %v2033, 0
      %v2112 = vsel %vm552, %v2100, 0
      %v2115 = vsel %vm552, %v2101, 0
      %v2118 = vsel %vm552, %v2102, 0
      %v2121 = vsel %vm552, %v2103, 0
      %v2124 = vsel %vm552, %v2104, 0
      %v2127 = vsel %vm552, %v2105, 0
      %v2130 = vsel %vm552, %v2106, 0
      %v2133 = vsel %vm552, %v2107, 0
      %2135 = vmatprep.subr.bf16.mxu0 %v2115
      %2136 = vmatpush1.bf16.msra.mxu0 %v2112
      %2137 = vmatprep.subr.bf16.mxu0 0
      %2138 = vmatpush1.bf16.msra.mxu0 0
      %2139 = vmatprep.subr.bf16.mxu0 0
      %2140 = vmatpush1.bf16.msra.mxu0 0
      %2141 = vmatprep.subr.bf16.mxu0 0
      %2142 = vmatpush1.bf16.msra.mxu0 0
      %2143 = vmatprep.subr.bf16.mxu0 0
      %2144 = vmatpush1.bf16.msra.mxu0 0
      %2145 = vmatprep.subr.bf16.mxu0 0
      %2146 = vmatpush1.bf16.msra.mxu0 0
      %2147 = vmatprep.subr.bf16.mxu0 0
      %2148 = vmatpush1.bf16.msra.mxu0 0
      %2149 = vmatprep.subr.bf16.mxu0 0
      %2150 = vmatpush1.bf16.msra.mxu0 0
      %2151 = vmatprep.subr.bf16.mxu0 0
      %2152 = vmatpush1.bf16.msra.mxu0 0
      %2153 = vmatprep.subr.bf16.mxu0 0
      %2154 = vmatpush1.bf16.msra.mxu0 0
      %2155 = vmatprep.subr.bf16.mxu0 0
      %2156 = vmatpush1.bf16.msra.mxu0 0
      %2157 = vmatprep.subr.bf16.mxu0 0
      %2158 = vmatpush1.bf16.msra.mxu0 0
      %2159 = vmatprep.subr.bf16.mxu0 0
      %2160 = vmatpush1.bf16.msra.mxu0 0
      %2161 = vmatprep.subr.bf16.mxu0 0
      %2162 = vmatpush1.bf16.msra.mxu0 0
      %2163 = vmatprep.subr.bf16.mxu0 0
      %2164 = vmatpush1.bf16.msra.mxu0 0
      %2165 = vmatprep.subr.bf16.mxu0 0
      %2166 = vmatpush1.bf16.msra.mxu0 0
      %2167 = vmatprep.mubr.bf16.mxu0 0
      %2168 = vmatmul.mubr.bf16.gmra.mrb[0].mxu0 %v2109
      %v2169 = vpop.f32.mrb[0].mxu0
      %v2170 = vadd.f32 0.0, %v2169
      %v2171 = vpop.f32.mrb[0].mxu0
      %v2172 = vadd.f32 0.0, %v2171
      %v2173 = vpop.f32.mrb[0].mxu0
      %v2174 = vpop.f32.mrb[0].mxu0
      %2175 = vdwg.mxu0
      %2176 = vmatprep.subr.bf16.mxu0 %v2121
      %2177 = vmatpush1.bf16.msra.mxu0 %v2118
      %2178 = vmatprep.subr.bf16.mxu0 0
      %2179 = vmatpush1.bf16.msra.mxu0 0
      %2180 = vmatprep.subr.bf16.mxu0 0
      %2181 = vmatpush1.bf16.msra.mxu0 0
      %2182 = vmatprep.subr.bf16.mxu0 0
      %2183 = vmatpush1.bf16.msra.mxu0 0
      %2184 = vmatprep.subr.bf16.mxu0 0
      %2185 = vmatpush1.bf16.msra.mxu0 0
      %2186 = vmatprep.subr.bf16.mxu0 0
      %2187 = vmatpush1.bf16.msra.mxu0 0
      %2188 = vmatprep.subr.bf16.mxu0 0
      %2189 = vmatpush1.bf16.msra.mxu0 0
      %2190 = vmatprep.subr.bf16.mxu0 0
      %2191 = vmatpush1.bf16.msra.mxu0 0
      %2192 = vmatprep.subr.bf16.mxu0 0
      %2193 = vmatpush1.bf16.msra.mxu0 0
      %2194 = vmatprep.subr.bf16.mxu0 0
      %2195 = vmatpush1.bf16.msra.mxu0 0
      %2196 = vmatprep.subr.bf16.mxu0 0
      %2197 = vmatpush1.bf16.msra.mxu0 0
      %2198 = vmatprep.subr.bf16.mxu0 0
      %2199 = vmatpush1.bf16.msra.mxu0 0
      %2200 = vmatprep.subr.bf16.mxu0 0
      %2201 = vmatpush1.bf16.msra.mxu0 0
      %2202 = vmatprep.subr.bf16.mxu0 0
      %2203 = vmatpush1.bf16.msra.mxu0 0
      %2204 = vmatprep.subr.bf16.mxu0 0
      %2205 = vmatpush1.bf16.msra.mxu0 0
      %2206 = vmatprep.subr.bf16.mxu0 0
      %2207 = vmatpush1.bf16.msra.mxu0 0
      %2208 = vmatprep.mubr.bf16.mxu0 0
      %2209 = vmatmul.mubr.bf16.gmra.mrb[0].mxu0 %v2109
      %v2210 = vpop.f32.mrb[0].mxu0
      %v2211 = vadd.f32 0.0, %v2210
      %v2212 = vpop.f32.mrb[0].mxu0
      %v2213 = vadd.f32 0.0, %v2212
      %v2214 = vpop.f32.mrb[0].mxu0
      %v2215 = vpop.f32.mrb[0].mxu0
      %2216 = vdwg.mxu0
      %2217 = vmatprep.subr.bf16.mxu0 %v2127
      %2218 = vmatpush1.bf16.msra.mxu0 %v2124
      %2219 = vmatprep.subr.bf16.mxu0 0
      %2220 = vmatpush1.bf16.msra.mxu0 0
      %2221 = vmatprep.subr.bf16.mxu0 0
      %2222 = vmatpush1.bf16.msra.mxu0 0
      %2223 = vmatprep.subr.bf16.mxu0 0
      %2224 = vmatpush1.bf16.msra.mxu0 0
      %2225 = vmatprep.subr.bf16.mxu0 0
      %2226 = vmatpush1.bf16.msra.mxu0 0
      %2227 = vmatprep.subr.bf16.mxu0 0
      %2228 = vmatpush1.bf16.msra.mxu0 0
      %2229 = vmatprep.subr.bf16.mxu0 0
      %2230 = vmatpush1.bf16.msra.mxu0 0
      %2231 = vmatprep.subr.bf16.mxu0 0
      %2232 = vmatpush1.bf16.msra.mxu0 0
      %2233 = vmatprep.subr.bf16.mxu0 0
      %2234 = vmatpush1.bf16.msra.mxu0 0
      %2235 = vmatprep.subr.bf16.mxu0 0
      %2236 = vmatpush1.bf16.msra.mxu0 0
      %2237 = vmatprep.subr.bf16.mxu0 0
      %2238 = vmatpush1.bf16.msra.mxu0 0
      %2239 = vmatprep.subr.bf16.mxu0 0
      %2240 = vmatpush1.bf16.msra.mxu0 0
      %2241 = vmatprep.subr.bf16.mxu0 0
      %2242 = vmatpush1.bf16.msra.mxu0 0
      %2243 = vmatprep.subr.bf16.mxu0 0
      %2244 = vmatpush1.bf16.msra.mxu0 0
      %2245 = vmatprep.subr.bf16.mxu0 0
      %2246 = vmatpush1.bf16.msra.mxu0 0
      %2247 = vmatprep.subr.bf16.mxu0 0
      %2248 = vmatpush1.bf16.msra.mxu0 0
      %2249 = vmatprep.mubr.bf16.mxu0 0
      %2250 = vmatmul.mubr.bf16.gmra.mrb[0].mxu0 %v2109
      %v2251 = vpop.f32.mrb[0].mxu0
      %v2252 = vadd.f32 0.0, %v2251
      %v2253 = vpop.f32.mrb[0].mxu0
      %v2254 = vadd.f32 0.0, %v2253
      %v2255 = vpop.f32.mrb[0].mxu0
      %v2256 = vpop.f32.mrb[0].mxu0
      %2257 = vdwg.mxu0
      %2258 = vmatprep.subr.bf16.mxu0 %v2133
      %2259 = vmatpush1.bf16.msra.mxu0 %v2130
      %2260 = vmatprep.subr.bf16.mxu0 0
      %2261 = vmatpush1.bf16.msra.mxu0 0
      %2262 = vmatprep.subr.bf16.mxu0 0
      %2263 = vmatpush1.bf16.msra.mxu0 0
      %2264 = vmatprep.subr.bf16.mxu0 0
      %2265 = vmatpush1.bf16.msra.mxu0 0
      %2266 = vmatprep.subr.bf16.mxu0 0
      %2267 = vmatpush1.bf16.msra.mxu0 0
      %2268 = vmatprep.subr.bf16.mxu0 0
      %2269 = vmatpush1.bf16.msra.mxu0 0
      %2270 = vmatprep.subr.bf16.mxu0 0
      %2271 = vmatpush1.bf16.msra.mxu0 0
      %2272 = vmatprep.subr.bf16.mxu0 0
      %2273 = vmatpush1.bf16.msra.mxu0 0
      %2274 = vmatprep.subr.bf16.mxu0 0
      %2275 = vmatpush1.bf16.msra.mxu0 0
      %2276 = vmatprep.subr.bf16.mxu0 0
      %2277 = vmatpush1.bf16.msra.mxu0 0
      %2278 = vmatprep.subr.bf16.mxu0 0
      %2279 = vmatpush1.bf16.msra.mxu0 0
      %2280 = vmatprep.subr.bf16.mxu0 0
      %2281 = vmatpush1.bf16.msra.mxu0 0
      %2282 = vmatprep.subr.bf16.mxu0 0
      %2283 = vmatpush1.bf16.msra.mxu0 0
      %2284 = vmatprep.subr.bf16.mxu0 0
      %2285 = vmatpush1.bf16.msra.mxu0 0
      %2286 = vmatprep.subr.bf16.mxu0 0
      %2287 = vmatpush1.bf16.msra.mxu0 0
      %2288 = vmatprep.subr.bf16.mxu0 0
      %2289 = vmatpush1.bf16.msra.mxu0 0
      %2290 = vmatprep.mubr.bf16.mxu0 0
      %2291 = vmatmul.mubr.bf16.gmra.mrb[0].mxu0 %v2109
      %v2292 = vpop.f32.mrb[0].mxu0
      %v2293 = vadd.f32 0.0, %v2292
      %v2294 = vpop.f32.mrb[0].mxu0
      %v2295 = vadd.f32 0.0, %v2294
      %v2296 = vpop.f32.mrb[0].mxu0
      %v2297 = vpop.f32.mrb[0].mxu0
      %2298 = vdwg.mxu0
      %v2299 = vadd.f32 %v2024, %v2170
      %v2300 = vadd.f32 %v2025, %v2172
      %v2301 = vadd.f32 %v2026, %v2211
      %v2302 = vadd.f32 %v2027, %v2213
      %v2303 = vadd.f32 %v2028, %v2252
      %v2304 = vadd.f32 %v2029, %v2254
      %v2305 = vadd.f32 %v2030, %v2293
      %v2306 = vadd.f32 %v2031, %v2295
      %s2307 = scalar_lea.vmem %s0, 28
      %v2308 = vld [vmem:[%s2307] sm:$0xf]
      %v2309 = vld [vmem:[#allocation2] sm:$0xff]
      %v2310 = vld [vmem:[#allocation2 + $0x8] sm:$0xff]
      %v2311 = vld [vmem:[#allocation2 + $0x10] sm:$0x3]
      %v2315 = vcombine.high %v2309, %v2309
      %v2317 = vunpack.c.l.s4 1983009808
      %v2318 = vunpack.c.0.s8 %v2317
      %v2319 = vlaneseq
      %v2320 = vshrl.u32 %v2319, 7
      %v2321 = vsub.s32 %v2318, %v2320
      %v2322 = vrot.slane %v2309, %v2321
      %v2324 = vunpack.c.l.s4 1983009808
      %v2325 = vunpack.c.0.s8 %v2324
      %v2326 = vlaneseq
      %v2327 = vshrl.u32 %v2326, 7
      %v2328 = vsub.s32 %v2325, %v2327
      %v2329 = vrot.slane %v2315, %v2328
      %v2330 = vcombine.high %v2322, %v2322
      %v2331 = vcombine.high %v2329, %v2329
      %v2332 = vcombine.high %v2310, %v2310
      %v2334 = vunpack.c.l.s4 1983009808
      %v2335 = vunpack.c.0.s8 %v2334
      %v2336 = vlaneseq
      %v2337 = vshrl.u32 %v2336, 7
      %v2338 = vsub.s32 %v2335, %v2337
      %v2339 = vrot.slane %v2310, %v2338
      %v2341 = vunpack.c.l.s4 1983009808
      %v2342 = vunpack.c.0.s8 %v2341
      %v2343 = vlaneseq
      %v2344 = vshrl.u32 %v2343, 7
      %v2345 = vsub.s32 %v2342, %v2344
      %v2346 = vrot.slane %v2332, %v2345
      %v2347 = vcombine.high %v2339, %v2339
      %v2348 = vcombine.high %v2346, %v2346
      %v2350 = vunpack.c.l.s4 1983009808
      %v2351 = vunpack.c.0.s8 %v2350
      %v2352 = vlaneseq
      %v2353 = vshrl.u32 %v2352, 7
      %v2354 = vsub.s32 %v2351, %v2353
      %v2355 = vrot.slane %v2311, %v2354
      %2356 = vrot.lane.b32.xlu0 %v2322, 107
      %v2357 = vpop.permute.xlu0 %2356
      %2358 = vrot.lane.b32.xlu0 %v2330, 107
      %v2359 = vpop.permute.xlu0 %2358
      %2360 = vrot.lane.b32.xlu0 %v2329, 107
      %v2361 = vpop.permute.xlu0 %2360
      %2362 = vrot.lane.b32.xlu0 %v2331, 107
      %v2363 = vpop.permute.xlu0 %2362
      %2364 = vrot.lane.b32.xlu0 %v2339, 107
      %v2365 = vpop.permute.xlu0 %2364
      %2366 = vrot.lane.b32.xlu0 %v2347, 107
      %v2367 = vpop.permute.xlu0 %2366
      %2368 = vrot.lane.b32.xlu0 %v2346, 107
      %v2369 = vpop.permute.xlu0 %2368
      %2370 = vrot.lane.b32.xlu0 %v2348, 107
      %v2371 = vpop.permute.xlu0 %2370
      %2372 = vrot.lane.b32.xlu0 %v2355, 107
      %v2373 = vpop.permute.xlu0 %2372
      %vm2374 = vcmask 875520
      %v2375 = vsel %vm2374, %v2357, %v2359
      %v2376 = vsel %vm2374, %v2359, %v2361
      %v2377 = vsel %vm2374, %v2361, %v2363
      %v2378 = vsel %vm2374, %v2363, %v2365
      %v2379 = vsel %vm2374, %v2365, %v2367
      %v2380 = vsel %vm2374, %v2367, %v2369
      %v2381 = vsel %vm2374, %v2369, %v2371
      %v2382 = vsel %vm2374, %v2371, %v2373
      %v2384 = vsel %vm548, %v2308, 0
      %v2387 = vsel %vm552, %v2375, 0
      %v2390 = vsel %vm552, %v2376, 0
      %v2393 = vsel %vm552, %v2377, 0
      %v2396 = vsel %vm552, %v2378, 0
      %v2399 = vsel %vm552, %v2379, 0
      %v2402 = vsel %vm552, %v2380, 0
      %v2405 = vsel %vm552, %v2381, 0
      %v2408 = vsel %vm552, %v2382, 0
      %2410 = vmatprep.subr.bf16.mxu0 %v2390
      %2411 = vmatpush1.bf16.msra.mxu0 %v2387
      %2412 = vmatprep.subr.bf16.mxu0 0
      %2413 = vmatpush1.bf16.msra.mxu0 0
      %2414 = vmatprep.subr.bf16.mxu0 0
      %2415 = vmatpush1.bf16.msra.mxu0 0
      %2416 = vmatprep.subr.bf16.mxu0 0
      %2417 = vmatpush1.bf16.msra.mxu0 0
      %2418 = vmatprep.subr.bf16.mxu0 0
      %2419 = vmatpush1.bf16.msra.mxu0 0
      %2420 = vmatprep.subr.bf16.mxu0 0
      %2421 = vmatpush1.bf16.msra.mxu0 0
      %2422 = vmatprep.subr.bf16.mxu0 0
      %2423 = vmatpush1.bf16.msra.mxu0 0
      %2424 = vmatprep.subr.bf16.mxu0 0
      %2425 = vmatpush1.bf16.msra.mxu0 0
      %2426 = vmatprep.subr.bf16.mxu0 0
      %2427 = vmatpush1.bf16.msra.mxu0 0
      %2428 = vmatprep.subr.bf16.mxu0 0
      %2429 = vmatpush1.bf16.msra.mxu0 0
      %2430 = vmatprep.subr.bf16.mxu0 0
      %2431 = vmatpush1.bf16.msra.mxu0 0
      %2432 = vmatprep.subr.bf16.mxu0 0
      %2433 = vmatpush1.bf16.msra.mxu0 0
      %2434 = vmatprep.subr.bf16.mxu0 0
      %2435 = vmatpush1.bf16.msra.mxu0 0
      %2436 = vmatprep.subr.bf16.mxu0 0
      %2437 = vmatpush1.bf16.msra.mxu0 0
      %2438 = vmatprep.subr.bf16.mxu0 0
      %2439 = vmatpush1.bf16.msra.mxu0 0
      %2440 = vmatprep.subr.bf16.mxu0 0
      %2441 = vmatpush1.bf16.msra.mxu0 0
      %2442 = vmatprep.mubr.bf16.mxu0 0
      %2443 = vmatmul.mubr.bf16.gmra.mrb[0].mxu0 %v2384
      %v2444 = vpop.f32.mrb[0].mxu0
      %v2445 = vadd.f32 0.0, %v2444
      %v2446 = vpop.f32.mrb[0].mxu0
      %v2447 = vadd.f32 0.0, %v2446
      %v2448 = vpop.f32.mrb[0].mxu0
      %v2449 = vpop.f32.mrb[0].mxu0
      %2450 = vdwg.mxu0
      %2451 = vmatprep.subr.bf16.mxu0 %v2396
      %2452 = vmatpush1.bf16.msra.mxu0 %v2393
      %2453 = vmatprep.subr.bf16.mxu0 0
      %2454 = vmatpush1.bf16.msra.mxu0 0
      %2455 = vmatprep.subr.bf16.mxu0 0
      %2456 = vmatpush1.bf16.msra.mxu0 0
      %2457 = vmatprep.subr.bf16.mxu0 0
      %2458 = vmatpush1.bf16.msra.mxu0 0
      %2459 = vmatprep.subr.bf16.mxu0 0
      %2460 = vmatpush1.bf16.msra.mxu0 0
      %2461 = vmatprep.subr.bf16.mxu0 0
      %2462 = vmatpush1.bf16.msra.mxu0 0
      %2463 = vmatprep.subr.bf16.mxu0 0
      %2464 = vmatpush1.bf16.msra.mxu0 0
      %2465 = vmatprep.subr.bf16.mxu0 0
      %2466 = vmatpush1.bf16.msra.mxu0 0
      %2467 = vmatprep.subr.bf16.mxu0 0
      %2468 = vmatpush1.bf16.msra.mxu0 0
      %2469 = vmatprep.subr.bf16.mxu0 0
      %2470 = vmatpush1.bf16.msra.mxu0 0
      %2471 = vmatprep.subr.bf16.mxu0 0
      %2472 = vmatpush1.bf16.msra.mxu0 0
      %2473 = vmatprep.subr.bf16.mxu0 0
      %2474 = vmatpush1.bf16.msra.mxu0 0
      %2475 = vmatprep.subr.bf16.mxu0 0
      %2476 = vmatpush1.bf16.msra.mxu0 0
      %2477 = vmatprep.subr.bf16.mxu0 0
      %2478 = vmatpush1.bf16.msra.mxu0 0
      %2479 = vmatprep.subr.bf16.mxu0 0
      %2480 = vmatpush1.bf16.msra.mxu0 0
      %2481 = vmatprep.subr.bf16.mxu0 0
      %2482 = vmatpush1.bf16.msra.mxu0 0
      %2483 = vmatprep.mubr.bf16.mxu0 0
      %2484 = vmatmul.mubr.bf16.gmra.mrb[0].mxu0 %v2384
      %v2485 = vpop.f32.mrb[0].mxu0
      %v2486 = vadd.f32 0.0, %v2485
      %v2487 = vpop.f32.mrb[0].mxu0
      %v2488 = vadd.f32 0.0, %v2487
      %v2489 = vpop.f32.mrb[0].mxu0
      %v2490 = vpop.f32.mrb[0].mxu0
      %2491 = vdwg.mxu0
      %2492 = vmatprep.subr.bf16.mxu0 %v2402
      %2493 = vmatpush1.bf16.msra.mxu0 %v2399
      %2494 = vmatprep.subr.bf16.mxu0 0
      %2495 = vmatpush1.bf16.msra.mxu0 0
      %2496 = vmatprep.subr.bf16.mxu0 0
      %2497 = vmatpush1.bf16.msra.mxu0 0
      %2498 = vmatprep.subr.bf16.mxu0 0
      %2499 = vmatpush1.bf16.msra.mxu0 0
      %2500 = vmatprep.subr.bf16.mxu0 0
      %2501 = vmatpush1.bf16.msra.mxu0 0
      %2502 = vmatprep.subr.bf16.mxu0 0
      %2503 = vmatpush1.bf16.msra.mxu0 0
      %2504 = vmatprep.subr.bf16.mxu0 0
      %2505 = vmatpush1.bf16.msra.mxu0 0
      %2506 = vmatprep.subr.bf16.mxu0 0
      %2507 = vmatpush1.bf16.msra.mxu0 0
      %2508 = vmatprep.subr.bf16.mxu0 0
      %2509 = vmatpush1.bf16.msra.mxu0 0
      %2510 = vmatprep.subr.bf16.mxu0 0
      %2511 = vmatpush1.bf16.msra.mxu0 0
      %2512 = vmatprep.subr.bf16.mxu0 0
      %2513 = vmatpush1.bf16.msra.mxu0 0
      %2514 = vmatprep.subr.bf16.mxu0 0
      %2515 = vmatpush1.bf16.msra.mxu0 0
      %2516 = vmatprep.subr.bf16.mxu0 0
      %2517 = vmatpush1.bf16.msra.mxu0 0
      %2518 = vmatprep.subr.bf16.mxu0 0
      %2519 = vmatpush1.bf16.msra.mxu0 0
      %2520 = vmatprep.subr.bf16.mxu0 0
      %2521 = vmatpush1.bf16.msra.mxu0 0
      %2522 = vmatprep.subr.bf16.mxu0 0
      %2523 = vmatpush1.bf16.msra.mxu0 0
      %2524 = vmatprep.mubr.bf16.mxu0 0
      %2525 = vmatmul.mubr.bf16.gmra.mrb[0].mxu0 %v2384
      %v2526 = vpop.f32.mrb[0].mxu0
      %v2527 = vadd.f32 0.0, %v2526
      %v2528 = vpop.f32.mrb[0].mxu0
      %v2529 = vadd.f32 0.0, %v2528
      %v2530 = vpop.f32.mrb[0].mxu0
      %v2531 = vpop.f32.mrb[0].mxu0
      %2532 = vdwg.mxu0
      %2533 = vmatprep.subr.bf16.mxu0 %v2408
      %2534 = vmatpush1.bf16.msra.mxu0 %v2405
      %2535 = vmatprep.subr.bf16.mxu0 0
      %2536 = vmatpush1.bf16.msra.mxu0 0
      %2537 = vmatprep.subr.bf16.mxu0 0
      %2538 = vmatpush1.bf16.msra.mxu0 0
      %2539 = vmatprep.subr.bf16.mxu0 0
      %2540 = vmatpush1.bf16.msra.mxu0 0
      %2541 = vmatprep.subr.bf16.mxu0 0
      %2542 = vmatpush1.bf16.msra.mxu0 0
      %2543 = vmatprep.subr.bf16.mxu0 0
      %2544 = vmatpush1.bf16.msra.mxu0 0
      %2545 = vmatprep.subr.bf16.mxu0 0
      %2546 = vmatpush1.bf16.msra.mxu0 0
      %2547 = vmatprep.subr.bf16.mxu0 0
      %2548 = vmatpush1.bf16.msra.mxu0 0
      %2549 = vmatprep.subr.bf16.mxu0 0
      %2550 = vmatpush1.bf16.msra.mxu0 0
      %2551 = vmatprep.subr.bf16.mxu0 0
      %2552 = vmatpush1.bf16.msra.mxu0 0
      %2553 = vmatprep.subr.bf16.mxu0 0
      %2554 = vmatpush1.bf16.msra.mxu0 0
      %2555 = vmatprep.subr.bf16.mxu0 0
      %2556 = vmatpush1.bf16.msra.mxu0 0
      %2557 = vmatprep.subr.bf16.mxu0 0
      %2558 = vmatpush1.bf16.msra.mxu0 0
      %2559 = vmatprep.subr.bf16.mxu0 0
      %2560 = vmatpush1.bf16.msra.mxu0 0
      %2561 = vmatprep.subr.bf16.mxu0 0
      %2562 = vmatpush1.bf16.msra.mxu0 0
      %2563 = vmatprep.subr.bf16.mxu0 0
      %2564 = vmatpush1.bf16.msra.mxu0 0
      %2565 = vmatprep.mubr.bf16.mxu0 0
      %2566 = vmatmul.mubr.bf16.gmra.mrb[0].mxu0 %v2384
      %v2567 = vpop.f32.mrb[0].mxu0
      %v2568 = vadd.f32 0.0, %v2567
      %v2569 = vpop.f32.mrb[0].mxu0
      %v2570 = vadd.f32 0.0, %v2569
      %v2571 = vpop.f32.mrb[0].mxu0
      %v2572 = vpop.f32.mrb[0].mxu0
      %2573 = vdwg.mxu0
      %v2574 = vadd.f32 %v2299, %v2445
      %v2575 = vadd.f32 %v2300, %v2447
      %v2576 = vadd.f32 %v2301, %v2486
      %v2577 = vadd.f32 %v2302, %v2488
      %v2578 = vadd.f32 %v2303, %v2527
      %v2579 = vadd.f32 %v2304, %v2529
      %v2580 = vadd.f32 %v2305, %v2568
      %v2581 = vadd.f32 %v2306, %v2570
      %s2582 = scalar_lea.vmem %s0, 32
      %v2583 = vld [vmem:[%s2582] sm:$0xf]
      %v2584 = vld [vmem:[#allocation2] sm:$0xff]
      %v2585 = vld [vmem:[#allocation2 + $0x8] sm:$0xff]
      %v2586 = vld [vmem:[#allocation2 + $0x10] sm:$0x3]
      %v2590 = vcombine.high %v2584, %v2584
      %v2592 = vunpack.c.l.s4 1983009808
      %v2593 = vunpack.c.0.s8 %v2592
      %v2594 = vlaneseq
      %v2595 = vshrl.u32 %v2594, 7
      %v2596 = vsub.s32 %v2593, %v2595
      %v2597 = vrot.slane %v2584, %v2596
      %v2599 = vunpack.c.l.s4 1983009808
      %v2600 = vunpack.c.0.s8 %v2599
      %v2601 = vlaneseq
      %v2602 = vshrl.u32 %v2601, 7
      %v2603 = vsub.s32 %v2600, %v2602
      %v2604 = vrot.slane %v2590, %v2603
      %v2605 = vcombine.high %v2597, %v2597
      %v2606 = vcombine.high %v2604, %v2604
      %v2607 = vcombine.high %v2585, %v2585
      %v2609 = vunpack.c.l.s4 1983009808
      %v2610 = vunpack.c.0.s8 %v2609
      %v2611 = vlaneseq
      %v2612 = vshrl.u32 %v2611, 7
      %v2613 = vsub.s32 %v2610, %v2612
      %v2614 = vrot.slane %v2585, %v2613
      %v2616 = vunpack.c.l.s4 1983009808
      %v2617 = vunpack.c.0.s8 %v2616
      %v2618 = vlaneseq
      %v2619 = vshrl.u32 %v2618, 7
      %v2620 = vsub.s32 %v2617, %v2619
      %v2621 = vrot.slane %v2607, %v2620
      %v2622 = vcombine.high %v2614, %v2614
      %v2623 = vcombine.high %v2621, %v2621
      %v2625 = vunpack.c.l.s4 1983009808
      %v2626 = vunpack.c.0.s8 %v2625
      %v2627 = vlaneseq
      %v2628 = vshrl.u32 %v2627, 7
      %v2629 = vsub.s32 %v2626, %v2628
      %v2630 = vrot.slane %v2586, %v2629
      %2631 = vrot.lane.b32.xlu0 %v2597, 106
      %v2632 = vpop.permute.xlu0 %2631
      %2633 = vrot.lane.b32.xlu0 %v2605, 106
      %v2634 = vpop.permute.xlu0 %2633
      %2635 = vrot.lane.b32.xlu0 %v2604, 106
      %v2636 = vpop.permute.xlu0 %2635
      %2637 = vrot.lane.b32.xlu0 %v2606, 106
      %v2638 = vpop.permute.xlu0 %2637
      %2639 = vrot.lane.b32.xlu0 %v2614, 106
      %v2640 = vpop.permute.xlu0 %2639
      %2641 = vrot.lane.b32.xlu0 %v2622, 106
      %v2642 = vpop.permute.xlu0 %2641
      %2643 = vrot.lane.b32.xlu0 %v2621, 106
      %v2644 = vpop.permute.xlu0 %2643
      %2645 = vrot.lane.b32.xlu0 %v2623, 106
      %v2646 = vpop.permute.xlu0 %2645
      %2647 = vrot.lane.b32.xlu0 %v2630, 106
      %v2648 = vpop.permute.xlu0 %2647
      %vm2649 = vcmask 867328
      %v2650 = vsel %vm2649, %v2632, %v2634
      %v2651 = vsel %vm2649, %v2634, %v2636
      %v2652 = vsel %vm2649, %v2636, %v2638
      %v2653 = vsel %vm2649, %v2638, %v2640
      %v2654 = vsel %vm2649, %v2640, %v2642
      %v2655 = vsel %vm2649, %v2642, %v2644
      %v2656 = vsel %vm2649, %v2644, %v2646
      %v2657 = vsel %vm2649, %v2646, %v2648
      %v2659 = vsel %vm548, %v2583, 0
      %v2662 = vsel %vm552, %v2650, 0
      %v2665 = vsel %vm552, %v2651, 0
      %v2668 = vsel %vm552, %v2652, 0
      %v2671 = vsel %vm552, %v2653, 0
      %v2674 = vsel %vm552, %v2654, 0
      %v2677 = vsel %vm552, %v2655, 0
      %v2680 = vsel %vm552, %v2656, 0
      %v2683 = vsel %vm552, %v2657, 0
      %2685 = vmatprep.subr.bf16.mxu0 %v2665
      %2686 = vmatpush1.bf16.msra.mxu0 %v2662
      %2687 = vmatprep.subr.bf16.mxu0 0
      %2688 = vmatpush1.bf16.msra.mxu0 0
      %2689 = vmatprep.subr.bf16.mxu0 0
      %2690 = vmatpush1.bf16.msra.mxu0 0
      %2691 = vmatprep.subr.bf16.mxu0 0
      %2692 = vmatpush1.bf16.msra.mxu0 0
      %2693 = vmatprep.subr.bf16.mxu0 0
      %2694 = vmatpush1.bf16.msra.mxu0 0
      %2695 = vmatprep.subr.bf16.mxu0 0
      %2696 = vmatpush1.bf16.msra.mxu0 0
      %2697 = vmatprep.subr.bf16.mxu0 0
      %2698 = vmatpush1.bf16.msra.mxu0 0
      %2699 = vmatprep.subr.bf16.mxu0 0
      %2700 = vmatpush1.bf16.msra.mxu0 0
      %2701 = vmatprep.subr.bf16.mxu0 0
      %2702 = vmatpush1.bf16.msra.mxu0 0
      %2703 = vmatprep.subr.bf16.mxu0 0
      %2704 = vmatpush1.bf16.msra.mxu0 0
      %2705 = vmatprep.subr.bf16.mxu0 0
      %2706 = vmatpush1.bf16.msra.mxu0 0
      %2707 = vmatprep.subr.bf16.mxu0 0
      %2708 = vmatpush1.bf16.msra.mxu0 0
      %2709 = vmatprep.subr.bf16.mxu0 0
      %2710 = vmatpush1.bf16.msra.mxu0 0
      %2711 = vmatprep.subr.bf16.mxu0 0
      %2712 = vmatpush1.bf16.msra.mxu0 0
      %2713 = vmatprep.subr.bf16.mxu0 0
      %2714 = vmatpush1.bf16.msra.mxu0 0
      %2715 = vmatprep.subr.bf16.mxu0 0
      %2716 = vmatpush1.bf16.msra.mxu0 0
      %2717 = vmatprep.mubr.bf16.mxu0 0
      %2718 = vmatmul.mubr.bf16.gmra.mrb[0].mxu0 %v2659
      %v2719 = vpop.f32.mrb[0].mxu0
      %v2720 = vadd.f32 0.0, %v2719
      %v2721 = vpop.f32.mrb[0].mxu0
      %v2722 = vadd.f32 0.0, %v2721
      %v2723 = vpop.f32.mrb[0].mxu0
      %v2724 = vpop.f32.mrb[0].mxu0
      %2725 = vdwg.mxu0
      %2726 = vmatprep.subr.bf16.mxu0 %v2671
      %2727 = vmatpush1.bf16.msra.mxu0 %v2668
      %2728 = vmatprep.subr.bf16.mxu0 0
      %2729 = vmatpush1.bf16.msra.mxu0 0
      %2730 = vmatprep.subr.bf16.mxu0 0
      %2731 = vmatpush1.bf16.msra.mxu0 0
      %2732 = vmatprep.subr.bf16.mxu0 0
      %2733 = vmatpush1.bf16.msra.mxu0 0
      %2734 = vmatprep.subr.bf16.mxu0 0
      %2735 = vmatpush1.bf16.msra.mxu0 0
      %2736 = vmatprep.subr.bf16.mxu0 0
      %2737 = vmatpush1.bf16.msra.mxu0 0
      %2738 = vmatprep.subr.bf16.mxu0 0
      %2739 = vmatpush1.bf16.msra.mxu0 0
      %2740 = vmatprep.subr.bf16.mxu0 0
      %2741 = vmatpush1.bf16.msra.mxu0 0
      %2742 = vmatprep.subr.bf16.mxu0 0
      %2743 = vmatpush1.bf16.msra.mxu0 0
      %2744 = vmatprep.subr.bf16.mxu0 0
      %2745 = vmatpush1.bf16.msra.mxu0 0
      %2746 = vmatprep.subr.bf16.mxu0 0
      %2747 = vmatpush1.bf16.msra.mxu0 0
      %2748 = vmatprep.subr.bf16.mxu0 0
      %2749 = vmatpush1.bf16.msra.mxu0 0
      %2750 = vmatprep.subr.bf16.mxu0 0
      %2751 = vmatpush1.bf16.msra.mxu0 0
      %2752 = vmatprep.subr.bf16.mxu0 0
      %2753 = vmatpush1.bf16.msra.mxu0 0
      %2754 = vmatprep.subr.bf16.mxu0 0
      %2755 = vmatpush1.bf16.msra.mxu0 0
      %2756 = vmatprep.subr.bf16.mxu0 0
      %2757 = vmatpush1.bf16.msra.mxu0 0
      %2758 = vmatprep.mubr.bf16.mxu0 0
      %2759 = vmatmul.mubr.bf16.gmra.mrb[0].mxu0 %v2659
      %v2760 = vpop.f32.mrb[0].mxu0
      %v2761 = vadd.f32 0.0, %v2760
      %v2762 = vpop.f32.mrb[0].mxu0
      %v2763 = vadd.f32 0.0, %v2762
      %v2764 = vpop.f32.mrb[0].mxu0
      %v2765 = vpop.f32.mrb[0].mxu0
      %2766 = vdwg.mxu0
      %2767 = vmatprep.subr.bf16.mxu0 %v2677
      %2768 = vmatpush1.bf16.msra.mxu0 %v2674
      %2769 = vmatprep.subr.bf16.mxu0 0
      %2770 = vmatpush1.bf16.msra.mxu0 0
      %2771 = vmatprep.subr.bf16.mxu0 0
      %2772 = vmatpush1.bf16.msra.mxu0 0
      %2773 = vmatprep.subr.bf16.mxu0 0
      %2774 = vmatpush1.bf16.msra.mxu0 0
      %2775 = vmatprep.subr.bf16.mxu0 0
      %2776 = vmatpush1.bf16.msra.mxu0 0
      %2777 = vmatprep.subr.bf16.mxu0 0
      %2778 = vmatpush1.bf16.msra.mxu0 0
      %2779 = vmatprep.subr.bf16.mxu0 0
      %2780 = vmatpush1.bf16.msra.mxu0 0
      %2781 = vmatprep.subr.bf16.mxu0 0
      %2782 = vmatpush1.bf16.msra.mxu0 0
      %2783 = vmatprep.subr.bf16.mxu0 0
      %2784 = vmatpush1.bf16.msra.mxu0 0
      %2785 = vmatprep.subr.bf16.mxu0 0
      %2786 = vmatpush1.bf16.msra.mxu0 0
      %2787 = vmatprep.subr.bf16.mxu0 0
      %2788 = vmatpush1.bf16.msra.mxu0 0
      %2789 = vmatprep.subr.bf16.mxu0 0
      %2790 = vmatpush1.bf16.msra.mxu0 0
      %2791 = vmatprep.subr.bf16.mxu0 0
      %2792 = vmatpush1.bf16.msra.mxu0 0
      %2793 = vmatprep.subr.bf16.mxu0 0
      %2794 = vmatpush1.bf16.msra.mxu0 0
      %2795 = vmatprep.subr.bf16.mxu0 0
      %2796 = vmatpush1.bf16.msra.mxu0 0
      %2797 = vmatprep.subr.bf16.mxu0 0
      %2798 = vmatpush1.bf16.msra.mxu0 0
      %2799 = vmatprep.mubr.bf16.mxu0 0
      %2800 = vmatmul.mubr.bf16.gmra.mrb[0].mxu0 %v2659
      %v2801 = vpop.f32.mrb[0].mxu0
      %v2802 = vadd.f32 0.0, %v2801
      %v2803 = vpop.f32.mrb[0].mxu0
      %v2804 = vadd.f32 0.0, %v2803
      %v2805 = vpop.f32.mrb[0].mxu0
      %v2806 = vpop.f32.mrb[0].mxu0
      %2807 = vdwg.mxu0
      %2808 = vmatprep.subr.bf16.mxu0 %v2683
      %2809 = vmatpush1.bf16.msra.mxu0 %v2680
      %2810 = vmatprep.subr.bf16.mxu0 0
      %2811 = vmatpush1.bf16.msra.mxu0 0
      %2812 = vmatprep.subr.bf16.mxu0 0
      %2813 = vmatpush1.bf16.msra.mxu0 0
      %2814 = vmatprep.subr.bf16.mxu0 0
      %2815 = vmatpush1.bf16.msra.mxu0 0
      %2816 = vmatprep.subr.bf16.mxu0 0
      %2817 = vmatpush1.bf16.msra.mxu0 0
      %2818 = vmatprep.subr.bf16.mxu0 0
      %2819 = vmatpush1.bf16.msra.mxu0 0
      %2820 = vmatprep.subr.bf16.mxu0 0
      %2821 = vmatpush1.bf16.msra.mxu0 0
      %2822 = vmatprep.subr.bf16.mxu0 0
      %2823 = vmatpush1.bf16.msra.mxu0 0
      %2824 = vmatprep.subr.bf16.mxu0 0
      %2825 = vmatpush1.bf16.msra.mxu0 0
      %2826 = vmatprep.subr.bf16.mxu0 0
      %2827 = vmatpush1.bf16.msra.mxu0 0
      %2828 = vmatprep.subr.bf16.mxu0 0
      %2829 = vmatpush1.bf16.msra.mxu0 0
      %2830 = vmatprep.subr.bf16.mxu0 0
      %2831 = vmatpush1.bf16.msra.mxu0 0
      %2832 = vmatprep.subr.bf16.mxu0 0
      %2833 = vmatpush1.bf16.msra.mxu0 0
      %2834 = vmatprep.subr.bf16.mxu0 0
      %2835 = vmatpush1.bf16.msra.mxu0 0
      %2836 = vmatprep.subr.bf16.mxu0 0
      %2837 = vmatpush1.bf16.msra.mxu0 0
      %2838 = vmatprep.subr.bf16.mxu0 0
      %2839 = vmatpush1.bf16.msra.mxu0 0
      %2840 = vmatprep.mubr.bf16.mxu0 0
      %2841 = vmatmul.mubr.bf16.gmra.mrb[0].mxu0 %v2659
      %v2842 = vpop.f32.mrb[0].mxu0
      %v2843 = vadd.f32 0.0, %v2842
      %v2844 = vpop.f32.mrb[0].mxu0
      %v2845 = vadd.f32 0.0, %v2844
      %v2846 = vpop.f32.mrb[0].mxu0
      %v2847 = vpop.f32.mrb[0].mxu0
      %2848 = vdwg.mxu0
      %v2849 = vadd.f32 %v2574, %v2720
      %v2850 = vadd.f32 %v2575, %v2722
      %v2851 = vadd.f32 %v2576, %v2761
      %v2852 = vadd.f32 %v2577, %v2763
      %v2853 = vadd.f32 %v2578, %v2802
      %v2854 = vadd.f32 %v2579, %v2804
      %v2855 = vadd.f32 %v2580, %v2843
      %v2856 = vadd.f32 %v2581, %v2845
      %vm2857 = vcmp.ge.f32.partialorder %v2849, 0.0
      %vm2858 = vcmp.ge.f32.partialorder %v2850, 0.0
      %vm2859 = vcmp.ge.f32.partialorder %v2851, 0.0
      %vm2860 = vcmp.ge.f32.partialorder %v2852, 0.0
      %vm2861 = vcmp.ge.f32.partialorder %v2853, 0.0
      %vm2862 = vcmp.ge.f32.partialorder %v2854, 0.0
      %vm2863 = vcmp.ge.f32.partialorder %v2855, 0.0
      %vm2864 = vcmp.ge.f32.partialorder %v2856, 0.0
      %v2865 = vmul.f32 %v2849, 0.01
      %v2866 = vmul.f32 %v2850, 0.01
      %v2867 = vmul.f32 %v2851, 0.01
      %v2868 = vmul.f32 %v2852, 0.01
      %v2869 = vmul.f32 %v2853, 0.01
      %v2870 = vmul.f32 %v2854, 0.01
      %v2871 = vmul.f32 %v2855, 0.01
      %v2872 = vmul.f32 %v2856, 0.01
      %v2873 = vsel %vm2857, %v2849, %v2865
      %v2874 = vsel %vm2858, %v2850, %v2866
      %v2875 = vsel %vm2859, %v2851, %v2867
      %v2876 = vsel %vm2860, %v2852, %v2868
      %v2877 = vsel %vm2861, %v2853, %v2869
      %v2878 = vsel %vm2862, %v2854, %v2870
      %v2879 = vsel %vm2863, %v2855, %v2871
      %v2880 = vsel %vm2864, %v2856, %v2872
      %2881 = vst [vmem:[%s448] sm:$0xff] %v2873
      %2882 = vst [vmem:[%s448 + $0x8] sm:$0xff] %v2874
      %2883 = vst [vmem:[%s448 + $0x10] sm:$0xff] %v2875
      %2884 = vst [vmem:[%s448 + $0x18] sm:$0xff] %v2876
      %2885 = vst [vmem:[%s448 + $0x20] sm:$0xff] %v2877
      %2886 = vst [vmem:[%s448 + $0x28] sm:$0xff] %v2878
      %2887 = vst [vmem:[%s448 + $0x30] sm:$0xff] %v2879
      %2888 = vst [vmem:[%s448 + $0x38] sm:$0xff] %v2880
      %v2889 = vld [vmem:[%s437] sm:$0xff]
      %v2891 = vlaneseq
      %v2892 = vshrl.u32 %v2891, 7
      %v2893 = vsub.s32 0, %v2892
      %v2894 = vrot.slane %v2889, %v2893
      %v2895 = vlaneseq
      %v2896 = vshrl.u32 %v2895, 7
      %v2897 = vsub.s32 1, %v2896
      %v2898 = vrot.slane %v2889, %v2897
      %v2899 = vlaneseq
      %v2900 = vshrl.u32 %v2899, 7
      %v2901 = vsub.s32 2, %v2900
      %v2902 = vrot.slane %v2889, %v2901
      %v2903 = vlaneseq
      %v2904 = vshrl.u32 %v2903, 7
      %v2905 = vsub.s32 3, %v2904
      %v2906 = vrot.slane %v2889, %v2905
      %v2907 = vlaneseq
      %v2908 = vshrl.u32 %v2907, 7
      %v2909 = vsub.s32 4, %v2908
      %v2910 = vrot.slane %v2889, %v2909
      %v2911 = vlaneseq
      %v2912 = vshrl.u32 %v2911, 7
      %v2913 = vsub.s32 5, %v2912
      %v2914 = vrot.slane %v2889, %v2913
      %v2915 = vlaneseq
      %v2916 = vshrl.u32 %v2915, 7
      %v2917 = vsub.s32 6, %v2916
      %v2918 = vrot.slane %v2889, %v2917
      %v2919 = vlaneseq
      %v2920 = vshrl.u32 %v2919, 7
      %v2921 = vsub.s32 7, %v2920
      %v2922 = vrot.slane %v2889, %v2921
      %v2931 = vmul.f32 %v2873, %v2894
      %v2932 = vmul.f32 %v2874, %v2898
      %v2933 = vmul.f32 %v2875, %v2902
      %v2934 = vmul.f32 %v2876, %v2906
      %v2935 = vmul.f32 %v2877, %v2910
      %v2936 = vmul.f32 %v2878, %v2914
      %v2937 = vmul.f32 %v2879, %v2918
      %v2938 = vmul.f32 %v2880, %v2922
      %v2939 = vadd.f32 %v2931, %v2932
      %v2940 = vadd.f32 %v2939, %v2933
      %v2941 = vadd.f32 %v2940, %v2934
      %v2942 = vadd.f32 %v2941, %v2935
      %v2943 = vadd.f32 %v2942, %v2936
      %v2944 = vadd.f32 %v2943, %v2937
      %v2945 = vadd.f32 %v2944, %v2938
      %2946 = vadd.xlane.f32.xlu0 %v2945
      %v2947 = vpop.xlane.xlu0 %2946
      %v2948 = vmul.f32 %v2931, %v2873
      %v2949 = vmul.f32 %v2932, %v2874
      %v2950 = vmul.f32 %v2933, %v2875
      %v2951 = vmul.f32 %v2934, %v2876
      %v2952 = vmul.f32 %v2935, %v2877
      %v2953 = vmul.f32 %v2936, %v2878
      %v2954 = vmul.f32 %v2937, %v2879
      %v2955 = vmul.f32 %v2938, %v2880
      %v2956 = vadd.f32 %v2948, %v2949
      %v2957 = vadd.f32 %v2956, %v2950
      %v2958 = vadd.f32 %v2957, %v2951
      %v2959 = vadd.f32 %v2958, %v2952
      %v2960 = vadd.f32 %v2959, %v2953
      %v2961 = vadd.f32 %v2960, %v2954
      %v2962 = vadd.f32 %v2961, %v2955
      %2963 = vadd.xlane.f32.xlu0 %v2962
      %v2964 = vpop.xlane.xlu0 %2963
      %vm2965 = vcmask 7168
      %v2966 = vsel %vm2965, %v2947, %v2964
      %vm2967 = vcmask 15360
      %2968 = vst.msk [vmem:[%s459] sm:$0xff] %vm2967, %v2966
      %v2969 = vld [vmem:[%s1] sm:$0xf]
      %v2970 = vld [vmem:[#allocation2] sm:$0xff]
      %v2971 = vld [vmem:[#allocation2 + $0x8] sm:$0xff]
      %s2972 = scalar_lea.vmem %s1, 4
      %v2973 = vld [vmem:[%s2972] sm:$0xf]
      %v2974 = vld [vmem:[#allocation2 + $0x10] sm:$0x3]
      %v2978 = vcombine.high %v2970, %v2970
      %v2980 = vunpack.c.l.s4 1983009808
      %v2981 = vunpack.c.0.s8 %v2980
      %v2982 = vlaneseq
      %v2983 = vshrl.u32 %v2982, 7
      %v2984 = vsub.s32 %v2981, %v2983
      %v2985 = vrot.slane %v2970, %v2984
      %v2987 = vunpack.c.l.s4 1983009808
      %v2988 = vunpack.c.0.s8 %v2987
      %v2989 = vlaneseq
      %v2990 = vshrl.u32 %v2989, 7
      %v2991 = vsub.s32 %v2988, %v2990
      %v2992 = vrot.slane %v2978, %v2991
      %v2993 = vcombine.high %v2985, %v2985
      %v2994 = vcombine.high %v2992, %v2992
      %v2995 = vcombine.high %v2971, %v2971
      %v2997 = vunpack.c.l.s4 1983009808
      %v2998 = vunpack.c.0.s8 %v2997
      %v2999 = vlaneseq
      %v3000 = vshrl.u32 %v2999, 7
      %v3001 = vsub.s32 %v2998, %v3000
      %v3002 = vrot.slane %v2971, %v3001
      %v3004 = vunpack.c.l.s4 1983009808
      %v3005 = vunpack.c.0.s8 %v3004
      %v3006 = vlaneseq
      %v3007 = vshrl.u32 %v3006, 7
      %v3008 = vsub.s32 %v3005, %v3007
      %v3009 = vrot.slane %v2995, %v3008
      %v3010 = vcombine.high %v3002, %v3002
      %v3011 = vcombine.high %v3009, %v3009
      %v3013 = vunpack.c.l.s4 1983009808
      %v3014 = vunpack.c.0.s8 %v3013
      %v3015 = vlaneseq
      %v3016 = vshrl.u32 %v3015, 7
      %v3017 = vsub.s32 %v3014, %v3016
      %v3018 = vrot.slane %v2974, %v3017
      %3019 = vrot.lane.b32.xlu0 %v2985, 127
      %v3020 = vpop.permute.xlu0 %3019
      %3021 = vrot.lane.b32.xlu0 %v2993, 127
      %v3022 = vpop.permute.xlu0 %3021
      %3023 = vrot.lane.b32.xlu0 %v2992, 127
      %v3024 = vpop.permute.xlu0 %3023
      %3025 = vrot.lane.b32.xlu0 %v2994, 127
      %v3026 = vpop.permute.xlu0 %3025
      %3027 = vrot.lane.b32.xlu0 %v3002, 127
      %v3028 = vpop.permute.xlu0 %3027
      %3029 = vrot.lane.b32.xlu0 %v3010, 127
      %v3030 = vpop.permute.xlu0 %3029
      %3031 = vrot.lane.b32.xlu0 %v3009, 127
      %v3032 = vpop.permute.xlu0 %3031
      %3033 = vrot.lane.b32.xlu0 %v3011, 127
      %v3034 = vpop.permute.xlu0 %3033
      %3035 = vrot.lane.b32.xlu0 %v3018, 127
      %v3036 = vpop.permute.xlu0 %3035
      %v3037 = vsel %vm539, %v3020, %v3022
      %v3038 = vsel %vm539, %v3022, %v3024
      %v3039 = vsel %vm539, %v3024, %v3026
      %v3040 = vsel %vm539, %v3026, %v3028
      %v3041 = vsel %vm539, %v3028, %v3030
      %v3042 = vsel %vm539, %v3030, %v3032
      %v3043 = vsel %vm539, %v3032, %v3034
      %v3044 = vsel %vm539, %v3034, %v3036
      %v3046 = vsel %vm548, %v2973, 0
      %v3049 = vsel %vm552, %v3037, 0
      %v3052 = vsel %vm552, %v3038, 0
      %v3055 = vsel %vm552, %v3039, 0
      %v3058 = vsel %vm552, %v3040, 0
      %v3061 = vsel %vm552, %v3041, 0
      %v3064 = vsel %vm552, %v3042, 0
      %v3067 = vsel %vm552, %v3043, 0
      %v3070 = vsel %vm552, %v3044, 0
      %3072 = vmatprep.subr.bf16.mxu0 %v3052
      %3073 = vmatpush1.bf16.msra.mxu0 %v3049
      %3074 = vmatprep.subr.bf16.mxu0 0
      %3075 = vmatpush1.bf16.msra.mxu0 0
      %3076 = vmatprep.subr.bf16.mxu0 0
      %3077 = vmatpush1.bf16.msra.mxu0 0
      %3078 = vmatprep.subr.bf16.mxu0 0
      %3079 = vmatpush1.bf16.msra.mxu0 0
      %3080 = vmatprep.subr.bf16.mxu0 0
      %3081 = vmatpush1.bf16.msra.mxu0 0
      %3082 = vmatprep.subr.bf16.mxu0 0
      %3083 = vmatpush1.bf16.msra.mxu0 0
      %3084 = vmatprep.subr.bf16.mxu0 0
      %3085 = vmatpush1.bf16.msra.mxu0 0
      %3086 = vmatprep.subr.bf16.mxu0 0
      %3087 = vmatpush1.bf16.msra.mxu0 0
      %3088 = vmatprep.subr.bf16.mxu0 0
      %3089 = vmatpush1.bf16.msra.mxu0 0
      %3090 = vmatprep.subr.bf16.mxu0 0
      %3091 = vmatpush1.bf16.msra.mxu0 0
      %3092 = vmatprep.subr.bf16.mxu0 0
      %3093 = vmatpush1.bf16.msra.mxu0 0
      %3094 = vmatprep.subr.bf16.mxu0 0
      %3095 = vmatpush1.bf16.msra.mxu0 0
      %3096 = vmatprep.subr.bf16.mxu0 0
      %3097 = vmatpush1.bf16.msra.mxu0 0
      %3098 = vmatprep.subr.bf16.mxu0 0
      %3099 = vmatpush1.bf16.msra.mxu0 0
      %3100 = vmatprep.subr.bf16.mxu0 0
      %3101 = vmatpush1.bf16.msra.mxu0 0
      %3102 = vmatprep.subr.bf16.mxu0 0
      %3103 = vmatpush1.bf16.msra.mxu0 0
      %3104 = vmatprep.mubr.bf16.mxu0 0
      %3105 = vmatmul.mubr.bf16.gmra.mrb[0].mxu0 %v3046
      %v3106 = vpop.f32.mrb[0].mxu0
      %v3107 = vadd.f32 0.0, %v3106
      %v3108 = vpop.f32.mrb[0].mxu0
      %v3109 = vadd.f32 0.0, %v3108
      %v3110 = vpop.f32.mrb[0].mxu0
      %v3111 = vpop.f32.mrb[0].mxu0
      %3112 = vdwg.mxu0
      %3113 = vmatprep.subr.bf16.mxu0 %v3058
      %3114 = vmatpush1.bf16.msra.mxu0 %v3055
      %3115 = vmatprep.subr.bf16.mxu0 0
      %3116 = vmatpush1.bf16.msra.mxu0 0
      %3117 = vmatprep.subr.bf16.mxu0 0
      %3118 = vmatpush1.bf16.msra.mxu0 0
      %3119 = vmatprep.subr.bf16.mxu0 0
      %3120 = vmatpush1.bf16.msra.mxu0 0
      %3121 = vmatprep.subr.bf16.mxu0 0
      %3122 = vmatpush1.bf16.msra.mxu0 0
      %3123 = vmatprep.subr.bf16.mxu0 0
      %3124 = vmatpush1.bf16.msra.mxu0 0
      %3125 = vmatprep.subr.bf16.mxu0 0
      %3126 = vmatpush1.bf16.msra.mxu0 0
      %3127 = vmatprep.subr.bf16.mxu0 0
      %3128 = vmatpush1.bf16.msra.mxu0 0
      %3129 = vmatprep.subr.bf16.mxu0 0
      %3130 = vmatpush1.bf16.msra.mxu0 0
      %3131 = vmatprep.subr.bf16.mxu0 0
      %3132 = vmatpush1.bf16.msra.mxu0 0
      %3133 = vmatprep.subr.bf16.mxu0 0
      %3134 = vmatpush1.bf16.msra.mxu0 0
      %3135 = vmatprep.subr.bf16.mxu0 0
      %3136 = vmatpush1.bf16.msra.mxu0 0
      %3137 = vmatprep.subr.bf16.mxu0 0
      %3138 = vmatpush1.bf16.msra.mxu0 0
      %3139 = vmatprep.subr.bf16.mxu0 0
      %3140 = vmatpush1.bf16.msra.mxu0 0
      %3141 = vmatprep.subr.bf16.mxu0 0
      %3142 = vmatpush1.bf16.msra.mxu0 0
      %3143 = vmatprep.subr.bf16.mxu0 0
      %3144 = vmatpush1.bf16.msra.mxu0 0
      %3145 = vmatprep.mubr.bf16.mxu0 0
      %3146 = vmatmul.mubr.bf16.gmra.mrb[0].mxu0 %v3046
      %v3147 = vpop.f32.mrb[0].mxu0
      %v3148 = vadd.f32 0.0, %v3147
      %v3149 = vpop.f32.mrb[0].mxu0
      %v3150 = vadd.f32 0.0, %v3149
      %v3151 = vpop.f32.mrb[0].mxu0
      %v3152 = vpop.f32.mrb[0].mxu0
      %3153 = vdwg.mxu0
      %3154 = vmatprep.subr.bf16.mxu0 %v3064
      %3155 = vmatpush1.bf16.msra.mxu0 %v3061
      %3156 = vmatprep.subr.bf16.mxu0 0
      %3157 = vmatpush1.bf16.msra.mxu0 0
      %3158 = vmatprep.subr.bf16.mxu0 0
      %3159 = vmatpush1.bf16.msra.mxu0 0
      %3160 = vmatprep.subr.bf16.mxu0 0
      %3161 = vmatpush1.bf16.msra.mxu0 0
      %3162 = vmatprep.subr.bf16.mxu0 0
      %3163 = vmatpush1.bf16.msra.mxu0 0
      %3164 = vmatprep.subr.bf16.mxu0 0
      %3165 = vmatpush1.bf16.msra.mxu0 0
      %3166 = vmatprep.subr.bf16.mxu0 0
      %3167 = vmatpush1.bf16.msra.mxu0 0
      %3168 = vmatprep.subr.bf16.mxu0 0
      %3169 = vmatpush1.bf16.msra.mxu0 0
      %3170 = vmatprep.subr.bf16.mxu0 0
      %3171 = vmatpush1.bf16.msra.mxu0 0
      %3172 = vmatprep.subr.bf16.mxu0 0
      %3173 = vmatpush1.bf16.msra.mxu0 0
      %3174 = vmatprep.subr.bf16.mxu0 0
      %3175 = vmatpush1.bf16.msra.mxu0 0
      %3176 = vmatprep.subr.bf16.mxu0 0
      %3177 = vmatpush1.bf16.msra.mxu0 0
      %3178 = vmatprep.subr.bf16.mxu0 0
      %3179 = vmatpush1.bf16.msra.mxu0 0
      %3180 = vmatprep.subr.bf16.mxu0 0
      %3181 = vmatpush1.bf16.msra.mxu0 0
      %3182 = vmatprep.subr.bf16.mxu0 0
      %3183 = vmatpush1.bf16.msra.mxu0 0
      %3184 = vmatprep.subr.bf16.mxu0 0
      %3185 = vmatpush1.bf16.msra.mxu0 0
      %3186 = vmatprep.mubr.bf16.mxu0 0
      %3187 = vmatmul.mubr.bf16.gmra.mrb[0].mxu0 %v3046
      %v3188 = vpop.f32.mrb[0].mxu0
      %v3189 = vadd.f32 0.0, %v3188
      %v3190 = vpop.f32.mrb[0].mxu0
      %v3191 = vadd.f32 0.0, %v3190
      %v3192 = vpop.f32.mrb[0].mxu0
      %v3193 = vpop.f32.mrb[0].mxu0
      %3194 = vdwg.mxu0
      %3195 = vmatprep.subr.bf16.mxu0 %v3070
      %3196 = vmatpush1.bf16.msra.mxu0 %v3067
      %3197 = vmatprep.subr.bf16.mxu0 0
      %3198 = vmatpush1.bf16.msra.mxu0 0
      %3199 = vmatprep.subr.bf16.mxu0 0
      %3200 = vmatpush1.bf16.msra.mxu0 0
      %3201 = vmatprep.subr.bf16.mxu0 0
      %3202 = vmatpush1.bf16.msra.mxu0 0
      %3203 = vmatprep.subr.bf16.mxu0 0
      %3204 = vmatpush1.bf16.msra.mxu0 0
      %3205 = vmatprep.subr.bf16.mxu0 0
      %3206 = vmatpush1.bf16.msra.mxu0 0
      %3207 = vmatprep.subr.bf16.mxu0 0
      %3208 = vmatpush1.bf16.msra.mxu0 0
      %3209 = vmatprep.subr.bf16.mxu0 0
      %3210 = vmatpush1.bf16.msra.mxu0 0
      %3211 = vmatprep.subr.bf16.mxu0 0
      %3212 = vmatpush1.bf16.msra.mxu0 0
      %3213 = vmatprep.subr.bf16.mxu0 0
      %3214 = vmatpush1.bf16.msra.mxu0 0
      %3215 = vmatprep.subr.bf16.mxu0 0
      %3216 = vmatpush1.bf16.msra.mxu0 0
      %3217 = vmatprep.subr.bf16.mxu0 0
      %3218 = vmatpush1.bf16.msra.mxu0 0
      %3219 = vmatprep.subr.bf16.mxu0 0
      %3220 = vmatpush1.bf16.msra.mxu0 0
      %3221 = vmatprep.subr.bf16.mxu0 0
      %3222 = vmatpush1.bf16.msra.mxu0 0
      %3223 = vmatprep.subr.bf16.mxu0 0
      %3224 = vmatpush1.bf16.msra.mxu0 0
      %3225 = vmatprep.subr.bf16.mxu0 0
      %3226 = vmatpush1.bf16.msra.mxu0 0
      %3227 = vmatprep.mubr.bf16.mxu0 0
      %3228 = vmatmul.mubr.bf16.gmra.mrb[0].mxu0 %v3046
      %v3229 = vpop.f32.mrb[0].mxu0
      %v3230 = vadd.f32 0.0, %v3229
      %v3231 = vpop.f32.mrb[0].mxu0
      %v3232 = vadd.f32 0.0, %v3231
      %v3233 = vpop.f32.mrb[0].mxu0
      %v3234 = vpop.f32.mrb[0].mxu0
      %3235 = vdwg.mxu0
      %v3237 = vsel %vm548, %v2969, 0
      %v3240 = vsel %vm552, %v2985, 0
      %v3243 = vsel %vm552, %v2993, 0
      %v3246 = vsel %vm552, %v2992, 0
      %v3249 = vsel %vm552, %v2994, 0
      %v3252 = vsel %vm552, %v3002, 0
      %v3255 = vsel %vm552, %v3010, 0
      %v3258 = vsel %vm552, %v3009, 0
      %v3261 = vsel %vm552, %v3011, 0
      %3263 = vmatprep.subr.bf16.mxu0 %v3243
      %3264 = vmatpush1.bf16.msra.mxu0 %v3240
      %3265 = vmatprep.subr.bf16.mxu0 0
      %3266 = vmatpush1.bf16.msra.mxu0 0
      %3267 = vmatprep.subr.bf16.mxu0 0
      %3268 = vmatpush1.bf16.msra.mxu0 0
      %3269 = vmatprep.subr.bf16.mxu0 0
      %3270 = vmatpush1.bf16.msra.mxu0 0
      %3271 = vmatprep.subr.bf16.mxu0 0
      %3272 = vmatpush1.bf16.msra.mxu0 0
      %3273 = vmatprep.subr.bf16.mxu0 0
      %3274 = vmatpush1.bf16.msra.mxu0 0
      %3275 = vmatprep.subr.bf16.mxu0 0
      %3276 = vmatpush1.bf16.msra.mxu0 0
      %3277 = vmatprep.subr.bf16.mxu0 0
      %3278 = vmatpush1.bf16.msra.mxu0 0
      %3279 = vmatprep.subr.bf16.mxu0 0
      %3280 = vmatpush1.bf16.msra.mxu0 0
      %3281 = vmatprep.subr.bf16.mxu0 0
      %3282 = vmatpush1.bf16.msra.mxu0 0
      %3283 = vmatprep.subr.bf16.mxu0 0
      %3284 = vmatpush1.bf16.msra.mxu0 0
      %3285 = vmatprep.subr.bf16.mxu0 0
      %3286 = vmatpush1.bf16.msra.mxu0 0
      %3287 = vmatprep.subr.bf16.mxu0 0
      %3288 = vmatpush1.bf16.msra.mxu0 0
      %3289 = vmatprep.subr.bf16.mxu0 0
      %3290 = vmatpush1.bf16.msra.mxu0 0
      %3291 = vmatprep.subr.bf16.mxu0 0
      %3292 = vmatpush1.bf16.msra.mxu0 0
      %3293 = vmatprep.subr.bf16.mxu0 0
      %3294 = vmatpush1.bf16.msra.mxu0 0
      %3295 = vmatprep.mubr.bf16.mxu0 0
      %3296 = vmatmul.mubr.bf16.gmra.mrb[0].mxu0 %v3237
      %v3297 = vpop.f32.mrb[0].mxu0
      %v3298 = vadd.f32 %v3107, %v3297
      %v3299 = vpop.f32.mrb[0].mxu0
      %v3300 = vadd.f32 %v3109, %v3299
      %v3301 = vpop.f32.mrb[0].mxu0
      %v3302 = vpop.f32.mrb[0].mxu0
      %3303 = vdwg.mxu0
      %3304 = vmatprep.subr.bf16.mxu0 %v3249
      %3305 = vmatpush1.bf16.msra.mxu0 %v3246
      %3306 = vmatprep.subr.bf16.mxu0 0
      %3307 = vmatpush1.bf16.msra.mxu0 0
      %3308 = vmatprep.subr.bf16.mxu0 0
      %3309 = vmatpush1.bf16.msra.mxu0 0
      %3310 = vmatprep.subr.bf16.mxu0 0
      %3311 = vmatpush1.bf16.msra.mxu0 0
      %3312 = vmatprep.subr.bf16.mxu0 0
      %3313 = vmatpush1.bf16.msra.mxu0 0
      %3314 = vmatprep.subr.bf16.mxu0 0
      %3315 = vmatpush1.bf16.msra.mxu0 0
      %3316 = vmatprep.subr.bf16.mxu0 0
      %3317 = vmatpush1.bf16.msra.mxu0 0
      %3318 = vmatprep.subr.bf16.mxu0 0
      %3319 = vmatpush1.bf16.msra.mxu0 0
      %3320 = vmatprep.subr.bf16.mxu0 0
      %3321 = vmatpush1.bf16.msra.mxu0 0
      %3322 = vmatprep.subr.bf16.mxu0 0
      %3323 = vmatpush1.bf16.msra.mxu0 0
      %3324 = vmatprep.subr.bf16.mxu0 0
      %3325 = vmatpush1.bf16.msra.mxu0 0
      %3326 = vmatprep.subr.bf16.mxu0 0
      %3327 = vmatpush1.bf16.msra.mxu0 0
      %3328 = vmatprep.subr.bf16.mxu0 0
      %3329 = vmatpush1.bf16.msra.mxu0 0
      %3330 = vmatprep.subr.bf16.mxu0 0
      %3331 = vmatpush1.bf16.msra.mxu0 0
      %3332 = vmatprep.subr.bf16.mxu0 0
      %3333 = vmatpush1.bf16.msra.mxu0 0
      %3334 = vmatprep.subr.bf16.mxu0 0
      %3335 = vmatpush1.bf16.msra.mxu0 0
      %3336 = vmatprep.mubr.bf16.mxu0 0
      %3337 = vmatmul.mubr.bf16.gmra.mrb[0].mxu0 %v3237
      %v3338 = vpop.f32.mrb[0].mxu0
      %v3339 = vadd.f32 %v3148, %v3338
      %v3340 = vpop.f32.mrb[0].mxu0
      %v3341 = vadd.f32 %v3150, %v3340
      %v3342 = vpop.f32.mrb[0].mxu0
      %v3343 = vpop.f32.mrb[0].mxu0
      %3344 = vdwg.mxu0
      %3345 = vmatprep.subr.bf16.mxu0 %v3255
      %3346 = vmatpush1.bf16.msra.mxu0 %v3252
      %3347 = vmatprep.subr.bf16.mxu0 0
      %3348 = vmatpush1.bf16.msra.mxu0 0
      %3349 = vmatprep.subr.bf16.mxu0 0
      %3350 = vmatpush1.bf16.msra.mxu0 0
      %3351 = vmatprep.subr.bf16.mxu0 0
      %3352 = vmatpush1.bf16.msra.mxu0 0
      %3353 = vmatprep.subr.bf16.mxu0 0
      %3354 = vmatpush1.bf16.msra.mxu0 0
      %3355 = vmatprep.subr.bf16.mxu0 0
      %3356 = vmatpush1.bf16.msra.mxu0 0
      %3357 = vmatprep.subr.bf16.mxu0 0
      %3358 = vmatpush1.bf16.msra.mxu0 0
      %3359 = vmatprep.subr.bf16.mxu0 0
      %3360 = vmatpush1.bf16.msra.mxu0 0
      %3361 = vmatprep.subr.bf16.mxu0 0
      %3362 = vmatpush1.bf16.msra.mxu0 0
      %3363 = vmatprep.subr.bf16.mxu0 0
      %3364 = vmatpush1.bf16.msra.mxu0 0
      %3365 = vmatprep.subr.bf16.mxu0 0
      %3366 = vmatpush1.bf16.msra.mxu0 0
      %3367 = vmatprep.subr.bf16.mxu0 0
      %3368 = vmatpush1.bf16.msra.mxu0 0
      %3369 = vmatprep.subr.bf16.mxu0 0
      %3370 = vmatpush1.bf16.msra.mxu0 0
      %3371 = vmatprep.subr.bf16.mxu0 0
      %3372 = vmatpush1.bf16.msra.mxu0 0
      %3373 = vmatprep.subr.bf16.mxu0 0
      %3374 = vmatpush1.bf16.msra.mxu0 0
      %3375 = vmatprep.subr.bf16.mxu0 0
      %3376 = vmatpush1.bf16.msra.mxu0 0
      %3377 = vmatprep.mubr.bf16.mxu0 0
      %3378 = vmatmul.mubr.bf16.gmra.mrb[0].mxu0 %v3237
      %v3379 = vpop.f32.mrb[0].mxu0
      %v3380 = vadd.f32 %v3189, %v3379
      %v3381 = vpop.f32.mrb[0].mxu0
      %v3382 = vadd.f32 %v3191, %v3381
      %v3383 = vpop.f32.mrb[0].mxu0
      %v3384 = vpop.f32.mrb[0].mxu0
      %3385 = vdwg.mxu0
      %3386 = vmatprep.subr.bf16.mxu0 %v3261
      %3387 = vmatpush1.bf16.msra.mxu0 %v3258
      %3388 = vmatprep.subr.bf16.mxu0 0
      %3389 = vmatpush1.bf16.msra.mxu0 0
      %3390 = vmatprep.subr.bf16.mxu0 0
      %3391 = vmatpush1.bf16.msra.mxu0 0
      %3392 = vmatprep.subr.bf16.mxu0 0
      %3393 = vmatpush1.bf16.msra.mxu0 0
      %3394 = vmatprep.subr.bf16.mxu0 0
      %3395 = vmatpush1.bf16.msra.mxu0 0
      %3396 = vmatprep.subr.bf16.mxu0 0
      %3397 = vmatpush1.bf16.msra.mxu0 0
      %3398 = vmatprep.subr.bf16.mxu0 0
      %3399 = vmatpush1.bf16.msra.mxu0 0
      %3400 = vmatprep.subr.bf16.mxu0 0
      %3401 = vmatpush1.bf16.msra.mxu0 0
      %3402 = vmatprep.subr.bf16.mxu0 0
      %3403 = vmatpush1.bf16.msra.mxu0 0
      %3404 = vmatprep.subr.bf16.mxu0 0
      %3405 = vmatpush1.bf16.msra.mxu0 0
      %3406 = vmatprep.subr.bf16.mxu0 0
      %3407 = vmatpush1.bf16.msra.mxu0 0
      %3408 = vmatprep.subr.bf16.mxu0 0
      %3409 = vmatpush1.bf16.msra.mxu0 0
      %3410 = vmatprep.subr.bf16.mxu0 0
      %3411 = vmatpush1.bf16.msra.mxu0 0
      %3412 = vmatprep.subr.bf16.mxu0 0
      %3413 = vmatpush1.bf16.msra.mxu0 0
      %3414 = vmatprep.subr.bf16.mxu0 0
      %3415 = vmatpush1.bf16.msra.mxu0 0
      %3416 = vmatprep.subr.bf16.mxu0 0
      %3417 = vmatpush1.bf16.msra.mxu0 0
      %3418 = vmatprep.mubr.bf16.mxu0 0
      %3419 = vmatmul.mubr.bf16.gmra.mrb[0].mxu0 %v3237
      %v3420 = vpop.f32.mrb[0].mxu0
      %v3421 = vadd.f32 %v3230, %v3420
      %v3422 = vpop.f32.mrb[0].mxu0
      %v3423 = vadd.f32 %v3232, %v3422
      %v3424 = vpop.f32.mrb[0].mxu0
      %v3425 = vpop.f32.mrb[0].mxu0
      %3426 = vdwg.mxu0
      %s3427 = scalar_lea.vmem %s1, 8
      %v3428 = vld [vmem:[%s3427] sm:$0xf]
      %v3429 = vld [vmem:[#allocation2] sm:$0xff]
      %v3430 = vld [vmem:[#allocation2 + $0x8] sm:$0xff]
      %v3431 = vld [vmem:[#allocation2 + $0x10] sm:$0x3]
      %v3435 = vcombine.high %v3429, %v3429
      %v3437 = vunpack.c.l.s4 1983009808
      %v3438 = vunpack.c.0.s8 %v3437
      %v3439 = vlaneseq
      %v3440 = vshrl.u32 %v3439, 7
      %v3441 = vsub.s32 %v3438, %v3440
      %v3442 = vrot.slane %v3429, %v3441
      %v3444 = vunpack.c.l.s4 1983009808
      %v3445 = vunpack.c.0.s8 %v3444
      %v3446 = vlaneseq
      %v3447 = vshrl.u32 %v3446, 7
      %v3448 = vsub.s32 %v3445, %v3447
      %v3449 = vrot.slane %v3435, %v3448
      %v3450 = vcombine.high %v3442, %v3442
      %v3451 = vcombine.high %v3449, %v3449
      %v3452 = vcombine.high %v3430, %v3430
      %v3454 = vunpack.c.l.s4 1983009808
      %v3455 = vunpack.c.0.s8 %v3454
      %v3456 = vlaneseq
      %v3457 = vshrl.u32 %v3456, 7
      %v3458 = vsub.s32 %v3455, %v3457
      %v3459 = vrot.slane %v3430, %v3458
      %v3461 = vunpack.c.l.s4 1983009808
      %v3462 = vunpack.c.0.s8 %v3461
      %v3463 = vlaneseq
      %v3464 = vshrl.u32 %v3463, 7
      %v3465 = vsub.s32 %v3462, %v3464
      %v3466 = vrot.slane %v3452, %v3465
      %v3467 = vcombine.high %v3459, %v3459
      %v3468 = vcombine.high %v3466, %v3466
      %v3470 = vunpack.c.l.s4 1983009808
      %v3471 = vunpack.c.0.s8 %v3470
      %v3472 = vlaneseq
      %v3473 = vshrl.u32 %v3472, 7
      %v3474 = vsub.s32 %v3471, %v3473
      %v3475 = vrot.slane %v3431, %v3474
      %3476 = vrot.lane.b32.xlu0 %v3442, 126
      %v3477 = vpop.permute.xlu0 %3476
      %3478 = vrot.lane.b32.xlu0 %v3450, 126
      %v3479 = vpop.permute.xlu0 %3478
      %3480 = vrot.lane.b32.xlu0 %v3449, 126
      %v3481 = vpop.permute.xlu0 %3480
      %3482 = vrot.lane.b32.xlu0 %v3451, 126
      %v3483 = vpop.permute.xlu0 %3482
      %3484 = vrot.lane.b32.xlu0 %v3459, 126
      %v3485 = vpop.permute.xlu0 %3484
      %3486 = vrot.lane.b32.xlu0 %v3467, 126
      %v3487 = vpop.permute.xlu0 %3486
      %3488 = vrot.lane.b32.xlu0 %v3466, 126
      %v3489 = vpop.permute.xlu0 %3488
      %3490 = vrot.lane.b32.xlu0 %v3468, 126
      %v3491 = vpop.permute.xlu0 %3490
      %3492 = vrot.lane.b32.xlu0 %v3475, 126
      %v3493 = vpop.permute.xlu0 %3492
      %v3494 = vsel %vm999, %v3477, %v3479
      %v3495 = vsel %vm999, %v3479, %v3481
      %v3496 = vsel %vm999, %v3481, %v3483
      %v3497 = vsel %vm999, %v3483, %v3485
      %v3498 = vsel %vm999, %v3485, %v3487
      %v3499 = vsel %vm999, %v3487, %v3489
      %v3500 = vsel %vm999, %v3489, %v3491
      %v3501 = vsel %vm999, %v3491, %v3493
      %v3503 = vsel %vm548, %v3428, 0
      %v3506 = vsel %vm552, %v3494, 0
      %v3509 = vsel %vm552, %v3495, 0
      %v3512 = vsel %vm552, %v3496, 0
      %v3515 = vsel %vm552, %v3497, 0
      %v3518 = vsel %vm552, %v3498, 0
      %v3521 = vsel %vm552, %v3499, 0
      %v3524 = vsel %vm552, %v3500, 0
      %v3527 = vsel %vm552, %v3501, 0
      %3529 = vmatprep.subr.bf16.mxu0 %v3509
      %3530 = vmatpush1.bf16.msra.mxu0 %v3506
      %3531 = vmatprep.subr.bf16.mxu0 0
      %3532 = vmatpush1.bf16.msra.mxu0 0
      %3533 = vmatprep.subr.bf16.mxu0 0
      %3534 = vmatpush1.bf16.msra.mxu0 0
      %3535 = vmatprep.subr.bf16.mxu0 0
      %3536 = vmatpush1.bf16.msra.mxu0 0
      %3537 = vmatprep.subr.bf16.mxu0 0
      %3538 = vmatpush1.bf16.msra.mxu0 0
      %3539 = vmatprep.subr.bf16.mxu0 0
      %3540 = vmatpush1.bf16.msra.mxu0 0
      %3541 = vmatprep.subr.bf16.mxu0 0
      %3542 = vmatpush1.bf16.msra.mxu0 0
      %3543 = vmatprep.subr.bf16.mxu0 0
      %3544 = vmatpush1.bf16.msra.mxu0 0
      %3545 = vmatprep.subr.bf16.mxu0 0
      %3546 = vmatpush1.bf16.msra.mxu0 0
      %3547 = vmatprep.subr.bf16.mxu0 0
      %3548 = vmatpush1.bf16.msra.mxu0 0
      %3549 = vmatprep.subr.bf16.mxu0 0
      %3550 = vmatpush1.bf16.msra.mxu0 0
      %3551 = vmatprep.subr.bf16.mxu0 0
      %3552 = vmatpush1.bf16.msra.mxu0 0
      %3553 = vmatprep.subr.bf16.mxu0 0
      %3554 = vmatpush1.bf16.msra.mxu0 0
      %3555 = vmatprep.subr.bf16.mxu0 0
      %3556 = vmatpush1.bf16.msra.mxu0 0
      %3557 = vmatprep.subr.bf16.mxu0 0
      %3558 = vmatpush1.bf16.msra.mxu0 0
      %3559 = vmatprep.subr.bf16.mxu0 0
      %3560 = vmatpush1.bf16.msra.mxu0 0
      %3561 = vmatprep.mubr.bf16.mxu0 0
      %3562 = vmatmul.mubr.bf16.gmra.mrb[0].mxu0 %v3503
      %v3563 = vpop.f32.mrb[0].mxu0
      %v3564 = vadd.f32 0.0, %v3563
      %v3565 = vpop.f32.mrb[0].mxu0
      %v3566 = vadd.f32 0.0, %v3565
      %v3567 = vpop.f32.mrb[0].mxu0
      %v3568 = vpop.f32.mrb[0].mxu0
      %3569 = vdwg.mxu0
      %3570 = vmatprep.subr.bf16.mxu0 %v3515
      %3571 = vmatpush1.bf16.msra.mxu0 %v3512
      %3572 = vmatprep.subr.bf16.mxu0 0
      %3573 = vmatpush1.bf16.msra.mxu0 0
      %3574 = vmatprep.subr.bf16.mxu0 0
      %3575 = vmatpush1.bf16.msra.mxu0 0
      %3576 = vmatprep.subr.bf16.mxu0 0
      %3577 = vmatpush1.bf16.msra.mxu0 0
      %3578 = vmatprep.subr.bf16.mxu0 0
      %3579 = vmatpush1.bf16.msra.mxu0 0
      %3580 = vmatprep.subr.bf16.mxu0 0
      %3581 = vmatpush1.bf16.msra.mxu0 0
      %3582 = vmatprep.subr.bf16.mxu0 0
      %3583 = vmatpush1.bf16.msra.mxu0 0
      %3584 = vmatprep.subr.bf16.mxu0 0
      %3585 = vmatpush1.bf16.msra.mxu0 0
      %3586 = vmatprep.subr.bf16.mxu0 0
      %3587 = vmatpush1.bf16.msra.mxu0 0
      %3588 = vmatprep.subr.bf16.mxu0 0
      %3589 = vmatpush1.bf16.msra.mxu0 0
      %3590 = vmatprep.subr.bf16.mxu0 0
      %3591 = vmatpush1.bf16.msra.mxu0 0
      %3592 = vmatprep.subr.bf16.mxu0 0
      %3593 = vmatpush1.bf16.msra.mxu0 0
      %3594 = vmatprep.subr.bf16.mxu0 0
      %3595 = vmatpush1.bf16.msra.mxu0 0
      %3596 = vmatprep.subr.bf16.mxu0 0
      %3597 = vmatpush1.bf16.msra.mxu0 0
      %3598 = vmatprep.subr.bf16.mxu0 0
      %3599 = vmatpush1.bf16.msra.mxu0 0
      %3600 = vmatprep.subr.bf16.mxu0 0
      %3601 = vmatpush1.bf16.msra.mxu0 0
      %3602 = vmatprep.mubr.bf16.mxu0 0
      %3603 = vmatmul.mubr.bf16.gmra.mrb[0].mxu0 %v3503
      %v3604 = vpop.f32.mrb[0].mxu0
      %v3605 = vadd.f32 0.0, %v3604
      %v3606 = vpop.f32.mrb[0].mxu0
      %v3607 = vadd.f32 0.0, %v3606
      %v3608 = vpop.f32.mrb[0].mxu0
      %v3609 = vpop.f32.mrb[0].mxu0
      %3610 = vdwg.mxu0
      %3611 = vmatprep.subr.bf16.mxu0 %v3521
      %3612 = vmatpush1.bf16.msra.mxu0 %v3518
      %3613 = vmatprep.subr.bf16.mxu0 0
      %3614 = vmatpush1.bf16.msra.mxu0 0
      %3615 = vmatprep.subr.bf16.mxu0 0
      %3616 = vmatpush1.bf16.msra.mxu0 0
      %3617 = vmatprep.subr.bf16.mxu0 0
      %3618 = vmatpush1.bf16.msra.mxu0 0
      %3619 = vmatprep.subr.bf16.mxu0 0
      %3620 = vmatpush1.bf16.msra.mxu0 0
      %3621 = vmatprep.subr.bf16.mxu0 0
      %3622 = vmatpush1.bf16.msra.mxu0 0
      %3623 = vmatprep.subr.bf16.mxu0 0
      %3624 = vmatpush1.bf16.msra.mxu0 0
      %3625 = vmatprep.subr.bf16.mxu0 0
      %3626 = vmatpush1.bf16.msra.mxu0 0
      %3627 = vmatprep.subr.bf16.mxu0 0
      %3628 = vmatpush1.bf16.msra.mxu0 0
      %3629 = vmatprep.subr.bf16.mxu0 0
      %3630 = vmatpush1.bf16.msra.mxu0 0
      %3631 = vmatprep.subr.bf16.mxu0 0
      %3632 = vmatpush1.bf16.msra.mxu0 0
      %3633 = vmatprep.subr.bf16.mxu0 0
      %3634 = vmatpush1.bf16.msra.mxu0 0
      %3635 = vmatprep.subr.bf16.mxu0 0
      %3636 = vmatpush1.bf16.msra.mxu0 0
      %3637 = vmatprep.subr.bf16.mxu0 0
      %3638 = vmatpush1.bf16.msra.mxu0 0
      %3639 = vmatprep.subr.bf16.mxu0 0
      %3640 = vmatpush1.bf16.msra.mxu0 0
      %3641 = vmatprep.subr.bf16.mxu0 0
      %3642 = vmatpush1.bf16.msra.mxu0 0
      %3643 = vmatprep.mubr.bf16.mxu0 0
      %3644 = vmatmul.mubr.bf16.gmra.mrb[0].mxu0 %v3503
      %v3645 = vpop.f32.mrb[0].mxu0
      %v3646 = vadd.f32 0.0, %v3645
      %v3647 = vpop.f32.mrb[0].mxu0
      %v3648 = vadd.f32 0.0, %v3647
      %v3649 = vpop.f32.mrb[0].mxu0
      %v3650 = vpop.f32.mrb[0].mxu0
      %3651 = vdwg.mxu0
      %3652 = vmatprep.subr.bf16.mxu0 %v3527
      %3653 = vmatpush1.bf16.msra.mxu0 %v3524
      %3654 = vmatprep.subr.bf16.mxu0 0
      %3655 = vmatpush1.bf16.msra.mxu0 0
      %3656 = vmatprep.subr.bf16.mxu0 0
      %3657 = vmatpush1.bf16.msra.mxu0 0
      %3658 = vmatprep.subr.bf16.mxu0 0
      %3659 = vmatpush1.bf16.msra.mxu0 0
      %3660 = vmatprep.subr.bf16.mxu0 0
      %3661 = vmatpush1.bf16.msra.mxu0 0
      %3662 = vmatprep.subr.bf16.mxu0 0
      %3663 = vmatpush1.bf16.msra.mxu0 0
      %3664 = vmatprep.subr.bf16.mxu0 0
      %3665 = vmatpush1.bf16.msra.mxu0 0
      %3666 = vmatprep.subr.bf16.mxu0 0
      %3667 = vmatpush1.bf16.msra.mxu0 0
      %3668 = vmatprep.subr.bf16.mxu0 0
      %3669 = vmatpush1.bf16.msra.mxu0 0
      %3670 = vmatprep.subr.bf16.mxu0 0
      %3671 = vmatpush1.bf16.msra.mxu0 0
      %3672 = vmatprep.subr.bf16.mxu0 0
      %3673 = vmatpush1.bf16.msra.mxu0 0
      %3674 = vmatprep.subr.bf16.mxu0 0
      %3675 = vmatpush1.bf16.msra.mxu0 0
      %3676 = vmatprep.subr.bf16.mxu0 0
      %3677 = vmatpush1.bf16.msra.mxu0 0
      %3678 = vmatprep.subr.bf16.mxu0 0
      %3679 = vmatpush1.bf16.msra.mxu0 0
      %3680 = vmatprep.subr.bf16.mxu0 0
      %3681 = vmatpush1.bf16.msra.mxu0 0
      %3682 = vmatprep.subr.bf16.mxu0 0
      %3683 = vmatpush1.bf16.msra.mxu0 0
      %3684 = vmatprep.mubr.bf16.mxu0 0
      %3685 = vmatmul.mubr.bf16.gmra.mrb[0].mxu0 %v3503
      %v3686 = vpop.f32.mrb[0].mxu0
      %v3687 = vadd.f32 0.0, %v3686
      %v3688 = vpop.f32.mrb[0].mxu0
      %v3689 = vadd.f32 0.0, %v3688
      %v3690 = vpop.f32.mrb[0].mxu0
      %v3691 = vpop.f32.mrb[0].mxu0
      %3692 = vdwg.mxu0
      %v3693 = vadd.f32 %v3298, %v3564
      %v3694 = vadd.f32 %v3300, %v3566
      %v3695 = vadd.f32 %v3339, %v3605
      %v3696 = vadd.f32 %v3341, %v3607
      %v3697 = vadd.f32 %v3380, %v3646
      %v3698 = vadd.f32 %v3382, %v3648
      %v3699 = vadd.f32 %v3421, %v3687
      %v3700 = vadd.f32 %v3423, %v3689
      %s3701 = scalar_lea.vmem %s1, 12
      %v3702 = vld [vmem:[%s3701] sm:$0xf]
      %v3703 = vld [vmem:[#allocation2] sm:$0xff]
      %v3704 = vld [vmem:[#allocation2 + $0x8] sm:$0xff]
      %v3705 = vld [vmem:[#allocation2 + $0x10] sm:$0x3]
      %v3709 = vcombine.high %v3703, %v3703
      %v3711 = vunpack.c.l.s4 1983009808
      %v3712 = vunpack.c.0.s8 %v3711
      %v3713 = vlaneseq
      %v3714 = vshrl.u32 %v3713, 7
      %v3715 = vsub.s32 %v3712, %v3714
      %v3716 = vrot.slane %v3703, %v3715
      %v3718 = vunpack.c.l.s4 1983009808
      %v3719 = vunpack.c.0.s8 %v3718
      %v3720 = vlaneseq
      %v3721 = vshrl.u32 %v3720, 7
      %v3722 = vsub.s32 %v3719, %v3721
      %v3723 = vrot.slane %v3709, %v3722
      %v3724 = vcombine.high %v3716, %v3716
      %v3725 = vcombine.high %v3723, %v3723
      %v3726 = vcombine.high %v3704, %v3704
      %v3728 = vunpack.c.l.s4 1983009808
      %v3729 = vunpack.c.0.s8 %v3728
      %v3730 = vlaneseq
      %v3731 = vshrl.u32 %v3730, 7
      %v3732 = vsub.s32 %v3729, %v3731
      %v3733 = vrot.slane %v3704, %v3732
      %v3735 = vunpack.c.l.s4 1983009808
      %v3736 = vunpack.c.0.s8 %v3735
      %v3737 = vlaneseq
      %v3738 = vshrl.u32 %v3737, 7
      %v3739 = vsub.s32 %v3736, %v3738
      %v3740 = vrot.slane %v3726, %v3739
      %v3741 = vcombine.high %v3733, %v3733
      %v3742 = vcombine.high %v3740, %v3740
      %v3744 = vunpack.c.l.s4 1983009808
      %v3745 = vunpack.c.0.s8 %v3744
      %v3746 = vlaneseq
      %v3747 = vshrl.u32 %v3746, 7
      %v3748 = vsub.s32 %v3745, %v3747
      %v3749 = vrot.slane %v3705, %v3748
      %3750 = vrot.lane.b32.xlu0 %v3716, 28
      %v3751 = vpop.permute.xlu0 %3750
      %3752 = vrot.lane.b32.xlu0 %v3724, 28
      %v3753 = vpop.permute.xlu0 %3752
      %3754 = vrot.lane.b32.xlu0 %v3723, 28
      %v3755 = vpop.permute.xlu0 %3754
      %3756 = vrot.lane.b32.xlu0 %v3725, 28
      %v3757 = vpop.permute.xlu0 %3756
      %3758 = vrot.lane.b32.xlu0 %v3733, 28
      %v3759 = vpop.permute.xlu0 %3758
      %3760 = vrot.lane.b32.xlu0 %v3741, 28
      %v3761 = vpop.permute.xlu0 %3760
      %3762 = vrot.lane.b32.xlu0 %v3740, 28
      %v3763 = vpop.permute.xlu0 %3762
      %3764 = vrot.lane.b32.xlu0 %v3742, 28
      %v3765 = vpop.permute.xlu0 %3764
      %3766 = vrot.lane.b32.xlu0 %v3749, 28
      %v3767 = vpop.permute.xlu0 %3766
      %vm3768 = vcmask 228352
      %v3769 = vsel %vm3768, %v3751, %v3753
      %v3770 = vsel %vm3768, %v3753, %v3755
      %v3771 = vsel %vm3768, %v3755, %v3757
      %v3772 = vsel %vm3768, %v3757, %v3759
      %v3773 = vsel %vm3768, %v3759, %v3761
      %v3774 = vsel %vm3768, %v3761, %v3763
      %v3775 = vsel %vm3768, %v3763, %v3765
      %v3776 = vsel %vm3768, %v3765, %v3767
      %v3778 = vsel %vm548, %v3702, 0
      %v3781 = vsel %vm552, %v3769, 0
      %v3784 = vsel %vm552, %v3770, 0
      %v3787 = vsel %vm552, %v3771, 0
      %v3790 = vsel %vm552, %v3772, 0
      %v3793 = vsel %vm552, %v3773, 0
      %v3796 = vsel %vm552, %v3774, 0
      %v3799 = vsel %vm552, %v3775, 0
      %v3802 = vsel %vm552, %v3776, 0
      %3804 = vmatprep.subr.bf16.mxu0 %v3784
      %3805 = vmatpush1.bf16.msra.mxu0 %v3781
      %3806 = vmatprep.subr.bf16.mxu0 0
      %3807 = vmatpush1.bf16.msra.mxu0 0
      %3808 = vmatprep.subr.bf16.mxu0 0
      %3809 = vmatpush1.bf16.msra.mxu0 0
      %3810 = vmatprep.subr.bf16.mxu0 0
      %3811 = vmatpush1.bf16.msra.mxu0 0
      %3812 = vmatprep.subr.bf16.mxu0 0
      %3813 = vmatpush1.bf16.msra.mxu0 0
      %3814 = vmatprep.subr.bf16.mxu0 0
      %3815 = vmatpush1.bf16.msra.mxu0 0
      %3816 = vmatprep.subr.bf16.mxu0 0
      %3817 = vmatpush1.bf16.msra.mxu0 0
      %3818 = vmatprep.subr.bf16.mxu0 0
      %3819 = vmatpush1.bf16.msra.mxu0 0
      %3820 = vmatprep.subr.bf16.mxu0 0
      %3821 = vmatpush1.bf16.msra.mxu0 0
      %3822 = vmatprep.subr.bf16.mxu0 0
      %3823 = vmatpush1.bf16.msra.mxu0 0
      %3824 = vmatprep.subr.bf16.mxu0 0
      %3825 = vmatpush1.bf16.msra.mxu0 0
      %3826 = vmatprep.subr.bf16.mxu0 0
      %3827 = vmatpush1.bf16.msra.mxu0 0
      %3828 = vmatprep.subr.bf16.mxu0 0
      %3829 = vmatpush1.bf16.msra.mxu0 0
      %3830 = vmatprep.subr.bf16.mxu0 0
      %3831 = vmatpush1.bf16.msra.mxu0 0
      %3832 = vmatprep.subr.bf16.mxu0 0
      %3833 = vmatpush1.bf16.msra.mxu0 0
      %3834 = vmatprep.subr.bf16.mxu0 0
      %3835 = vmatpush1.bf16.msra.mxu0 0
      %3836 = vmatprep.mubr.bf16.mxu0 0
      %3837 = vmatmul.mubr.bf16.gmra.mrb[0].mxu0 %v3778
      %v3838 = vpop.f32.mrb[0].mxu0
      %v3839 = vadd.f32 0.0, %v3838
      %v3840 = vpop.f32.mrb[0].mxu0
      %v3841 = vadd.f32 0.0, %v3840
      %v3842 = vpop.f32.mrb[0].mxu0
      %v3843 = vpop.f32.mrb[0].mxu0
      %3844 = vdwg.mxu0
      %3845 = vmatprep.subr.bf16.mxu0 %v3790
      %3846 = vmatpush1.bf16.msra.mxu0 %v3787
      %3847 = vmatprep.subr.bf16.mxu0 0
      %3848 = vmatpush1.bf16.msra.mxu0 0
      %3849 = vmatprep.subr.bf16.mxu0 0
      %3850 = vmatpush1.bf16.msra.mxu0 0
      %3851 = vmatprep.subr.bf16.mxu0 0
      %3852 = vmatpush1.bf16.msra.mxu0 0
      %3853 = vmatprep.subr.bf16.mxu0 0
      %3854 = vmatpush1.bf16.msra.mxu0 0
      %3855 = vmatprep.subr.bf16.mxu0 0
      %3856 = vmatpush1.bf16.msra.mxu0 0
      %3857 = vmatprep.subr.bf16.mxu0 0
      %3858 = vmatpush1.bf16.msra.mxu0 0
      %3859 = vmatprep.subr.bf16.mxu0 0
      %3860 = vmatpush1.bf16.msra.mxu0 0
      %3861 = vmatprep.subr.bf16.mxu0 0
      %3862 = vmatpush1.bf16.msra.mxu0 0
      %3863 = vmatprep.subr.bf16.mxu0 0
      %3864 = vmatpush1.bf16.msra.mxu0 0
      %3865 = vmatprep.subr.bf16.mxu0 0
      %3866 = vmatpush1.bf16.msra.mxu0 0
      %3867 = vmatprep.subr.bf16.mxu0 0
      %3868 = vmatpush1.bf16.msra.mxu0 0
      %3869 = vmatprep.subr.bf16.mxu0 0
      %3870 = vmatpush1.bf16.msra.mxu0 0
      %3871 = vmatprep.subr.bf16.mxu0 0
      %3872 = vmatpush1.bf16.msra.mxu0 0
      %3873 = vmatprep.subr.bf16.mxu0 0
      %3874 = vmatpush1.bf16.msra.mxu0 0
      %3875 = vmatprep.subr.bf16.mxu0 0
      %3876 = vmatpush1.bf16.msra.mxu0 0
      %3877 = vmatprep.mubr.bf16.mxu0 0
      %3878 = vmatmul.mubr.bf16.gmra.mrb[0].mxu0 %v3778
      %v3879 = vpop.f32.mrb[0].mxu0
      %v3880 = vadd.f32 0.0, %v3879
      %v3881 = vpop.f32.mrb[0].mxu0
      %v3882 = vadd.f32 0.0, %v3881
      %v3883 = vpop.f32.mrb[0].mxu0
      %v3884 = vpop.f32.mrb[0].mxu0
      %3885 = vdwg.mxu0
      %3886 = vmatprep.subr.bf16.mxu0 %v3796
      %3887 = vmatpush1.bf16.msra.mxu0 %v3793
      %3888 = vmatprep.subr.bf16.mxu0 0
      %3889 = vmatpush1.bf16.msra.mxu0 0
      %3890 = vmatprep.subr.bf16.mxu0 0
      %3891 = vmatpush1.bf16.msra.mxu0 0
      %3892 = vmatprep.subr.bf16.mxu0 0
      %3893 = vmatpush1.bf16.msra.mxu0 0
      %3894 = vmatprep.subr.bf16.mxu0 0
      %3895 = vmatpush1.bf16.msra.mxu0 0
      %3896 = vmatprep.subr.bf16.mxu0 0
      %3897 = vmatpush1.bf16.msra.mxu0 0
      %3898 = vmatprep.subr.bf16.mxu0 0
      %3899 = vmatpush1.bf16.msra.mxu0 0
      %3900 = vmatprep.subr.bf16.mxu0 0
      %3901 = vmatpush1.bf16.msra.mxu0 0
      %3902 = vmatprep.subr.bf16.mxu0 0
      %3903 = vmatpush1.bf16.msra.mxu0 0
      %3904 = vmatprep.subr.bf16.mxu0 0
      %3905 = vmatpush1.bf16.msra.mxu0 0
      %3906 = vmatprep.subr.bf16.mxu0 0
      %3907 = vmatpush1.bf16.msra.mxu0 0
      %3908 = vmatprep.subr.bf16.mxu0 0
      %3909 = vmatpush1.bf16.msra.mxu0 0
      %3910 = vmatprep.subr.bf16.mxu0 0
      %3911 = vmatpush1.bf16.msra.mxu0 0
      %3912 = vmatprep.subr.bf16.mxu0 0
      %3913 = vmatpush1.bf16.msra.mxu0 0
      %3914 = vmatprep.subr.bf16.mxu0 0
      %3915 = vmatpush1.bf16.msra.mxu0 0
      %3916 = vmatprep.subr.bf16.mxu0 0
      %3917 = vmatpush1.bf16.msra.mxu0 0
      %3918 = vmatprep.mubr.bf16.mxu0 0
      %3919 = vmatmul.mubr.bf16.gmra.mrb[0].mxu0 %v3778
      %v3920 = vpop.f32.mrb[0].mxu0
      %v3921 = vadd.f32 0.0, %v3920
      %v3922 = vpop.f32.mrb[0].mxu0
      %v3923 = vadd.f32 0.0, %v3922
      %v3924 = vpop.f32.mrb[0].mxu0
      %v3925 = vpop.f32.mrb[0].mxu0
      %3926 = vdwg.mxu0
      %3927 = vmatprep.subr.bf16.mxu0 %v3802
      %3928 = vmatpush1.bf16.msra.mxu0 %v3799
      %3929 = vmatprep.subr.bf16.mxu0 0
      %3930 = vmatpush1.bf16.msra.mxu0 0
      %3931 = vmatprep.subr.bf16.mxu0 0
      %3932 = vmatpush1.bf16.msra.mxu0 0
      %3933 = vmatprep.subr.bf16.mxu0 0
      %3934 = vmatpush1.bf16.msra.mxu0 0
      %3935 = vmatprep.subr.bf16.mxu0 0
      %3936 = vmatpush1.bf16.msra.mxu0 0
      %3937 = vmatprep.subr.bf16.mxu0 0
      %3938 = vmatpush1.bf16.msra.mxu0 0
      %3939 = vmatprep.subr.bf16.mxu0 0
      %3940 = vmatpush1.bf16.msra.mxu0 0
      %3941 = vmatprep.subr.bf16.mxu0 0
      %3942 = vmatpush1.bf16.msra.mxu0 0
      %3943 = vmatprep.subr.bf16.mxu0 0
      %3944 = vmatpush1.bf16.msra.mxu0 0
      %3945 = vmatprep.subr.bf16.mxu0 0
      %3946 = vmatpush1.bf16.msra.mxu0 0
      %3947 = vmatprep.subr.bf16.mxu0 0
      %3948 = vmatpush1.bf16.msra.mxu0 0
      %3949 = vmatprep.subr.bf16.mxu0 0
      %3950 = vmatpush1.bf16.msra.mxu0 0
      %3951 = vmatprep.subr.bf16.mxu0 0
      %3952 = vmatpush1.bf16.msra.mxu0 0
      %3953 = vmatprep.subr.bf16.mxu0 0
      %3954 = vmatpush1.bf16.msra.mxu0 0
      %3955 = vmatprep.subr.bf16.mxu0 0
      %3956 = vmatpush1.bf16.msra.mxu0 0
      %3957 = vmatprep.subr.bf16.mxu0 0
      %3958 = vmatpush1.bf16.msra.mxu0 0
      %3959 = vmatprep.mubr.bf16.mxu0 0
      %3960 = vmatmul.mubr.bf16.gmra.mrb[0].mxu0 %v3778
      %v3961 = vpop.f32.mrb[0].mxu0
      %v3962 = vadd.f32 0.0, %v3961
      %v3963 = vpop.f32.mrb[0].mxu0
      %v3964 = vadd.f32 0.0, %v3963
      %v3965 = vpop.f32.mrb[0].mxu0
      %v3966 = vpop.f32.mrb[0].mxu0
      %3967 = vdwg.mxu0
      %v3968 = vadd.f32 %v3693, %v3839
      %v3969 = vadd.f32 %v3694, %v3841
      %v3970 = vadd.f32 %v3695, %v3880
      %v3971 = vadd.f32 %v3696, %v3882
      %v3972 = vadd.f32 %v3697, %v3921
      %v3973 = vadd.f32 %v3698, %v3923
      %v3974 = vadd.f32 %v3699, %v3962
      %v3975 = vadd.f32 %v3700, %v3964
      %s3976 = scalar_lea.vmem %s1, 16
      %v3977 = vld [vmem:[%s3976] sm:$0xf]
      %v3978 = vld [vmem:[#allocation2] sm:$0xff]
      %v3979 = vld [vmem:[#allocation2 + $0x8] sm:$0xff]
      %v3980 = vld [vmem:[#allocation2 + $0x10] sm:$0x3]
      %v3984 = vcombine.high %v3978, %v3978
      %v3986 = vunpack.c.l.s4 1983009808
      %v3987 = vunpack.c.0.s8 %v3986
      %v3988 = vlaneseq
      %v3989 = vshrl.u32 %v3988, 7
      %v3990 = vsub.s32 %v3987, %v3989
      %v3991 = vrot.slane %v3978, %v3990
      %v3993 = vunpack.c.l.s4 1983009808
      %v3994 = vunpack.c.0.s8 %v3993
      %v3995 = vlaneseq
      %v3996 = vshrl.u32 %v3995, 7
      %v3997 = vsub.s32 %v3994, %v3996
      %v3998 = vrot.slane %v3984, %v3997
      %v3999 = vcombine.high %v3991, %v3991
      %v4000 = vcombine.high %v3998, %v3998
      %v4001 = vcombine.high %v3979, %v3979
      %v4003 = vunpack.c.l.s4 1983009808
      %v4004 = vunpack.c.0.s8 %v4003
      %v4005 = vlaneseq
      %v4006 = vshrl.u32 %v4005, 7
      %v4007 = vsub.s32 %v4004, %v4006
      %v4008 = vrot.slane %v3979, %v4007
      %v4010 = vunpack.c.l.s4 1983009808
      %v4011 = vunpack.c.0.s8 %v4010
      %v4012 = vlaneseq
      %v4013 = vshrl.u32 %v4012, 7
      %v4014 = vsub.s32 %v4011, %v4013
      %v4015 = vrot.slane %v4001, %v4014
      %v4016 = vcombine.high %v4008, %v4008
      %v4017 = vcombine.high %v4015, %v4015
      %v4019 = vunpack.c.l.s4 1983009808
      %v4020 = vunpack.c.0.s8 %v4019
      %v4021 = vlaneseq
      %v4022 = vshrl.u32 %v4021, 7
      %v4023 = vsub.s32 %v4020, %v4022
      %v4024 = vrot.slane %v3980, %v4023
      %4025 = vrot.lane.b32.xlu0 %v3991, 27
      %v4026 = vpop.permute.xlu0 %4025
      %4027 = vrot.lane.b32.xlu0 %v3999, 27
      %v4028 = vpop.permute.xlu0 %4027
      %4029 = vrot.lane.b32.xlu0 %v3998, 27
      %v4030 = vpop.permute.xlu0 %4029
      %4031 = vrot.lane.b32.xlu0 %v4000, 27
      %v4032 = vpop.permute.xlu0 %4031
      %4033 = vrot.lane.b32.xlu0 %v4008, 27
      %v4034 = vpop.permute.xlu0 %4033
      %4035 = vrot.lane.b32.xlu0 %v4016, 27
      %v4036 = vpop.permute.xlu0 %4035
      %4037 = vrot.lane.b32.xlu0 %v4015, 27
      %v4038 = vpop.permute.xlu0 %4037
      %4039 = vrot.lane.b32.xlu0 %v4017, 27
      %v4040 = vpop.permute.xlu0 %4039
      %4041 = vrot.lane.b32.xlu0 %v4024, 27
      %v4042 = vpop.permute.xlu0 %4041
      %vm4043 = vcmask 220160
      %v4044 = vsel %vm4043, %v4026, %v4028
      %v4045 = vsel %vm4043, %v4028, %v4030
      %v4046 = vsel %vm4043, %v4030, %v4032
      %v4047 = vsel %vm4043, %v4032, %v4034
      %v4048 = vsel %vm4043, %v4034, %v4036
      %v4049 = vsel %vm4043, %v4036, %v4038
      %v4050 = vsel %vm4043, %v4038, %v4040
      %v4051 = vsel %vm4043, %v4040, %v4042
      %v4053 = vsel %vm548, %v3977, 0
      %v4056 = vsel %vm552, %v4044, 0
      %v4059 = vsel %vm552, %v4045, 0
      %v4062 = vsel %vm552, %v4046, 0
      %v4065 = vsel %vm552, %v4047, 0
      %v4068 = vsel %vm552, %v4048, 0
      %v4071 = vsel %vm552, %v4049, 0
      %v4074 = vsel %vm552, %v4050, 0
      %v4077 = vsel %vm552, %v4051, 0
      %4079 = vmatprep.subr.bf16.mxu0 %v4059
      %4080 = vmatpush1.bf16.msra.mxu0 %v4056
      %4081 = vmatprep.subr.bf16.mxu0 0
      %4082 = vmatpush1.bf16.msra.mxu0 0
      %4083 = vmatprep.subr.bf16.mxu0 0
      %4084 = vmatpush1.bf16.msra.mxu0 0
      %4085 = vmatprep.subr.bf16.mxu0 0
      %4086 = vmatpush1.bf16.msra.mxu0 0
      %4087 = vmatprep.subr.bf16.mxu0 0
      %4088 = vmatpush1.bf16.msra.mxu0 0
      %4089 = vmatprep.subr.bf16.mxu0 0
      %4090 = vmatpush1.bf16.msra.mxu0 0
      %4091 = vmatprep.subr.bf16.mxu0 0
      %4092 = vmatpush1.bf16.msra.mxu0 0
      %4093 = vmatprep.subr.bf16.mxu0 0
      %4094 = vmatpush1.bf16.msra.mxu0 0
      %4095 = vmatprep.subr.bf16.mxu0 0
      %4096 = vmatpush1.bf16.msra.mxu0 0
      %4097 = vmatprep.subr.bf16.mxu0 0
      %4098 = vmatpush1.bf16.msra.mxu0 0
      %4099 = vmatprep.subr.bf16.mxu0 0
      %4100 = vmatpush1.bf16.msra.mxu0 0
      %4101 = vmatprep.subr.bf16.mxu0 0
      %4102 = vmatpush1.bf16.msra.mxu0 0
      %4103 = vmatprep.subr.bf16.mxu0 0
      %4104 = vmatpush1.bf16.msra.mxu0 0
      %4105 = vmatprep.subr.bf16.mxu0 0
      %4106 = vmatpush1.bf16.msra.mxu0 0
      %4107 = vmatprep.subr.bf16.mxu0 0
      %4108 = vmatpush1.bf16.msra.mxu0 0
      %4109 = vmatprep.subr.bf16.mxu0 0
      %4110 = vmatpush1.bf16.msra.mxu0 0
      %4111 = vmatprep.mubr.bf16.mxu0 0
      %4112 = vmatmul.mubr.bf16.gmra.mrb[0].mxu0 %v4053
      %v4113 = vpop.f32.mrb[0].mxu0
      %v4114 = vadd.f32 0.0, %v4113
      %v4115 = vpop.f32.mrb[0].mxu0
      %v4116 = vadd.f32 0.0, %v4115
      %v4117 = vpop.f32.mrb[0].mxu0
      %v4118 = vpop.f32.mrb[0].mxu0
      %4119 = vdwg.mxu0
      %4120 = vmatprep.subr.bf16.mxu0 %v4065
      %4121 = vmatpush1.bf16.msra.mxu0 %v4062
      %4122 = vmatprep.subr.bf16.mxu0 0
      %4123 = vmatpush1.bf16.msra.mxu0 0
      %4124 = vmatprep.subr.bf16.mxu0 0
      %4125 = vmatpush1.bf16.msra.mxu0 0
      %4126 = vmatprep.subr.bf16.mxu0 0
      %4127 = vmatpush1.bf16.msra.mxu0 0
      %4128 = vmatprep.subr.bf16.mxu0 0
      %4129 = vmatpush1.bf16.msra.mxu0 0
      %4130 = vmatprep.subr.bf16.mxu0 0
      %4131 = vmatpush1.bf16.msra.mxu0 0
      %4132 = vmatprep.subr.bf16.mxu0 0
      %4133 = vmatpush1.bf16.msra.mxu0 0
      %4134 = vmatprep.subr.bf16.mxu0 0
      %4135 = vmatpush1.bf16.msra.mxu0 0
      %4136 = vmatprep.subr.bf16.mxu0 0
      %4137 = vmatpush1.bf16.msra.mxu0 0
      %4138 = vmatprep.subr.bf16.mxu0 0
      %4139 = vmatpush1.bf16.msra.mxu0 0
      %4140 = vmatprep.subr.bf16.mxu0 0
      %4141 = vmatpush1.bf16.msra.mxu0 0
      %4142 = vmatprep.subr.bf16.mxu0 0
      %4143 = vmatpush1.bf16.msra.mxu0 0
      %4144 = vmatprep.subr.bf16.mxu0 0
      %4145 = vmatpush1.bf16.msra.mxu0 0
      %4146 = vmatprep.subr.bf16.mxu0 0
      %4147 = vmatpush1.bf16.msra.mxu0 0
      %4148 = vmatprep.subr.bf16.mxu0 0
      %4149 = vmatpush1.bf16.msra.mxu0 0
      %4150 = vmatprep.subr.bf16.mxu0 0
      %4151 = vmatpush1.bf16.msra.mxu0 0
      %4152 = vmatprep.mubr.bf16.mxu0 0
      %4153 = vmatmul.mubr.bf16.gmra.mrb[0].mxu0 %v4053
      %v4154 = vpop.f32.mrb[0].mxu0
      %v4155 = vadd.f32 0.0, %v4154
      %v4156 = vpop.f32.mrb[0].mxu0
      %v4157 = vadd.f32 0.0, %v4156
      %v4158 = vpop.f32.mrb[0].mxu0
      %v4159 = vpop.f32.mrb[0].mxu0
      %4160 = vdwg.mxu0
      %4161 = vmatprep.subr.bf16.mxu0 %v4071
      %4162 = vmatpush1.bf16.msra.mxu0 %v4068
      %4163 = vmatprep.subr.bf16.mxu0 0
      %4164 = vmatpush1.bf16.msra.mxu0 0
      %4165 = vmatprep.subr.bf16.mxu0 0
      %4166 = vmatpush1.bf16.msra.mxu0 0
      %4167 = vmatprep.subr.bf16.mxu0 0
      %4168 = vmatpush1.bf16.msra.mxu0 0
      %4169 = vmatprep.subr.bf16.mxu0 0
      %4170 = vmatpush1.bf16.msra.mxu0 0
      %4171 = vmatprep.subr.bf16.mxu0 0
      %4172 = vmatpush1.bf16.msra.mxu0 0
      %4173 = vmatprep.subr.bf16.mxu0 0
      %4174 = vmatpush1.bf16.msra.mxu0 0
      %4175 = vmatprep.subr.bf16.mxu0 0
      %4176 = vmatpush1.bf16.msra.mxu0 0
      %4177 = vmatprep.subr.bf16.mxu0 0
      %4178 = vmatpush1.bf16.msra.mxu0 0
      %4179 = vmatprep.subr.bf16.mxu0 0
      %4180 = vmatpush1.bf16.msra.mxu0 0
      %4181 = vmatprep.subr.bf16.mxu0 0
      %4182 = vmatpush1.bf16.msra.mxu0 0
      %4183 = vmatprep.subr.bf16.mxu0 0
      %4184 = vmatpush1.bf16.msra.mxu0 0
      %4185 = vmatprep.subr.bf16.mxu0 0
      %4186 = vmatpush1.bf16.msra.mxu0 0
      %4187 = vmatprep.subr.bf16.mxu0 0
      %4188 = vmatpush1.bf16.msra.mxu0 0
      %4189 = vmatprep.subr.bf16.mxu0 0
      %4190 = vmatpush1.bf16.msra.mxu0 0
      %4191 = vmatprep.subr.bf16.mxu0 0
      %4192 = vmatpush1.bf16.msra.mxu0 0
      %4193 = vmatprep.mubr.bf16.mxu0 0
      %4194 = vmatmul.mubr.bf16.gmra.mrb[0].mxu0 %v4053
      %v4195 = vpop.f32.mrb[0].mxu0
      %v4196 = vadd.f32 0.0, %v4195
      %v4197 = vpop.f32.mrb[0].mxu0
      %v4198 = vadd.f32 0.0, %v4197
      %v4199 = vpop.f32.mrb[0].mxu0
      %v4200 = vpop.f32.mrb[0].mxu0
      %4201 = vdwg.mxu0
      %4202 = vmatprep.subr.bf16.mxu0 %v4077
      %4203 = vmatpush1.bf16.msra.mxu0 %v4074
      %4204 = vmatprep.subr.bf16.mxu0 0
      %4205 = vmatpush1.bf16.msra.mxu0 0
      %4206 = vmatprep.subr.bf16.mxu0 0
      %4207 = vmatpush1.bf16.msra.mxu0 0
      %4208 = vmatprep.subr.bf16.mxu0 0
      %4209 = vmatpush1.bf16.msra.mxu0 0
      %4210 = vmatprep.subr.bf16.mxu0 0
      %4211 = vmatpush1.bf16.msra.mxu0 0
      %4212 = vmatprep.subr.bf16.mxu0 0
      %4213 = vmatpush1.bf16.msra.mxu0 0
      %4214 = vmatprep.subr.bf16.mxu0 0
      %4215 = vmatpush1.bf16.msra.mxu0 0
      %4216 = vmatprep.subr.bf16.mxu0 0
      %4217 = vmatpush1.bf16.msra.mxu0 0
      %4218 = vmatprep.subr.bf16.mxu0 0
      %4219 = vmatpush1.bf16.msra.mxu0 0
      %4220 = vmatprep.subr.bf16.mxu0 0
      %4221 = vmatpush1.bf16.msra.mxu0 0
      %4222 = vmatprep.subr.bf16.mxu0 0
      %4223 = vmatpush1.bf16.msra.mxu0 0
      %4224 = vmatprep.subr.bf16.mxu0 0
      %4225 = vmatpush1.bf16.msra.mxu0 0
      %4226 = vmatprep.subr.bf16.mxu0 0
      %4227 = vmatpush1.bf16.msra.mxu0 0
      %4228 = vmatprep.subr.bf16.mxu0 0
      %4229 = vmatpush1.bf16.msra.mxu0 0
      %4230 = vmatprep.subr.bf16.mxu0 0
      %4231 = vmatpush1.bf16.msra.mxu0 0
      %4232 = vmatprep.subr.bf16.mxu0 0
      %4233 = vmatpush1.bf16.msra.mxu0 0
      %4234 = vmatprep.mubr.bf16.mxu0 0
      %4235 = vmatmul.mubr.bf16.gmra.mrb[0].mxu0 %v4053
      %v4236 = vpop.f32.mrb[0].mxu0
      %v4237 = vadd.f32 0.0, %v4236
      %v4238 = vpop.f32.mrb[0].mxu0
      %v4239 = vadd.f32 0.0, %v4238
      %v4240 = vpop.f32.mrb[0].mxu0
      %v4241 = vpop.f32.mrb[0].mxu0
      %4242 = vdwg.mxu0
      %v4243 = vadd.f32 %v3968, %v4114
      %v4244 = vadd.f32 %v3969, %v4116
      %v4245 = vadd.f32 %v3970, %v4155
      %v4246 = vadd.f32 %v3971, %v4157
      %v4247 = vadd.f32 %v3972, %v4196
      %v4248 = vadd.f32 %v3973, %v4198
      %v4249 = vadd.f32 %v3974, %v4237
      %v4250 = vadd.f32 %v3975, %v4239
      %s4251 = scalar_lea.vmem %s1, 20
      %v4252 = vld [vmem:[%s4251] sm:$0xf]
      %v4253 = vld [vmem:[#allocation2] sm:$0xff]
      %v4254 = vld [vmem:[#allocation2 + $0x8] sm:$0xff]
      %v4255 = vld [vmem:[#allocation2 + $0x10] sm:$0x3]
      %v4259 = vcombine.high %v4253, %v4253
      %v4261 = vunpack.c.l.s4 1983009808
      %v4262 = vunpack.c.0.s8 %v4261
      %v4263 = vlaneseq
      %v4264 = vshrl.u32 %v4263, 7
      %v4265 = vsub.s32 %v4262, %v4264
      %v4266 = vrot.slane %v4253, %v4265
      %v4268 = vunpack.c.l.s4 1983009808
      %v4269 = vunpack.c.0.s8 %v4268
      %v4270 = vlaneseq
      %v4271 = vshrl.u32 %v4270, 7
      %v4272 = vsub.s32 %v4269, %v4271
      %v4273 = vrot.slane %v4259, %v4272
      %v4274 = vcombine.high %v4266, %v4266
      %v4275 = vcombine.high %v4273, %v4273
      %v4276 = vcombine.high %v4254, %v4254
      %v4278 = vunpack.c.l.s4 1983009808
      %v4279 = vunpack.c.0.s8 %v4278
      %v4280 = vlaneseq
      %v4281 = vshrl.u32 %v4280, 7
      %v4282 = vsub.s32 %v4279, %v4281
      %v4283 = vrot.slane %v4254, %v4282
      %v4285 = vunpack.c.l.s4 1983009808
      %v4286 = vunpack.c.0.s8 %v4285
      %v4287 = vlaneseq
      %v4288 = vshrl.u32 %v4287, 7
      %v4289 = vsub.s32 %v4286, %v4288
      %v4290 = vrot.slane %v4276, %v4289
      %v4291 = vcombine.high %v4283, %v4283
      %v4292 = vcombine.high %v4290, %v4290
      %v4294 = vunpack.c.l.s4 1983009808
      %v4295 = vunpack.c.0.s8 %v4294
      %v4296 = vlaneseq
      %v4297 = vshrl.u32 %v4296, 7
      %v4298 = vsub.s32 %v4295, %v4297
      %v4299 = vrot.slane %v4255, %v4298
      %4300 = vrot.lane.b32.xlu0 %v4266, 26
      %v4301 = vpop.permute.xlu0 %4300
      %4302 = vrot.lane.b32.xlu0 %v4274, 26
      %v4303 = vpop.permute.xlu0 %4302
      %4304 = vrot.lane.b32.xlu0 %v4273, 26
      %v4305 = vpop.permute.xlu0 %4304
      %4306 = vrot.lane.b32.xlu0 %v4275, 26
      %v4307 = vpop.permute.xlu0 %4306
      %4308 = vrot.lane.b32.xlu0 %v4283, 26
      %v4309 = vpop.permute.xlu0 %4308
      %4310 = vrot.lane.b32.xlu0 %v4291, 26
      %v4311 = vpop.permute.xlu0 %4310
      %4312 = vrot.lane.b32.xlu0 %v4290, 26
      %v4313 = vpop.permute.xlu0 %4312
      %4314 = vrot.lane.b32.xlu0 %v4292, 26
      %v4315 = vpop.permute.xlu0 %4314
      %4316 = vrot.lane.b32.xlu0 %v4299, 26
      %v4317 = vpop.permute.xlu0 %4316
      %vm4318 = vcmask 211968
      %v4319 = vsel %vm4318, %v4301, %v4303
      %v4320 = vsel %vm4318, %v4303, %v4305
      %v4321 = vsel %vm4318, %v4305, %v4307
      %v4322 = vsel %vm4318, %v4307, %v4309
      %v4323 = vsel %vm4318, %v4309, %v4311
      %v4324 = vsel %vm4318, %v4311, %v4313
      %v4325 = vsel %vm4318, %v4313, %v4315
      %v4326 = vsel %vm4318, %v4315, %v4317
      %v4328 = vsel %vm548, %v4252, 0
      %v4331 = vsel %vm552, %v4319, 0
      %v4334 = vsel %vm552, %v4320, 0
      %v4337 = vsel %vm552, %v4321, 0
      %v4340 = vsel %vm552, %v4322, 0
      %v4343 = vsel %vm552, %v4323, 0
      %v4346 = vsel %vm552, %v4324, 0
      %v4349 = vsel %vm552, %v4325, 0
      %v4352 = vsel %vm552, %v4326, 0
      %4354 = vmatprep.subr.bf16.mxu0 %v4334
      %4355 = vmatpush1.bf16.msra.mxu0 %v4331
      %4356 = vmatprep.subr.bf16.mxu0 0
      %4357 = vmatpush1.bf16.msra.mxu0 0
      %4358 = vmatprep.subr.bf16.mxu0 0
      %4359 = vmatpush1.bf16.msra.mxu0 0
      %4360 = vmatprep.subr.bf16.mxu0 0
      %4361 = vmatpush1.bf16.msra.mxu0 0
      %4362 = vmatprep.subr.bf16.mxu0 0
      %4363 = vmatpush1.bf16.msra.mxu0 0
      %4364 = vmatprep.subr.bf16.mxu0 0
      %4365 = vmatpush1.bf16.msra.mxu0 0
      %4366 = vmatprep.subr.bf16.mxu0 0
      %4367 = vmatpush1.bf16.msra.mxu0 0
      %4368 = vmatprep.subr.bf16.mxu0 0
      %4369 = vmatpush1.bf16.msra.mxu0 0
      %4370 = vmatprep.subr.bf16.mxu0 0
      %4371 = vmatpush1.bf16.msra.mxu0 0
      %4372 = vmatprep.subr.bf16.mxu0 0
      %4373 = vmatpush1.bf16.msra.mxu0 0
      %4374 = vmatprep.subr.bf16.mxu0 0
      %4375 = vmatpush1.bf16.msra.mxu0 0
      %4376 = vmatprep.subr.bf16.mxu0 0
      %4377 = vmatpush1.bf16.msra.mxu0 0
      %4378 = vmatprep.subr.bf16.mxu0 0
      %4379 = vmatpush1.bf16.msra.mxu0 0
      %4380 = vmatprep.subr.bf16.mxu0 0
      %4381 = vmatpush1.bf16.msra.mxu0 0
      %4382 = vmatprep.subr.bf16.mxu0 0
      %4383 = vmatpush1.bf16.msra.mxu0 0
      %4384 = vmatprep.subr.bf16.mxu0 0
      %4385 = vmatpush1.bf16.msra.mxu0 0
      %4386 = vmatprep.mubr.bf16.mxu0 0
      %4387 = vmatmul.mubr.bf16.gmra.mrb[0].mxu0 %v4328
      %v4388 = vpop.f32.mrb[0].mxu0
      %v4389 = vadd.f32 0.0, %v4388
      %v4390 = vpop.f32.mrb[0].mxu0
      %v4391 = vadd.f32 0.0, %v4390
      %v4392 = vpop.f32.mrb[0].mxu0
      %v4393 = vpop.f32.mrb[0].mxu0
      %4394 = vdwg.mxu0
      %4395 = vmatprep.subr.bf16.mxu0 %v4340
      %4396 = vmatpush1.bf16.msra.mxu0 %v4337
      %4397 = vmatprep.subr.bf16.mxu0 0
      %4398 = vmatpush1.bf16.msra.mxu0 0
      %4399 = vmatprep.subr.bf16.mxu0 0
      %4400 = vmatpush1.bf16.msra.mxu0 0
      %4401 = vmatprep.subr.bf16.mxu0 0
      %4402 = vmatpush1.bf16.msra.mxu0 0
      %4403 = vmatprep.subr.bf16.mxu0 0
      %4404 = vmatpush1.bf16.msra.mxu0 0
      %4405 = vmatprep.subr.bf16.mxu0 0
      %4406 = vmatpush1.bf16.msra.mxu0 0
      %4407 = vmatprep.subr.bf16.mxu0 0
      %4408 = vmatpush1.bf16.msra.mxu0 0
      %4409 = vmatprep.subr.bf16.mxu0 0
      %4410 = vmatpush1.bf16.msra.mxu0 0
      %4411 = vmatprep.subr.bf16.mxu0 0
      %4412 = vmatpush1.bf16.msra.mxu0 0
      %4413 = vmatprep.subr.bf16.mxu0 0
      %4414 = vmatpush1.bf16.msra.mxu0 0
      %4415 = vmatprep.subr.bf16.mxu0 0
      %4416 = vmatpush1.bf16.msra.mxu0 0
      %4417 = vmatprep.subr.bf16.mxu0 0
      %4418 = vmatpush1.bf16.msra.mxu0 0
      %4419 = vmatprep.subr.bf16.mxu0 0
      %4420 = vmatpush1.bf16.msra.mxu0 0
      %4421 = vmatprep.subr.bf16.mxu0 0
      %4422 = vmatpush1.bf16.msra.mxu0 0
      %4423 = vmatprep.subr.bf16.mxu0 0
      %4424 = vmatpush1.bf16.msra.mxu0 0
      %4425 = vmatprep.subr.bf16.mxu0 0
      %4426 = vmatpush1.bf16.msra.mxu0 0
      %4427 = vmatprep.mubr.bf16.mxu0 0
      %4428 = vmatmul.mubr.bf16.gmra.mrb[0].mxu0 %v4328
      %v4429 = vpop.f32.mrb[0].mxu0
      %v4430 = vadd.f32 0.0, %v4429
      %v4431 = vpop.f32.mrb[0].mxu0
      %v4432 = vadd.f32 0.0, %v4431
      %v4433 = vpop.f32.mrb[0].mxu0
      %v4434 = vpop.f32.mrb[0].mxu0
      %4435 = vdwg.mxu0
      %4436 = vmatprep.subr.bf16.mxu0 %v4346
      %4437 = vmatpush1.bf16.msra.mxu0 %v4343
      %4438 = vmatprep.subr.bf16.mxu0 0
      %4439 = vmatpush1.bf16.msra.mxu0 0
      %4440 = vmatprep.subr.bf16.mxu0 0
      %4441 = vmatpush1.bf16.msra.mxu0 0
      %4442 = vmatprep.subr.bf16.mxu0 0
      %4443 = vmatpush1.bf16.msra.mxu0 0
      %4444 = vmatprep.subr.bf16.mxu0 0
      %4445 = vmatpush1.bf16.msra.mxu0 0
      %4446 = vmatprep.subr.bf16.mxu0 0
      %4447 = vmatpush1.bf16.msra.mxu0 0
      %4448 = vmatprep.subr.bf16.mxu0 0
      %4449 = vmatpush1.bf16.msra.mxu0 0
      %4450 = vmatprep.subr.bf16.mxu0 0
      %4451 = vmatpush1.bf16.msra.mxu0 0
      %4452 = vmatprep.subr.bf16.mxu0 0
      %4453 = vmatpush1.bf16.msra.mxu0 0
      %4454 = vmatprep.subr.bf16.mxu0 0
      %4455 = vmatpush1.bf16.msra.mxu0 0
      %4456 = vmatprep.subr.bf16.mxu0 0
      %4457 = vmatpush1.bf16.msra.mxu0 0
      %4458 = vmatprep.subr.bf16.mxu0 0
      %4459 = vmatpush1.bf16.msra.mxu0 0
      %4460 = vmatprep.subr.bf16.mxu0 0
      %4461 = vmatpush1.bf16.msra.mxu0 0
      %4462 = vmatprep.subr.bf16.mxu0 0
      %4463 = vmatpush1.bf16.msra.mxu0 0
      %4464 = vmatprep.subr.bf16.mxu0 0
      %4465 = vmatpush1.bf16.msra.mxu0 0
      %4466 = vmatprep.subr.bf16.mxu0 0
      %4467 = vmatpush1.bf16.msra.mxu0 0
      %4468 = vmatprep.mubr.bf16.mxu0 0
      %4469 = vmatmul.mubr.bf16.gmra.mrb[0].mxu0 %v4328
      %v4470 = vpop.f32.mrb[0].mxu0
      %v4471 = vadd.f32 0.0, %v4470
      %v4472 = vpop.f32.mrb[0].mxu0
      %v4473 = vadd.f32 0.0, %v4472
      %v4474 = vpop.f32.mrb[0].mxu0
      %v4475 = vpop.f32.mrb[0].mxu0
      %4476 = vdwg.mxu0
      %4477 = vmatprep.subr.bf16.mxu0 %v4352
      %4478 = vmatpush1.bf16.msra.mxu0 %v4349
      %4479 = vmatprep.subr.bf16.mxu0 0
      %4480 = vmatpush1.bf16.msra.mxu0 0
      %4481 = vmatprep.subr.bf16.mxu0 0
      %4482 = vmatpush1.bf16.msra.mxu0 0
      %4483 = vmatprep.subr.bf16.mxu0 0
      %4484 = vmatpush1.bf16.msra.mxu0 0
      %4485 = vmatprep.subr.bf16.mxu0 0
      %4486 = vmatpush1.bf16.msra.mxu0 0
      %4487 = vmatprep.subr.bf16.mxu0 0
      %4488 = vmatpush1.bf16.msra.mxu0 0
      %4489 = vmatprep.subr.bf16.mxu0 0
      %4490 = vmatpush1.bf16.msra.mxu0 0
      %4491 = vmatprep.subr.bf16.mxu0 0
      %4492 = vmatpush1.bf16.msra.mxu0 0
      %4493 = vmatprep.subr.bf16.mxu0 0
      %4494 = vmatpush1.bf16.msra.mxu0 0
      %4495 = vmatprep.subr.bf16.mxu0 0
      %4496 = vmatpush1.bf16.msra.mxu0 0
      %4497 = vmatprep.subr.bf16.mxu0 0
      %4498 = vmatpush1.bf16.msra.mxu0 0
      %4499 = vmatprep.subr.bf16.mxu0 0
      %4500 = vmatpush1.bf16.msra.mxu0 0
      %4501 = vmatprep.subr.bf16.mxu0 0
      %4502 = vmatpush1.bf16.msra.mxu0 0
      %4503 = vmatprep.subr.bf16.mxu0 0
      %4504 = vmatpush1.bf16.msra.mxu0 0
      %4505 = vmatprep.subr.bf16.mxu0 0
      %4506 = vmatpush1.bf16.msra.mxu0 0
      %4507 = vmatprep.subr.bf16.mxu0 0
      %4508 = vmatpush1.bf16.msra.mxu0 0
      %4509 = vmatprep.mubr.bf16.mxu0 0
      %4510 = vmatmul.mubr.bf16.gmra.mrb[0].mxu0 %v4328
      %v4511 = vpop.f32.mrb[0].mxu0
      %v4512 = vadd.f32 0.0, %v4511
      %v4513 = vpop.f32.mrb[0].mxu0
      %v4514 = vadd.f32 0.0, %v4513
      %v4515 = vpop.f32.mrb[0].mxu0
      %v4516 = vpop.f32.mrb[0].mxu0
      %4517 = vdwg.mxu0
      %v4518 = vadd.f32 %v4243, %v4389
      %v4519 = vadd.f32 %v4244, %v4391
      %v4520 = vadd.f32 %v4245, %v4430
      %v4521 = vadd.f32 %v4246, %v4432
      %v4522 = vadd.f32 %v4247, %v4471
      %v4523 = vadd.f32 %v4248, %v4473
      %v4524 = vadd.f32 %v4249, %v4512
      %v4525 = vadd.f32 %v4250, %v4514
      %s4526 = scalar_lea.vmem %s1, 24
      %v4527 = vld [vmem:[%s4526] sm:$0xf]
      %v4528 = vld [vmem:[#allocation2 + $0x2] sm:$0xff]
      %v4529 = vld [vmem:[#allocation2 + $0xa] sm:$0xff]
      %v4530 = vld [vmem:[#allocation2 + $0x12] sm:$0x3]
      %v4534 = vcombine.high %v4528, %v4528
      %v4536 = vunpack.c.l.s4 1983009808
      %v4537 = vunpack.c.0.s8 %v4536
      %v4538 = vlaneseq
      %v4539 = vshrl.u32 %v4538, 7
      %v4540 = vsub.s32 %v4537, %v4539
      %v4541 = vrot.slane %v4528, %v4540
      %v4543 = vunpack.c.l.s4 1983009808
      %v4544 = vunpack.c.0.s8 %v4543
      %v4545 = vlaneseq
      %v4546 = vshrl.u32 %v4545, 7
      %v4547 = vsub.s32 %v4544, %v4546
      %v4548 = vrot.slane %v4534, %v4547
      %v4549 = vcombine.high %v4541, %v4541
      %v4550 = vcombine.high %v4548, %v4548
      %v4551 = vcombine.high %v4529, %v4529
      %v4553 = vunpack.c.l.s4 1983009808
      %v4554 = vunpack.c.0.s8 %v4553
      %v4555 = vlaneseq
      %v4556 = vshrl.u32 %v4555, 7
      %v4557 = vsub.s32 %v4554, %v4556
      %v4558 = vrot.slane %v4529, %v4557
      %v4560 = vunpack.c.l.s4 1983009808
      %v4561 = vunpack.c.0.s8 %v4560
      %v4562 = vlaneseq
      %v4563 = vshrl.u32 %v4562, 7
      %v4564 = vsub.s32 %v4561, %v4563
      %v4565 = vrot.slane %v4551, %v4564
      %v4566 = vcombine.high %v4558, %v4558
      %v4567 = vcombine.high %v4565, %v4565
      %v4569 = vunpack.c.l.s4 1983009808
      %v4570 = vunpack.c.0.s8 %v4569
      %v4571 = vlaneseq
      %v4572 = vshrl.u32 %v4571, 7
      %v4573 = vsub.s32 %v4570, %v4572
      %v4574 = vrot.slane %v4530, %v4573
      %4575 = vrot.lane.b32.xlu0 %v4541, 56
      %v4576 = vpop.permute.xlu0 %4575
      %4577 = vrot.lane.b32.xlu0 %v4549, 56
      %v4578 = vpop.permute.xlu0 %4577
      %4579 = vrot.lane.b32.xlu0 %v4548, 56
      %v4580 = vpop.permute.xlu0 %4579
      %4581 = vrot.lane.b32.xlu0 %v4550, 56
      %v4582 = vpop.permute.xlu0 %4581
      %4583 = vrot.lane.b32.xlu0 %v4558, 56
      %v4584 = vpop.permute.xlu0 %4583
      %4585 = vrot.lane.b32.xlu0 %v4566, 56
      %v4586 = vpop.permute.xlu0 %4585
      %4587 = vrot.lane.b32.xlu0 %v4565, 56
      %v4588 = vpop.permute.xlu0 %4587
      %4589 = vrot.lane.b32.xlu0 %v4567, 56
      %v4590 = vpop.permute.xlu0 %4589
      %4591 = vrot.lane.b32.xlu0 %v4574, 56
      %v4592 = vpop.permute.xlu0 %4591
      %vm4593 = vcmask 457728
      %v4594 = vsel %vm4593, %v4576, %v4578
      %v4595 = vsel %vm4593, %v4578, %v4580
      %v4596 = vsel %vm4593, %v4580, %v4582
      %v4597 = vsel %vm4593, %v4582, %v4584
      %v4598 = vsel %vm4593, %v4584, %v4586
      %v4599 = vsel %vm4593, %v4586, %v4588
      %v4600 = vsel %vm4593, %v4588, %v4590
      %v4601 = vsel %vm4593, %v4590, %v4592
      %v4603 = vsel %vm548, %v4527, 0
      %v4606 = vsel %vm552, %v4594, 0
      %v4609 = vsel %vm552, %v4595, 0
      %v4612 = vsel %vm552, %v4596, 0
      %v4615 = vsel %vm552, %v4597, 0
      %v4618 = vsel %vm552, %v4598, 0
      %v4621 = vsel %vm552, %v4599, 0
      %v4624 = vsel %vm552, %v4600, 0
      %v4627 = vsel %vm552, %v4601, 0
      %4629 = vmatprep.subr.bf16.mxu0 %v4609
      %4630 = vmatpush1.bf16.msra.mxu0 %v4606
      %4631 = vmatprep.subr.bf16.mxu0 0
      %4632 = vmatpush1.bf16.msra.mxu0 0
      %4633 = vmatprep.subr.bf16.mxu0 0
      %4634 = vmatpush1.bf16.msra.mxu0 0
      %4635 = vmatprep.subr.bf16.mxu0 0
      %4636 = vmatpush1.bf16.msra.mxu0 0
      %4637 = vmatprep.subr.bf16.mxu0 0
      %4638 = vmatpush1.bf16.msra.mxu0 0
      %4639 = vmatprep.subr.bf16.mxu0 0
      %4640 = vmatpush1.bf16.msra.mxu0 0
      %4641 = vmatprep.subr.bf16.mxu0 0
      %4642 = vmatpush1.bf16.msra.mxu0 0
      %4643 = vmatprep.subr.bf16.mxu0 0
      %4644 = vmatpush1.bf16.msra.mxu0 0
      %4645 = vmatprep.subr.bf16.mxu0 0
      %4646 = vmatpush1.bf16.msra.mxu0 0
      %4647 = vmatprep.subr.bf16.mxu0 0
      %4648 = vmatpush1.bf16.msra.mxu0 0
      %4649 = vmatprep.subr.bf16.mxu0 0
      %4650 = vmatpush1.bf16.msra.mxu0 0
      %4651 = vmatprep.subr.bf16.mxu0 0
      %4652 = vmatpush1.bf16.msra.mxu0 0
      %4653 = vmatprep.subr.bf16.mxu0 0
      %4654 = vmatpush1.bf16.msra.mxu0 0
      %4655 = vmatprep.subr.bf16.mxu0 0
      %4656 = vmatpush1.bf16.msra.mxu0 0
      %4657 = vmatprep.subr.bf16.mxu0 0
      %4658 = vmatpush1.bf16.msra.mxu0 0
      %4659 = vmatprep.subr.bf16.mxu0 0
      %4660 = vmatpush1.bf16.msra.mxu0 0
      %4661 = vmatprep.mubr.bf16.mxu0 0
      %4662 = vmatmul.mubr.bf16.gmra.mrb[0].mxu0 %v4603
      %v4663 = vpop.f32.mrb[0].mxu0
      %v4664 = vadd.f32 0.0, %v4663
      %v4665 = vpop.f32.mrb[0].mxu0
      %v4666 = vadd.f32 0.0, %v4665
      %v4667 = vpop.f32.mrb[0].mxu0
      %v4668 = vpop.f32.mrb[0].mxu0
      %4669 = vdwg.mxu0
      %4670 = vmatprep.subr.bf16.mxu0 %v4615
      %4671 = vmatpush1.bf16.msra.mxu0 %v4612
      %4672 = vmatprep.subr.bf16.mxu0 0
      %4673 = vmatpush1.bf16.msra.mxu0 0
      %4674 = vmatprep.subr.bf16.mxu0 0
      %4675 = vmatpush1.bf16.msra.mxu0 0
      %4676 = vmatprep.subr.bf16.mxu0 0
      %4677 = vmatpush1.bf16.msra.mxu0 0
      %4678 = vmatprep.subr.bf16.mxu0 0
      %4679 = vmatpush1.bf16.msra.mxu0 0
      %4680 = vmatprep.subr.bf16.mxu0 0
      %4681 = vmatpush1.bf16.msra.mxu0 0
      %4682 = vmatprep.subr.bf16.mxu0 0
      %4683 = vmatpush1.bf16.msra.mxu0 0
      %4684 = vmatprep.subr.bf16.mxu0 0
      %4685 = vmatpush1.bf16.msra.mxu0 0
      %4686 = vmatprep.subr.bf16.mxu0 0
      %4687 = vmatpush1.bf16.msra.mxu0 0
      %4688 = vmatprep.subr.bf16.mxu0 0
      %4689 = vmatpush1.bf16.msra.mxu0 0
      %4690 = vmatprep.subr.bf16.mxu0 0
      %4691 = vmatpush1.bf16.msra.mxu0 0
      %4692 = vmatprep.subr.bf16.mxu0 0
      %4693 = vmatpush1.bf16.msra.mxu0 0
      %4694 = vmatprep.subr.bf16.mxu0 0
      %4695 = vmatpush1.bf16.msra.mxu0 0
      %4696 = vmatprep.subr.bf16.mxu0 0
      %4697 = vmatpush1.bf16.msra.mxu0 0
      %4698 = vmatprep.subr.bf16.mxu0 0
      %4699 = vmatpush1.bf16.msra.mxu0 0
      %4700 = vmatprep.subr.bf16.mxu0 0
      %4701 = vmatpush1.bf16.msra.mxu0 0
      %4702 = vmatprep.mubr.bf16.mxu0 0
      %4703 = vmatmul.mubr.bf16.gmra.mrb[0].mxu0 %v4603
      %v4704 = vpop.f32.mrb[0].mxu0
      %v4705 = vadd.f32 0.0, %v4704
      %v4706 = vpop.f32.mrb[0].mxu0
      %v4707 = vadd.f32 0.0, %v4706
      %v4708 = vpop.f32.mrb[0].mxu0
      %v4709 = vpop.f32.mrb[0].mxu0
      %4710 = vdwg.mxu0
      %4711 = vmatprep.subr.bf16.mxu0 %v4621
      %4712 = vmatpush1.bf16.msra.mxu0 %v4618
      %4713 = vmatprep.subr.bf16.mxu0 0
      %4714 = vmatpush1.bf16.msra.mxu0 0
      %4715 = vmatprep.subr.bf16.mxu0 0
      %4716 = vmatpush1.bf16.msra.mxu0 0
      %4717 = vmatprep.subr.bf16.mxu0 0
      %4718 = vmatpush1.bf16.msra.mxu0 0
      %4719 = vmatprep.subr.bf16.mxu0 0
      %4720 = vmatpush1.bf16.msra.mxu0 0
      %4721 = vmatprep.subr.bf16.mxu0 0
      %4722 = vmatpush1.bf16.msra.mxu0 0
      %4723 = vmatprep.subr.bf16.mxu0 0
      %4724 = vmatpush1.bf16.msra.mxu0 0
      %4725 = vmatprep.subr.bf16.mxu0 0
      %4726 = vmatpush1.bf16.msra.mxu0 0
      %4727 = vmatprep.subr.bf16.mxu0 0
      %4728 = vmatpush1.bf16.msra.mxu0 0
      %4729 = vmatprep.subr.bf16.mxu0 0
      %4730 = vmatpush1.bf16.msra.mxu0 0
      %4731 = vmatprep.subr.bf16.mxu0 0
      %4732 = vmatpush1.bf16.msra.mxu0 0
      %4733 = vmatprep.subr.bf16.mxu0 0
      %4734 = vmatpush1.bf16.msra.mxu0 0
      %4735 = vmatprep.subr.bf16.mxu0 0
      %4736 = vmatpush1.bf16.msra.mxu0 0
      %4737 = vmatprep.subr.bf16.mxu0 0
      %4738 = vmatpush1.bf16.msra.mxu0 0
      %4739 = vmatprep.subr.bf16.mxu0 0
      %4740 = vmatpush1.bf16.msra.mxu0 0
      %4741 = vmatprep.subr.bf16.mxu0 0
      %4742 = vmatpush1.bf16.msra.mxu0 0
      %4743 = vmatprep.mubr.bf16.mxu0 0
      %4744 = vmatmul.mubr.bf16.gmra.mrb[0].mxu0 %v4603
      %v4745 = vpop.f32.mrb[0].mxu0
      %v4746 = vadd.f32 0.0, %v4745
      %v4747 = vpop.f32.mrb[0].mxu0
      %v4748 = vadd.f32 0.0, %v4747
      %v4749 = vpop.f32.mrb[0].mxu0
      %v4750 = vpop.f32.mrb[0].mxu0
      %4751 = vdwg.mxu0
      %4752 = vmatprep.subr.bf16.mxu0 %v4627
      %4753 = vmatpush1.bf16.msra.mxu0 %v4624
      %4754 = vmatprep.subr.bf16.mxu0 0
      %4755 = vmatpush1.bf16.msra.mxu0 0
      %4756 = vmatprep.subr.bf16.mxu0 0
      %4757 = vmatpush1.bf16.msra.mxu0 0
      %4758 = vmatprep.subr.bf16.mxu0 0
      %4759 = vmatpush1.bf16.msra.mxu0 0
      %4760 = vmatprep.subr.bf16.mxu0 0
      %4761 = vmatpush1.bf16.msra.mxu0 0
      %4762 = vmatprep.subr.bf16.mxu0 0
      %4763 = vmatpush1.bf16.msra.mxu0 0
      %4764 = vmatprep.subr.bf16.mxu0 0
      %4765 = vmatpush1.bf16.msra.mxu0 0
      %4766 = vmatprep.subr.bf16.mxu0 0
      %4767 = vmatpush1.bf16.msra.mxu0 0
      %4768 = vmatprep.subr.bf16.mxu0 0
      %4769 = vmatpush1.bf16.msra.mxu0 0
      %4770 = vmatprep.subr.bf16.mxu0 0
      %4771 = vmatpush1.bf16.msra.mxu0 0
      %4772 = vmatprep.subr.bf16.mxu0 0
      %4773 = vmatpush1.bf16.msra.mxu0 0
      %4774 = vmatprep.subr.bf16.mxu0 0
      %4775 = vmatpush1.bf16.msra.mxu0 0
      %4776 = vmatprep.subr.bf16.mxu0 0
      %4777 = vmatpush1.bf16.msra.mxu0 0
      %4778 = vmatprep.subr.bf16.mxu0 0
      %4779 = vmatpush1.bf16.msra.mxu0 0
      %4780 = vmatprep.subr.bf16.mxu0 0
      %4781 = vmatpush1.bf16.msra.mxu0 0
      %4782 = vmatprep.subr.bf16.mxu0 0
      %4783 = vmatpush1.bf16.msra.mxu0 0
      %4784 = vmatprep.mubr.bf16.mxu0 0
      %4785 = vmatmul.mubr.bf16.gmra.mrb[0].mxu0 %v4603
      %v4786 = vpop.f32.mrb[0].mxu0
      %v4787 = vadd.f32 0.0, %v4786
      %v4788 = vpop.f32.mrb[0].mxu0
      %v4789 = vadd.f32 0.0, %v4788
      %v4790 = vpop.f32.mrb[0].mxu0
      %v4791 = vpop.f32.mrb[0].mxu0
      %4792 = vdwg.mxu0
      %v4793 = vadd.f32 %v4518, %v4664
      %v4794 = vadd.f32 %v4519, %v4666
      %v4795 = vadd.f32 %v4520, %v4705
      %v4796 = vadd.f32 %v4521, %v4707
      %v4797 = vadd.f32 %v4522, %v4746
      %v4798 = vadd.f32 %v4523, %v4748
      %v4799 = vadd.f32 %v4524, %v4787
      %v4800 = vadd.f32 %v4525, %v4789
      %s4801 = scalar_lea.vmem %s1, 28
      %v4802 = vld [vmem:[%s4801] sm:$0xf]
      %v4803 = vld [vmem:[#allocation2 + $0x2] sm:$0xff]
      %v4804 = vld [vmem:[#allocation2 + $0xa] sm:$0xff]
      %v4805 = vld [vmem:[#allocation2 + $0x12] sm:$0x3]
      %v4809 = vcombine.high %v4803, %v4803
      %v4811 = vunpack.c.l.s4 1983009808
      %v4812 = vunpack.c.0.s8 %v4811
      %v4813 = vlaneseq
      %v4814 = vshrl.u32 %v4813, 7
      %v4815 = vsub.s32 %v4812, %v4814
      %v4816 = vrot.slane %v4803, %v4815
      %v4818 = vunpack.c.l.s4 1983009808
      %v4819 = vunpack.c.0.s8 %v4818
      %v4820 = vlaneseq
      %v4821 = vshrl.u32 %v4820, 7
      %v4822 = vsub.s32 %v4819, %v4821
      %v4823 = vrot.slane %v4809, %v4822
      %v4824 = vcombine.high %v4816, %v4816
      %v4825 = vcombine.high %v4823, %v4823
      %v4826 = vcombine.high %v4804, %v4804
      %v4828 = vunpack.c.l.s4 1983009808
      %v4829 = vunpack.c.0.s8 %v4828
      %v4830 = vlaneseq
      %v4831 = vshrl.u32 %v4830, 7
      %v4832 = vsub.s32 %v4829, %v4831
      %v4833 = vrot.slane %v4804, %v4832
      %v4835 = vunpack.c.l.s4 1983009808
      %v4836 = vunpack.c.0.s8 %v4835
      %v4837 = vlaneseq
      %v4838 = vshrl.u32 %v4837, 7
      %v4839 = vsub.s32 %v4836, %v4838
      %v4840 = vrot.slane %v4826, %v4839
      %v4841 = vcombine.high %v4833, %v4833
      %v4842 = vcombine.high %v4840, %v4840
      %v4844 = vunpack.c.l.s4 1983009808
      %v4845 = vunpack.c.0.s8 %v4844
      %v4846 = vlaneseq
      %v4847 = vshrl.u32 %v4846, 7
      %v4848 = vsub.s32 %v4845, %v4847
      %v4849 = vrot.slane %v4805, %v4848
      %4850 = vrot.lane.b32.xlu0 %v4816, 55
      %v4851 = vpop.permute.xlu0 %4850
      %4852 = vrot.lane.b32.xlu0 %v4824, 55
      %v4853 = vpop.permute.xlu0 %4852
      %4854 = vrot.lane.b32.xlu0 %v4823, 55
      %v4855 = vpop.permute.xlu0 %4854
      %4856 = vrot.lane.b32.xlu0 %v4825, 55
      %v4857 = vpop.permute.xlu0 %4856
      %4858 = vrot.lane.b32.xlu0 %v4833, 55
      %v4859 = vpop.permute.xlu0 %4858
      %4860 = vrot.lane.b32.xlu0 %v4841, 55
      %v4861 = vpop.permute.xlu0 %4860
      %4862 = vrot.lane.b32.xlu0 %v4840, 55
      %v4863 = vpop.permute.xlu0 %4862
      %4864 = vrot.lane.b32.xlu0 %v4842, 55
      %v4865 = vpop.permute.xlu0 %4864
      %4866 = vrot.lane.b32.xlu0 %v4849, 55
      %v4867 = vpop.permute.xlu0 %4866
      %vm4868 = vcmask 449536
      %v4869 = vsel %vm4868, %v4851, %v4853
      %v4870 = vsel %vm4868, %v4853, %v4855
      %v4871 = vsel %vm4868, %v4855, %v4857
      %v4872 = vsel %vm4868, %v4857, %v4859
      %v4873 = vsel %vm4868, %v4859, %v4861
      %v4874 = vsel %vm4868, %v4861, %v4863
      %v4875 = vsel %vm4868, %v4863, %v4865
      %v4876 = vsel %vm4868, %v4865, %v4867
      %v4878 = vsel %vm548, %v4802, 0
      %v4881 = vsel %vm552, %v4869, 0
      %v4884 = vsel %vm552, %v4870, 0
      %v4887 = vsel %vm552, %v4871, 0
      %v4890 = vsel %vm552, %v4872, 0
      %v4893 = vsel %vm552, %v4873, 0
      %v4896 = vsel %vm552, %v4874, 0
      %v4899 = vsel %vm552, %v4875, 0
      %v4902 = vsel %vm552, %v4876, 0
      %4904 = vmatprep.subr.bf16.mxu0 %v4884
      %4905 = vmatpush1.bf16.msra.mxu0 %v4881
      %4906 = vmatprep.subr.bf16.mxu0 0
      %4907 = vmatpush1.bf16.msra.mxu0 0
      %4908 = vmatprep.subr.bf16.mxu0 0
      %4909 = vmatpush1.bf16.msra.mxu0 0
      %4910 = vmatprep.subr.bf16.mxu0 0
      %4911 = vmatpush1.bf16.msra.mxu0 0
      %4912 = vmatprep.subr.bf16.mxu0 0
      %4913 = vmatpush1.bf16.msra.mxu0 0
      %4914 = vmatprep.subr.bf16.mxu0 0
      %4915 = vmatpush1.bf16.msra.mxu0 0
      %4916 = vmatprep.subr.bf16.mxu0 0
      %4917 = vmatpush1.bf16.msra.mxu0 0
      %4918 = vmatprep.subr.bf16.mxu0 0
      %4919 = vmatpush1.bf16.msra.mxu0 0
      %4920 = vmatprep.subr.bf16.mxu0 0
      %4921 = vmatpush1.bf16.msra.mxu0 0
      %4922 = vmatprep.subr.bf16.mxu0 0
      %4923 = vmatpush1.bf16.msra.mxu0 0
      %4924 = vmatprep.subr.bf16.mxu0 0
      %4925 = vmatpush1.bf16.msra.mxu0 0
      %4926 = vmatprep.subr.bf16.mxu0 0
      %4927 = vmatpush1.bf16.msra.mxu0 0
      %4928 = vmatprep.subr.bf16.mxu0 0
      %4929 = vmatpush1.bf16.msra.mxu0 0
      %4930 = vmatprep.subr.bf16.mxu0 0
      %4931 = vmatpush1.bf16.msra.mxu0 0
      %4932 = vmatprep.subr.bf16.mxu0 0
      %4933 = vmatpush1.bf16.msra.mxu0 0
      %4934 = vmatprep.subr.bf16.mxu0 0
      %4935 = vmatpush1.bf16.msra.mxu0 0
      %4936 = vmatprep.mubr.bf16.mxu0 0
      %4937 = vmatmul.mubr.bf16.gmra.mrb[0].mxu0 %v4878
      %v4938 = vpop.f32.mrb[0].mxu0
      %v4939 = vadd.f32 0.0, %v4938
      %v4940 = vpop.f32.mrb[0].mxu0
      %v4941 = vadd.f32 0.0, %v4940
      %v4942 = vpop.f32.mrb[0].mxu0
      %v4943 = vpop.f32.mrb[0].mxu0
      %4944 = vdwg.mxu0
      %4945 = vmatprep.subr.bf16.mxu0 %v4890
      %4946 = vmatpush1.bf16.msra.mxu0 %v4887
      %4947 = vmatprep.subr.bf16.mxu0 0
      %4948 = vmatpush1.bf16.msra.mxu0 0
      %4949 = vmatprep.subr.bf16.mxu0 0
      %4950 = vmatpush1.bf16.msra.mxu0 0
      %4951 = vmatprep.subr.bf16.mxu0 0
      %4952 = vmatpush1.bf16.msra.mxu0 0
      %4953 = vmatprep.subr.bf16.mxu0 0
      %4954 = vmatpush1.bf16.msra.mxu0 0
      %4955 = vmatprep.subr.bf16.mxu0 0
      %4956 = vmatpush1.bf16.msra.mxu0 0
      %4957 = vmatprep.subr.bf16.mxu0 0
      %4958 = vmatpush1.bf16.msra.mxu0 0
      %4959 = vmatprep.subr.bf16.mxu0 0
      %4960 = vmatpush1.bf16.msra.mxu0 0
      %4961 = vmatprep.subr.bf16.mxu0 0
      %4962 = vmatpush1.bf16.msra.mxu0 0
      %4963 = vmatprep.subr.bf16.mxu0 0
      %4964 = vmatpush1.bf16.msra.mxu0 0
      %4965 = vmatprep.subr.bf16.mxu0 0
      %4966 = vmatpush1.bf16.msra.mxu0 0
      %4967 = vmatprep.subr.bf16.mxu0 0
      %4968 = vmatpush1.bf16.msra.mxu0 0
      %4969 = vmatprep.subr.bf16.mxu0 0
      %4970 = vmatpush1.bf16.msra.mxu0 0
      %4971 = vmatprep.subr.bf16.mxu0 0
      %4972 = vmatpush1.bf16.msra.mxu0 0
      %4973 = vmatprep.subr.bf16.mxu0 0
      %4974 = vmatpush1.bf16.msra.mxu0 0
      %4975 = vmatprep.subr.bf16.mxu0 0
      %4976 = vmatpush1.bf16.msra.mxu0 0
      %4977 = vmatprep.mubr.bf16.mxu0 0
      %4978 = vmatmul.mubr.bf16.gmra.mrb[0].mxu0 %v4878
      %v4979 = vpop.f32.mrb[0].mxu0
      %v4980 = vadd.f32 0.0, %v4979
      %v4981 = vpop.f32.mrb[0].mxu0
      %v4982 = vadd.f32 0.0, %v4981
      %v4983 = vpop.f32.mrb[0].mxu0
      %v4984 = vpop.f32.mrb[0].mxu0
      %4985 = vdwg.mxu0
      %4986 = vmatprep.subr.bf16.mxu0 %v4896
      %4987 = vmatpush1.bf16.msra.mxu0 %v4893
      %4988 = vmatprep.subr.bf16.mxu0 0
      %4989 = vmatpush1.bf16.msra.mxu0 0
      %4990 = vmatprep.subr.bf16.mxu0 0
      %4991 = vmatpush1.bf16.msra.mxu0 0
      %4992 = vmatprep.subr.bf16.mxu0 0
      %4993 = vmatpush1.bf16.msra.mxu0 0
      %4994 = vmatprep.subr.bf16.mxu0 0
      %4995 = vmatpush1.bf16.msra.mxu0 0
      %4996 = vmatprep.subr.bf16.mxu0 0
      %4997 = vmatpush1.bf16.msra.mxu0 0
      %4998 = vmatprep.subr.bf16.mxu0 0
      %4999 = vmatpush1.bf16.msra.mxu0 0
      %5000 = vmatprep.subr.bf16.mxu0 0
      %5001 = vmatpush1.bf16.msra.mxu0 0
      %5002 = vmatprep.subr.bf16.mxu0 0
      %5003 = vmatpush1.bf16.msra.mxu0 0
      %5004 = vmatprep.subr.bf16.mxu0 0
      %5005 = vmatpush1.bf16.msra.mxu0 0
      %5006 = vmatprep.subr.bf16.mxu0 0
      %5007 = vmatpush1.bf16.msra.mxu0 0
      %5008 = vmatprep.subr.bf16.mxu0 0
      %5009 = vmatpush1.bf16.msra.mxu0 0
      %5010 = vmatprep.subr.bf16.mxu0 0
      %5011 = vmatpush1.bf16.msra.mxu0 0
      %5012 = vmatprep.subr.bf16.mxu0 0
      %5013 = vmatpush1.bf16.msra.mxu0 0
      %5014 = vmatprep.subr.bf16.mxu0 0
      %5015 = vmatpush1.bf16.msra.mxu0 0
      %5016 = vmatprep.subr.bf16.mxu0 0
      %5017 = vmatpush1.bf16.msra.mxu0 0
      %5018 = vmatprep.mubr.bf16.mxu0 0
      %5019 = vmatmul.mubr.bf16.gmra.mrb[0].mxu0 %v4878
      %v5020 = vpop.f32.mrb[0].mxu0
      %v5021 = vadd.f32 0.0, %v5020
      %v5022 = vpop.f32.mrb[0].mxu0
      %v5023 = vadd.f32 0.0, %v5022
      %v5024 = vpop.f32.mrb[0].mxu0
      %v5025 = vpop.f32.mrb[0].mxu0
      %5026 = vdwg.mxu0
      %5027 = vmatprep.subr.bf16.mxu0 %v4902
      %5028 = vmatpush1.bf16.msra.mxu0 %v4899
      %5029 = vmatprep.subr.bf16.mxu0 0
      %5030 = vmatpush1.bf16.msra.mxu0 0
      %5031 = vmatprep.subr.bf16.mxu0 0
      %5032 = vmatpush1.bf16.msra.mxu0 0
      %5033 = vmatprep.subr.bf16.mxu0 0
      %5034 = vmatpush1.bf16.msra.mxu0 0
      %5035 = vmatprep.subr.bf16.mxu0 0
      %5036 = vmatpush1.bf16.msra.mxu0 0
      %5037 = vmatprep.subr.bf16.mxu0 0
      %5038 = vmatpush1.bf16.msra.mxu0 0
      %5039 = vmatprep.subr.bf16.mxu0 0
      %5040 = vmatpush1.bf16.msra.mxu0 0
      %5041 = vmatprep.subr.bf16.mxu0 0
      %5042 = vmatpush1.bf16.msra.mxu0 0
      %5043 = vmatprep.subr.bf16.mxu0 0
      %5044 = vmatpush1.bf16.msra.mxu0 0
      %5045 = vmatprep.subr.bf16.mxu0 0
      %5046 = vmatpush1.bf16.msra.mxu0 0
      %5047 = vmatprep.subr.bf16.mxu0 0
      %5048 = vmatpush1.bf16.msra.mxu0 0
      %5049 = vmatprep.subr.bf16.mxu0 0
      %5050 = vmatpush1.bf16.msra.mxu0 0
      %5051 = vmatprep.subr.bf16.mxu0 0
      %5052 = vmatpush1.bf16.msra.mxu0 0
      %5053 = vmatprep.subr.bf16.mxu0 0
      %5054 = vmatpush1.bf16.msra.mxu0 0
      %5055 = vmatprep.subr.bf16.mxu0 0
      %5056 = vmatpush1.bf16.msra.mxu0 0
      %5057 = vmatprep.subr.bf16.mxu0 0
      %5058 = vmatpush1.bf16.msra.mxu0 0
      %5059 = vmatprep.mubr.bf16.mxu0 0
      %5060 = vmatmul.mubr.bf16.gmra.mrb[0].mxu0 %v4878
      %v5061 = vpop.f32.mrb[0].mxu0
      %v5062 = vadd.f32 0.0, %v5061
      %v5063 = vpop.f32.mrb[0].mxu0
      %v5064 = vadd.f32 0.0, %v5063
      %v5065 = vpop.f32.mrb[0].mxu0
      %v5066 = vpop.f32.mrb[0].mxu0
      %5067 = vdwg.mxu0
      %v5068 = vadd.f32 %v4793, %v4939
      %v5069 = vadd.f32 %v4794, %v4941
      %v5070 = vadd.f32 %v4795, %v4980
      %v5071 = vadd.f32 %v4796, %v4982
      %v5072 = vadd.f32 %v4797, %v5021
      %v5073 = vadd.f32 %v4798, %v5023
      %v5074 = vadd.f32 %v4799, %v5062
      %v5075 = vadd.f32 %v4800, %v5064
      %s5076 = scalar_lea.vmem %s1, 32
      %v5077 = vld [vmem:[%s5076] sm:$0xf]
      %v5078 = vld [vmem:[#allocation2 + $0x2] sm:$0xff]
      %v5079 = vld [vmem:[#allocation2 + $0xa] sm:$0xff]
      %v5080 = vld [vmem:[#allocation2 + $0x12] sm:$0x3]
      %v5084 = vcombine.high %v5078, %v5078
      %v5086 = vunpack.c.l.s4 1983009808
      %v5087 = vunpack.c.0.s8 %v5086
      %v5088 = vlaneseq
      %v5089 = vshrl.u32 %v5088, 7
      %v5090 = vsub.s32 %v5087, %v5089
      %v5091 = vrot.slane %v5078, %v5090
      %v5093 = vunpack.c.l.s4 1983009808
      %v5094 = vunpack.c.0.s8 %v5093
      %v5095 = vlaneseq
      %v5096 = vshrl.u32 %v5095, 7
      %v5097 = vsub.s32 %v5094, %v5096
      %v5098 = vrot.slane %v5084, %v5097
      %v5099 = vcombine.high %v5091, %v5091
      %v5100 = vcombine.high %v5098, %v5098
      %v5101 = vcombine.high %v5079, %v5079
      %v5103 = vunpack.c.l.s4 1983009808
      %v5104 = vunpack.c.0.s8 %v5103
      %v5105 = vlaneseq
      %v5106 = vshrl.u32 %v5105, 7
      %v5107 = vsub.s32 %v5104, %v5106
      %v5108 = vrot.slane %v5079, %v5107
      %v5110 = vunpack.c.l.s4 1983009808
      %v5111 = vunpack.c.0.s8 %v5110
      %v5112 = vlaneseq
      %v5113 = vshrl.u32 %v5112, 7
      %v5114 = vsub.s32 %v5111, %v5113
      %v5115 = vrot.slane %v5101, %v5114
      %v5116 = vcombine.high %v5108, %v5108
      %v5117 = vcombine.high %v5115, %v5115
      %v5119 = vunpack.c.l.s4 1983009808
      %v5120 = vunpack.c.0.s8 %v5119
      %v5121 = vlaneseq
      %v5122 = vshrl.u32 %v5121, 7
      %v5123 = vsub.s32 %v5120, %v5122
      %v5124 = vrot.slane %v5080, %v5123
      %5125 = vrot.lane.b32.xlu0 %v5091, 54
      %v5126 = vpop.permute.xlu0 %5125
      %5127 = vrot.lane.b32.xlu0 %v5099, 54
      %v5128 = vpop.permute.xlu0 %5127
      %5129 = vrot.lane.b32.xlu0 %v5098, 54
      %v5130 = vpop.permute.xlu0 %5129
      %5131 = vrot.lane.b32.xlu0 %v5100, 54
      %v5132 = vpop.permute.xlu0 %5131
      %5133 = vrot.lane.b32.xlu0 %v5108, 54
      %v5134 = vpop.permute.xlu0 %5133
      %5135 = vrot.lane.b32.xlu0 %v5116, 54
      %v5136 = vpop.permute.xlu0 %5135
      %5137 = vrot.lane.b32.xlu0 %v5115, 54
      %v5138 = vpop.permute.xlu0 %5137
      %5139 = vrot.lane.b32.xlu0 %v5117, 54
      %v5140 = vpop.permute.xlu0 %5139
      %5141 = vrot.lane.b32.xlu0 %v5124, 54
      %v5142 = vpop.permute.xlu0 %5141
      %vm5143 = vcmask 441344
      %v5144 = vsel %vm5143, %v5126, %v5128
      %v5145 = vsel %vm5143, %v5128, %v5130
      %v5146 = vsel %vm5143, %v5130, %v5132
      %v5147 = vsel %vm5143, %v5132, %v5134
      %v5148 = vsel %vm5143, %v5134, %v5136
      %v5149 = vsel %vm5143, %v5136, %v5138
      %v5150 = vsel %vm5143, %v5138, %v5140
      %v5151 = vsel %vm5143, %v5140, %v5142
      %v5153 = vsel %vm548, %v5077, 0
      %v5156 = vsel %vm552, %v5144, 0
      %v5159 = vsel %vm552, %v5145, 0
      %v5162 = vsel %vm552, %v5146, 0
      %v5165 = vsel %vm552, %v5147, 0
      %v5168 = vsel %vm552, %v5148, 0
      %v5171 = vsel %vm552, %v5149, 0
      %v5174 = vsel %vm552, %v5150, 0
      %v5177 = vsel %vm552, %v5151, 0
      %5179 = vmatprep.subr.bf16.mxu0 %v5159
      %5180 = vmatpush1.bf16.msra.mxu0 %v5156
      %5181 = vmatprep.subr.bf16.mxu0 0
      %5182 = vmatpush1.bf16.msra.mxu0 0
      %5183 = vmatprep.subr.bf16.mxu0 0
      %5184 = vmatpush1.bf16.msra.mxu0 0
      %5185 = vmatprep.subr.bf16.mxu0 0
      %5186 = vmatpush1.bf16.msra.mxu0 0
      %5187 = vmatprep.subr.bf16.mxu0 0
      %5188 = vmatpush1.bf16.msra.mxu0 0
      %5189 = vmatprep.subr.bf16.mxu0 0
      %5190 = vmatpush1.bf16.msra.mxu0 0
      %5191 = vmatprep.subr.bf16.mxu0 0
      %5192 = vmatpush1.bf16.msra.mxu0 0
      %5193 = vmatprep.subr.bf16.mxu0 0
      %5194 = vmatpush1.bf16.msra.mxu0 0
      %5195 = vmatprep.subr.bf16.mxu0 0
      %5196 = vmatpush1.bf16.msra.mxu0 0
      %5197 = vmatprep.subr.bf16.mxu0 0
      %5198 = vmatpush1.bf16.msra.mxu0 0
      %5199 = vmatprep.subr.bf16.mxu0 0
      %5200 = vmatpush1.bf16.msra.mxu0 0
      %5201 = vmatprep.subr.bf16.mxu0 0
      %5202 = vmatpush1.bf16.msra.mxu0 0
      %5203 = vmatprep.subr.bf16.mxu0 0
      %5204 = vmatpush1.bf16.msra.mxu0 0
      %5205 = vmatprep.subr.bf16.mxu0 0
      %5206 = vmatpush1.bf16.msra.mxu0 0
      %5207 = vmatprep.subr.bf16.mxu0 0
      %5208 = vmatpush1.bf16.msra.mxu0 0
      %5209 = vmatprep.subr.bf16.mxu0 0
      %5210 = vmatpush1.bf16.msra.mxu0 0
      %5211 = vmatprep.mubr.bf16.mxu0 0
      %5212 = vmatmul.mubr.bf16.gmra.mrb[0].mxu0 %v5153
      %v5213 = vpop.f32.mrb[0].mxu0
      %v5214 = vadd.f32 0.0, %v5213
      %v5215 = vpop.f32.mrb[0].mxu0
      %v5216 = vadd.f32 0.0, %v5215
      %v5217 = vpop.f32.mrb[0].mxu0
      %v5218 = vpop.f32.mrb[0].mxu0
      %5219 = vdwg.mxu0
      %5220 = vmatprep.subr.bf16.mxu0 %v5165
      %5221 = vmatpush1.bf16.msra.mxu0 %v5162
      %5222 = vmatprep.subr.bf16.mxu0 0
      %5223 = vmatpush1.bf16.msra.mxu0 0
      %5224 = vmatprep.subr.bf16.mxu0 0
      %5225 = vmatpush1.bf16.msra.mxu0 0
      %5226 = vmatprep.subr.bf16.mxu0 0
      %5227 = vmatpush1.bf16.msra.mxu0 0
      %5228 = vmatprep.subr.bf16.mxu0 0
      %5229 = vmatpush1.bf16.msra.mxu0 0
      %5230 = vmatprep.subr.bf16.mxu0 0
      %5231 = vmatpush1.bf16.msra.mxu0 0
      %5232 = vmatprep.subr.bf16.mxu0 0
      %5233 = vmatpush1.bf16.msra.mxu0 0
      %5234 = vmatprep.subr.bf16.mxu0 0
      %5235 = vmatpush1.bf16.msra.mxu0 0
      %5236 = vmatprep.subr.bf16.mxu0 0
      %5237 = vmatpush1.bf16.msra.mxu0 0
      %5238 = vmatprep.subr.bf16.mxu0 0
      %5239 = vmatpush1.bf16.msra.mxu0 0
      %5240 = vmatprep.subr.bf16.mxu0 0
      %5241 = vmatpush1.bf16.msra.mxu0 0
      %5242 = vmatprep.subr.bf16.mxu0 0
      %5243 = vmatpush1.bf16.msra.mxu0 0
      %5244 = vmatprep.subr.bf16.mxu0 0
      %5245 = vmatpush1.bf16.msra.mxu0 0
      %5246 = vmatprep.subr.bf16.mxu0 0
      %5247 = vmatpush1.bf16.msra.mxu0 0
      %5248 = vmatprep.subr.bf16.mxu0 0
      %5249 = vmatpush1.bf16.msra.mxu0 0
      %5250 = vmatprep.subr.bf16.mxu0 0
      %5251 = vmatpush1.bf16.msra.mxu0 0
      %5252 = vmatprep.mubr.bf16.mxu0 0
      %5253 = vmatmul.mubr.bf16.gmra.mrb[0].mxu0 %v5153
      %v5254 = vpop.f32.mrb[0].mxu0
      %v5255 = vadd.f32 0.0, %v5254
      %v5256 = vpop.f32.mrb[0].mxu0
      %v5257 = vadd.f32 0.0, %v5256
      %v5258 = vpop.f32.mrb[0].mxu0
      %v5259 = vpop.f32.mrb[0].mxu0
      %5260 = vdwg.mxu0
      %5261 = vmatprep.subr.bf16.mxu0 %v5171
      %5262 = vmatpush1.bf16.msra.mxu0 %v5168
      %5263 = vmatprep.subr.bf16.mxu0 0
      %5264 = vmatpush1.bf16.msra.mxu0 0
      %5265 = vmatprep.subr.bf16.mxu0 0
      %5266 = vmatpush1.bf16.msra.mxu0 0
      %5267 = vmatprep.subr.bf16.mxu0 0
      %5268 = vmatpush1.bf16.msra.mxu0 0
      %5269 = vmatprep.subr.bf16.mxu0 0
      %5270 = vmatpush1.bf16.msra.mxu0 0
      %5271 = vmatprep.subr.bf16.mxu0 0
      %5272 = vmatpush1.bf16.msra.mxu0 0
      %5273 = vmatprep.subr.bf16.mxu0 0
      %5274 = vmatpush1.bf16.msra.mxu0 0
      %5275 = vmatprep.subr.bf16.mxu0 0
      %5276 = vmatpush1.bf16.msra.mxu0 0
      %5277 = vmatprep.subr.bf16.mxu0 0
      %5278 = vmatpush1.bf16.msra.mxu0 0
      %5279 = vmatprep.subr.bf16.mxu0 0
      %5280 = vmatpush1.bf16.msra.mxu0 0
      %5281 = vmatprep.subr.bf16.mxu0 0
      %5282 = vmatpush1.bf16.msra.mxu0 0
      %5283 = vmatprep.subr.bf16.mxu0 0
      %5284 = vmatpush1.bf16.msra.mxu0 0
      %5285 = vmatprep.subr.bf16.mxu0 0
      %5286 = vmatpush1.bf16.msra.mxu0 0
      %5287 = vmatprep.subr.bf16.mxu0 0
      %5288 = vmatpush1.bf16.msra.mxu0 0
      %5289 = vmatprep.subr.bf16.mxu0 0
      %5290 = vmatpush1.bf16.msra.mxu0 0
      %5291 = vmatprep.subr.bf16.mxu0 0
      %5292 = vmatpush1.bf16.msra.mxu0 0
      %5293 = vmatprep.mubr.bf16.mxu0 0
      %5294 = vmatmul.mubr.bf16.gmra.mrb[0].mxu0 %v5153
      %v5295 = vpop.f32.mrb[0].mxu0
      %v5296 = vadd.f32 0.0, %v5295
      %v5297 = vpop.f32.mrb[0].mxu0
      %v5298 = vadd.f32 0.0, %v5297
      %v5299 = vpop.f32.mrb[0].mxu0
      %v5300 = vpop.f32.mrb[0].mxu0
      %5301 = vdwg.mxu0
      %5302 = vmatprep.subr.bf16.mxu0 %v5177
      %5303 = vmatpush1.bf16.msra.mxu0 %v5174
      %5304 = vmatprep.subr.bf16.mxu0 0
      %5305 = vmatpush1.bf16.msra.mxu0 0
      %5306 = vmatprep.subr.bf16.mxu0 0
      %5307 = vmatpush1.bf16.msra.mxu0 0
      %5308 = vmatprep.subr.bf16.mxu0 0
      %5309 = vmatpush1.bf16.msra.mxu0 0
      %5310 = vmatprep.subr.bf16.mxu0 0
      %5311 = vmatpush1.bf16.msra.mxu0 0
      %5312 = vmatprep.subr.bf16.mxu0 0
      %5313 = vmatpush1.bf16.msra.mxu0 0
      %5314 = vmatprep.subr.bf16.mxu0 0
      %5315 = vmatpush1.bf16.msra.mxu0 0
      %5316 = vmatprep.subr.bf16.mxu0 0
      %5317 = vmatpush1.bf16.msra.mxu0 0
      %5318 = vmatprep.subr.bf16.mxu0 0
      %5319 = vmatpush1.bf16.msra.mxu0 0
      %5320 = vmatprep.subr.bf16.mxu0 0
      %5321 = vmatpush1.bf16.msra.mxu0 0
      %5322 = vmatprep.subr.bf16.mxu0 0
      %5323 = vmatpush1.bf16.msra.mxu0 0
      %5324 = vmatprep.subr.bf16.mxu0 0
      %5325 = vmatpush1.bf16.msra.mxu0 0
      %5326 = vmatprep.subr.bf16.mxu0 0
      %5327 = vmatpush1.bf16.msra.mxu0 0
      %5328 = vmatprep.subr.bf16.mxu0 0
      %5329 = vmatpush1.bf16.msra.mxu0 0
      %5330 = vmatprep.subr.bf16.mxu0 0
      %5331 = vmatpush1.bf16.msra.mxu0 0
      %5332 = vmatprep.subr.bf16.mxu0 0
      %5333 = vmatpush1.bf16.msra.mxu0 0
      %5334 = vmatprep.mubr.bf16.mxu0 0
      %5335 = vmatmul.mubr.bf16.gmra.mrb[0].mxu0 %v5153
      %v5336 = vpop.f32.mrb[0].mxu0
      %v5337 = vadd.f32 0.0, %v5336
      %v5338 = vpop.f32.mrb[0].mxu0
      %v5339 = vadd.f32 0.0, %v5338
      %v5340 = vpop.f32.mrb[0].mxu0
      %v5341 = vpop.f32.mrb[0].mxu0
      %5342 = vdwg.mxu0
      %v5343 = vadd.f32 %v5068, %v5214
      %v5344 = vadd.f32 %v5069, %v5216
      %v5345 = vadd.f32 %v5070, %v5255
      %v5346 = vadd.f32 %v5071, %v5257
      %v5347 = vadd.f32 %v5072, %v5296
      %v5348 = vadd.f32 %v5073, %v5298
      %v5349 = vadd.f32 %v5074, %v5337
      %v5350 = vadd.f32 %v5075, %v5339
      %vm5351 = vcmp.ge.f32.partialorder %v5343, 0.0
      %vm5352 = vcmp.ge.f32.partialorder %v5344, 0.0
      %vm5353 = vcmp.ge.f32.partialorder %v5345, 0.0
      %vm5354 = vcmp.ge.f32.partialorder %v5346, 0.0
      %vm5355 = vcmp.ge.f32.partialorder %v5347, 0.0
      %vm5356 = vcmp.ge.f32.partialorder %v5348, 0.0
      %vm5357 = vcmp.ge.f32.partialorder %v5349, 0.0
      %vm5358 = vcmp.ge.f32.partialorder %v5350, 0.0
      %v5359 = vmul.f32 %v5343, 0.01
      %v5360 = vmul.f32 %v5344, 0.01
      %v5361 = vmul.f32 %v5345, 0.01
      %v5362 = vmul.f32 %v5346, 0.01
      %v5363 = vmul.f32 %v5347, 0.01
      %v5364 = vmul.f32 %v5348, 0.01
      %v5365 = vmul.f32 %v5349, 0.01
      %v5366 = vmul.f32 %v5350, 0.01
      %v5367 = vsel %vm5351, %v5343, %v5359
      %v5368 = vsel %vm5352, %v5344, %v5360
      %v5369 = vsel %vm5353, %v5345, %v5361
      %v5370 = vsel %vm5354, %v5346, %v5362
      %v5371 = vsel %vm5355, %v5347, %v5363
      %v5372 = vsel %vm5356, %v5348, %v5364
      %v5373 = vsel %vm5357, %v5349, %v5365
      %v5374 = vsel %vm5358, %v5350, %v5366
      %5375 = vst [vmem:[%s454] sm:$0xff] %v5367
      %5376 = vst [vmem:[%s454 + $0x8] sm:$0xff] %v5368
      %5377 = vst [vmem:[%s454 + $0x10] sm:$0xff] %v5369
      %5378 = vst [vmem:[%s454 + $0x18] sm:$0xff] %v5370
      %5379 = vst [vmem:[%s454 + $0x20] sm:$0xff] %v5371
      %5380 = vst [vmem:[%s454 + $0x28] sm:$0xff] %v5372
      %5381 = vst [vmem:[%s454 + $0x30] sm:$0xff] %v5373
      %5382 = vst [vmem:[%s454 + $0x38] sm:$0xff] %v5374
      %v5383 = vld [vmem:[%s442] sm:$0xff]
      %v5385 = vlaneseq
      %v5386 = vshrl.u32 %v5385, 7
      %v5387 = vsub.s32 0, %v5386
      %v5388 = vrot.slane %v5383, %v5387
      %v5389 = vlaneseq
      %v5390 = vshrl.u32 %v5389, 7
      %v5391 = vsub.s32 1, %v5390
      %v5392 = vrot.slane %v5383, %v5391
      %v5393 = vlaneseq
      %v5394 = vshrl.u32 %v5393, 7
      %v5395 = vsub.s32 2, %v5394
      %v5396 = vrot.slane %v5383, %v5395
      %v5397 = vlaneseq
      %v5398 = vshrl.u32 %v5397, 7
      %v5399 = vsub.s32 3, %v5398
      %v5400 = vrot.slane %v5383, %v5399
      %v5401 = vlaneseq
      %v5402 = vshrl.u32 %v5401, 7
      %v5403 = vsub.s32 4, %v5402
      %v5404 = vrot.slane %v5383, %v5403
      %v5405 = vlaneseq
      %v5406 = vshrl.u32 %v5405, 7
      %v5407 = vsub.s32 5, %v5406
      %v5408 = vrot.slane %v5383, %v5407
      %v5409 = vlaneseq
      %v5410 = vshrl.u32 %v5409, 7
      %v5411 = vsub.s32 6, %v5410
      %v5412 = vrot.slane %v5383, %v5411
      %v5413 = vlaneseq
      %v5414 = vshrl.u32 %v5413, 7
      %v5415 = vsub.s32 7, %v5414
      %v5416 = vrot.slane %v5383, %v5415
      %v5425 = vmul.f32 %v5367, %v5388
      %v5426 = vmul.f32 %v5368, %v5392
      %v5427 = vmul.f32 %v5369, %v5396
      %v5428 = vmul.f32 %v5370, %v5400
      %v5429 = vmul.f32 %v5371, %v5404
      %v5430 = vmul.f32 %v5372, %v5408
      %v5431 = vmul.f32 %v5373, %v5412
      %v5432 = vmul.f32 %v5374, %v5416
      %v5433 = vadd.f32 %v5425, %v5426
      %v5434 = vadd.f32 %v5433, %v5427
      %v5435 = vadd.f32 %v5434, %v5428
      %v5436 = vadd.f32 %v5435, %v5429
      %v5437 = vadd.f32 %v5436, %v5430
      %v5438 = vadd.f32 %v5437, %v5431
      %v5439 = vadd.f32 %v5438, %v5432
      %5440 = vadd.xlane.f32.xlu0 %v5439
      %v5441 = vpop.xlane.xlu0 %5440
      %v5442 = vmul.f32 %v5425, %v5367
      %v5443 = vmul.f32 %v5426, %v5368
      %v5444 = vmul.f32 %v5427, %v5369
      %v5445 = vmul.f32 %v5428, %v5370
      %v5446 = vmul.f32 %v5429, %v5371
      %v5447 = vmul.f32 %v5430, %v5372
      %v5448 = vmul.f32 %v5431, %v5373
      %v5449 = vmul.f32 %v5432, %v5374
      %v5450 = vadd.f32 %v5442, %v5443
      %v5451 = vadd.f32 %v5450, %v5444
      %v5452 = vadd.f32 %v5451, %v5445
      %v5453 = vadd.f32 %v5452, %v5446
      %v5454 = vadd.f32 %v5453, %v5447
      %v5455 = vadd.f32 %v5454, %v5448
      %v5456 = vadd.f32 %v5455, %v5449
      %5457 = vadd.xlane.f32.xlu0 %v5456
      %v5458 = vpop.xlane.xlu0 %5457
      %v5459 = vsel %vm2965, %v5441, %v5458
      %5460 = vst.msk [vmem:[%s463] sm:$0xff] %vm2967, %v5459
      %s5461 = smul.u32 8, %s21
      %p5462 = scmp.lt.s32.totalorder %s5461, 15
      %s5463 = scalar_select %p5462, %s5461, 15
      %s5464 = smul.addr %s5463, 8
      %s5465 = scalar_lea.vmem %s6, %s5464
      %s5466 = smul.u32 8, %s21
      %p5467 = scmp.lt.s32.totalorder %s5466, 15
      %s5468 = scalar_select %p5467, %s5466, 15
      %s5469 = smul.addr %s5468, 8
      %s5470 = scalar_lea.vmem %s7, %s5469
      %p5471 = scmp.lt.s32.totalorder %s21, 1
      %s5472 = scalar_select %p5471, %s21, 1
      %s5473 = smul.addr %s5472, 8
      %s5474 = scalar_lea.vmem %s8, %s5473
      %p5475 = scmp.lt.s32.totalorder %s21, 1
      %s5476 = scalar_select %p5475, %s21, 1
      %s5477 = smul.addr %s5476, 8
      %s5478 = scalar_lea.vmem %s9, %s5477
      // Predicated region
      $region45: #{res_context_block.2} parent=43 // pred_check
        %p5479 = pneg %p189
      $region46: #{res_context_block.2} parent=43 // pred_check_branch
        %5481 = sbr.rel (%p5479) target = $region48
      $region47: #{res_context_block.2} parent=43 // pred_region
        %s5482 = smul.u32 8, %s21
      $region48: #{res_context_block.2} parent=43 // pred_fallthru
        _
      // Predicated region
      $region49: #{res_context_block.2} parent=43 // pred_check
        %p5483 = pneg %p215
      $region50: #{res_context_block.2} parent=43 // pred_check_branch
        %5485 = sbr.rel (%p5483) target = $region52
      $region51: #{res_context_block.2} parent=43 // pred_region
        %s5486 = smul.u32 8, %s21
      $region52: #{res_context_block.2} parent=43 // pred_fallthru
        _
      // Predicated region
      $region53: #{res_context_block.2} parent=43 // pred_check
        %p5487 = pneg %p241
      $region54: #{res_context_block.2} parent=43 // pred_check_branch
        %5489 = sbr.rel (%p5487) target = $region56
      $region55: #{res_context_block.2} parent=43 // pred_region
        _
      $region56: #{res_context_block.2} parent=43 // pred_fallthru
        _
      // Predicated region
      $region57: #{res_context_block.2} parent=43 // pred_check
        %p5490 = pneg %p267
      $region58: #{res_context_block.2} parent=43 // pred_check_branch
        %5492 = sbr.rel (%p5490) target = $region60
      $region59: #{res_context_block.2} parent=43 // pred_region
        _
      $region60: #{res_context_block.2} parent=43 // pred_fallthru
        _
    $region44: #{res_context_block.2} parent=5 // pred_fallthru
      _
    %p5493 = scmp.le.s32.totalorder 2, %s16
    // Predicated region
    $region61: #{res_context_block.2} parent=5 // pred_check
      %p5494 = pneg %p5493
    $region62: #{res_context_block.2} parent=5 // pred_check_branch
      %5496 = sbr.rel (%p5494) target = $region64
    $region63: #{res_context_block.2} parent=5 // pred_region
      %s5497 = ssub.s32 %s16, 2
      // Predicated region
      $region65: #{res_context_block.2} parent=63 // pred_check
        %p5498 = pneg %p195
      $region66: #{res_context_block.2} parent=63 // pred_check_branch
        %5500 = sbr.rel (%p5498) target = $region68
      $region67: #{res_context_block.2} parent=63 // pred_region
        %s5501 = smul.u32 8, %s22
        %p5502 = scmp.lt.s32.totalorder %s5501, 15
        %s5503 = scalar_select %p5502, %s5501, 15
        %s5504 = smul.addr %s5503, 8
        %s5505 = scalar_lea.vmem %s6, %s5504
      $region68: #{res_context_block.2} parent=63 // pred_fallthru
        _
      // Predicated region
      $region69: #{res_context_block.2} parent=63 // pred_check
        %p5506 = pneg %p221
      $region70: #{res_context_block.2} parent=63 // pred_check_branch
        %5508 = sbr.rel (%p5506) target = $region72
      $region71: #{res_context_block.2} parent=63 // pred_region
        %s5509 = smul.u32 8, %s22
        %p5510 = scmp.lt.s32.totalorder %s5509, 15
        %s5511 = scalar_select %p5510, %s5509, 15
        %s5512 = smul.addr %s5511, 8
        %s5513 = scalar_lea.vmem %s7, %s5512
      $region72: #{res_context_block.2} parent=63 // pred_fallthru
        _
      // Predicated region
      $region73: #{res_context_block.2} parent=63 // pred_check
        %p5514 = pneg %p247
      $region74: #{res_context_block.2} parent=63 // pred_check_branch
        %5516 = sbr.rel (%p5514) target = $region76
      $region75: #{res_context_block.2} parent=63 // pred_region
        %p5517 = scmp.lt.s32.totalorder %s22, 1
        %s5518 = scalar_select %p5517, %s22, 1
        %s5519 = smul.addr %s5518, 8
        %s5520 = scalar_lea.vmem %s8, %s5519
      $region76: #{res_context_block.2} parent=63 // pred_fallthru
        _
      // Predicated region
      $region77: #{res_context_block.2} parent=63 // pred_check
        %p5521 = pneg %p273
      $region78: #{res_context_block.2} parent=63 // pred_check_branch
        %5523 = sbr.rel (%p5521) target = $region80
      $region79: #{res_context_block.2} parent=63 // pred_region
        %p5524 = scmp.lt.s32.totalorder %s22, 1
        %s5525 = scalar_select %p5524, %s22, 1
        %s5526 = smul.addr %s5525, 8
        %s5527 = scalar_lea.vmem %s9, %s5526
      $region80: #{res_context_block.2} parent=63 // pred_fallthru
        _
    $region64: #{res_context_block.2} parent=5 // pred_fallthru
      _
  $region6: #{res_context_block.2} parent=0 // loop_footer
    %s20 = sadd.s32 1, %s16
  $region7: #{res_context_block.2} parent=0 // loop_footer_branch
    %15 = sbr.rel target = $region3
  $region8: #{res_context_block.2} parent=0 // loop_exit
    _

// kernel: res_context_block.3
$region0: #{res_context_block.3}
  #allocation0 [shape = 'u32[]', space=smem, size = 0x4, offset = 0x4, fixed_abs, tag = 'smem constant byte address 0x4 - core index']
  #allocation1 [shape = 'u32[144,128]{1,0:T(1,128)}', space=vmem, size = 0x12000, scoped, tag = 'internal scratch']
  #allocation2 [shape = 'bf16[8,1280]{1,0:T(8,128)(2,1)}', space=vmem, size = 0x5000, scoped, tag = 'scratch operand']
  #allocation3 [shape = 'bf16[8,1280]{1,0:T(8,128)(2,1)}', space=vmem, size = 0x5000, scoped, tag = 'scratch operand']
  %s0 = inlined_call_operand.vmem [shape: bf16[9,8,8], index: 0, kind: input, shape index: {}]
  %s1 = inlined_call_operand.vmem [shape: bf16[9,8,8], index: 1, kind: input, shape index: {}]
  %s2 = inlined_call_operand.vmem [shape: bf16[8,2304], index: 2, kind: input, shape index: {}, may-alias: {2,4}]
  %s3 = inlined_call_operand.vmem [shape: bf16[8,2304], index: 3, kind: input, shape index: {}, may-alias: {3,5}]
  %s4 = inlined_call_operand.vmem [shape: bf16[8,2304], index: 4, kind: input, shape index: {}, may-alias: {2,4}]
  %s5 = inlined_call_operand.vmem [shape: bf16[8,2304], index: 5, kind: input, shape index: {}, may-alias: {3,5}]
  %s6 = inlined_call_operand.vmem [shape: f32[1,2048], index: 6, kind: input, shape index: {}]
  %s7 = inlined_call_operand.vmem [shape: f32[1,2048], index: 7, kind: input, shape index: {}]
  %s8 = inlined_call_operand.vmem [shape: f32[8,2048], index: 8, kind: output, shape index: {0}]
  %s9 = inlined_call_operand.vmem [shape: f32[8,2048], index: 9, kind: output, shape index: {1}]
  %s10 = inlined_call_operand.vmem [shape: f32[2,8,2], index: 10, kind: output, shape index: {2}]
  %s11 = inlined_call_operand.vmem [shape: f32[2,8,2], index: 11, kind: output, shape index: {3}]
  %12 = xla_tuple %s8, %s9, %s10, %s11
  %s13 = sld [smem:[#allocation0]]
  $region89: #{res_context_block.3} parent=0
    _
  %s15 = ssub.s32 1, %s13
  %s16 = scalar_select 0, %s15, %s13
  loop: start=0, step=1, limit=4
  $region2: #{res_context_block.3} parent=0 // loop_pre_header
    _
  $region3: #{res_context_block.3} parent=0 // loop_header
    %s18 = sphi 0, %s22
    %p19 = scmp.ge.s32.totalorder %s18, 4
    %s26 = sphi 0, %s26
    %s28 = sphi 0, %s26
    %s29 = sphi 0, %s28
    %s43 = sphi 0, %s29
    %s47 = sphi 0, %s47
    %s49 = sphi 0, %s47
    %s50 = sphi 0, %s49
    %s64 = sphi 0, %s50
    %s70 = sphi 0, %s72
    %s73 = sphi 0, %s70
    %s74 = sphi 0, %s73
    %s90 = sphi 0, %s74
    %s96 = sphi 0, %s98
    %s99 = sphi 0, %s96
    %s100 = sphi 0, %s99
    %s116 = sphi 0, %s100
    %s126 = sphi 0, %s128
    %s129 = sphi 0, %s126
    %s130 = sphi 0, %s129
    %s146 = sphi 0, %s130
    %s156 = sphi 0, %s158
    %s159 = sphi 0, %s156
    %s160 = sphi 0, %s159
    %s176 = sphi 0, %s160
    %s182 = sphi 0, %s184
    %s185 = sphi 0, %s182
    %s186 = sphi 0, %s185
    %s202 = sphi 0, %s186
    %s208 = sphi 0, %s210
    %s211 = sphi 0, %s208
    %s212 = sphi 0, %s211
    %s228 = sphi 0, %s212
    %s234 = sphi 0, %s236
    %s237 = sphi 0, %s234
    %s238 = sphi 0, %s237
    %s254 = sphi 0, %s238
    %s260 = sphi 0, %s262
    %s263 = sphi 0, %s260
    %s264 = sphi 0, %s263
    %s280 = sphi 0, %s264
    %s286 = sphi 0, %s288
    %s289 = sphi 0, %s286
    %s290 = sphi 0, %s289
    %s306 = sphi 0, %s290
    %s312 = sphi 0, %s314
    %s315 = sphi 0, %s312
    %s316 = sphi 0, %s315
    %s332 = sphi 0, %s316
  $region4: #{res_context_block.3} parent=0 // loop_header_branch
    %21 = sbr.rel (%p19) target = $region8
  $region5: #{res_context_block.3} parent=0 // loop_body
    %s23 = ssub.s32 %s18, 1
    %s24 = ssub.s32 %s18, 2
    %s25 = sadd.s32 %s18, 1
    %s27 = sadd.s32 %s26, 1
    %p30 = scmp.eq.s32.totalorder %s18, 1
    %p31 = scmp.ne.s32.totalorder %s26, %s28
    %p32 = scmp.eq.s32.totalorder %s18, 0
    %p33 = por %p31, %p32
    %p34 = scmp.ne.s32.totalorder %s26, %s28
    %p35 = scmp.eq.s32.totalorder %s23, 1
    %p36 = por %p34, %p35
    %p37 = scmp.ne.s32.totalorder %s28, %s29
    %p38 = scmp.eq.s32.totalorder %s23, 0
    %p39 = por %p37, %p38
    %p40 = scmp.ne.s32.totalorder %s28, %s29
    %p41 = scmp.eq.s32.totalorder %s24, 1
    %p42 = por %p40, %p41
    %p44 = scmp.ne.s32.totalorder %s29, %s43
    %p45 = scmp.eq.s32.totalorder %s24, 0
    %p46 = por %p44, %p45
    %s48 = sadd.s32 %s47, 1
    %p51 = scmp.eq.s32.totalorder %s18, 1
    %p52 = scmp.ne.s32.totalorder %s47, %s49
    %p53 = scmp.eq.s32.totalorder %s18, 0
    %p54 = por %p52, %p53
    %p55 = scmp.ne.s32.totalorder %s47, %s49
    %p56 = scmp.eq.s32.totalorder %s23, 1
    %p57 = por %p55, %p56
    %p58 = scmp.ne.s32.totalorder %s49, %s50
    %p59 = scmp.eq.s32.totalorder %s23, 0
    %p60 = por %p58, %p59
    %p61 = scmp.ne.s32.totalorder %s49, %s50
    %p62 = scmp.eq.s32.totalorder %s24, 1
    %p63 = por %p61, %p62
    %p65 = scmp.ne.s32.totalorder %s50, %s64
    %p66 = scmp.eq.s32.totalorder %s24, 0
    %p67 = por %p65, %p66
    %s68 = ssub.s32 %s18, %s25
    %p69 = scmp.eq.s32.totalorder %s68, 0
    %s71 = sadd.s32 %s70, 1
    %s72 = scalar_select %p69, %s70, %s71
    %p75 = pneg %p69
    %p76 = scmp.eq.s32.totalorder %s18, 1
    %p77 = por %p75, %p76
    %p78 = scmp.ne.s32.totalorder %s70, %s73
    %p79 = scmp.eq.s32.totalorder %s18, 0
    %p80 = por %p78, %p79
    %p81 = scmp.ne.s32.totalorder %s70, %s73
    %p82 = scmp.eq.s32.totalorder %s23, 1
    %p83 = por %p81, %p82
    %p84 = scmp.ne.s32.totalorder %s73, %s74
    %p85 = scmp.eq.s32.totalorder %s23, 0
    %p86 = por %p84, %p85
    %p87 = scmp.ne.s32.totalorder %s73, %s74
    %p88 = scmp.eq.s32.totalorder %s24, 1
    %p89 = por %p87, %p88
    %p91 = scmp.ne.s32.totalorder %s74, %s90
    %p92 = scmp.eq.s32.totalorder %s24, 0
    %p93 = por %p91, %p92
    %s94 = ssub.s32 %s18, %s25
    %p95 = scmp.eq.s32.totalorder %s94, 0
    %s97 = sadd.s32 %s96, 1
    %s98 = scalar_select %p95, %s96, %s97
    %p101 = pneg %p95
    %p102 = scmp.eq.s32.totalorder %s18, 1
    %p103 = por %p101, %p102
    %p104 = scmp.ne.s32.totalorder %s96, %s99
    %p105 = scmp.eq.s32.totalorder %s18, 0
    %p106 = por %p104, %p105
    %p107 = scmp.ne.s32.totalorder %s96, %s99
    %p108 = scmp.eq.s32.totalorder %s23, 1
    %p109 = por %p107, %p108
    %p110 = scmp.ne.s32.totalorder %s99, %s100
    %p111 = scmp.eq.s32.totalorder %s23, 0
    %p112 = por %p110, %p111
    %p113 = scmp.ne.s32.totalorder %s99, %s100
    %p114 = scmp.eq.s32.totalorder %s24, 1
    %p115 = por %p113, %p114
    %p117 = scmp.ne.s32.totalorder %s100, %s116
    %p118 = scmp.eq.s32.totalorder %s24, 0
    %p119 = por %p117, %p118
    %s120 = sadd.s32 %s18, 1
    %s121 = smul.u32 %s120, 4
    %s122 = sadd.s32 %s25, 1
    %s123 = smul.u32 %s122, 4
    %s124 = ssub.s32 %s121, %s123
    %p125 = scmp.eq.s32.totalorder %s124, 0
    %s127 = sadd.s32 %s126, 1
    %s128 = scalar_select %p125, %s126, %s127
    %p131 = pneg %p125
    %p132 = scmp.eq.s32.totalorder %s18, 1
    %p133 = por %p131, %p132
    %p134 = scmp.ne.s32.totalorder %s126, %s129
    %p135 = scmp.eq.s32.totalorder %s18, 0
    %p136 = por %p134, %p135
    %p137 = scmp.ne.s32.totalorder %s126, %s129
    %p138 = scmp.eq.s32.totalorder %s23, 1
    %p139 = por %p137, %p138
    %p140 = scmp.ne.s32.totalorder %s129, %s130
    %p141 = scmp.eq.s32.totalorder %s23, 0
    %p142 = por %p140, %p141
    %p143 = scmp.ne.s32.totalorder %s129, %s130
    %p144 = scmp.eq.s32.totalorder %s24, 1
    %p145 = por %p143, %p144
    %p147 = scmp.ne.s32.totalorder %s130, %s146
    %p148 = scmp.eq.s32.totalorder %s24, 0
    %p149 = por %p147, %p148
    %s150 = sadd.s32 %s18, 1
    %s151 = smul.u32 %s150, 4
    %s152 = sadd.s32 %s25, 1
    %s153 = smul.u32 %s152, 4
    %s154 = ssub.s32 %s151, %s153
    %p155 = scmp.eq.s32.totalorder %s154, 0
    %s157 = sadd.s32 %s156, 1
    %s158 = scalar_select %p155, %s156, %s157
    %p161 = pneg %p155
    %p162 = scmp.eq.s32.totalorder %s18, 1
    %p163 = por %p161, %p162
    %p164 = scmp.ne.s32.totalorder %s156, %s159
    %p165 = scmp.eq.s32.totalorder %s18, 0
    %p166 = por %p164, %p165
    %p167 = scmp.ne.s32.totalorder %s156, %s159
    %p168 = scmp.eq.s32.totalorder %s23, 1
    %p169 = por %p167, %p168
    %p170 = scmp.ne.s32.totalorder %s159, %s160
    %p171 = scmp.eq.s32.totalorder %s23, 0
    %p172 = por %p170, %p171
    %p173 = scmp.ne.s32.totalorder %s159, %s160
    %p174 = scmp.eq.s32.totalorder %s24, 1
    %p175 = por %p173, %p174
    %p177 = scmp.ne.s32.totalorder %s160, %s176
    %p178 = scmp.eq.s32.totalorder %s24, 0
    %p179 = por %p177, %p178
    %s180 = ssub.s32 %s18, %s25
    %p181 = scmp.eq.s32.totalorder %s180, 0
    %s183 = sadd.s32 %s182, 1
    %s184 = scalar_select %p181, %s182, %s183
    %p187 = pneg %p181
    %p188 = scmp.eq.s32.totalorder %s18, 1
    %p189 = por %p187, %p188
    %p190 = scmp.ne.s32.totalorder %s182, %s185
    %p191 = scmp.eq.s32.totalorder %s18, 0
    %p192 = por %p190, %p191
    %p193 = scmp.ne.s32.totalorder %s182, %s185
    %p194 = scmp.eq.s32.totalorder %s23, 1
    %p195 = por %p193, %p194
    %p196 = scmp.ne.s32.totalorder %s185, %s186
    %p197 = scmp.eq.s32.totalorder %s23, 0
    %p198 = por %p196, %p197
    %p199 = scmp.ne.s32.totalorder %s185, %s186
    %p200 = scmp.eq.s32.totalorder %s24, 1
    %p201 = por %p199, %p200
    %p203 = scmp.ne.s32.totalorder %s186, %s202
    %p204 = scmp.eq.s32.totalorder %s24, 0
    %p205 = por %p203, %p204
    %s206 = ssub.s32 %s18, %s25
    %p207 = scmp.eq.s32.totalorder %s206, 0
    %s209 = sadd.s32 %s208, 1
    %s210 = scalar_select %p207, %s208, %s209
    %p213 = pneg %p207
    %p214 = scmp.eq.s32.totalorder %s18, 1
    %p215 = por %p213, %p214
    %p216 = scmp.ne.s32.totalorder %s208, %s211
    %p217 = scmp.eq.s32.totalorder %s18, 0
    %p218 = por %p216, %p217
    %p219 = scmp.ne.s32.totalorder %s208, %s211
    %p220 = scmp.eq.s32.totalorder %s23, 1
    %p221 = por %p219, %p220
    %p222 = scmp.ne.s32.totalorder %s211, %s212
    %p223 = scmp.eq.s32.totalorder %s23, 0
    %p224 = por %p222, %p223
    %p225 = scmp.ne.s32.totalorder %s211, %s212
    %p226 = scmp.eq.s32.totalorder %s24, 1
    %p227 = por %p225, %p226
    %p229 = scmp.ne.s32.totalorder %s212, %s228
    %p230 = scmp.eq.s32.totalorder %s24, 0
    %p231 = por %p229, %p230
    %s232 = ssub.s32 %s18, %s25
    %p233 = scmp.eq.s32.totalorder %s232, 0
    %s235 = sadd.s32 %s234, 1
    %s236 = scalar_select %p233, %s234, %s235
    %p239 = pneg %p233
    %p240 = scmp.eq.s32.totalorder %s18, 1
    %p241 = por %p239, %p240
    %p242 = scmp.ne.s32.totalorder %s234, %s237
    %p243 = scmp.eq.s32.totalorder %s18, 0
    %p244 = por %p242, %p243
    %p245 = scmp.ne.s32.totalorder %s234, %s237
    %p246 = scmp.eq.s32.totalorder %s23, 1
    %p247 = por %p245, %p246
    %p248 = scmp.ne.s32.totalorder %s237, %s238
    %p249 = scmp.eq.s32.totalorder %s23, 0
    %p250 = por %p248, %p249
    %p251 = scmp.ne.s32.totalorder %s237, %s238
    %p252 = scmp.eq.s32.totalorder %s24, 1
    %p253 = por %p251, %p252
    %p255 = scmp.ne.s32.totalorder %s238, %s254
    %p256 = scmp.eq.s32.totalorder %s24, 0
    %p257 = por %p255, %p256
    %s258 = ssub.s32 %s18, %s25
    %p259 = scmp.eq.s32.totalorder %s258, 0
    %s261 = sadd.s32 %s260, 1
    %s262 = scalar_select %p259, %s260, %s261
    %p265 = pneg %p259
    %p266 = scmp.eq.s32.totalorder %s18, 1
    %p267 = por %p265, %p266
    %p268 = scmp.ne.s32.totalorder %s260, %s263
    %p269 = scmp.eq.s32.totalorder %s18, 0
    %p270 = por %p268, %p269
    %p271 = scmp.ne.s32.totalorder %s260, %s263
    %p272 = scmp.eq.s32.totalorder %s23, 1
    %p273 = por %p271, %p272
    %p274 = scmp.ne.s32.totalorder %s263, %s264
    %p275 = scmp.eq.s32.totalorder %s23, 0
    %p276 = por %p274, %p275
    %p277 = scmp.ne.s32.totalorder %s263, %s264
    %p278 = scmp.eq.s32.totalorder %s24, 1
    %p279 = por %p277, %p278
    %p281 = scmp.ne.s32.totalorder %s264, %s280
    %p282 = scmp.eq.s32.totalorder %s24, 0
    %p283 = por %p281, %p282
    %s284 = ssub.s32 %s18, %s25
    %p285 = scmp.eq.s32.totalorder %s284, 0
    %s287 = sadd.s32 %s286, 1
    %s288 = scalar_select %p285, %s286, %s287
    %p291 = pneg %p285
    %p292 = scmp.eq.s32.totalorder %s18, 1
    %p293 = por %p291, %p292
    %p294 = scmp.ne.s32.totalorder %s286, %s289
    %p295 = scmp.eq.s32.totalorder %s18, 0
    %p296 = por %p294, %p295
    %p297 = scmp.ne.s32.totalorder %s286, %s289
    %p298 = scmp.eq.s32.totalorder %s23, 1
    %p299 = por %p297, %p298
    %p300 = scmp.ne.s32.totalorder %s289, %s290
    %p301 = scmp.eq.s32.totalorder %s23, 0
    %p302 = por %p300, %p301
    %p303 = scmp.ne.s32.totalorder %s289, %s290
    %p304 = scmp.eq.s32.totalorder %s24, 1
    %p305 = por %p303, %p304
    %p307 = scmp.ne.s32.totalorder %s290, %s306
    %p308 = scmp.eq.s32.totalorder %s24, 0
    %p309 = por %p307, %p308
    %s310 = ssub.s32 %s18, %s25
    %p311 = scmp.eq.s32.totalorder %s310, 0
    %s313 = sadd.s32 %s312, 1
    %s314 = scalar_select %p311, %s312, %s313
    %p317 = pneg %p311
    %p318 = scmp.eq.s32.totalorder %s18, 1
    %p319 = por %p317, %p318
    %p320 = scmp.ne.s32.totalorder %s312, %s315
    %p321 = scmp.eq.s32.totalorder %s18, 0
    %p322 = por %p320, %p321
    %p323 = scmp.ne.s32.totalorder %s312, %s315
    %p324 = scmp.eq.s32.totalorder %s23, 1
    %p325 = por %p323, %p324
    %p326 = scmp.ne.s32.totalorder %s315, %s316
    %p327 = scmp.eq.s32.totalorder %s23, 0
    %p328 = por %p326, %p327
    %p329 = scmp.ne.s32.totalorder %s315, %s316
    %p330 = scmp.eq.s32.totalorder %s24, 1
    %p331 = por %p329, %p330
    %p333 = scmp.ne.s32.totalorder %s316, %s332
    %p334 = scmp.eq.s32.totalorder %s24, 0
    %p335 = por %p333, %p334
    %p336 = scmp.le.s32.totalorder 1, %s18
    %p337 = scmp.lt.s32.totalorder %s18, 3
    %p338 = pnand %p336, %p337
    %p339 = pneg %p338
    // Predicated region
    $region9: #{res_context_block.3} parent=5 // pred_check
      _
    $region10: #{res_context_block.3} parent=5 // pred_check_branch
      %341 = sbr.rel (%p338) target = $region12
    $region11: #{res_context_block.3} parent=5 // pred_region
      %s342 = ssub.s32 %s18, 1
      // Predicated region
      $region13: #{res_context_block.3} parent=11 // pred_check
        %p343 = pneg %p39
      $region14: #{res_context_block.3} parent=11 // pred_check_branch
        %345 = sbr.rel (%p343) target = $region16
      $region15: #{res_context_block.3} parent=11 // pred_region
        _
      $region16: #{res_context_block.3} parent=11 // pred_fallthru
        _
      // Predicated region
      $region17: #{res_context_block.3} parent=11 // pred_check
        %p346 = pneg %p60
      $region18: #{res_context_block.3} parent=11 // pred_check_branch
        %348 = sbr.rel (%p346) target = $region20
      $region19: #{res_context_block.3} parent=11 // pred_region
        _
      $region20: #{res_context_block.3} parent=11 // pred_fallthru
        _
    $region12: #{res_context_block.3} parent=5 // pred_fallthru
      _
    %p349 = scmp.lt.s32.totalorder %s18, 2
    // Predicated region
    $region21: #{res_context_block.3} parent=5 // pred_check
      %p350 = pneg %p349
    $region22: #{res_context_block.3} parent=5 // pred_check_branch
      %352 = sbr.rel (%p350) target = $region24
    $region23: #{res_context_block.3} parent=5 // pred_region
      // Predicated region
      $region25: #{res_context_block.3} parent=23 // pred_check
        %p353 = pneg %p80
      $region26: #{res_context_block.3} parent=23 // pred_check_branch
        %355 = sbr.rel (%p353) target = $region28
      $region27: #{res_context_block.3} parent=23 // pred_region
        %s356 = smul.u32 8, %s18
        %s357 = ssub.s32 18, %s356
        %p358 = scmp.lt.s32.totalorder %s357, 8
        %s359 = scalar_select %p358, %s357, 8
        %s360 = smul.u32 64, %s359
        %p361 = scmp.lt.s32.totalorder %s356, 17
        %s362 = scalar_select %p361, %s356, 17
        %s363 = smul.addr %s362, 4
        %s364 = scalar_lea.vmem %s2, %s363
        %s365 = smul.u32 8, %s18
        %s366 = ssub.s32 18, %s365
        %p367 = scmp.lt.s32.totalorder %s366, 8
        %s368 = scalar_select %p367, %s366, 8
        %s369 = smul.u32 64, %s368
      $region28: #{res_context_block.3} parent=23 // pred_fallthru
        _
      // Predicated region
      $region29: #{res_context_block.3} parent=23 // pred_check
        %p370 = pneg %p106
      $region30: #{res_context_block.3} parent=23 // pred_check_branch
        %372 = sbr.rel (%p370) target = $region32
      $region31: #{res_context_block.3} parent=23 // pred_region
        %s373 = smul.u32 8, %s18
        %s374 = ssub.s32 18, %s373
        %p375 = scmp.lt.s32.totalorder %s374, 8
        %s376 = scalar_select %p375, %s374, 8
        %s377 = smul.u32 64, %s376
        %p378 = scmp.lt.s32.totalorder %s373, 17
        %s379 = scalar_select %p378, %s373, 17
        %s380 = smul.addr %s379, 4
        %s381 = scalar_lea.vmem %s3, %s380
        %s382 = smul.u32 8, %s18
        %s383 = ssub.s32 18, %s382
        %p384 = scmp.lt.s32.totalorder %s383, 8
        %s385 = scalar_select %p384, %s383, 8
        %s386 = smul.u32 64, %s385
      $region32: #{res_context_block.3} parent=23 // pred_fallthru
        _
      // Predicated region
      $region33: #{res_context_block.3} parent=23 // pred_check
        %p387 = pneg %p136
      $region34: #{res_context_block.3} parent=23 // pred_check_branch
        %389 = sbr.rel (%p387) target = $region36
      $region35: #{res_context_block.3} parent=23 // pred_region
        %s390 = sadd.s32 %s18, 1
        %s391 = smul.u32 %s390, 4
        %s392 = smul.u32 2, %s391
        %p393 = scmp.lt.s32.totalorder %s392, 17
        %s394 = scalar_select %p393, %s392, 17
        %s395 = smul.addr %s394, 4
        %s396 = scalar_lea.vmem %s4, %s395
        %s397 = sadd.s32 %s18, 1
        %s398 = smul.u32 %s397, 4
        %s399 = smul.u32 2, %s398
      $region36: #{res_context_block.3} parent=23 // pred_fallthru
        _
      // Predicated region
      $region37: #{res_context_block.3} parent=23 // pred_check
        %p400 = pneg %p166
      $region38: #{res_context_block.3} parent=23 // pred_check_branch
        %402 = sbr.rel (%p400) target = $region40
      $region39: #{res_context_block.3} parent=23 // pred_region
        %s403 = sadd.s32 %s18, 1
        %s404 = smul.u32 %s403, 4
        %s405 = smul.u32 2, %s404
        %p406 = scmp.lt.s32.totalorder %s405, 17
        %s407 = scalar_select %p406, %s405, 17
        %s408 = smul.addr %s407, 4
        %s409 = scalar_lea.vmem %s5, %s408
        %s410 = sadd.s32 %s18, 1
        %s411 = smul.u32 %s410, 4
        %s412 = smul.u32 2, %s411
      $region40: #{res_context_block.3} parent=23 // pred_fallthru
        _
      // Predicated region
      $region41: #{res_context_block.3} parent=23 // pred_check
        %p413 = pneg %p192
      $region42: #{res_context_block.3} parent=23 // pred_check_branch
        %415 = sbr.rel (%p413) target = $region44
      $region43: #{res_context_block.3} parent=23 // pred_region
        %s416 = smul.u32 8, %s18
        %p417 = scmp.lt.s32.totalorder %s416, 15
        %s418 = scalar_select %p417, %s416, 15
        %s419 = scalar_lea.vmem %s6, %s418
        %s420 = smul.u32 8, %s18
      $region44: #{res_context_block.3} parent=23 // pred_fallthru
        _
      // Predicated region
      $region45: #{res_context_block.3} parent=23 // pred_check
        %p421 = pneg %p218
      $region46: #{res_context_block.3} parent=23 // pred_check_branch
        %423 = sbr.rel (%p421) target = $region48
      $region47: #{res_context_block.3} parent=23 // pred_region
        %s424 = smul.u32 8, %s18
        %p425 = scmp.lt.s32.totalorder %s424, 15
        %s426 = scalar_select %p425, %s424, 15
        %s427 = scalar_lea.vmem %s7, %s426
        %s428 = smul.u32 8, %s18
      $region48: #{res_context_block.3} parent=23 // pred_fallthru
        _
    $region24: #{res_context_block.3} parent=5 // pred_fallthru
      _
    %p429 = scmp.le.s32.totalorder 1, %s18
    %p430 = scmp.lt.s32.totalorder %s18, 3
    %p431 = pnand %p429, %p430
    %p432 = pneg %p431
    // Predicated region
    $region49: #{res_context_block.3} parent=5 // pred_check
      _
    $region50: #{res_context_block.3} parent=5 // pred_check_branch
      %434 = sbr.rel (%p431) target = $region52
    $region51: #{res_context_block.3} parent=5 // pred_region
      %s435 = ssub.s32 %s18, 1
      %p436 = pneg %p39
      %p437 = pneg %p36
      %p438 = pneg %p60
      %p439 = pneg %p57
      %s440 = smul.u32 8, %s23
      %s441 = ssub.s32 18, %s440
      %p442 = scmp.lt.s32.totalorder %s441, 8
      %s443 = scalar_select %p442, %s441, 8
      %s444 = smul.u32 64, %s443
      %p445 = scmp.lt.s32.totalorder %s440, 17
      %s446 = scalar_select %p445, %s440, 17
      %s447 = smul.addr %s446, 4
      %s448 = scalar_lea.vmem %s2, %s447
      %p449 = pneg %p86
      %p450 = pneg %p83
      %s451 = smul.u32 8, %s23
      %s452 = ssub.s32 18, %s451
      %p453 = scmp.lt.s32.totalorder %s452, 8
      %s454 = scalar_select %p453, %s452, 8
      %s455 = smul.u32 64, %s454
      %p456 = scmp.lt.s32.totalorder %s451, 17
      %s457 = scalar_select %p456, %s451, 17
      %s458 = smul.addr %s457, 4
      %s459 = scalar_lea.vmem %s3, %s458
      %p460 = pneg %p112
      %p461 = pneg %p109
      %s462 = sadd.s32 %s23, 1
      %s463 = smul.u32 %s462, 4
      %s464 = smul.u32 2, %s463
      %p465 = scmp.lt.s32.totalorder %s464, 17
      %s466 = scalar_select %p465, %s464, 17
      %s467 = smul.addr %s466, 4
      %s468 = scalar_lea.vmem %s4, %s467
      %p469 = pneg %p142
      %p470 = pneg %p139
      %s471 = sadd.s32 %s23, 1
      %s472 = smul.u32 %s471, 4
      %s473 = smul.u32 2, %s472
      %p474 = scmp.lt.s32.totalorder %s473, 17
      %s475 = scalar_select %p474, %s473, 17
      %s476 = smul.addr %s475, 4
      %s477 = scalar_lea.vmem %s5, %s476
      %p478 = pneg %p172
      %p479 = pneg %p169
      %s480 = smul.u32 8, %s23
      %p481 = scmp.lt.s32.totalorder %s480, 15
      %s482 = scalar_select %p481, %s480, 15
      %s483 = scalar_lea.vmem %s6, %s482
      %p484 = pneg %p198
      %p485 = pneg %p195
      %s486 = smul.u32 8, %s23
      %p487 = scmp.lt.s32.totalorder %s486, 15
      %s488 = scalar_select %p487, %s486, 15
      %s489 = scalar_lea.vmem %s7, %s488
      %p490 = pneg %p224
      %p491 = pneg %p221
      %p492 = pneg %p250
      %p493 = pneg %p247
      %s494 = smul.u32 8, %s23
      %p495 = scmp.lt.s32.totalorder %s494, 15
      %s496 = scalar_select %p495, %s494, 15
      %s497 = smul.addr %s496, 8
      %s498 = scalar_lea.vmem %s8, %s497
      %p499 = pneg %p276
      %p500 = pneg %p273
      %s501 = smul.u32 8, %s23
      %p502 = scmp.lt.s32.totalorder %s501, 15
      %s503 = scalar_select %p502, %s501, 15
      %s504 = smul.addr %s503, 8
      %s505 = scalar_lea.vmem %s9, %s504
      %p506 = pneg %p302
      %p507 = pneg %p299
      %p508 = scmp.lt.s32.totalorder %s23, 1
      %s509 = scalar_select %p508, %s23, 1
      %s510 = smul.addr %s509, 8
      %s511 = scalar_lea.vmem %s10, %s510
      %p512 = pneg %p328
      %p513 = pneg %p325
      %p514 = scmp.lt.s32.totalorder %s23, 1
      %s515 = scalar_select %p514, %s23, 1
      %s516 = smul.addr %s515, 8
      %s517 = scalar_lea.vmem %s11, %s516
      %s518 = smul.u32 8, %s23
      %s519 = ssub.s32 18, %s518
      %p520 = scmp.lt.s32.totalorder %s519, 8
      %s521 = scalar_select %p520, %s519, 8
      %s522 = smul.u32 64, %s521
      %p523 = scmp.lt.s32.totalorder %s518, 17
      %s524 = scalar_select %p523, %s518, 17
      %s525 = smul.addr %s524, 4
      %s526 = scalar_lea.vmem %s2, %s525
      %s527 = smul.u32 8, %s23
      %s528 = ssub.s32 18, %s527
      %p529 = scmp.lt.s32.totalorder %s528, 8
      %s530 = scalar_select %p529, %s528, 8
      %s531 = smul.u32 64, %s530
      %s532 = smul.u32 8, %s23
      %s533 = ssub.s32 18, %s532
      %p534 = scmp.lt.s32.totalorder %s533, 8
      %s535 = scalar_select %p534, %s533, 8
      %s536 = smul.u32 64, %s535
      %p537 = scmp.lt.s32.totalorder %s532, 17
      %s538 = scalar_select %p537, %s532, 17
      %s539 = smul.addr %s538, 4
      %s540 = scalar_lea.vmem %s3, %s539
      %s541 = smul.u32 8, %s23
      %s542 = ssub.s32 18, %s541
      %p543 = scmp.lt.s32.totalorder %s542, 8
      %s544 = scalar_select %p543, %s542, 8
      %s545 = smul.u32 64, %s544
      %s546 = sadd.s32 %s23, 1
      %s547 = smul.u32 %s546, 4
      %s548 = smul.u32 2, %s547
      %p549 = scmp.lt.s32.totalorder %s548, 17
      %s550 = scalar_select %p549, %s548, 17
      %s551 = smul.addr %s550, 4
      %s552 = scalar_lea.vmem %s4, %s551
      %s553 = sadd.s32 %s23, 1
      %s554 = smul.u32 %s553, 4
      %s555 = smul.u32 2, %s554
      %s556 = sadd.s32 %s23, 1
      %s557 = smul.u32 %s556, 4
      %s558 = smul.u32 2, %s557
      %p559 = scmp.lt.s32.totalorder %s558, 17
      %s560 = scalar_select %p559, %s558, 17
      %s561 = smul.addr %s560, 4
      %s562 = scalar_lea.vmem %s5, %s561
      %s563 = sadd.s32 %s23, 1
      %s564 = smul.u32 %s563, 4
      %s565 = smul.u32 2, %s564
      %s566 = smul.u32 8, %s23
      %p567 = scmp.lt.s32.totalorder %s566, 15
      %s568 = scalar_select %p567, %s566, 15
      %s569 = scalar_lea.vmem %s6, %s568
      %s570 = smul.u32 8, %s23
      %s571 = smul.u32 8, %s23
      %p572 = scmp.lt.s32.totalorder %s571, 15
      %s573 = scalar_select %p572, %s571, 15
      %s574 = scalar_lea.vmem %s7, %s573
      %s575 = smul.u32 8, %s23
      %s576 = smul.u32 8, %s23
      %p577 = scmp.lt.s32.totalorder %s576, 15
      %s578 = scalar_select %p577, %s576, 15
      %s579 = smul.addr %s578, 8
      %s580 = scalar_lea.vmem %s8, %s579
      %s581 = smul.u32 8, %s23
      %s582 = smul.u32 8, %s23
      %p583 = scmp.lt.s32.totalorder %s582, 15
      %s584 = scalar_select %p583, %s582, 15
      %s585 = smul.addr %s584, 8
      %s586 = scalar_lea.vmem %s9, %s585
      %s587 = smul.u32 8, %s23
      %p588 = scmp.lt.s32.totalorder %s23, 1
      %s589 = scalar_select %p588, %s23, 1
      %s590 = smul.addr %s589, 8
      %s591 = scalar_lea.vmem %s10, %s590
      %p592 = scmp.lt.s32.totalorder %s23, 1
      %s593 = scalar_select %p592, %s23, 1
      %s594 = smul.addr %s593, 8
      %s595 = scalar_lea.vmem %s11, %s594
      %v597 = vld [vmem:[%s526] sm:$0xff]
      %v598 = vld [vmem:[%s526 + $0x8] sm:$0xff]
      %v599 = vld [vmem:[%s526 + $0x10] sm:$0xff]
      %v600 = vld [vmem:[%s526 + $0x18] sm:$0xff]
      %601 = vst [vmem:[#allocation2] sm:$0xff] %v597
      %602 = vst [vmem:[#allocation2 + $0x8] sm:$0xff] %v598
      %603 = vst [vmem:[#allocation2 + $0x10] sm:$0xff] %v599
      %604 = vst [vmem:[#allocation2 + $0x18] sm:$0xff] %v600
      %v605 = vld [vmem:[%s552] sm:$0xff]
      %606 = vst [vmem:[#allocation2 + $0x20] sm:$0xff] %v605
      %v607 = vld [vmem:[%s0] sm:$0xf]
      %v608 = vld [vmem:[#allocation2] sm:$0xff]
      %v609 = vld [vmem:[#allocation2 + $0x8] sm:$0xff]
      %v610 = vld [vmem:[#allocation2 + $0x10] sm:$0xff]
      %v611 = vld [vmem:[#allocation2 + $0x18] sm:$0xff]
      %s612 = scalar_lea.vmem %s0, 4
      %v613 = vld [vmem:[%s612] sm:$0xf]
      %v614 = vld [vmem:[#allocation2 + $0x20] sm:$0xf]
      %v620 = vunpack.c.l.b16 %v608
      %v621 = vunpack.c.h.b16 %v608
      %v622 = vunpack.c.l.b16 %v609
      %v623 = vunpack.c.h.b16 %v609
      %v624 = vunpack.c.l.b16 %v610
      %v625 = vunpack.c.h.b16 %v610
      %v626 = vunpack.c.l.b16 %v611
      %v627 = vunpack.c.h.b16 %v611
      %v628 = vunpack.c.l.b16 %v614
      %v629 = vpack.c.b16 %v620, %v620
      %v630 = vpack.c.b16 %v621, %v621
      %v631 = vpack.c.b16 %v622, %v622
      %v632 = vpack.c.b16 %v623, %v623
      %v633 = vpack.c.b16 %v624, %v624
      %v634 = vpack.c.b16 %v625, %v625
      %v635 = vpack.c.b16 %v626, %v626
      %v636 = vpack.c.b16 %v627, %v627
      %v637 = vpack.c.b16 %v628, %v628
      %638 = vrot.lane.b32.xlu0 %v629, 127
      %v639 = vpop.permute.xlu0 %638
      %640 = vrot.lane.b32.xlu0 %v630, 127
      %v641 = vpop.permute.xlu0 %640
      %642 = vrot.lane.b32.xlu0 %v631, 127
      %v643 = vpop.permute.xlu0 %642
      %644 = vrot.lane.b32.xlu0 %v632, 127
      %v645 = vpop.permute.xlu0 %644
      %646 = vrot.lane.b32.xlu0 %v633, 127
      %v647 = vpop.permute.xlu0 %646
      %648 = vrot.lane.b32.xlu0 %v634, 127
      %v649 = vpop.permute.xlu0 %648
      %650 = vrot.lane.b32.xlu0 %v635, 127
      %v651 = vpop.permute.xlu0 %650
      %652 = vrot.lane.b32.xlu0 %v636, 127
      %v653 = vpop.permute.xlu0 %652
      %654 = vrot.lane.b32.xlu0 %v637, 127
      %v655 = vpop.permute.xlu0 %654
      %vm656 = vcmask 1039360
      %v657 = vsel %vm656, %v639, %v641
      %v658 = vsel %vm656, %v641, %v643
      %v659 = vsel %vm656, %v643, %v645
      %v660 = vsel %vm656, %v645, %v647
      %v661 = vsel %vm656, %v647, %v649
      %v662 = vsel %vm656, %v649, %v651
      %v663 = vsel %vm656, %v651, %v653
      %v664 = vsel %vm656, %v653, %v655
      %vm665 = vcmask 64512
      %v667 = vsel %vm665, %v613, 0
      %vm669 = vcmask 1043456
      %v671 = vsel %vm669, %v657, 0
      %v674 = vsel %vm669, %v658, 0
      %v677 = vsel %vm669, %v659, 0
      %v680 = vsel %vm669, %v660, 0
      %v683 = vsel %vm669, %v661, 0
      %v686 = vsel %vm669, %v662, 0
      %v689 = vsel %vm669, %v663, 0
      %v692 = vsel %vm669, %v664, 0
      %694 = vmatprep.subr.bf16.mxu0 %v674
      %695 = vmatpush1.bf16.msra.mxu0 %v671
      %696 = vmatprep.subr.bf16.mxu0 0
      %697 = vmatpush1.bf16.msra.mxu0 0
      %698 = vmatprep.subr.bf16.mxu0 0
      %699 = vmatpush1.bf16.msra.mxu0 0
      %700 = vmatprep.subr.bf16.mxu0 0
      %701 = vmatpush1.bf16.msra.mxu0 0
      %702 = vmatprep.subr.bf16.mxu0 0
      %703 = vmatpush1.bf16.msra.mxu0 0
      %704 = vmatprep.subr.bf16.mxu0 0
      %705 = vmatpush1.bf16.msra.mxu0 0
      %706 = vmatprep.subr.bf16.mxu0 0
      %707 = vmatpush1.bf16.msra.mxu0 0
      %708 = vmatprep.subr.bf16.mxu0 0
      %709 = vmatpush1.bf16.msra.mxu0 0
      %710 = vmatprep.subr.bf16.mxu0 0
      %711 = vmatpush1.bf16.msra.mxu0 0
      %712 = vmatprep.subr.bf16.mxu0 0
      %713 = vmatpush1.bf16.msra.mxu0 0
      %714 = vmatprep.subr.bf16.mxu0 0
      %715 = vmatpush1.bf16.msra.mxu0 0
      %716 = vmatprep.subr.bf16.mxu0 0
      %717 = vmatpush1.bf16.msra.mxu0 0
      %718 = vmatprep.subr.bf16.mxu0 0
      %719 = vmatpush1.bf16.msra.mxu0 0
      %720 = vmatprep.subr.bf16.mxu0 0
      %721 = vmatpush1.bf16.msra.mxu0 0
      %722 = vmatprep.subr.bf16.mxu0 0
      %723 = vmatpush1.bf16.msra.mxu0 0
      %724 = vmatprep.subr.bf16.mxu0 0
      %725 = vmatpush1.bf16.msra.mxu0 0
      %726 = vmatprep.mubr.bf16.mxu0 0
      %727 = vmatmul.mubr.bf16.gmra.mrb[0].mxu0 %v667
      %v728 = vpop.f32.mrb[0].mxu0
      %v729 = vadd.f32 0.0, %v728
      %v730 = vpop.f32.mrb[0].mxu0
      %v731 = vadd.f32 0.0, %v730
      %v732 = vpop.f32.mrb[0].mxu0
      %v733 = vpop.f32.mrb[0].mxu0
      %734 = vdwg.mxu0
      %735 = vmatprep.subr.bf16.mxu0 %v680
      %736 = vmatpush1.bf16.msra.mxu0 %v677
      %737 = vmatprep.subr.bf16.mxu0 0
      %738 = vmatpush1.bf16.msra.mxu0 0
      %739 = vmatprep.subr.bf16.mxu0 0
      %740 = vmatpush1.bf16.msra.mxu0 0
      %741 = vmatprep.subr.bf16.mxu0 0
      %742 = vmatpush1.bf16.msra.mxu0 0
      %743 = vmatprep.subr.bf16.mxu0 0
      %744 = vmatpush1.bf16.msra.mxu0 0
      %745 = vmatprep.subr.bf16.mxu0 0
      %746 = vmatpush1.bf16.msra.mxu0 0
      %747 = vmatprep.subr.bf16.mxu0 0
      %748 = vmatpush1.bf16.msra.mxu0 0
      %749 = vmatprep.subr.bf16.mxu0 0
      %750 = vmatpush1.bf16.msra.mxu0 0
      %751 = vmatprep.subr.bf16.mxu0 0
      %752 = vmatpush1.bf16.msra.mxu0 0
      %753 = vmatprep.subr.bf16.mxu0 0
      %754 = vmatpush1.bf16.msra.mxu0 0
      %755 = vmatprep.subr.bf16.mxu0 0
      %756 = vmatpush1.bf16.msra.mxu0 0
      %757 = vmatprep.subr.bf16.mxu0 0
      %758 = vmatpush1.bf16.msra.mxu0 0
      %759 = vmatprep.subr.bf16.mxu0 0
      %760 = vmatpush1.bf16.msra.mxu0 0
      %761 = vmatprep.subr.bf16.mxu0 0
      %762 = vmatpush1.bf16.msra.mxu0 0
      %763 = vmatprep.subr.bf16.mxu0 0
      %764 = vmatpush1.bf16.msra.mxu0 0
      %765 = vmatprep.subr.bf16.mxu0 0
      %766 = vmatpush1.bf16.msra.mxu0 0
      %767 = vmatprep.mubr.bf16.mxu0 0
      %768 = vmatmul.mubr.bf16.gmra.mrb[0].mxu0 %v667
      %v769 = vpop.f32.mrb[0].mxu0
      %v770 = vadd.f32 0.0, %v769
      %v771 = vpop.f32.mrb[0].mxu0
      %v772 = vadd.f32 0.0, %v771
      %v773 = vpop.f32.mrb[0].mxu0
      %v774 = vpop.f32.mrb[0].mxu0
      %775 = vdwg.mxu0
      %776 = vmatprep.subr.bf16.mxu0 %v686
      %777 = vmatpush1.bf16.msra.mxu0 %v683
      %778 = vmatprep.subr.bf16.mxu0 0
      %779 = vmatpush1.bf16.msra.mxu0 0
      %780 = vmatprep.subr.bf16.mxu0 0
      %781 = vmatpush1.bf16.msra.mxu0 0
      %782 = vmatprep.subr.bf16.mxu0 0
      %783 = vmatpush1.bf16.msra.mxu0 0
      %784 = vmatprep.subr.bf16.mxu0 0
      %785 = vmatpush1.bf16.msra.mxu0 0
      %786 = vmatprep.subr.bf16.mxu0 0
      %787 = vmatpush1.bf16.msra.mxu0 0
      %788 = vmatprep.subr.bf16.mxu0 0
      %789 = vmatpush1.bf16.msra.mxu0 0
      %790 = vmatprep.subr.bf16.mxu0 0
      %791 = vmatpush1.bf16.msra.mxu0 0
      %792 = vmatprep.subr.bf16.mxu0 0
      %793 = vmatpush1.bf16.msra.mxu0 0
      %794 = vmatprep.subr.bf16.mxu0 0
      %795 = vmatpush1.bf16.msra.mxu0 0
      %796 = vmatprep.subr.bf16.mxu0 0
      %797 = vmatpush1.bf16.msra.mxu0 0
      %798 = vmatprep.subr.bf16.mxu0 0
      %799 = vmatpush1.bf16.msra.mxu0 0
      %800 = vmatprep.subr.bf16.mxu0 0
      %801 = vmatpush1.bf16.msra.mxu0 0
      %802 = vmatprep.subr.bf16.mxu0 0
      %803 = vmatpush1.bf16.msra.mxu0 0
      %804 = vmatprep.subr.bf16.mxu0 0
      %805 = vmatpush1.bf16.msra.mxu0 0
      %806 = vmatprep.subr.bf16.mxu0 0
      %807 = vmatpush1.bf16.msra.mxu0 0
      %808 = vmatprep.mubr.bf16.mxu0 0
      %809 = vmatmul.mubr.bf16.gmra.mrb[0].mxu0 %v667
      %v810 = vpop.f32.mrb[0].mxu0
      %v811 = vadd.f32 0.0, %v810
      %v812 = vpop.f32.mrb[0].mxu0
      %v813 = vadd.f32 0.0, %v812
      %v814 = vpop.f32.mrb[0].mxu0
      %v815 = vpop.f32.mrb[0].mxu0
      %816 = vdwg.mxu0
      %817 = vmatprep.subr.bf16.mxu0 %v692
      %818 = vmatpush1.bf16.msra.mxu0 %v689
      %819 = vmatprep.subr.bf16.mxu0 0
      %820 = vmatpush1.bf16.msra.mxu0 0
      %821 = vmatprep.subr.bf16.mxu0 0
      %822 = vmatpush1.bf16.msra.mxu0 0
      %823 = vmatprep.subr.bf16.mxu0 0
      %824 = vmatpush1.bf16.msra.mxu0 0
      %825 = vmatprep.subr.bf16.mxu0 0
      %826 = vmatpush1.bf16.msra.mxu0 0
      %827 = vmatprep.subr.bf16.mxu0 0
      %828 = vmatpush1.bf16.msra.mxu0 0
      %829 = vmatprep.subr.bf16.mxu0 0
      %830 = vmatpush1.bf16.msra.mxu0 0
      %831 = vmatprep.subr.bf16.mxu0 0
      %832 = vmatpush1.bf16.msra.mxu0 0
      %833 = vmatprep.subr.bf16.mxu0 0
      %834 = vmatpush1.bf16.msra.mxu0 0
      %835 = vmatprep.subr.bf16.mxu0 0
      %836 = vmatpush1.bf16.msra.mxu0 0
      %837 = vmatprep.subr.bf16.mxu0 0
      %838 = vmatpush1.bf16.msra.mxu0 0
      %839 = vmatprep.subr.bf16.mxu0 0
      %840 = vmatpush1.bf16.msra.mxu0 0
      %841 = vmatprep.subr.bf16.mxu0 0
      %842 = vmatpush1.bf16.msra.mxu0 0
      %843 = vmatprep.subr.bf16.mxu0 0
      %844 = vmatpush1.bf16.msra.mxu0 0
      %845 = vmatprep.subr.bf16.mxu0 0
      %846 = vmatpush1.bf16.msra.mxu0 0
      %847 = vmatprep.subr.bf16.mxu0 0
      %848 = vmatpush1.bf16.msra.mxu0 0
      %849 = vmatprep.mubr.bf16.mxu0 0
      %850 = vmatmul.mubr.bf16.gmra.mrb[0].mxu0 %v667
      %v851 = vpop.f32.mrb[0].mxu0
      %v852 = vadd.f32 0.0, %v851
      %v853 = vpop.f32.mrb[0].mxu0
      %v854 = vadd.f32 0.0, %v853
      %v855 = vpop.f32.mrb[0].mxu0
      %v856 = vpop.f32.mrb[0].mxu0
      %857 = vdwg.mxu0
      %v859 = vsel %vm665, %v607, 0
      %v862 = vsel %vm669, %v629, 0
      %v865 = vsel %vm669, %v630, 0
      %v868 = vsel %vm669, %v631, 0
      %v871 = vsel %vm669, %v632, 0
      %v874 = vsel %vm669, %v633, 0
      %v877 = vsel %vm669, %v634, 0
      %v880 = vsel %vm669, %v635, 0
      %v883 = vsel %vm669, %v636, 0
      %885 = vmatprep.subr.bf16.mxu0 %v865
      %886 = vmatpush1.bf16.msra.mxu0 %v862
      %887 = vmatprep.subr.bf16.mxu0 0
      %888 = vmatpush1.bf16.msra.mxu0 0
      %889 = vmatprep.subr.bf16.mxu0 0
      %890 = vmatpush1.bf16.msra.mxu0 0
      %891 = vmatprep.subr.bf16.mxu0 0
      %892 = vmatpush1.bf16.msra.mxu0 0
      %893 = vmatprep.subr.bf16.mxu0 0
      %894 = vmatpush1.bf16.msra.mxu0 0
      %895 = vmatprep.subr.bf16.mxu0 0
      %896 = vmatpush1.bf16.msra.mxu0 0
      %897 = vmatprep.subr.bf16.mxu0 0
      %898 = vmatpush1.bf16.msra.mxu0 0
      %899 = vmatprep.subr.bf16.mxu0 0
      %900 = vmatpush1.bf16.msra.mxu0 0
      %901 = vmatprep.subr.bf16.mxu0 0
      %902 = vmatpush1.bf16.msra.mxu0 0
      %903 = vmatprep.subr.bf16.mxu0 0
      %904 = vmatpush1.bf16.msra.mxu0 0
      %905 = vmatprep.subr.bf16.mxu0 0
      %906 = vmatpush1.bf16.msra.mxu0 0
      %907 = vmatprep.subr.bf16.mxu0 0
      %908 = vmatpush1.bf16.msra.mxu0 0
      %909 = vmatprep.subr.bf16.mxu0 0
      %910 = vmatpush1.bf16.msra.mxu0 0
      %911 = vmatprep.subr.bf16.mxu0 0
      %912 = vmatpush1.bf16.msra.mxu0 0
      %913 = vmatprep.subr.bf16.mxu0 0
      %914 = vmatpush1.bf16.msra.mxu0 0
      %915 = vmatprep.subr.bf16.mxu0 0
      %916 = vmatpush1.bf16.msra.mxu0 0
      %917 = vmatprep.mubr.bf16.mxu0 0
      %918 = vmatmul.mubr.bf16.gmra.mrb[0].mxu0 %v859
      %v919 = vpop.f32.mrb[0].mxu0
      %v920 = vadd.f32 %v729, %v919
      %v921 = vpop.f32.mrb[0].mxu0
      %v922 = vadd.f32 %v731, %v921
      %v923 = vpop.f32.mrb[0].mxu0
      %v924 = vpop.f32.mrb[0].mxu0
      %925 = vdwg.mxu0
      %926 = vmatprep.subr.bf16.mxu0 %v871
      %927 = vmatpush1.bf16.msra.mxu0 %v868
      %928 = vmatprep.subr.bf16.mxu0 0
      %929 = vmatpush1.bf16.msra.mxu0 0
      %930 = vmatprep.subr.bf16.mxu0 0
      %931 = vmatpush1.bf16.msra.mxu0 0
      %932 = vmatprep.subr.bf16.mxu0 0
      %933 = vmatpush1.bf16.msra.mxu0 0
      %934 = vmatprep.subr.bf16.mxu0 0
      %935 = vmatpush1.bf16.msra.mxu0 0
      %936 = vmatprep.subr.bf16.mxu0 0
      %937 = vmatpush1.bf16.msra.mxu0 0
      %938 = vmatprep.subr.bf16.mxu0 0
      %939 = vmatpush1.bf16.msra.mxu0 0
      %940 = vmatprep.subr.bf16.mxu0 0
      %941 = vmatpush1.bf16.msra.mxu0 0
      %942 = vmatprep.subr.bf16.mxu0 0
      %943 = vmatpush1.bf16.msra.mxu0 0
      %944 = vmatprep.subr.bf16.mxu0 0
      %945 = vmatpush1.bf16.msra.mxu0 0
      %946 = vmatprep.subr.bf16.mxu0 0
      %947 = vmatpush1.bf16.msra.mxu0 0
      %948 = vmatprep.subr.bf16.mxu0 0
      %949 = vmatpush1.bf16.msra.mxu0 0
      %950 = vmatprep.subr.bf16.mxu0 0
      %951 = vmatpush1.bf16.msra.mxu0 0
      %952 = vmatprep.subr.bf16.mxu0 0
      %953 = vmatpush1.bf16.msra.mxu0 0
      %954 = vmatprep.subr.bf16.mxu0 0
      %955 = vmatpush1.bf16.msra.mxu0 0
      %956 = vmatprep.subr.bf16.mxu0 0
      %957 = vmatpush1.bf16.msra.mxu0 0
      %958 = vmatprep.mubr.bf16.mxu0 0
      %959 = vmatmul.mubr.bf16.gmra.mrb[0].mxu0 %v859
      %v960 = vpop.f32.mrb[0].mxu0
      %v961 = vadd.f32 %v770, %v960
      %v962 = vpop.f32.mrb[0].mxu0
      %v963 = vadd.f32 %v772, %v962
      %v964 = vpop.f32.mrb[0].mxu0
      %v965 = vpop.f32.mrb[0].mxu0
      %966 = vdwg.mxu0
      %967 = vmatprep.subr.bf16.mxu0 %v877
      %968 = vmatpush1.bf16.msra.mxu0 %v874
      %969 = vmatprep.subr.bf16.mxu0 0
      %970 = vmatpush1.bf16.msra.mxu0 0
      %971 = vmatprep.subr.bf16.mxu0 0
      %972 = vmatpush1.bf16.msra.mxu0 0
      %973 = vmatprep.subr.bf16.mxu0 0
      %974 = vmatpush1.bf16.msra.mxu0 0
      %975 = vmatprep.subr.bf16.mxu0 0
      %976 = vmatpush1.bf16.msra.mxu0 0
      %977 = vmatprep.subr.bf16.mxu0 0
      %978 = vmatpush1.bf16.msra.mxu0 0
      %979 = vmatprep.subr.bf16.mxu0 0
      %980 = vmatpush1.bf16.msra.mxu0 0
      %981 = vmatprep.subr.bf16.mxu0 0
      %982 = vmatpush1.bf16.msra.mxu0 0
      %983 = vmatprep.subr.bf16.mxu0 0
      %984 = vmatpush1.bf16.msra.mxu0 0
      %985 = vmatprep.subr.bf16.mxu0 0
      %986 = vmatpush1.bf16.msra.mxu0 0
      %987 = vmatprep.subr.bf16.mxu0 0
      %988 = vmatpush1.bf16.msra.mxu0 0
      %989 = vmatprep.subr.bf16.mxu0 0
      %990 = vmatpush1.bf16.msra.mxu0 0
      %991 = vmatprep.subr.bf16.mxu0 0
      %992 = vmatpush1.bf16.msra.mxu0 0
      %993 = vmatprep.subr.bf16.mxu0 0
      %994 = vmatpush1.bf16.msra.mxu0 0
      %995 = vmatprep.subr.bf16.mxu0 0
      %996 = vmatpush1.bf16.msra.mxu0 0
      %997 = vmatprep.subr.bf16.mxu0 0
      %998 = vmatpush1.bf16.msra.mxu0 0
      %999 = vmatprep.mubr.bf16.mxu0 0
      %1000 = vmatmul.mubr.bf16.gmra.mrb[0].mxu0 %v859
      %v1001 = vpop.f32.mrb[0].mxu0
      %v1002 = vadd.f32 %v811, %v1001
      %v1003 = vpop.f32.mrb[0].mxu0
      %v1004 = vadd.f32 %v813, %v1003
      %v1005 = vpop.f32.mrb[0].mxu0
      %v1006 = vpop.f32.mrb[0].mxu0
      %1007 = vdwg.mxu0
      %1008 = vmatprep.subr.bf16.mxu0 %v883
      %1009 = vmatpush1.bf16.msra.mxu0 %v880
      %1010 = vmatprep.subr.bf16.mxu0 0
      %1011 = vmatpush1.bf16.msra.mxu0 0
      %1012 = vmatprep.subr.bf16.mxu0 0
      %1013 = vmatpush1.bf16.msra.mxu0 0
      %1014 = vmatprep.subr.bf16.mxu0 0
      %1015 = vmatpush1.bf16.msra.mxu0 0
      %1016 = vmatprep.subr.bf16.mxu0 0
      %1017 = vmatpush1.bf16.msra.mxu0 0
      %1018 = vmatprep.subr.bf16.mxu0 0
      %1019 = vmatpush1.bf16.msra.mxu0 0
      %1020 = vmatprep.subr.bf16.mxu0 0
      %1021 = vmatpush1.bf16.msra.mxu0 0
      %1022 = vmatprep.subr.bf16.mxu0 0
      %1023 = vmatpush1.bf16.msra.mxu0 0
      %1024 = vmatprep.subr.bf16.mxu0 0
      %1025 = vmatpush1.bf16.msra.mxu0 0
      %1026 = vmatprep.subr.bf16.mxu0 0
      %1027 = vmatpush1.bf16.msra.mxu0 0
      %1028 = vmatprep.subr.bf16.mxu0 0
      %1029 = vmatpush1.bf16.msra.mxu0 0
      %1030 = vmatprep.subr.bf16.mxu0 0
      %1031 = vmatpush1.bf16.msra.mxu0 0
      %1032 = vmatprep.subr.bf16.mxu0 0
      %1033 = vmatpush1.bf16.msra.mxu0 0
      %1034 = vmatprep.subr.bf16.mxu0 0
      %1035 = vmatpush1.bf16.msra.mxu0 0
      %1036 = vmatprep.subr.bf16.mxu0 0
      %1037 = vmatpush1.bf16.msra.mxu0 0
      %1038 = vmatprep.subr.bf16.mxu0 0
      %1039 = vmatpush1.bf16.msra.mxu0 0
      %1040 = vmatprep.mubr.bf16.mxu0 0
      %1041 = vmatmul.mubr.bf16.gmra.mrb[0].mxu0 %v859
      %v1042 = vpop.f32.mrb[0].mxu0
      %v1043 = vadd.f32 %v852, %v1042
      %v1044 = vpop.f32.mrb[0].mxu0
      %v1045 = vadd.f32 %v854, %v1044
      %v1046 = vpop.f32.mrb[0].mxu0
      %v1047 = vpop.f32.mrb[0].mxu0
      %1048 = vdwg.mxu0
      %s1049 = scalar_lea.vmem %s0, 8
      %v1050 = vld [vmem:[%s1049] sm:$0xf]
      %1051 = vrot.lane.b32.xlu0 %v629, 126
      %v1052 = vpop.permute.xlu0 %1051
      %1053 = vrot.lane.b32.xlu0 %v630, 126
      %v1054 = vpop.permute.xlu0 %1053
      %1055 = vrot.lane.b32.xlu0 %v631, 126
      %v1056 = vpop.permute.xlu0 %1055
      %1057 = vrot.lane.b32.xlu0 %v632, 126
      %v1058 = vpop.permute.xlu0 %1057
      %1059 = vrot.lane.b32.xlu0 %v633, 126
      %v1060 = vpop.permute.xlu0 %1059
      %1061 = vrot.lane.b32.xlu0 %v634, 126
      %v1062 = vpop.permute.xlu0 %1061
      %1063 = vrot.lane.b32.xlu0 %v635, 126
      %v1064 = vpop.permute.xlu0 %1063
      %1065 = vrot.lane.b32.xlu0 %v636, 126
      %v1066 = vpop.permute.xlu0 %1065
      %1067 = vrot.lane.b32.xlu0 %v637, 126
      %v1068 = vpop.permute.xlu0 %1067
      %vm1069 = vcmask 1031168
      %v1070 = vsel %vm1069, %v1052, %v1054
      %v1071 = vsel %vm1069, %v1054, %v1056
      %v1072 = vsel %vm1069, %v1056, %v1058
      %v1073 = vsel %vm1069, %v1058, %v1060
      %v1074 = vsel %vm1069, %v1060, %v1062
      %v1075 = vsel %vm1069, %v1062, %v1064
      %v1076 = vsel %vm1069, %v1064, %v1066
      %v1077 = vsel %vm1069, %v1066, %v1068
      %v1079 = vsel %vm665, %v1050, 0
      %v1082 = vsel %vm669, %v1070, 0
      %v1085 = vsel %vm669, %v1071, 0
      %v1088 = vsel %vm669, %v1072, 0
      %v1091 = vsel %vm669, %v1073, 0
      %v1094 = vsel %vm669, %v1074, 0
      %v1097 = vsel %vm669, %v1075, 0
      %v1100 = vsel %vm669, %v1076, 0
      %v1103 = vsel %vm669, %v1077, 0
      %1105 = vmatprep.subr.bf16.mxu0 %v1085
      %1106 = vmatpush1.bf16.msra.mxu0 %v1082
      %1107 = vmatprep.subr.bf16.mxu0 0
      %1108 = vmatpush1.bf16.msra.mxu0 0
      %1109 = vmatprep.subr.bf16.mxu0 0
      %1110 = vmatpush1.bf16.msra.mxu0 0
      %1111 = vmatprep.subr.bf16.mxu0 0
      %1112 = vmatpush1.bf16.msra.mxu0 0
      %1113 = vmatprep.subr.bf16.mxu0 0
      %1114 = vmatpush1.bf16.msra.mxu0 0
      %1115 = vmatprep.subr.bf16.mxu0 0
      %1116 = vmatpush1.bf16.msra.mxu0 0
      %1117 = vmatprep.subr.bf16.mxu0 0
      %1118 = vmatpush1.bf16.msra.mxu0 0
      %1119 = vmatprep.subr.bf16.mxu0 0
      %1120 = vmatpush1.bf16.msra.mxu0 0
      %1121 = vmatprep.subr.bf16.mxu0 0
      %1122 = vmatpush1.bf16.msra.mxu0 0
      %1123 = vmatprep.subr.bf16.mxu0 0
      %1124 = vmatpush1.bf16.msra.mxu0 0
      %1125 = vmatprep.subr.bf16.mxu0 0
      %1126 = vmatpush1.bf16.msra.mxu0 0
      %1127 = vmatprep.subr.bf16.mxu0 0
      %1128 = vmatpush1.bf16.msra.mxu0 0
      %1129 = vmatprep.subr.bf16.mxu0 0
      %1130 = vmatpush1.bf16.msra.mxu0 0
      %1131 = vmatprep.subr.bf16.mxu0 0
      %1132 = vmatpush1.bf16.msra.mxu0 0
      %1133 = vmatprep.subr.bf16.mxu0 0
      %1134 = vmatpush1.bf16.msra.mxu0 0
      %1135 = vmatprep.subr.bf16.mxu0 0
      %1136 = vmatpush1.bf16.msra.mxu0 0
      %1137 = vmatprep.mubr.bf16.mxu0 0
      %1138 = vmatmul.mubr.bf16.gmra.mrb[0].mxu0 %v1079
      %v1139 = vpop.f32.mrb[0].mxu0
      %v1140 = vadd.f32 0.0, %v1139
      %v1141 = vpop.f32.mrb[0].mxu0
      %v1142 = vadd.f32 0.0, %v1141
      %v1143 = vpop.f32.mrb[0].mxu0
      %v1144 = vpop.f32.mrb[0].mxu0
      %1145 = vdwg.mxu0
      %1146 = vmatprep.subr.bf16.mxu0 %v1091
      %1147 = vmatpush1.bf16.msra.mxu0 %v1088
      %1148 = vmatprep.subr.bf16.mxu0 0
      %1149 = vmatpush1.bf16.msra.mxu0 0
      %1150 = vmatprep.subr.bf16.mxu0 0
      %1151 = vmatpush1.bf16.msra.mxu0 0
      %1152 = vmatprep.subr.bf16.mxu0 0
      %1153 = vmatpush1.bf16.msra.mxu0 0
      %1154 = vmatprep.subr.bf16.mxu0 0
      %1155 = vmatpush1.bf16.msra.mxu0 0
      %1156 = vmatprep.subr.bf16.mxu0 0
      %1157 = vmatpush1.bf16.msra.mxu0 0
      %1158 = vmatprep.subr.bf16.mxu0 0
      %1159 = vmatpush1.bf16.msra.mxu0 0
      %1160 = vmatprep.subr.bf16.mxu0 0
      %1161 = vmatpush1.bf16.msra.mxu0 0
      %1162 = vmatprep.subr.bf16.mxu0 0
      %1163 = vmatpush1.bf16.msra.mxu0 0
      %1164 = vmatprep.subr.bf16.mxu0 0
      %1165 = vmatpush1.bf16.msra.mxu0 0
      %1166 = vmatprep.subr.bf16.mxu0 0
      %1167 = vmatpush1.bf16.msra.mxu0 0
      %1168 = vmatprep.subr.bf16.mxu0 0
      %1169 = vmatpush1.bf16.msra.mxu0 0
      %1170 = vmatprep.subr.bf16.mxu0 0
      %1171 = vmatpush1.bf16.msra.mxu0 0
      %1172 = vmatprep.subr.bf16.mxu0 0
      %1173 = vmatpush1.bf16.msra.mxu0 0
      %1174 = vmatprep.subr.bf16.mxu0 0
      %1175 = vmatpush1.bf16.msra.mxu0 0
      %1176 = vmatprep.subr.bf16.mxu0 0
      %1177 = vmatpush1.bf16.msra.mxu0 0
      %1178 = vmatprep.mubr.bf16.mxu0 0
      %1179 = vmatmul.mubr.bf16.gmra.mrb[0].mxu0 %v1079
      %v1180 = vpop.f32.mrb[0].mxu0
      %v1181 = vadd.f32 0.0, %v1180
      %v1182 = vpop.f32.mrb[0].mxu0
      %v1183 = vadd.f32 0.0, %v1182
      %v1184 = vpop.f32.mrb[0].mxu0
      %v1185 = vpop.f32.mrb[0].mxu0
      %1186 = vdwg.mxu0
      %1187 = vmatprep.subr.bf16.mxu0 %v1097
      %1188 = vmatpush1.bf16.msra.mxu0 %v1094
      %1189 = vmatprep.subr.bf16.mxu0 0
      %1190 = vmatpush1.bf16.msra.mxu0 0
      %1191 = vmatprep.subr.bf16.mxu0 0
      %1192 = vmatpush1.bf16.msra.mxu0 0
      %1193 = vmatprep.subr.bf16.mxu0 0
      %1194 = vmatpush1.bf16.msra.mxu0 0
      %1195 = vmatprep.subr.bf16.mxu0 0
      %1196 = vmatpush1.bf16.msra.mxu0 0
      %1197 = vmatprep.subr.bf16.mxu0 0
      %1198 = vmatpush1.bf16.msra.mxu0 0
      %1199 = vmatprep.subr.bf16.mxu0 0
      %1200 = vmatpush1.bf16.msra.mxu0 0
      %1201 = vmatprep.subr.bf16.mxu0 0
      %1202 = vmatpush1.bf16.msra.mxu0 0
      %1203 = vmatprep.subr.bf16.mxu0 0
      %1204 = vmatpush1.bf16.msra.mxu0 0
      %1205 = vmatprep.subr.bf16.mxu0 0
      %1206 = vmatpush1.bf16.msra.mxu0 0
      %1207 = vmatprep.subr.bf16.mxu0 0
      %1208 = vmatpush1.bf16.msra.mxu0 0
      %1209 = vmatprep.subr.bf16.mxu0 0
      %1210 = vmatpush1.bf16.msra.mxu0 0
      %1211 = vmatprep.subr.bf16.mxu0 0
      %1212 = vmatpush1.bf16.msra.mxu0 0
      %1213 = vmatprep.subr.bf16.mxu0 0
      %1214 = vmatpush1.bf16.msra.mxu0 0
      %1215 = vmatprep.subr.bf16.mxu0 0
      %1216 = vmatpush1.bf16.msra.mxu0 0
      %1217 = vmatprep.subr.bf16.mxu0 0
      %1218 = vmatpush1.bf16.msra.mxu0 0
      %1219 = vmatprep.mubr.bf16.mxu0 0
      %1220 = vmatmul.mubr.bf16.gmra.mrb[0].mxu0 %v1079
      %v1221 = vpop.f32.mrb[0].mxu0
      %v1222 = vadd.f32 0.0, %v1221
      %v1223 = vpop.f32.mrb[0].mxu0
      %v1224 = vadd.f32 0.0, %v1223
      %v1225 = vpop.f32.mrb[0].mxu0
      %v1226 = vpop.f32.mrb[0].mxu0
      %1227 = vdwg.mxu0
      %1228 = vmatprep.subr.bf16.mxu0 %v1103
      %1229 = vmatpush1.bf16.msra.mxu0 %v1100
      %1230 = vmatprep.subr.bf16.mxu0 0
      %1231 = vmatpush1.bf16.msra.mxu0 0
      %1232 = vmatprep.subr.bf16.mxu0 0
      %1233 = vmatpush1.bf16.msra.mxu0 0
      %1234 = vmatprep.subr.bf16.mxu0 0
      %1235 = vmatpush1.bf16.msra.mxu0 0
      %1236 = vmatprep.subr.bf16.mxu0 0
      %1237 = vmatpush1.bf16.msra.mxu0 0
      %1238 = vmatprep.subr.bf16.mxu0 0
      %1239 = vmatpush1.bf16.msra.mxu0 0
      %1240 = vmatprep.subr.bf16.mxu0 0
      %1241 = vmatpush1.bf16.msra.mxu0 0
      %1242 = vmatprep.subr.bf16.mxu0 0
      %1243 = vmatpush1.bf16.msra.mxu0 0
      %1244 = vmatprep.subr.bf16.mxu0 0
      %1245 = vmatpush1.bf16.msra.mxu0 0
      %1246 = vmatprep.subr.bf16.mxu0 0
      %1247 = vmatpush1.bf16.msra.mxu0 0
      %1248 = vmatprep.subr.bf16.mxu0 0
      %1249 = vmatpush1.bf16.msra.mxu0 0
      %1250 = vmatprep.subr.bf16.mxu0 0
      %1251 = vmatpush1.bf16.msra.mxu0 0
      %1252 = vmatprep.subr.bf16.mxu0 0
      %1253 = vmatpush1.bf16.msra.mxu0 0
      %1254 = vmatprep.subr.bf16.mxu0 0
      %1255 = vmatpush1.bf16.msra.mxu0 0
      %1256 = vmatprep.subr.bf16.mxu0 0
      %1257 = vmatpush1.bf16.msra.mxu0 0
      %1258 = vmatprep.subr.bf16.mxu0 0
      %1259 = vmatpush1.bf16.msra.mxu0 0
      %1260 = vmatprep.mubr.bf16.mxu0 0
      %1261 = vmatmul.mubr.bf16.gmra.mrb[0].mxu0 %v1079
      %v1262 = vpop.f32.mrb[0].mxu0
      %v1263 = vadd.f32 0.0, %v1262
      %v1264 = vpop.f32.mrb[0].mxu0
      %v1265 = vadd.f32 0.0, %v1264
      %v1266 = vpop.f32.mrb[0].mxu0
      %v1267 = vpop.f32.mrb[0].mxu0
      %1268 = vdwg.mxu0
      %v1269 = vadd.f32 %v920, %v1140
      %v1270 = vadd.f32 %v922, %v1142
      %v1271 = vadd.f32 %v961, %v1181
      %v1272 = vadd.f32 %v963, %v1183
      %v1273 = vadd.f32 %v1002, %v1222
      %v1274 = vadd.f32 %v1004, %v1224
      %v1275 = vadd.f32 %v1043, %v1263
      %v1276 = vadd.f32 %v1045, %v1265
      %s1277 = scalar_lea.vmem %s0, 12
      %v1278 = vld [vmem:[%s1277] sm:$0xf]
      %1279 = vrot.lane.b32.xlu0 %v629, 28
      %v1280 = vpop.permute.xlu0 %1279
      %1281 = vrot.lane.b32.xlu0 %v630, 28
      %v1282 = vpop.permute.xlu0 %1281
      %1283 = vrot.lane.b32.xlu0 %v631, 28
      %v1284 = vpop.permute.xlu0 %1283
      %1285 = vrot.lane.b32.xlu0 %v632, 28
      %v1286 = vpop.permute.xlu0 %1285
      %1287 = vrot.lane.b32.xlu0 %v633, 28
      %v1288 = vpop.permute.xlu0 %1287
      %1289 = vrot.lane.b32.xlu0 %v634, 28
      %v1290 = vpop.permute.xlu0 %1289
      %1291 = vrot.lane.b32.xlu0 %v635, 28
      %v1292 = vpop.permute.xlu0 %1291
      %1293 = vrot.lane.b32.xlu0 %v636, 28
      %v1294 = vpop.permute.xlu0 %1293
      %1295 = vrot.lane.b32.xlu0 %v637, 28
      %v1296 = vpop.permute.xlu0 %1295
      %vm1297 = vcmask 228352
      %v1298 = vsel %vm1297, %v1280, %v1282
      %v1299 = vsel %vm1297, %v1282, %v1284
      %v1300 = vsel %vm1297, %v1284, %v1286
      %v1301 = vsel %vm1297, %v1286, %v1288
      %v1302 = vsel %vm1297, %v1288, %v1290
      %v1303 = vsel %vm1297, %v1290, %v1292
      %v1304 = vsel %vm1297, %v1292, %v1294
      %v1305 = vsel %vm1297, %v1294, %v1296
      %v1307 = vsel %vm665, %v1278, 0
      %v1310 = vsel %vm669, %v1298, 0
      %v1313 = vsel %vm669, %v1299, 0
      %v1316 = vsel %vm669, %v1300, 0
      %v1319 = vsel %vm669, %v1301, 0
      %v1322 = vsel %vm669, %v1302, 0
      %v1325 = vsel %vm669, %v1303, 0
      %v1328 = vsel %vm669, %v1304, 0
      %v1331 = vsel %vm669, %v1305, 0
      %1333 = vmatprep.subr.bf16.mxu0 %v1313
      %1334 = vmatpush1.bf16.msra.mxu0 %v1310
      %1335 = vmatprep.subr.bf16.mxu0 0
      %1336 = vmatpush1.bf16.msra.mxu0 0
      %1337 = vmatprep.subr.bf16.mxu0 0
      %1338 = vmatpush1.bf16.msra.mxu0 0
      %1339 = vmatprep.subr.bf16.mxu0 0
      %1340 = vmatpush1.bf16.msra.mxu0 0
      %1341 = vmatprep.subr.bf16.mxu0 0
      %1342 = vmatpush1.bf16.msra.mxu0 0
      %1343 = vmatprep.subr.bf16.mxu0 0
      %1344 = vmatpush1.bf16.msra.mxu0 0
      %1345 = vmatprep.subr.bf16.mxu0 0
      %1346 = vmatpush1.bf16.msra.mxu0 0
      %1347 = vmatprep.subr.bf16.mxu0 0
      %1348 = vmatpush1.bf16.msra.mxu0 0
      %1349 = vmatprep.subr.bf16.mxu0 0
      %1350 = vmatpush1.bf16.msra.mxu0 0
      %1351 = vmatprep.subr.bf16.mxu0 0
      %1352 = vmatpush1.bf16.msra.mxu0 0
      %1353 = vmatprep.subr.bf16.mxu0 0
      %1354 = vmatpush1.bf16.msra.mxu0 0
      %1355 = vmatprep.subr.bf16.mxu0 0
      %1356 = vmatpush1.bf16.msra.mxu0 0
      %1357 = vmatprep.subr.bf16.mxu0 0
      %1358 = vmatpush1.bf16.msra.mxu0 0
      %1359 = vmatprep.subr.bf16.mxu0 0
      %1360 = vmatpush1.bf16.msra.mxu0 0
      %1361 = vmatprep.subr.bf16.mxu0 0
      %1362 = vmatpush1.bf16.msra.mxu0 0
      %1363 = vmatprep.subr.bf16.mxu0 0
      %1364 = vmatpush1.bf16.msra.mxu0 0
      %1365 = vmatprep.mubr.bf16.mxu0 0
      %1366 = vmatmul.mubr.bf16.gmra.mrb[0].mxu0 %v1307
      %v1367 = vpop.f32.mrb[0].mxu0
      %v1368 = vadd.f32 0.0, %v1367
      %v1369 = vpop.f32.mrb[0].mxu0
      %v1370 = vadd.f32 0.0, %v1369
      %v1371 = vpop.f32.mrb[0].mxu0
      %v1372 = vpop.f32.mrb[0].mxu0
      %1373 = vdwg.mxu0
      %1374 = vmatprep.subr.bf16.mxu0 %v1319
      %1375 = vmatpush1.bf16.msra.mxu0 %v1316
      %1376 = vmatprep.subr.bf16.mxu0 0
      %1377 = vmatpush1.bf16.msra.mxu0 0
      %1378 = vmatprep.subr.bf16.mxu0 0
      %1379 = vmatpush1.bf16.msra.mxu0 0
      %1380 = vmatprep.subr.bf16.mxu0 0
      %1381 = vmatpush1.bf16.msra.mxu0 0
      %1382 = vmatprep.subr.bf16.mxu0 0
      %1383 = vmatpush1.bf16.msra.mxu0 0
      %1384 = vmatprep.subr.bf16.mxu0 0
      %1385 = vmatpush1.bf16.msra.mxu0 0
      %1386 = vmatprep.subr.bf16.mxu0 0
      %1387 = vmatpush1.bf16.msra.mxu0 0
      %1388 = vmatprep.subr.bf16.mxu0 0
      %1389 = vmatpush1.bf16.msra.mxu0 0
      %1390 = vmatprep.subr.bf16.mxu0 0
      %1391 = vmatpush1.bf16.msra.mxu0 0
      %1392 = vmatprep.subr.bf16.mxu0 0
      %1393 = vmatpush1.bf16.msra.mxu0 0
      %1394 = vmatprep.subr.bf16.mxu0 0
      %1395 = vmatpush1.bf16.msra.mxu0 0
      %1396 = vmatprep.subr.bf16.mxu0 0
      %1397 = vmatpush1.bf16.msra.mxu0 0
      %1398 = vmatprep.subr.bf16.mxu0 0
      %1399 = vmatpush1.bf16.msra.mxu0 0
      %1400 = vmatprep.subr.bf16.mxu0 0
      %1401 = vmatpush1.bf16.msra.mxu0 0
      %1402 = vmatprep.subr.bf16.mxu0 0
      %1403 = vmatpush1.bf16.msra.mxu0 0
      %1404 = vmatprep.subr.bf16.mxu0 0
      %1405 = vmatpush1.bf16.msra.mxu0 0
      %1406 = vmatprep.mubr.bf16.mxu0 0
      %1407 = vmatmul.mubr.bf16.gmra.mrb[0].mxu0 %v1307
      %v1408 = vpop.f32.mrb[0].mxu0
      %v1409 = vadd.f32 0.0, %v1408
      %v1410 = vpop.f32.mrb[0].mxu0
      %v1411 = vadd.f32 0.0, %v1410
      %v1412 = vpop.f32.mrb[0].mxu0
      %v1413 = vpop.f32.mrb[0].mxu0
      %1414 = vdwg.mxu0
      %1415 = vmatprep.subr.bf16.mxu0 %v1325
      %1416 = vmatpush1.bf16.msra.mxu0 %v1322
      %1417 = vmatprep.subr.bf16.mxu0 0
      %1418 = vmatpush1.bf16.msra.mxu0 0
      %1419 = vmatprep.subr.bf16.mxu0 0
      %1420 = vmatpush1.bf16.msra.mxu0 0
      %1421 = vmatprep.subr.bf16.mxu0 0
      %1422 = vmatpush1.bf16.msra.mxu0 0
      %1423 = vmatprep.subr.bf16.mxu0 0
      %1424 = vmatpush1.bf16.msra.mxu0 0
      %1425 = vmatprep.subr.bf16.mxu0 0
      %1426 = vmatpush1.bf16.msra.mxu0 0
      %1427 = vmatprep.subr.bf16.mxu0 0
      %1428 = vmatpush1.bf16.msra.mxu0 0
      %1429 = vmatprep.subr.bf16.mxu0 0
      %1430 = vmatpush1.bf16.msra.mxu0 0
      %1431 = vmatprep.subr.bf16.mxu0 0
      %1432 = vmatpush1.bf16.msra.mxu0 0
      %1433 = vmatprep.subr.bf16.mxu0 0
      %1434 = vmatpush1.bf16.msra.mxu0 0
      %1435 = vmatprep.subr.bf16.mxu0 0
      %1436 = vmatpush1.bf16.msra.mxu0 0
      %1437 = vmatprep.subr.bf16.mxu0 0
      %1438 = vmatpush1.bf16.msra.mxu0 0
      %1439 = vmatprep.subr.bf16.mxu0 0
      %1440 = vmatpush1.bf16.msra.mxu0 0
      %1441 = vmatprep.subr.bf16.mxu0 0
      %1442 = vmatpush1.bf16.msra.mxu0 0
      %1443 = vmatprep.subr.bf16.mxu0 0
      %1444 = vmatpush1.bf16.msra.mxu0 0
      %1445 = vmatprep.subr.bf16.mxu0 0
      %1446 = vmatpush1.bf16.msra.mxu0 0
      %1447 = vmatprep.mubr.bf16.mxu0 0
      %1448 = vmatmul.mubr.bf16.gmra.mrb[0].mxu0 %v1307
      %v1449 = vpop.f32.mrb[0].mxu0
      %v1450 = vadd.f32 0.0, %v1449
      %v1451 = vpop.f32.mrb[0].mxu0
      %v1452 = vadd.f32 0.0, %v1451
      %v1453 = vpop.f32.mrb[0].mxu0
      %v1454 = vpop.f32.mrb[0].mxu0
      %1455 = vdwg.mxu0
      %1456 = vmatprep.subr.bf16.mxu0 %v1331
      %1457 = vmatpush1.bf16.msra.mxu0 %v1328
      %1458 = vmatprep.subr.bf16.mxu0 0
      %1459 = vmatpush1.bf16.msra.mxu0 0
      %1460 = vmatprep.subr.bf16.mxu0 0
      %1461 = vmatpush1.bf16.msra.mxu0 0
      %1462 = vmatprep.subr.bf16.mxu0 0
      %1463 = vmatpush1.bf16.msra.mxu0 0
      %1464 = vmatprep.subr.bf16.mxu0 0
      %1465 = vmatpush1.bf16.msra.mxu0 0
      %1466 = vmatprep.subr.bf16.mxu0 0
      %1467 = vmatpush1.bf16.msra.mxu0 0
      %1468 = vmatprep.subr.bf16.mxu0 0
      %1469 = vmatpush1.bf16.msra.mxu0 0
      %1470 = vmatprep.subr.bf16.mxu0 0
      %1471 = vmatpush1.bf16.msra.mxu0 0
      %1472 = vmatprep.subr.bf16.mxu0 0
      %1473 = vmatpush1.bf16.msra.mxu0 0
      %1474 = vmatprep.subr.bf16.mxu0 0
      %1475 = vmatpush1.bf16.msra.mxu0 0
      %1476 = vmatprep.subr.bf16.mxu0 0
      %1477 = vmatpush1.bf16.msra.mxu0 0
      %1478 = vmatprep.subr.bf16.mxu0 0
      %1479 = vmatpush1.bf16.msra.mxu0 0
      %1480 = vmatprep.subr.bf16.mxu0 0
      %1481 = vmatpush1.bf16.msra.mxu0 0
      %1482 = vmatprep.subr.bf16.mxu0 0
      %1483 = vmatpush1.bf16.msra.mxu0 0
      %1484 = vmatprep.subr.bf16.mxu0 0
      %1485 = vmatpush1.bf16.msra.mxu0 0
      %1486 = vmatprep.subr.bf16.mxu0 0
      %1487 = vmatpush1.bf16.msra.mxu0 0
      %1488 = vmatprep.mubr.bf16.mxu0 0
      %1489 = vmatmul.mubr.bf16.gmra.mrb[0].mxu0 %v1307
      %v1490 = vpop.f32.mrb[0].mxu0
      %v1491 = vadd.f32 0.0, %v1490
      %v1492 = vpop.f32.mrb[0].mxu0
      %v1493 = vadd.f32 0.0, %v1492
      %v1494 = vpop.f32.mrb[0].mxu0
      %v1495 = vpop.f32.mrb[0].mxu0
      %1496 = vdwg.mxu0
      %v1497 = vadd.f32 %v1269, %v1368
      %v1498 = vadd.f32 %v1270, %v1370
      %v1499 = vadd.f32 %v1271, %v1409
      %v1500 = vadd.f32 %v1272, %v1411
      %v1501 = vadd.f32 %v1273, %v1450
      %v1502 = vadd.f32 %v1274, %v1452
      %v1503 = vadd.f32 %v1275, %v1491
      %v1504 = vadd.f32 %v1276, %v1493
      %s1505 = scalar_lea.vmem %s0, 16
      %v1506 = vld [vmem:[%s1505] sm:$0xf]
      %1507 = vrot.lane.b32.xlu0 %v629, 27
      %v1508 = vpop.permute.xlu0 %1507
      %1509 = vrot.lane.b32.xlu0 %v630, 27
      %v1510 = vpop.permute.xlu0 %1509
      %1511 = vrot.lane.b32.xlu0 %v631, 27
      %v1512 = vpop.permute.xlu0 %1511
      %1513 = vrot.lane.b32.xlu0 %v632, 27
      %v1514 = vpop.permute.xlu0 %1513
      %1515 = vrot.lane.b32.xlu0 %v633, 27
      %v1516 = vpop.permute.xlu0 %1515
      %1517 = vrot.lane.b32.xlu0 %v634, 27
      %v1518 = vpop.permute.xlu0 %1517
      %1519 = vrot.lane.b32.xlu0 %v635, 27
      %v1520 = vpop.permute.xlu0 %1519
      %1521 = vrot.lane.b32.xlu0 %v636, 27
      %v1522 = vpop.permute.xlu0 %1521
      %1523 = vrot.lane.b32.xlu0 %v637, 27
      %v1524 = vpop.permute.xlu0 %1523
      %vm1525 = vcmask 220160
      %v1526 = vsel %vm1525, %v1508, %v1510
      %v1527 = vsel %vm1525, %v1510, %v1512
      %v1528 = vsel %vm1525, %v1512, %v1514
      %v1529 = vsel %vm1525, %v1514, %v1516
      %v1530 = vsel %vm1525, %v1516, %v1518
      %v1531 = vsel %vm1525, %v1518, %v1520
      %v1532 = vsel %vm1525, %v1520, %v1522
      %v1533 = vsel %vm1525, %v1522, %v1524
      %v1535 = vsel %vm665, %v1506, 0
      %v1538 = vsel %vm669, %v1526, 0
      %v1541 = vsel %vm669, %v1527, 0
      %v1544 = vsel %vm669, %v1528, 0
      %v1547 = vsel %vm669, %v1529, 0
      %v1550 = vsel %vm669, %v1530, 0
      %v1553 = vsel %vm669, %v1531, 0
      %v1556 = vsel %vm669, %v1532, 0
      %v1559 = vsel %vm669, %v1533, 0
      %1561 = vmatprep.subr.bf16.mxu0 %v1541
      %1562 = vmatpush1.bf16.msra.mxu0 %v1538
      %1563 = vmatprep.subr.bf16.mxu0 0
      %1564 = vmatpush1.bf16.msra.mxu0 0
      %1565 = vmatprep.subr.bf16.mxu0 0
      %1566 = vmatpush1.bf16.msra.mxu0 0
      %1567 = vmatprep.subr.bf16.mxu0 0
      %1568 = vmatpush1.bf16.msra.mxu0 0
      %1569 = vmatprep.subr.bf16.mxu0 0
      %1570 = vmatpush1.bf16.msra.mxu0 0
      %1571 = vmatprep.subr.bf16.mxu0 0
      %1572 = vmatpush1.bf16.msra.mxu0 0
      %1573 = vmatprep.subr.bf16.mxu0 0
      %1574 = vmatpush1.bf16.msra.mxu0 0
      %1575 = vmatprep.subr.bf16.mxu0 0
      %1576 = vmatpush1.bf16.msra.mxu0 0
      %1577 = vmatprep.subr.bf16.mxu0 0
      %1578 = vmatpush1.bf16.msra.mxu0 0
      %1579 = vmatprep.subr.bf16.mxu0 0
      %1580 = vmatpush1.bf16.msra.mxu0 0
      %1581 = vmatprep.subr.bf16.mxu0 0
      %1582 = vmatpush1.bf16.msra.mxu0 0
      %1583 = vmatprep.subr.bf16.mxu0 0
      %1584 = vmatpush1.bf16.msra.mxu0 0
      %1585 = vmatprep.subr.bf16.mxu0 0
      %1586 = vmatpush1.bf16.msra.mxu0 0
      %1587 = vmatprep.subr.bf16.mxu0 0
      %1588 = vmatpush1.bf16.msra.mxu0 0
      %1589 = vmatprep.subr.bf16.mxu0 0
      %1590 = vmatpush1.bf16.msra.mxu0 0
      %1591 = vmatprep.subr.bf16.mxu0 0
      %1592 = vmatpush1.bf16.msra.mxu0 0
      %1593 = vmatprep.mubr.bf16.mxu0 0
      %1594 = vmatmul.mubr.bf16.gmra.mrb[0].mxu0 %v1535
      %v1595 = vpop.f32.mrb[0].mxu0
      %v1596 = vadd.f32 0.0, %v1595
      %v1597 = vpop.f32.mrb[0].mxu0
      %v1598 = vadd.f32 0.0, %v1597
      %v1599 = vpop.f32.mrb[0].mxu0
      %v1600 = vpop.f32.mrb[0].mxu0
      %1601 = vdwg.mxu0
      %1602 = vmatprep.subr.bf16.mxu0 %v1547
      %1603 = vmatpush1.bf16.msra.mxu0 %v1544
      %1604 = vmatprep.subr.bf16.mxu0 0
      %1605 = vmatpush1.bf16.msra.mxu0 0
      %1606 = vmatprep.subr.bf16.mxu0 0
      %1607 = vmatpush1.bf16.msra.mxu0 0
      %1608 = vmatprep.subr.bf16.mxu0 0
      %1609 = vmatpush1.bf16.msra.mxu0 0
      %1610 = vmatprep.subr.bf16.mxu0 0
      %1611 = vmatpush1.bf16.msra.mxu0 0
      %1612 = vmatprep.subr.bf16.mxu0 0
      %1613 = vmatpush1.bf16.msra.mxu0 0
      %1614 = vmatprep.subr.bf16.mxu0 0
      %1615 = vmatpush1.bf16.msra.mxu0 0
      %1616 = vmatprep.subr.bf16.mxu0 0
      %1617 = vmatpush1.bf16.msra.mxu0 0
      %1618 = vmatprep.subr.bf16.mxu0 0
      %1619 = vmatpush1.bf16.msra.mxu0 0
      %1620 = vmatprep.subr.bf16.mxu0 0
      %1621 = vmatpush1.bf16.msra.mxu0 0
      %1622 = vmatprep.subr.bf16.mxu0 0
      %1623 = vmatpush1.bf16.msra.mxu0 0
      %1624 = vmatprep.subr.bf16.mxu0 0
      %1625 = vmatpush1.bf16.msra.mxu0 0
      %1626 = vmatprep.subr.bf16.mxu0 0
      %1627 = vmatpush1.bf16.msra.mxu0 0
      %1628 = vmatprep.subr.bf16.mxu0 0
      %1629 = vmatpush1.bf16.msra.mxu0 0
      %1630 = vmatprep.subr.bf16.mxu0 0
      %1631 = vmatpush1.bf16.msra.mxu0 0
      %1632 = vmatprep.subr.bf16.mxu0 0
      %1633 = vmatpush1.bf16.msra.mxu0 0
      %1634 = vmatprep.mubr.bf16.mxu0 0
      %1635 = vmatmul.mubr.bf16.gmra.mrb[0].mxu0 %v1535
      %v1636 = vpop.f32.mrb[0].mxu0
      %v1637 = vadd.f32 0.0, %v1636
      %v1638 = vpop.f32.mrb[0].mxu0
      %v1639 = vadd.f32 0.0, %v1638
      %v1640 = vpop.f32.mrb[0].mxu0
      %v1641 = vpop.f32.mrb[0].mxu0
      %1642 = vdwg.mxu0
      %1643 = vmatprep.subr.bf16.mxu0 %v1553
      %1644 = vmatpush1.bf16.msra.mxu0 %v1550
      %1645 = vmatprep.subr.bf16.mxu0 0
      %1646 = vmatpush1.bf16.msra.mxu0 0
      %1647 = vmatprep.subr.bf16.mxu0 0
      %1648 = vmatpush1.bf16.msra.mxu0 0
      %1649 = vmatprep.subr.bf16.mxu0 0
      %1650 = vmatpush1.bf16.msra.mxu0 0
      %1651 = vmatprep.subr.bf16.mxu0 0
      %1652 = vmatpush1.bf16.msra.mxu0 0
      %1653 = vmatprep.subr.bf16.mxu0 0
      %1654 = vmatpush1.bf16.msra.mxu0 0
      %1655 = vmatprep.subr.bf16.mxu0 0
      %1656 = vmatpush1.bf16.msra.mxu0 0
      %1657 = vmatprep.subr.bf16.mxu0 0
      %1658 = vmatpush1.bf16.msra.mxu0 0
      %1659 = vmatprep.subr.bf16.mxu0 0
      %1660 = vmatpush1.bf16.msra.mxu0 0
      %1661 = vmatprep.subr.bf16.mxu0 0
      %1662 = vmatpush1.bf16.msra.mxu0 0
      %1663 = vmatprep.subr.bf16.mxu0 0
      %1664 = vmatpush1.bf16.msra.mxu0 0
      %1665 = vmatprep.subr.bf16.mxu0 0
      %1666 = vmatpush1.bf16.msra.mxu0 0
      %1667 = vmatprep.subr.bf16.mxu0 0
      %1668 = vmatpush1.bf16.msra.mxu0 0
      %1669 = vmatprep.subr.bf16.mxu0 0
      %1670 = vmatpush1.bf16.msra.mxu0 0
      %1671 = vmatprep.subr.bf16.mxu0 0
      %1672 = vmatpush1.bf16.msra.mxu0 0
      %1673 = vmatprep.subr.bf16.mxu0 0
      %1674 = vmatpush1.bf16.msra.mxu0 0
      %1675 = vmatprep.mubr.bf16.mxu0 0
      %1676 = vmatmul.mubr.bf16.gmra.mrb[0].mxu0 %v1535
      %v1677 = vpop.f32.mrb[0].mxu0
      %v1678 = vadd.f32 0.0, %v1677
      %v1679 = vpop.f32.mrb[0].mxu0
      %v1680 = vadd.f32 0.0, %v1679
      %v1681 = vpop.f32.mrb[0].mxu0
      %v1682 = vpop.f32.mrb[0].mxu0
      %1683 = vdwg.mxu0
      %1684 = vmatprep.subr.bf16.mxu0 %v1559
      %1685 = vmatpush1.bf16.msra.mxu0 %v1556
      %1686 = vmatprep.subr.bf16.mxu0 0
      %1687 = vmatpush1.bf16.msra.mxu0 0
      %1688 = vmatprep.subr.bf16.mxu0 0
      %1689 = vmatpush1.bf16.msra.mxu0 0
      %1690 = vmatprep.subr.bf16.mxu0 0
      %1691 = vmatpush1.bf16.msra.mxu0 0
      %1692 = vmatprep.subr.bf16.mxu0 0
      %1693 = vmatpush1.bf16.msra.mxu0 0
      %1694 = vmatprep.subr.bf16.mxu0 0
      %1695 = vmatpush1.bf16.msra.mxu0 0
      %1696 = vmatprep.subr.bf16.mxu0 0
      %1697 = vmatpush1.bf16.msra.mxu0 0
      %1698 = vmatprep.subr.bf16.mxu0 0
      %1699 = vmatpush1.bf16.msra.mxu0 0
      %1700 = vmatprep.subr.bf16.mxu0 0
      %1701 = vmatpush1.bf16.msra.mxu0 0
      %1702 = vmatprep.subr.bf16.mxu0 0
      %1703 = vmatpush1.bf16.msra.mxu0 0
      %1704 = vmatprep.subr.bf16.mxu0 0
      %1705 = vmatpush1.bf16.msra.mxu0 0
      %1706 = vmatprep.subr.bf16.mxu0 0
      %1707 = vmatpush1.bf16.msra.mxu0 0
      %1708 = vmatprep.subr.bf16.mxu0 0
      %1709 = vmatpush1.bf16.msra.mxu0 0
      %1710 = vmatprep.subr.bf16.mxu0 0
      %1711 = vmatpush1.bf16.msra.mxu0 0
      %1712 = vmatprep.subr.bf16.mxu0 0
      %1713 = vmatpush1.bf16.msra.mxu0 0
      %1714 = vmatprep.subr.bf16.mxu0 0
      %1715 = vmatpush1.bf16.msra.mxu0 0
      %1716 = vmatprep.mubr.bf16.mxu0 0
      %1717 = vmatmul.mubr.bf16.gmra.mrb[0].mxu0 %v1535
      %v1718 = vpop.f32.mrb[0].mxu0
      %v1719 = vadd.f32 0.0, %v1718
      %v1720 = vpop.f32.mrb[0].mxu0
      %v1721 = vadd.f32 0.0, %v1720
      %v1722 = vpop.f32.mrb[0].mxu0
      %v1723 = vpop.f32.mrb[0].mxu0
      %1724 = vdwg.mxu0
      %v1725 = vadd.f32 %v1497, %v1596
      %v1726 = vadd.f32 %v1498, %v1598
      %v1727 = vadd.f32 %v1499, %v1637
      %v1728 = vadd.f32 %v1500, %v1639
      %v1729 = vadd.f32 %v1501, %v1678
      %v1730 = vadd.f32 %v1502, %v1680
      %v1731 = vadd.f32 %v1503, %v1719
      %v1732 = vadd.f32 %v1504, %v1721
      %s1733 = scalar_lea.vmem %s0, 20
      %v1734 = vld [vmem:[%s1733] sm:$0xf]
      %1735 = vrot.lane.b32.xlu0 %v629, 26
      %v1736 = vpop.permute.xlu0 %1735
      %1737 = vrot.lane.b32.xlu0 %v630, 26
      %v1738 = vpop.permute.xlu0 %1737
      %1739 = vrot.lane.b32.xlu0 %v631, 26
      %v1740 = vpop.permute.xlu0 %1739
      %1741 = vrot.lane.b32.xlu0 %v632, 26
      %v1742 = vpop.permute.xlu0 %1741
      %1743 = vrot.lane.b32.xlu0 %v633, 26
      %v1744 = vpop.permute.xlu0 %1743
      %1745 = vrot.lane.b32.xlu0 %v634, 26
      %v1746 = vpop.permute.xlu0 %1745
      %1747 = vrot.lane.b32.xlu0 %v635, 26
      %v1748 = vpop.permute.xlu0 %1747
      %1749 = vrot.lane.b32.xlu0 %v636, 26
      %v1750 = vpop.permute.xlu0 %1749
      %1751 = vrot.lane.b32.xlu0 %v637, 26
      %v1752 = vpop.permute.xlu0 %1751
      %vm1753 = vcmask 211968
      %v1754 = vsel %vm1753, %v1736, %v1738
      %v1755 = vsel %vm1753, %v1738, %v1740
      %v1756 = vsel %vm1753, %v1740, %v1742
      %v1757 = vsel %vm1753, %v1742, %v1744
      %v1758 = vsel %vm1753, %v1744, %v1746
      %v1759 = vsel %vm1753, %v1746, %v1748
      %v1760 = vsel %vm1753, %v1748, %v1750
      %v1761 = vsel %vm1753, %v1750, %v1752
      %v1763 = vsel %vm665, %v1734, 0
      %v1766 = vsel %vm669, %v1754, 0
      %v1769 = vsel %vm669, %v1755, 0
      %v1772 = vsel %vm669, %v1756, 0
      %v1775 = vsel %vm669, %v1757, 0
      %v1778 = vsel %vm669, %v1758, 0
      %v1781 = vsel %vm669, %v1759, 0
      %v1784 = vsel %vm669, %v1760, 0
      %v1787 = vsel %vm669, %v1761, 0
      %1789 = vmatprep.subr.bf16.mxu0 %v1769
      %1790 = vmatpush1.bf16.msra.mxu0 %v1766
      %1791 = vmatprep.subr.bf16.mxu0 0
      %1792 = vmatpush1.bf16.msra.mxu0 0
      %1793 = vmatprep.subr.bf16.mxu0 0
      %1794 = vmatpush1.bf16.msra.mxu0 0
      %1795 = vmatprep.subr.bf16.mxu0 0
      %1796 = vmatpush1.bf16.msra.mxu0 0
      %1797 = vmatprep.subr.bf16.mxu0 0
      %1798 = vmatpush1.bf16.msra.mxu0 0
      %1799 = vmatprep.subr.bf16.mxu0 0
      %1800 = vmatpush1.bf16.msra.mxu0 0
      %1801 = vmatprep.subr.bf16.mxu0 0
      %1802 = vmatpush1.bf16.msra.mxu0 0
      %1803 = vmatprep.subr.bf16.mxu0 0
      %1804 = vmatpush1.bf16.msra.mxu0 0
      %1805 = vmatprep.subr.bf16.mxu0 0
      %1806 = vmatpush1.bf16.msra.mxu0 0
      %1807 = vmatprep.subr.bf16.mxu0 0
      %1808 = vmatpush1.bf16.msra.mxu0 0
      %1809 = vmatprep.subr.bf16.mxu0 0
      %1810 = vmatpush1.bf16.msra.mxu0 0
      %1811 = vmatprep.subr.bf16.mxu0 0
      %1812 = vmatpush1.bf16.msra.mxu0 0
      %1813 = vmatprep.subr.bf16.mxu0 0
      %1814 = vmatpush1.bf16.msra.mxu0 0
      %1815 = vmatprep.subr.bf16.mxu0 0
      %1816 = vmatpush1.bf16.msra.mxu0 0
      %1817 = vmatprep.subr.bf16.mxu0 0
      %1818 = vmatpush1.bf16.msra.mxu0 0
      %1819 = vmatprep.subr.bf16.mxu0 0
      %1820 = vmatpush1.bf16.msra.mxu0 0
      %1821 = vmatprep.mubr.bf16.mxu0 0
      %1822 = vmatmul.mubr.bf16.gmra.mrb[0].mxu0 %v1763
      %v1823 = vpop.f32.mrb[0].mxu0
      %v1824 = vadd.f32 0.0, %v1823
      %v1825 = vpop.f32.mrb[0].mxu0
      %v1826 = vadd.f32 0.0, %v1825
      %v1827 = vpop.f32.mrb[0].mxu0
      %v1828 = vpop.f32.mrb[0].mxu0
      %1829 = vdwg.mxu0
      %1830 = vmatprep.subr.bf16.mxu0 %v1775
      %1831 = vmatpush1.bf16.msra.mxu0 %v1772
      %1832 = vmatprep.subr.bf16.mxu0 0
      %1833 = vmatpush1.bf16.msra.mxu0 0
      %1834 = vmatprep.subr.bf16.mxu0 0
      %1835 = vmatpush1.bf16.msra.mxu0 0
      %1836 = vmatprep.subr.bf16.mxu0 0
      %1837 = vmatpush1.bf16.msra.mxu0 0
      %1838 = vmatprep.subr.bf16.mxu0 0
      %1839 = vmatpush1.bf16.msra.mxu0 0
      %1840 = vmatprep.subr.bf16.mxu0 0
      %1841 = vmatpush1.bf16.msra.mxu0 0
      %1842 = vmatprep.subr.bf16.mxu0 0
      %1843 = vmatpush1.bf16.msra.mxu0 0
      %1844 = vmatprep.subr.bf16.mxu0 0
      %1845 = vmatpush1.bf16.msra.mxu0 0
      %1846 = vmatprep.subr.bf16.mxu0 0
      %1847 = vmatpush1.bf16.msra.mxu0 0
      %1848 = vmatprep.subr.bf16.mxu0 0
      %1849 = vmatpush1.bf16.msra.mxu0 0
      %1850 = vmatprep.subr.bf16.mxu0 0
      %1851 = vmatpush1.bf16.msra.mxu0 0
      %1852 = vmatprep.subr.bf16.mxu0 0
      %1853 = vmatpush1.bf16.msra.mxu0 0
      %1854 = vmatprep.subr.bf16.mxu0 0
      %1855 = vmatpush1.bf16.msra.mxu0 0
      %1856 = vmatprep.subr.bf16.mxu0 0
      %1857 = vmatpush1.bf16.msra.mxu0 0
      %1858 = vmatprep.subr.bf16.mxu0 0
      %1859 = vmatpush1.bf16.msra.mxu0 0
      %1860 = vmatprep.subr.bf16.mxu0 0
      %1861 = vmatpush1.bf16.msra.mxu0 0
      %1862 = vmatprep.mubr.bf16.mxu0 0
      %1863 = vmatmul.mubr.bf16.gmra.mrb[0].mxu0 %v1763
      %v1864 = vpop.f32.mrb[0].mxu0
      %v1865 = vadd.f32 0.0, %v1864
      %v1866 = vpop.f32.mrb[0].mxu0
      %v1867 = vadd.f32 0.0, %v1866
      %v1868 = vpop.f32.mrb[0].mxu0
      %v1869 = vpop.f32.mrb[0].mxu0
      %1870 = vdwg.mxu0
      %1871 = vmatprep.subr.bf16.mxu0 %v1781
      %1872 = vmatpush1.bf16.msra.mxu0 %v1778
      %1873 = vmatprep.subr.bf16.mxu0 0
      %1874 = vmatpush1.bf16.msra.mxu0 0
      %1875 = vmatprep.subr.bf16.mxu0 0
      %1876 = vmatpush1.bf16.msra.mxu0 0
      %1877 = vmatprep.subr.bf16.mxu0 0
      %1878 = vmatpush1.bf16.msra.mxu0 0
      %1879 = vmatprep.subr.bf16.mxu0 0
      %1880 = vmatpush1.bf16.msra.mxu0 0
      %1881 = vmatprep.subr.bf16.mxu0 0
      %1882 = vmatpush1.bf16.msra.mxu0 0
      %1883 = vmatprep.subr.bf16.mxu0 0
      %1884 = vmatpush1.bf16.msra.mxu0 0
      %1885 = vmatprep.subr.bf16.mxu0 0
      %1886 = vmatpush1.bf16.msra.mxu0 0
      %1887 = vmatprep.subr.bf16.mxu0 0
      %1888 = vmatpush1.bf16.msra.mxu0 0
      %1889 = vmatprep.subr.bf16.mxu0 0
      %1890 = vmatpush1.bf16.msra.mxu0 0
      %1891 = vmatprep.subr.bf16.mxu0 0
      %1892 = vmatpush1.bf16.msra.mxu0 0
      %1893 = vmatprep.subr.bf16.mxu0 0
      %1894 = vmatpush1.bf16.msra.mxu0 0
      %1895 = vmatprep.subr.bf16.mxu0 0
      %1896 = vmatpush1.bf16.msra.mxu0 0
      %1897 = vmatprep.subr.bf16.mxu0 0
      %1898 = vmatpush1.bf16.msra.mxu0 0
      %1899 = vmatprep.subr.bf16.mxu0 0
      %1900 = vmatpush1.bf16.msra.mxu0 0
      %1901 = vmatprep.subr.bf16.mxu0 0
      %1902 = vmatpush1.bf16.msra.mxu0 0
      %1903 = vmatprep.mubr.bf16.mxu0 0
      %1904 = vmatmul.mubr.bf16.gmra.mrb[0].mxu0 %v1763
      %v1905 = vpop.f32.mrb[0].mxu0
      %v1906 = vadd.f32 0.0, %v1905
      %v1907 = vpop.f32.mrb[0].mxu0
      %v1908 = vadd.f32 0.0, %v1907
      %v1909 = vpop.f32.mrb[0].mxu0
      %v1910 = vpop.f32.mrb[0].mxu0
      %1911 = vdwg.mxu0
      %1912 = vmatprep.subr.bf16.mxu0 %v1787
      %1913 = vmatpush1.bf16.msra.mxu0 %v1784
      %1914 = vmatprep.subr.bf16.mxu0 0
      %1915 = vmatpush1.bf16.msra.mxu0 0
      %1916 = vmatprep.subr.bf16.mxu0 0
      %1917 = vmatpush1.bf16.msra.mxu0 0
      %1918 = vmatprep.subr.bf16.mxu0 0
      %1919 = vmatpush1.bf16.msra.mxu0 0
      %1920 = vmatprep.subr.bf16.mxu0 0
      %1921 = vmatpush1.bf16.msra.mxu0 0
      %1922 = vmatprep.subr.bf16.mxu0 0
      %1923 = vmatpush1.bf16.msra.mxu0 0
      %1924 = vmatprep.subr.bf16.mxu0 0
      %1925 = vmatpush1.bf16.msra.mxu0 0
      %1926 = vmatprep.subr.bf16.mxu0 0
      %1927 = vmatpush1.bf16.msra.mxu0 0
      %1928 = vmatprep.subr.bf16.mxu0 0
      %1929 = vmatpush1.bf16.msra.mxu0 0
      %1930 = vmatprep.subr.bf16.mxu0 0
      %1931 = vmatpush1.bf16.msra.mxu0 0
      %1932 = vmatprep.subr.bf16.mxu0 0
      %1933 = vmatpush1.bf16.msra.mxu0 0
      %1934 = vmatprep.subr.bf16.mxu0 0
      %1935 = vmatpush1.bf16.msra.mxu0 0
      %1936 = vmatprep.subr.bf16.mxu0 0
      %1937 = vmatpush1.bf16.msra.mxu0 0
      %1938 = vmatprep.subr.bf16.mxu0 0
      %1939 = vmatpush1.bf16.msra.mxu0 0
      %1940 = vmatprep.subr.bf16.mxu0 0
      %1941 = vmatpush1.bf16.msra.mxu0 0
      %1942 = vmatprep.subr.bf16.mxu0 0
      %1943 = vmatpush1.bf16.msra.mxu0 0
      %1944 = vmatprep.mubr.bf16.mxu0 0
      %1945 = vmatmul.mubr.bf16.gmra.mrb[0].mxu0 %v1763
      %v1946 = vpop.f32.mrb[0].mxu0
      %v1947 = vadd.f32 0.0, %v1946
      %v1948 = vpop.f32.mrb[0].mxu0
      %v1949 = vadd.f32 0.0, %v1948
      %v1950 = vpop.f32.mrb[0].mxu0
      %v1951 = vpop.f32.mrb[0].mxu0
      %1952 = vdwg.mxu0
      %v1953 = vadd.f32 %v1725, %v1824
      %v1954 = vadd.f32 %v1726, %v1826
      %v1955 = vadd.f32 %v1727, %v1865
      %v1956 = vadd.f32 %v1728, %v1867
      %v1957 = vadd.f32 %v1729, %v1906
      %v1958 = vadd.f32 %v1730, %v1908
      %v1959 = vadd.f32 %v1731, %v1947
      %v1960 = vadd.f32 %v1732, %v1949
      %s1961 = scalar_lea.vmem %s0, 24
      %v1962 = vld [vmem:[%s1961] sm:$0xf]
      %v1963 = vld [vmem:[#allocation2 + $0x4] sm:$0xff]
      %v1964 = vld [vmem:[#allocation2 + $0xc] sm:$0xff]
      %v1965 = vld [vmem:[#allocation2 + $0x14] sm:$0xff]
      %v1966 = vld [vmem:[#allocation2 + $0x1c] sm:$0xff]
      %v1967 = vld [vmem:[#allocation2 + $0x24] sm:$0xf]
      %v1973 = vunpack.c.l.b16 %v1963
      %v1974 = vunpack.c.h.b16 %v1963
      %v1975 = vunpack.c.l.b16 %v1964
      %v1976 = vunpack.c.h.b16 %v1964
      %v1977 = vunpack.c.l.b16 %v1965
      %v1978 = vunpack.c.h.b16 %v1965
      %v1979 = vunpack.c.l.b16 %v1966
      %v1980 = vunpack.c.h.b16 %v1966
      %v1981 = vunpack.c.l.b16 %v1967
      %v1982 = vpack.c.b16 %v1973, %v1973
      %v1983 = vpack.c.b16 %v1974, %v1974
      %v1984 = vpack.c.b16 %v1975, %v1975
      %v1985 = vpack.c.b16 %v1976, %v1976
      %v1986 = vpack.c.b16 %v1977, %v1977
      %v1987 = vpack.c.b16 %v1978, %v1978
      %v1988 = vpack.c.b16 %v1979, %v1979
      %v1989 = vpack.c.b16 %v1980, %v1980
      %v1990 = vpack.c.b16 %v1981, %v1981
      %1991 = vrot.lane.b32.xlu0 %v1982, 56
      %v1992 = vpop.permute.xlu0 %1991
      %1993 = vrot.lane.b32.xlu0 %v1983, 56
      %v1994 = vpop.permute.xlu0 %1993
      %1995 = vrot.lane.b32.xlu0 %v1984, 56
      %v1996 = vpop.permute.xlu0 %1995
      %1997 = vrot.lane.b32.xlu0 %v1985, 56
      %v1998 = vpop.permute.xlu0 %1997
      %1999 = vrot.lane.b32.xlu0 %v1986, 56
      %v2000 = vpop.permute.xlu0 %1999
      %2001 = vrot.lane.b32.xlu0 %v1987, 56
      %v2002 = vpop.permute.xlu0 %2001
      %2003 = vrot.lane.b32.xlu0 %v1988, 56
      %v2004 = vpop.permute.xlu0 %2003
      %2005 = vrot.lane.b32.xlu0 %v1989, 56
      %v2006 = vpop.permute.xlu0 %2005
      %2007 = vrot.lane.b32.xlu0 %v1990, 56
      %v2008 = vpop.permute.xlu0 %2007
      %vm2009 = vcmask 457728
      %v2010 = vsel %vm2009, %v1992, %v1994
      %v2011 = vsel %vm2009, %v1994, %v1996
      %v2012 = vsel %vm2009, %v1996, %v1998
      %v2013 = vsel %vm2009, %v1998, %v2000
      %v2014 = vsel %vm2009, %v2000, %v2002
      %v2015 = vsel %vm2009, %v2002, %v2004
      %v2016 = vsel %vm2009, %v2004, %v2006
      %v2017 = vsel %vm2009, %v2006, %v2008
      %v2019 = vsel %vm665, %v1962, 0
      %v2022 = vsel %vm669, %v2010, 0
      %v2025 = vsel %vm669, %v2011, 0
      %v2028 = vsel %vm669, %v2012, 0
      %v2031 = vsel %vm669, %v2013, 0
      %v2034 = vsel %vm669, %v2014, 0
      %v2037 = vsel %vm669, %v2015, 0
      %v2040 = vsel %vm669, %v2016, 0
      %v2043 = vsel %vm669, %v2017, 0
      %2045 = vmatprep.subr.bf16.mxu0 %v2025
      %2046 = vmatpush1.bf16.msra.mxu0 %v2022
      %2047 = vmatprep.subr.bf16.mxu0 0
      %2048 = vmatpush1.bf16.msra.mxu0 0
      %2049 = vmatprep.subr.bf16.mxu0 0
      %2050 = vmatpush1.bf16.msra.mxu0 0
      %2051 = vmatprep.subr.bf16.mxu0 0
      %2052 = vmatpush1.bf16.msra.mxu0 0
      %2053 = vmatprep.subr.bf16.mxu0 0
      %2054 = vmatpush1.bf16.msra.mxu0 0
      %2055 = vmatprep.subr.bf16.mxu0 0
      %2056 = vmatpush1.bf16.msra.mxu0 0
      %2057 = vmatprep.subr.bf16.mxu0 0
      %2058 = vmatpush1.bf16.msra.mxu0 0
      %2059 = vmatprep.subr.bf16.mxu0 0
      %2060 = vmatpush1.bf16.msra.mxu0 0
      %2061 = vmatprep.subr.bf16.mxu0 0
      %2062 = vmatpush1.bf16.msra.mxu0 0
      %2063 = vmatprep.subr.bf16.mxu0 0
      %2064 = vmatpush1.bf16.msra.mxu0 0
      %2065 = vmatprep.subr.bf16.mxu0 0
      %2066 = vmatpush1.bf16.msra.mxu0 0
      %2067 = vmatprep.subr.bf16.mxu0 0
      %2068 = vmatpush1.bf16.msra.mxu0 0
      %2069 = vmatprep.subr.bf16.mxu0 0
      %2070 = vmatpush1.bf16.msra.mxu0 0
      %2071 = vmatprep.subr.bf16.mxu0 0
      %2072 = vmatpush1.bf16.msra.mxu0 0
      %2073 = vmatprep.subr.bf16.mxu0 0
      %2074 = vmatpush1.bf16.msra.mxu0 0
      %2075 = vmatprep.subr.bf16.mxu0 0
      %2076 = vmatpush1.bf16.msra.mxu0 0
      %2077 = vmatprep.mubr.bf16.mxu0 0
      %2078 = vmatmul.mubr.bf16.gmra.mrb[0].mxu0 %v2019
      %v2079 = vpop.f32.mrb[0].mxu0
      %v2080 = vadd.f32 0.0, %v2079
      %v2081 = vpop.f32.mrb[0].mxu0
      %v2082 = vadd.f32 0.0, %v2081
      %v2083 = vpop.f32.mrb[0].mxu0
      %v2084 = vpop.f32.mrb[0].mxu0
      %2085 = vdwg.mxu0
      %2086 = vmatprep.subr.bf16.mxu0 %v2031
      %2087 = vmatpush1.bf16.msra.mxu0 %v2028
      %2088 = vmatprep.subr.bf16.mxu0 0
      %2089 = vmatpush1.bf16.msra.mxu0 0
      %2090 = vmatprep.subr.bf16.mxu0 0
      %2091 = vmatpush1.bf16.msra.mxu0 0
      %2092 = vmatprep.subr.bf16.mxu0 0
      %2093 = vmatpush1.bf16.msra.mxu0 0
      %2094 = vmatprep.subr.bf16.mxu0 0
      %2095 = vmatpush1.bf16.msra.mxu0 0
      %2096 = vmatprep.subr.bf16.mxu0 0
      %2097 = vmatpush1.bf16.msra.mxu0 0
      %2098 = vmatprep.subr.bf16.mxu0 0
      %2099 = vmatpush1.bf16.msra.mxu0 0
      %2100 = vmatprep.subr.bf16.mxu0 0
      %2101 = vmatpush1.bf16.msra.mxu0 0
      %2102 = vmatprep.subr.bf16.mxu0 0
      %2103 = vmatpush1.bf16.msra.mxu0 0
      %2104 = vmatprep.subr.bf16.mxu0 0
      %2105 = vmatpush1.bf16.msra.mxu0 0
      %2106 = vmatprep.subr.bf16.mxu0 0
      %2107 = vmatpush1.bf16.msra.mxu0 0
      %2108 = vmatprep.subr.bf16.mxu0 0
      %2109 = vmatpush1.bf16.msra.mxu0 0
      %2110 = vmatprep.subr.bf16.mxu0 0
      %2111 = vmatpush1.bf16.msra.mxu0 0
      %2112 = vmatprep.subr.bf16.mxu0 0
      %2113 = vmatpush1.bf16.msra.mxu0 0
      %2114 = vmatprep.subr.bf16.mxu0 0
      %2115 = vmatpush1.bf16.msra.mxu0 0
      %2116 = vmatprep.subr.bf16.mxu0 0
      %2117 = vmatpush1.bf16.msra.mxu0 0
      %2118 = vmatprep.mubr.bf16.mxu0 0
      %2119 = vmatmul.mubr.bf16.gmra.mrb[0].mxu0 %v2019
      %v2120 = vpop.f32.mrb[0].mxu0
      %v2121 = vadd.f32 0.0, %v2120
      %v2122 = vpop.f32.mrb[0].mxu0
      %v2123 = vadd.f32 0.0, %v2122
      %v2124 = vpop.f32.mrb[0].mxu0
      %v2125 = vpop.f32.mrb[0].mxu0
      %2126 = vdwg.mxu0
      %2127 = vmatprep.subr.bf16.mxu0 %v2037
      %2128 = vmatpush1.bf16.msra.mxu0 %v2034
      %2129 = vmatprep.subr.bf16.mxu0 0
      %2130 = vmatpush1.bf16.msra.mxu0 0
      %2131 = vmatprep.subr.bf16.mxu0 0
      %2132 = vmatpush1.bf16.msra.mxu0 0
      %2133 = vmatprep.subr.bf16.mxu0 0
      %2134 = vmatpush1.bf16.msra.mxu0 0
      %2135 = vmatprep.subr.bf16.mxu0 0
      %2136 = vmatpush1.bf16.msra.mxu0 0
      %2137 = vmatprep.subr.bf16.mxu0 0
      %2138 = vmatpush1.bf16.msra.mxu0 0
      %2139 = vmatprep.subr.bf16.mxu0 0
      %2140 = vmatpush1.bf16.msra.mxu0 0
      %2141 = vmatprep.subr.bf16.mxu0 0
      %2142 = vmatpush1.bf16.msra.mxu0 0
      %2143 = vmatprep.subr.bf16.mxu0 0
      %2144 = vmatpush1.bf16.msra.mxu0 0
      %2145 = vmatprep.subr.bf16.mxu0 0
      %2146 = vmatpush1.bf16.msra.mxu0 0
      %2147 = vmatprep.subr.bf16.mxu0 0
      %2148 = vmatpush1.bf16.msra.mxu0 0
      %2149 = vmatprep.subr.bf16.mxu0 0
      %2150 = vmatpush1.bf16.msra.mxu0 0
      %2151 = vmatprep.subr.bf16.mxu0 0
      %2152 = vmatpush1.bf16.msra.mxu0 0
      %2153 = vmatprep.subr.bf16.mxu0 0
      %2154 = vmatpush1.bf16.msra.mxu0 0
      %2155 = vmatprep.subr.bf16.mxu0 0
      %2156 = vmatpush1.bf16.msra.mxu0 0
      %2157 = vmatprep.subr.bf16.mxu0 0
      %2158 = vmatpush1.bf16.msra.mxu0 0
      %2159 = vmatprep.mubr.bf16.mxu0 0
      %2160 = vmatmul.mubr.bf16.gmra.mrb[0].mxu0 %v2019
      %v2161 = vpop.f32.mrb[0].mxu0
      %v2162 = vadd.f32 0.0, %v2161
      %v2163 = vpop.f32.mrb[0].mxu0
      %v2164 = vadd.f32 0.0, %v2163
      %v2165 = vpop.f32.mrb[0].mxu0
      %v2166 = vpop.f32.mrb[0].mxu0
      %2167 = vdwg.mxu0
      %2168 = vmatprep.subr.bf16.mxu0 %v2043
      %2169 = vmatpush1.bf16.msra.mxu0 %v2040
      %2170 = vmatprep.subr.bf16.mxu0 0
      %2171 = vmatpush1.bf16.msra.mxu0 0
      %2172 = vmatprep.subr.bf16.mxu0 0
      %2173 = vmatpush1.bf16.msra.mxu0 0
      %2174 = vmatprep.subr.bf16.mxu0 0
      %2175 = vmatpush1.bf16.msra.mxu0 0
      %2176 = vmatprep.subr.bf16.mxu0 0
      %2177 = vmatpush1.bf16.msra.mxu0 0
      %2178 = vmatprep.subr.bf16.mxu0 0
      %2179 = vmatpush1.bf16.msra.mxu0 0
      %2180 = vmatprep.subr.bf16.mxu0 0
      %2181 = vmatpush1.bf16.msra.mxu0 0
      %2182 = vmatprep.subr.bf16.mxu0 0
      %2183 = vmatpush1.bf16.msra.mxu0 0
      %2184 = vmatprep.subr.bf16.mxu0 0
      %2185 = vmatpush1.bf16.msra.mxu0 0
      %2186 = vmatprep.subr.bf16.mxu0 0
      %2187 = vmatpush1.bf16.msra.mxu0 0
      %2188 = vmatprep.subr.bf16.mxu0 0
      %2189 = vmatpush1.bf16.msra.mxu0 0
      %2190 = vmatprep.subr.bf16.mxu0 0
      %2191 = vmatpush1.bf16.msra.mxu0 0
      %2192 = vmatprep.subr.bf16.mxu0 0
      %2193 = vmatpush1.bf16.msra.mxu0 0
      %2194 = vmatprep.subr.bf16.mxu0 0
      %2195 = vmatpush1.bf16.msra.mxu0 0
      %2196 = vmatprep.subr.bf16.mxu0 0
      %2197 = vmatpush1.bf16.msra.mxu0 0
      %2198 = vmatprep.subr.bf16.mxu0 0
      %2199 = vmatpush1.bf16.msra.mxu0 0
      %2200 = vmatprep.mubr.bf16.mxu0 0
      %2201 = vmatmul.mubr.bf16.gmra.mrb[0].mxu0 %v2019
      %v2202 = vpop.f32.mrb[0].mxu0
      %v2203 = vadd.f32 0.0, %v2202
      %v2204 = vpop.f32.mrb[0].mxu0
      %v2205 = vadd.f32 0.0, %v2204
      %v2206 = vpop.f32.mrb[0].mxu0
      %v2207 = vpop.f32.mrb[0].mxu0
      %2208 = vdwg.mxu0
      %v2209 = vadd.f32 %v1953, %v2080
      %v2210 = vadd.f32 %v1954, %v2082
      %v2211 = vadd.f32 %v1955, %v2121
      %v2212 = vadd.f32 %v1956, %v2123
      %v2213 = vadd.f32 %v1957, %v2162
      %v2214 = vadd.f32 %v1958, %v2164
      %v2215 = vadd.f32 %v1959, %v2203
      %v2216 = vadd.f32 %v1960, %v2205
      %s2217 = scalar_lea.vmem %s0, 28
      %v2218 = vld [vmem:[%s2217] sm:$0xf]
      %2219 = vrot.lane.b32.xlu0 %v1982, 55
      %v2220 = vpop.permute.xlu0 %2219
      %2221 = vrot.lane.b32.xlu0 %v1983, 55
      %v2222 = vpop.permute.xlu0 %2221
      %2223 = vrot.lane.b32.xlu0 %v1984, 55
      %v2224 = vpop.permute.xlu0 %2223
      %2225 = vrot.lane.b32.xlu0 %v1985, 55
      %v2226 = vpop.permute.xlu0 %2225
      %2227 = vrot.lane.b32.xlu0 %v1986, 55
      %v2228 = vpop.permute.xlu0 %2227
      %2229 = vrot.lane.b32.xlu0 %v1987, 55
      %v2230 = vpop.permute.xlu0 %2229
      %2231 = vrot.lane.b32.xlu0 %v1988, 55
      %v2232 = vpop.permute.xlu0 %2231
      %2233 = vrot.lane.b32.xlu0 %v1989, 55
      %v2234 = vpop.permute.xlu0 %2233
      %2235 = vrot.lane.b32.xlu0 %v1990, 55
      %v2236 = vpop.permute.xlu0 %2235
      %vm2237 = vcmask 449536
      %v2238 = vsel %vm2237, %v2220, %v2222
      %v2239 = vsel %vm2237, %v2222, %v2224
      %v2240 = vsel %vm2237, %v2224, %v2226
      %v2241 = vsel %vm2237, %v2226, %v2228
      %v2242 = vsel %vm2237, %v2228, %v2230
      %v2243 = vsel %vm2237, %v2230, %v2232
      %v2244 = vsel %vm2237, %v2232, %v2234
      %v2245 = vsel %vm2237, %v2234, %v2236
      %v2247 = vsel %vm665, %v2218, 0
      %v2250 = vsel %vm669, %v2238, 0
      %v2253 = vsel %vm669, %v2239, 0
      %v2256 = vsel %vm669, %v2240, 0
      %v2259 = vsel %vm669, %v2241, 0
      %v2262 = vsel %vm669, %v2242, 0
      %v2265 = vsel %vm669, %v2243, 0
      %v2268 = vsel %vm669, %v2244, 0
      %v2271 = vsel %vm669, %v2245, 0
      %2273 = vmatprep.subr.bf16.mxu0 %v2253
      %2274 = vmatpush1.bf16.msra.mxu0 %v2250
      %2275 = vmatprep.subr.bf16.mxu0 0
      %2276 = vmatpush1.bf16.msra.mxu0 0
      %2277 = vmatprep.subr.bf16.mxu0 0
      %2278 = vmatpush1.bf16.msra.mxu0 0
      %2279 = vmatprep.subr.bf16.mxu0 0
      %2280 = vmatpush1.bf16.msra.mxu0 0
      %2281 = vmatprep.subr.bf16.mxu0 0
      %2282 = vmatpush1.bf16.msra.mxu0 0
      %2283 = vmatprep.subr.bf16.mxu0 0
      %2284 = vmatpush1.bf16.msra.mxu0 0
      %2285 = vmatprep.subr.bf16.mxu0 0
      %2286 = vmatpush1.bf16.msra.mxu0 0
      %2287 = vmatprep.subr.bf16.mxu0 0
      %2288 = vmatpush1.bf16.msra.mxu0 0
      %2289 = vmatprep.subr.bf16.mxu0 0
      %2290 = vmatpush1.bf16.msra.mxu0 0
      %2291 = vmatprep.subr.bf16.mxu0 0
      %2292 = vmatpush1.bf16.msra.mxu0 0
      %2293 = vmatprep.subr.bf16.mxu0 0
      %2294 = vmatpush1.bf16.msra.mxu0 0
      %2295 = vmatprep.subr.bf16.mxu0 0
      %2296 = vmatpush1.bf16.msra.mxu0 0
      %2297 = vmatprep.subr.bf16.mxu0 0
      %2298 = vmatpush1.bf16.msra.mxu0 0
      %2299 = vmatprep.subr.bf16.mxu0 0
      %2300 = vmatpush1.bf16.msra.mxu0 0
      %2301 = vmatprep.subr.bf16.mxu0 0
      %2302 = vmatpush1.bf16.msra.mxu0 0
      %2303 = vmatprep.subr.bf16.mxu0 0
      %2304 = vmatpush1.bf16.msra.mxu0 0
      %2305 = vmatprep.mubr.bf16.mxu0 0
      %2306 = vmatmul.mubr.bf16.gmra.mrb[0].mxu0 %v2247
      %v2307 = vpop.f32.mrb[0].mxu0
      %v2308 = vadd.f32 0.0, %v2307
      %v2309 = vpop.f32.mrb[0].mxu0
      %v2310 = vadd.f32 0.0, %v2309
      %v2311 = vpop.f32.mrb[0].mxu0
      %v2312 = vpop.f32.mrb[0].mxu0
      %2313 = vdwg.mxu0
      %2314 = vmatprep.subr.bf16.mxu0 %v2259
      %2315 = vmatpush1.bf16.msra.mxu0 %v2256
      %2316 = vmatprep.subr.bf16.mxu0 0
      %2317 = vmatpush1.bf16.msra.mxu0 0
      %2318 = vmatprep.subr.bf16.mxu0 0
      %2319 = vmatpush1.bf16.msra.mxu0 0
      %2320 = vmatprep.subr.bf16.mxu0 0
      %2321 = vmatpush1.bf16.msra.mxu0 0
      %2322 = vmatprep.subr.bf16.mxu0 0
      %2323 = vmatpush1.bf16.msra.mxu0 0
      %2324 = vmatprep.subr.bf16.mxu0 0
      %2325 = vmatpush1.bf16.msra.mxu0 0
      %2326 = vmatprep.subr.bf16.mxu0 0
      %2327 = vmatpush1.bf16.msra.mxu0 0
      %2328 = vmatprep.subr.bf16.mxu0 0
      %2329 = vmatpush1.bf16.msra.mxu0 0
      %2330 = vmatprep.subr.bf16.mxu0 0
      %2331 = vmatpush1.bf16.msra.mxu0 0
      %2332 = vmatprep.subr.bf16.mxu0 0
      %2333 = vmatpush1.bf16.msra.mxu0 0
      %2334 = vmatprep.subr.bf16.mxu0 0
      %2335 = vmatpush1.bf16.msra.mxu0 0
      %2336 = vmatprep.subr.bf16.mxu0 0
      %2337 = vmatpush1.bf16.msra.mxu0 0
      %2338 = vmatprep.subr.bf16.mxu0 0
      %2339 = vmatpush1.bf16.msra.mxu0 0
      %2340 = vmatprep.subr.bf16.mxu0 0
      %2341 = vmatpush1.bf16.msra.mxu0 0
      %2342 = vmatprep.subr.bf16.mxu0 0
      %2343 = vmatpush1.bf16.msra.mxu0 0
      %2344 = vmatprep.subr.bf16.mxu0 0
      %2345 = vmatpush1.bf16.msra.mxu0 0
      %2346 = vmatprep.mubr.bf16.mxu0 0
      %2347 = vmatmul.mubr.bf16.gmra.mrb[0].mxu0 %v2247
      %v2348 = vpop.f32.mrb[0].mxu0
      %v2349 = vadd.f32 0.0, %v2348
      %v2350 = vpop.f32.mrb[0].mxu0
      %v2351 = vadd.f32 0.0, %v2350
      %v2352 = vpop.f32.mrb[0].mxu0
      %v2353 = vpop.f32.mrb[0].mxu0
      %2354 = vdwg.mxu0
      %2355 = vmatprep.subr.bf16.mxu0 %v2265
      %2356 = vmatpush1.bf16.msra.mxu0 %v2262
      %2357 = vmatprep.subr.bf16.mxu0 0
      %2358 = vmatpush1.bf16.msra.mxu0 0
      %2359 = vmatprep.subr.bf16.mxu0 0
      %2360 = vmatpush1.bf16.msra.mxu0 0
      %2361 = vmatprep.subr.bf16.mxu0 0
      %2362 = vmatpush1.bf16.msra.mxu0 0
      %2363 = vmatprep.subr.bf16.mxu0 0
      %2364 = vmatpush1.bf16.msra.mxu0 0
      %2365 = vmatprep.subr.bf16.mxu0 0
      %2366 = vmatpush1.bf16.msra.mxu0 0
      %2367 = vmatprep.subr.bf16.mxu0 0
      %2368 = vmatpush1.bf16.msra.mxu0 0
      %2369 = vmatprep.subr.bf16.mxu0 0
      %2370 = vmatpush1.bf16.msra.mxu0 0
      %2371 = vmatprep.subr.bf16.mxu0 0
      %2372 = vmatpush1.bf16.msra.mxu0 0
      %2373 = vmatprep.subr.bf16.mxu0 0
      %2374 = vmatpush1.bf16.msra.mxu0 0
      %2375 = vmatprep.subr.bf16.mxu0 0
      %2376 = vmatpush1.bf16.msra.mxu0 0
      %2377 = vmatprep.subr.bf16.mxu0 0
      %2378 = vmatpush1.bf16.msra.mxu0 0
      %2379 = vmatprep.subr.bf16.mxu0 0
      %2380 = vmatpush1.bf16.msra.mxu0 0
      %2381 = vmatprep.subr.bf16.mxu0 0
      %2382 = vmatpush1.bf16.msra.mxu0 0
      %2383 = vmatprep.subr.bf16.mxu0 0
      %2384 = vmatpush1.bf16.msra.mxu0 0
      %2385 = vmatprep.subr.bf16.mxu0 0
      %2386 = vmatpush1.bf16.msra.mxu0 0
      %2387 = vmatprep.mubr.bf16.mxu0 0
      %2388 = vmatmul.mubr.bf16.gmra.mrb[0].mxu0 %v2247
      %v2389 = vpop.f32.mrb[0].mxu0
      %v2390 = vadd.f32 0.0, %v2389
      %v2391 = vpop.f32.mrb[0].mxu0
      %v2392 = vadd.f32 0.0, %v2391
      %v2393 = vpop.f32.mrb[0].mxu0
      %v2394 = vpop.f32.mrb[0].mxu0
      %2395 = vdwg.mxu0
      %2396 = vmatprep.subr.bf16.mxu0 %v2271
      %2397 = vmatpush1.bf16.msra.mxu0 %v2268
      %2398 = vmatprep.subr.bf16.mxu0 0
      %2399 = vmatpush1.bf16.msra.mxu0 0
      %2400 = vmatprep.subr.bf16.mxu0 0
      %2401 = vmatpush1.bf16.msra.mxu0 0
      %2402 = vmatprep.subr.bf16.mxu0 0
      %2403 = vmatpush1.bf16.msra.mxu0 0
      %2404 = vmatprep.subr.bf16.mxu0 0
      %2405 = vmatpush1.bf16.msra.mxu0 0
      %2406 = vmatprep.subr.bf16.mxu0 0
      %2407 = vmatpush1.bf16.msra.mxu0 0
      %2408 = vmatprep.subr.bf16.mxu0 0
      %2409 = vmatpush1.bf16.msra.mxu0 0
      %2410 = vmatprep.subr.bf16.mxu0 0
      %2411 = vmatpush1.bf16.msra.mxu0 0
      %2412 = vmatprep.subr.bf16.mxu0 0
      %2413 = vmatpush1.bf16.msra.mxu0 0
      %2414 = vmatprep.subr.bf16.mxu0 0
      %2415 = vmatpush1.bf16.msra.mxu0 0
      %2416 = vmatprep.subr.bf16.mxu0 0
      %2417 = vmatpush1.bf16.msra.mxu0 0
      %2418 = vmatprep.subr.bf16.mxu0 0
      %2419 = vmatpush1.bf16.msra.mxu0 0
      %2420 = vmatprep.subr.bf16.mxu0 0
      %2421 = vmatpush1.bf16.msra.mxu0 0
      %2422 = vmatprep.subr.bf16.mxu0 0
      %2423 = vmatpush1.bf16.msra.mxu0 0
      %2424 = vmatprep.subr.bf16.mxu0 0
      %2425 = vmatpush1.bf16.msra.mxu0 0
      %2426 = vmatprep.subr.bf16.mxu0 0
      %2427 = vmatpush1.bf16.msra.mxu0 0
      %2428 = vmatprep.mubr.bf16.mxu0 0
      %2429 = vmatmul.mubr.bf16.gmra.mrb[0].mxu0 %v2247
      %v2430 = vpop.f32.mrb[0].mxu0
      %v2431 = vadd.f32 0.0, %v2430
      %v2432 = vpop.f32.mrb[0].mxu0
      %v2433 = vadd.f32 0.0, %v2432
      %v2434 = vpop.f32.mrb[0].mxu0
      %v2435 = vpop.f32.mrb[0].mxu0
      %2436 = vdwg.mxu0
      %v2437 = vadd.f32 %v2209, %v2308
      %v2438 = vadd.f32 %v2210, %v2310
      %v2439 = vadd.f32 %v2211, %v2349
      %v2440 = vadd.f32 %v2212, %v2351
      %v2441 = vadd.f32 %v2213, %v2390
      %v2442 = vadd.f32 %v2214, %v2392
      %v2443 = vadd.f32 %v2215, %v2431
      %v2444 = vadd.f32 %v2216, %v2433
      %s2445 = scalar_lea.vmem %s0, 32
      %v2446 = vld [vmem:[%s2445] sm:$0xf]
      %2447 = vrot.lane.b32.xlu0 %v1982, 54
      %v2448 = vpop.permute.xlu0 %2447
      %2449 = vrot.lane.b32.xlu0 %v1983, 54
      %v2450 = vpop.permute.xlu0 %2449
      %2451 = vrot.lane.b32.xlu0 %v1984, 54
      %v2452 = vpop.permute.xlu0 %2451
      %2453 = vrot.lane.b32.xlu0 %v1985, 54
      %v2454 = vpop.permute.xlu0 %2453
      %2455 = vrot.lane.b32.xlu0 %v1986, 54
      %v2456 = vpop.permute.xlu0 %2455
      %2457 = vrot.lane.b32.xlu0 %v1987, 54
      %v2458 = vpop.permute.xlu0 %2457
      %2459 = vrot.lane.b32.xlu0 %v1988, 54
      %v2460 = vpop.permute.xlu0 %2459
      %2461 = vrot.lane.b32.xlu0 %v1989, 54
      %v2462 = vpop.permute.xlu0 %2461
      %2463 = vrot.lane.b32.xlu0 %v1990, 54
      %v2464 = vpop.permute.xlu0 %2463
      %vm2465 = vcmask 441344
      %v2466 = vsel %vm2465, %v2448, %v2450
      %v2467 = vsel %vm2465, %v2450, %v2452
      %v2468 = vsel %vm2465, %v2452, %v2454
      %v2469 = vsel %vm2465, %v2454, %v2456
      %v2470 = vsel %vm2465, %v2456, %v2458
      %v2471 = vsel %vm2465, %v2458, %v2460
      %v2472 = vsel %vm2465, %v2460, %v2462
      %v2473 = vsel %vm2465, %v2462, %v2464
      %v2475 = vsel %vm665, %v2446, 0
      %v2478 = vsel %vm669, %v2466, 0
      %v2481 = vsel %vm669, %v2467, 0
      %v2484 = vsel %vm669, %v2468, 0
      %v2487 = vsel %vm669, %v2469, 0
      %v2490 = vsel %vm669, %v2470, 0
      %v2493 = vsel %vm669, %v2471, 0
      %v2496 = vsel %vm669, %v2472, 0
      %v2499 = vsel %vm669, %v2473, 0
      %2501 = vmatprep.subr.bf16.mxu0 %v2481
      %2502 = vmatpush1.bf16.msra.mxu0 %v2478
      %2503 = vmatprep.subr.bf16.mxu0 0
      %2504 = vmatpush1.bf16.msra.mxu0 0
      %2505 = vmatprep.subr.bf16.mxu0 0
      %2506 = vmatpush1.bf16.msra.mxu0 0
      %2507 = vmatprep.subr.bf16.mxu0 0
      %2508 = vmatpush1.bf16.msra.mxu0 0
      %2509 = vmatprep.subr.bf16.mxu0 0
      %2510 = vmatpush1.bf16.msra.mxu0 0
      %2511 = vmatprep.subr.bf16.mxu0 0
      %2512 = vmatpush1.bf16.msra.mxu0 0
      %2513 = vmatprep.subr.bf16.mxu0 0
      %2514 = vmatpush1.bf16.msra.mxu0 0
      %2515 = vmatprep.subr.bf16.mxu0 0
      %2516 = vmatpush1.bf16.msra.mxu0 0
      %2517 = vmatprep.subr.bf16.mxu0 0
      %2518 = vmatpush1.bf16.msra.mxu0 0
      %2519 = vmatprep.subr.bf16.mxu0 0
      %2520 = vmatpush1.bf16.msra.mxu0 0
      %2521 = vmatprep.subr.bf16.mxu0 0
      %2522 = vmatpush1.bf16.msra.mxu0 0
      %2523 = vmatprep.subr.bf16.mxu0 0
      %2524 = vmatpush1.bf16.msra.mxu0 0
      %2525 = vmatprep.subr.bf16.mxu0 0
      %2526 = vmatpush1.bf16.msra.mxu0 0
      %2527 = vmatprep.subr.bf16.mxu0 0
      %2528 = vmatpush1.bf16.msra.mxu0 0
      %2529 = vmatprep.subr.bf16.mxu0 0
      %2530 = vmatpush1.bf16.msra.mxu0 0
      %2531 = vmatprep.subr.bf16.mxu0 0
      %2532 = vmatpush1.bf16.msra.mxu0 0
      %2533 = vmatprep.mubr.bf16.mxu0 0
      %2534 = vmatmul.mubr.bf16.gmra.mrb[0].mxu0 %v2475
      %v2535 = vpop.f32.mrb[0].mxu0
      %v2536 = vadd.f32 0.0, %v2535
      %v2537 = vpop.f32.mrb[0].mxu0
      %v2538 = vadd.f32 0.0, %v2537
      %v2539 = vpop.f32.mrb[0].mxu0
      %v2540 = vpop.f32.mrb[0].mxu0
      %2541 = vdwg.mxu0
      %2542 = vmatprep.subr.bf16.mxu0 %v2487
      %2543 = vmatpush1.bf16.msra.mxu0 %v2484
      %2544 = vmatprep.subr.bf16.mxu0 0
      %2545 = vmatpush1.bf16.msra.mxu0 0
      %2546 = vmatprep.subr.bf16.mxu0 0
      %2547 = vmatpush1.bf16.msra.mxu0 0
      %2548 = vmatprep.subr.bf16.mxu0 0
      %2549 = vmatpush1.bf16.msra.mxu0 0
      %2550 = vmatprep.subr.bf16.mxu0 0
      %2551 = vmatpush1.bf16.msra.mxu0 0
      %2552 = vmatprep.subr.bf16.mxu0 0
      %2553 = vmatpush1.bf16.msra.mxu0 0
      %2554 = vmatprep.subr.bf16.mxu0 0
      %2555 = vmatpush1.bf16.msra.mxu0 0
      %2556 = vmatprep.subr.bf16.mxu0 0
      %2557 = vmatpush1.bf16.msra.mxu0 0
      %2558 = vmatprep.subr.bf16.mxu0 0
      %2559 = vmatpush1.bf16.msra.mxu0 0
      %2560 = vmatprep.subr.bf16.mxu0 0
      %2561 = vmatpush1.bf16.msra.mxu0 0
      %2562 = vmatprep.subr.bf16.mxu0 0
      %2563 = vmatpush1.bf16.msra.mxu0 0
      %2564 = vmatprep.subr.bf16.mxu0 0
      %2565 = vmatpush1.bf16.msra.mxu0 0
      %2566 = vmatprep.subr.bf16.mxu0 0
      %2567 = vmatpush1.bf16.msra.mxu0 0
      %2568 = vmatprep.subr.bf16.mxu0 0
      %2569 = vmatpush1.bf16.msra.mxu0 0
      %2570 = vmatprep.subr.bf16.mxu0 0
      %2571 = vmatpush1.bf16.msra.mxu0 0
      %2572 = vmatprep.subr.bf16.mxu0 0
      %2573 = vmatpush1.bf16.msra.mxu0 0
      %2574 = vmatprep.mubr.bf16.mxu0 0
      %2575 = vmatmul.mubr.bf16.gmra.mrb[0].mxu0 %v2475
      %v2576 = vpop.f32.mrb[0].mxu0
      %v2577 = vadd.f32 0.0, %v2576
      %v2578 = vpop.f32.mrb[0].mxu0
      %v2579 = vadd.f32 0.0, %v2578
      %v2580 = vpop.f32.mrb[0].mxu0
      %v2581 = vpop.f32.mrb[0].mxu0
      %2582 = vdwg.mxu0
      %2583 = vmatprep.subr.bf16.mxu0 %v2493
      %2584 = vmatpush1.bf16.msra.mxu0 %v2490
      %2585 = vmatprep.subr.bf16.mxu0 0
      %2586 = vmatpush1.bf16.msra.mxu0 0
      %2587 = vmatprep.subr.bf16.mxu0 0
      %2588 = vmatpush1.bf16.msra.mxu0 0
      %2589 = vmatprep.subr.bf16.mxu0 0
      %2590 = vmatpush1.bf16.msra.mxu0 0
      %2591 = vmatprep.subr.bf16.mxu0 0
      %2592 = vmatpush1.bf16.msra.mxu0 0
      %2593 = vmatprep.subr.bf16.mxu0 0
      %2594 = vmatpush1.bf16.msra.mxu0 0
      %2595 = vmatprep.subr.bf16.mxu0 0
      %2596 = vmatpush1.bf16.msra.mxu0 0
      %2597 = vmatprep.subr.bf16.mxu0 0
      %2598 = vmatpush1.bf16.msra.mxu0 0
      %2599 = vmatprep.subr.bf16.mxu0 0
      %2600 = vmatpush1.bf16.msra.mxu0 0
      %2601 = vmatprep.subr.bf16.mxu0 0
      %2602 = vmatpush1.bf16.msra.mxu0 0
      %2603 = vmatprep.subr.bf16.mxu0 0
      %2604 = vmatpush1.bf16.msra.mxu0 0
      %2605 = vmatprep.subr.bf16.mxu0 0
      %2606 = vmatpush1.bf16.msra.mxu0 0
      %2607 = vmatprep.subr.bf16.mxu0 0
      %2608 = vmatpush1.bf16.msra.mxu0 0
      %2609 = vmatprep.subr.bf16.mxu0 0
      %2610 = vmatpush1.bf16.msra.mxu0 0
      %2611 = vmatprep.subr.bf16.mxu0 0
      %2612 = vmatpush1.bf16.msra.mxu0 0
      %2613 = vmatprep.subr.bf16.mxu0 0
      %2614 = vmatpush1.bf16.msra.mxu0 0
      %2615 = vmatprep.mubr.bf16.mxu0 0
      %2616 = vmatmul.mubr.bf16.gmra.mrb[0].mxu0 %v2475
      %v2617 = vpop.f32.mrb[0].mxu0
      %v2618 = vadd.f32 0.0, %v2617
      %v2619 = vpop.f32.mrb[0].mxu0
      %v2620 = vadd.f32 0.0, %v2619
      %v2621 = vpop.f32.mrb[0].mxu0
      %v2622 = vpop.f32.mrb[0].mxu0
      %2623 = vdwg.mxu0
      %2624 = vmatprep.subr.bf16.mxu0 %v2499
      %2625 = vmatpush1.bf16.msra.mxu0 %v2496
      %2626 = vmatprep.subr.bf16.mxu0 0
      %2627 = vmatpush1.bf16.msra.mxu0 0
      %2628 = vmatprep.subr.bf16.mxu0 0
      %2629 = vmatpush1.bf16.msra.mxu0 0
      %2630 = vmatprep.subr.bf16.mxu0 0
      %2631 = vmatpush1.bf16.msra.mxu0 0
      %2632 = vmatprep.subr.bf16.mxu0 0
      %2633 = vmatpush1.bf16.msra.mxu0 0
      %2634 = vmatprep.subr.bf16.mxu0 0
      %2635 = vmatpush1.bf16.msra.mxu0 0
      %2636 = vmatprep.subr.bf16.mxu0 0
      %2637 = vmatpush1.bf16.msra.mxu0 0
      %2638 = vmatprep.subr.bf16.mxu0 0
      %2639 = vmatpush1.bf16.msra.mxu0 0
      %2640 = vmatprep.subr.bf16.mxu0 0
      %2641 = vmatpush1.bf16.msra.mxu0 0
      %2642 = vmatprep.subr.bf16.mxu0 0
      %2643 = vmatpush1.bf16.msra.mxu0 0
      %2644 = vmatprep.subr.bf16.mxu0 0
      %2645 = vmatpush1.bf16.msra.mxu0 0
      %2646 = vmatprep.subr.bf16.mxu0 0
      %2647 = vmatpush1.bf16.msra.mxu0 0
      %2648 = vmatprep.subr.bf16.mxu0 0
      %2649 = vmatpush1.bf16.msra.mxu0 0
      %2650 = vmatprep.subr.bf16.mxu0 0
      %2651 = vmatpush1.bf16.msra.mxu0 0
      %2652 = vmatprep.subr.bf16.mxu0 0
      %2653 = vmatpush1.bf16.msra.mxu0 0
      %2654 = vmatprep.subr.bf16.mxu0 0
      %2655 = vmatpush1.bf16.msra.mxu0 0
      %2656 = vmatprep.mubr.bf16.mxu0 0
      %2657 = vmatmul.mubr.bf16.gmra.mrb[0].mxu0 %v2475
      %v2658 = vpop.f32.mrb[0].mxu0
      %v2659 = vadd.f32 0.0, %v2658
      %v2660 = vpop.f32.mrb[0].mxu0
      %v2661 = vadd.f32 0.0, %v2660
      %v2662 = vpop.f32.mrb[0].mxu0
      %v2663 = vpop.f32.mrb[0].mxu0
      %2664 = vdwg.mxu0
      %v2665 = vadd.f32 %v2437, %v2536
      %v2666 = vadd.f32 %v2438, %v2538
      %v2667 = vadd.f32 %v2439, %v2577
      %v2668 = vadd.f32 %v2440, %v2579
      %v2669 = vadd.f32 %v2441, %v2618
      %v2670 = vadd.f32 %v2442, %v2620
      %v2671 = vadd.f32 %v2443, %v2659
      %v2672 = vadd.f32 %v2444, %v2661
      %vm2673 = vcmp.ge.f32.partialorder %v2665, 0.0
      %vm2674 = vcmp.ge.f32.partialorder %v2666, 0.0
      %vm2675 = vcmp.ge.f32.partialorder %v2667, 0.0
      %vm2676 = vcmp.ge.f32.partialorder %v2668, 0.0
      %vm2677 = vcmp.ge.f32.partialorder %v2669, 0.0
      %vm2678 = vcmp.ge.f32.partialorder %v2670, 0.0
      %vm2679 = vcmp.ge.f32.partialorder %v2671, 0.0
      %vm2680 = vcmp.ge.f32.partialorder %v2672, 0.0
      %v2681 = vmul.f32 %v2665, 0.01
      %v2682 = vmul.f32 %v2666, 0.01
      %v2683 = vmul.f32 %v2667, 0.01
      %v2684 = vmul.f32 %v2668, 0.01
      %v2685 = vmul.f32 %v2669, 0.01
      %v2686 = vmul.f32 %v2670, 0.01
      %v2687 = vmul.f32 %v2671, 0.01
      %v2688 = vmul.f32 %v2672, 0.01
      %v2689 = vsel %vm2673, %v2665, %v2681
      %v2690 = vsel %vm2674, %v2666, %v2682
      %v2691 = vsel %vm2675, %v2667, %v2683
      %v2692 = vsel %vm2676, %v2668, %v2684
      %v2693 = vsel %vm2677, %v2669, %v2685
      %v2694 = vsel %vm2678, %v2670, %v2686
      %v2695 = vsel %vm2679, %v2671, %v2687
      %v2696 = vsel %vm2680, %v2672, %v2688
      %2697 = vst [vmem:[%s580] sm:$0xff] %v2689
      %2698 = vst [vmem:[%s580 + $0x8] sm:$0xff] %v2690
      %2699 = vst [vmem:[%s580 + $0x10] sm:$0xff] %v2691
      %2700 = vst [vmem:[%s580 + $0x18] sm:$0xff] %v2692
      %2701 = vst [vmem:[%s580 + $0x20] sm:$0xff] %v2693
      %2702 = vst [vmem:[%s580 + $0x28] sm:$0xff] %v2694
      %2703 = vst [vmem:[%s580 + $0x30] sm:$0xff] %v2695
      %2704 = vst [vmem:[%s580 + $0x38] sm:$0xff] %v2696
      %v2705 = vld [vmem:[%s569] sm:$0xff]
      %v2707 = vlaneseq
      %v2708 = vshrl.u32 %v2707, 7
      %v2709 = vsub.s32 0, %v2708
      %v2710 = vrot.slane %v2705, %v2709
      %v2711 = vlaneseq
      %v2712 = vshrl.u32 %v2711, 7
      %v2713 = vsub.s32 1, %v2712
      %v2714 = vrot.slane %v2705, %v2713
      %v2715 = vlaneseq
      %v2716 = vshrl.u32 %v2715, 7
      %v2717 = vsub.s32 2, %v2716
      %v2718 = vrot.slane %v2705, %v2717
      %v2719 = vlaneseq
      %v2720 = vshrl.u32 %v2719, 7
      %v2721 = vsub.s32 3, %v2720
      %v2722 = vrot.slane %v2705, %v2721
      %v2723 = vlaneseq
      %v2724 = vshrl.u32 %v2723, 7
      %v2725 = vsub.s32 4, %v2724
      %v2726 = vrot.slane %v2705, %v2725
      %v2727 = vlaneseq
      %v2728 = vshrl.u32 %v2727, 7
      %v2729 = vsub.s32 5, %v2728
      %v2730 = vrot.slane %v2705, %v2729
      %v2731 = vlaneseq
      %v2732 = vshrl.u32 %v2731, 7
      %v2733 = vsub.s32 6, %v2732
      %v2734 = vrot.slane %v2705, %v2733
      %v2735 = vlaneseq
      %v2736 = vshrl.u32 %v2735, 7
      %v2737 = vsub.s32 7, %v2736
      %v2738 = vrot.slane %v2705, %v2737
      %v2747 = vmul.f32 %v2689, %v2710
      %v2748 = vmul.f32 %v2690, %v2714
      %v2749 = vmul.f32 %v2691, %v2718
      %v2750 = vmul.f32 %v2692, %v2722
      %v2751 = vmul.f32 %v2693, %v2726
      %v2752 = vmul.f32 %v2694, %v2730
      %v2753 = vmul.f32 %v2695, %v2734
      %v2754 = vmul.f32 %v2696, %v2738
      %v2755 = vadd.f32 %v2747, %v2748
      %v2756 = vadd.f32 %v2755, %v2749
      %v2757 = vadd.f32 %v2756, %v2750
      %v2758 = vadd.f32 %v2757, %v2751
      %v2759 = vadd.f32 %v2758, %v2752
      %v2760 = vadd.f32 %v2759, %v2753
      %v2761 = vadd.f32 %v2760, %v2754
      %2762 = vadd.xlane.f32.xlu0 %v2761
      %v2763 = vpop.xlane.xlu0 %2762
      %v2764 = vmul.f32 %v2747, %v2689
      %v2765 = vmul.f32 %v2748, %v2690
      %v2766 = vmul.f32 %v2749, %v2691
      %v2767 = vmul.f32 %v2750, %v2692
      %v2768 = vmul.f32 %v2751, %v2693
      %v2769 = vmul.f32 %v2752, %v2694
      %v2770 = vmul.f32 %v2753, %v2695
      %v2771 = vmul.f32 %v2754, %v2696
      %v2772 = vadd.f32 %v2764, %v2765
      %v2773 = vadd.f32 %v2772, %v2766
      %v2774 = vadd.f32 %v2773, %v2767
      %v2775 = vadd.f32 %v2774, %v2768
      %v2776 = vadd.f32 %v2775, %v2769
      %v2777 = vadd.f32 %v2776, %v2770
      %v2778 = vadd.f32 %v2777, %v2771
      %2779 = vadd.xlane.f32.xlu0 %v2778
      %v2780 = vpop.xlane.xlu0 %2779
      %vm2781 = vcmask 7168
      %v2782 = vsel %vm2781, %v2763, %v2780
      %vm2783 = vcmask 15360
      %2784 = vst.msk [vmem:[%s591] sm:$0xff] %vm2783, %v2782
      %v2785 = vld [vmem:[%s540] sm:$0xff]
      %v2786 = vld [vmem:[%s540 + $0x8] sm:$0xff]
      %v2787 = vld [vmem:[%s540 + $0x10] sm:$0xff]
      %v2788 = vld [vmem:[%s540 + $0x18] sm:$0xff]
      %2789 = vst [vmem:[#allocation3] sm:$0xff] %v2785
      %2790 = vst [vmem:[#allocation3 + $0x8] sm:$0xff] %v2786
      %2791 = vst [vmem:[#allocation3 + $0x10] sm:$0xff] %v2787
      %2792 = vst [vmem:[#allocation3 + $0x18] sm:$0xff] %v2788
      %v2793 = vld [vmem:[%s562] sm:$0xff]
      %2794 = vst [vmem:[#allocation3 + $0x20] sm:$0xff] %v2793
      %v2795 = vld [vmem:[%s1] sm:$0xf]
      %v2796 = vld [vmem:[#allocation3] sm:$0xff]
      %v2797 = vld [vmem:[#allocation3 + $0x8] sm:$0xff]
      %v2798 = vld [vmem:[#allocation3 + $0x10] sm:$0xff]
      %v2799 = vld [vmem:[#allocation3 + $0x18] sm:$0xff]
      %s2800 = scalar_lea.vmem %s1, 4
      %v2801 = vld [vmem:[%s2800] sm:$0xf]
      %v2802 = vld [vmem:[#allocation3 + $0x20] sm:$0xf]
      %v2808 = vunpack.c.l.b16 %v2796
      %v2809 = vunpack.c.h.b16 %v2796
      %v2810 = vunpack.c.l.b16 %v2797
      %v2811 = vunpack.c.h.b16 %v2797
      %v2812 = vunpack.c.l.b16 %v2798
      %v2813 = vunpack.c.h.b16 %v2798
      %v2814 = vunpack.c.l.b16 %v2799
      %v2815 = vunpack.c.h.b16 %v2799
      %v2816 = vunpack.c.l.b16 %v2802
      %v2817 = vpack.c.b16 %v2808, %v2808
      %v2818 = vpack.c.b16 %v2809, %v2809
      %v2819 = vpack.c.b16 %v2810, %v2810
      %v2820 = vpack.c.b16 %v2811, %v2811
      %v2821 = vpack.c.b16 %v2812, %v2812
      %v2822 = vpack.c.b16 %v2813, %v2813
      %v2823 = vpack.c.b16 %v2814, %v2814
      %v2824 = vpack.c.b16 %v2815, %v2815
      %v2825 = vpack.c.b16 %v2816, %v2816
      %2826 = vrot.lane.b32.xlu0 %v2817, 127
      %v2827 = vpop.permute.xlu0 %2826
      %2828 = vrot.lane.b32.xlu0 %v2818, 127
      %v2829 = vpop.permute.xlu0 %2828
      %2830 = vrot.lane.b32.xlu0 %v2819, 127
      %v2831 = vpop.permute.xlu0 %2830
      %2832 = vrot.lane.b32.xlu0 %v2820, 127
      %v2833 = vpop.permute.xlu0 %2832
      %2834 = vrot.lane.b32.xlu0 %v2821, 127
      %v2835 = vpop.permute.xlu0 %2834
      %2836 = vrot.lane.b32.xlu0 %v2822, 127
      %v2837 = vpop.permute.xlu0 %2836
      %2838 = vrot.lane.b32.xlu0 %v2823, 127
      %v2839 = vpop.permute.xlu0 %2838
      %2840 = vrot.lane.b32.xlu0 %v2824, 127
      %v2841 = vpop.permute.xlu0 %2840
      %2842 = vrot.lane.b32.xlu0 %v2825, 127
      %v2843 = vpop.permute.xlu0 %2842
      %v2844 = vsel %vm656, %v2827, %v2829
      %v2845 = vsel %vm656, %v2829, %v2831
      %v2846 = vsel %vm656, %v2831, %v2833
      %v2847 = vsel %vm656, %v2833, %v2835
      %v2848 = vsel %vm656, %v2835, %v2837
      %v2849 = vsel %vm656, %v2837, %v2839
      %v2850 = vsel %vm656, %v2839, %v2841
      %v2851 = vsel %vm656, %v2841, %v2843
      %v2853 = vsel %vm665, %v2801, 0
      %v2856 = vsel %vm669, %v2844, 0
      %v2859 = vsel %vm669, %v2845, 0
      %v2862 = vsel %vm669, %v2846, 0
      %v2865 = vsel %vm669, %v2847, 0
      %v2868 = vsel %vm669, %v2848, 0
      %v2871 = vsel %vm669, %v2849, 0
      %v2874 = vsel %vm669, %v2850, 0
      %v2877 = vsel %vm669, %v2851, 0
      %2879 = vmatprep.subr.bf16.mxu0 %v2859
      %2880 = vmatpush1.bf16.msra.mxu0 %v2856
      %2881 = vmatprep.subr.bf16.mxu0 0
      %2882 = vmatpush1.bf16.msra.mxu0 0
      %2883 = vmatprep.subr.bf16.mxu0 0
      %2884 = vmatpush1.bf16.msra.mxu0 0
      %2885 = vmatprep.subr.bf16.mxu0 0
      %2886 = vmatpush1.bf16.msra.mxu0 0
      %2887 = vmatprep.subr.bf16.mxu0 0
      %2888 = vmatpush1.bf16.msra.mxu0 0
      %2889 = vmatprep.subr.bf16.mxu0 0
      %2890 = vmatpush1.bf16.msra.mxu0 0
      %2891 = vmatprep.subr.bf16.mxu0 0
      %2892 = vmatpush1.bf16.msra.mxu0 0
      %2893 = vmatprep.subr.bf16.mxu0 0
      %2894 = vmatpush1.bf16.msra.mxu0 0
      %2895 = vmatprep.subr.bf16.mxu0 0
      %2896 = vmatpush1.bf16.msra.mxu0 0
      %2897 = vmatprep.subr.bf16.mxu0 0
      %2898 = vmatpush1.bf16.msra.mxu0 0
      %2899 = vmatprep.subr.bf16.mxu0 0
      %2900 = vmatpush1.bf16.msra.mxu0 0
      %2901 = vmatprep.subr.bf16.mxu0 0
      %2902 = vmatpush1.bf16.msra.mxu0 0
      %2903 = vmatprep.subr.bf16.mxu0 0
      %2904 = vmatpush1.bf16.msra.mxu0 0
      %2905 = vmatprep.subr.bf16.mxu0 0
      %2906 = vmatpush1.bf16.msra.mxu0 0
      %2907 = vmatprep.subr.bf16.mxu0 0
      %2908 = vmatpush1.bf16.msra.mxu0 0
      %2909 = vmatprep.subr.bf16.mxu0 0
      %2910 = vmatpush1.bf16.msra.mxu0 0
      %2911 = vmatprep.mubr.bf16.mxu0 0
      %2912 = vmatmul.mubr.bf16.gmra.mrb[0].mxu0 %v2853
      %v2913 = vpop.f32.mrb[0].mxu0
      %v2914 = vadd.f32 0.0, %v2913
      %v2915 = vpop.f32.mrb[0].mxu0
      %v2916 = vadd.f32 0.0, %v2915
      %v2917 = vpop.f32.mrb[0].mxu0
      %v2918 = vpop.f32.mrb[0].mxu0
      %2919 = vdwg.mxu0
      %2920 = vmatprep.subr.bf16.mxu0 %v2865
      %2921 = vmatpush1.bf16.msra.mxu0 %v2862
      %2922 = vmatprep.subr.bf16.mxu0 0
      %2923 = vmatpush1.bf16.msra.mxu0 0
      %2924 = vmatprep.subr.bf16.mxu0 0
      %2925 = vmatpush1.bf16.msra.mxu0 0
      %2926 = vmatprep.subr.bf16.mxu0 0
      %2927 = vmatpush1.bf16.msra.mxu0 0
      %2928 = vmatprep.subr.bf16.mxu0 0
      %2929 = vmatpush1.bf16.msra.mxu0 0
      %2930 = vmatprep.subr.bf16.mxu0 0
      %2931 = vmatpush1.bf16.msra.mxu0 0
      %2932 = vmatprep.subr.bf16.mxu0 0
      %2933 = vmatpush1.bf16.msra.mxu0 0
      %2934 = vmatprep.subr.bf16.mxu0 0
      %2935 = vmatpush1.bf16.msra.mxu0 0
      %2936 = vmatprep.subr.bf16.mxu0 0
      %2937 = vmatpush1.bf16.msra.mxu0 0
      %2938 = vmatprep.subr.bf16.mxu0 0
      %2939 = vmatpush1.bf16.msra.mxu0 0
      %2940 = vmatprep.subr.bf16.mxu0 0
      %2941 = vmatpush1.bf16.msra.mxu0 0
      %2942 = vmatprep.subr.bf16.mxu0 0
      %2943 = vmatpush1.bf16.msra.mxu0 0
      %2944 = vmatprep.subr.bf16.mxu0 0
      %2945 = vmatpush1.bf16.msra.mxu0 0
      %2946 = vmatprep.subr.bf16.mxu0 0
      %2947 = vmatpush1.bf16.msra.mxu0 0
      %2948 = vmatprep.subr.bf16.mxu0 0
      %2949 = vmatpush1.bf16.msra.mxu0 0
      %2950 = vmatprep.subr.bf16.mxu0 0
      %2951 = vmatpush1.bf16.msra.mxu0 0
      %2952 = vmatprep.mubr.bf16.mxu0 0
      %2953 = vmatmul.mubr.bf16.gmra.mrb[0].mxu0 %v2853
      %v2954 = vpop.f32.mrb[0].mxu0
      %v2955 = vadd.f32 0.0, %v2954
      %v2956 = vpop.f32.mrb[0].mxu0
      %v2957 = vadd.f32 0.0, %v2956
      %v2958 = vpop.f32.mrb[0].mxu0
      %v2959 = vpop.f32.mrb[0].mxu0
      %2960 = vdwg.mxu0
      %2961 = vmatprep.subr.bf16.mxu0 %v2871
      %2962 = vmatpush1.bf16.msra.mxu0 %v2868
      %2963 = vmatprep.subr.bf16.mxu0 0
      %2964 = vmatpush1.bf16.msra.mxu0 0
      %2965 = vmatprep.subr.bf16.mxu0 0
      %2966 = vmatpush1.bf16.msra.mxu0 0
      %2967 = vmatprep.subr.bf16.mxu0 0
      %2968 = vmatpush1.bf16.msra.mxu0 0
      %2969 = vmatprep.subr.bf16.mxu0 0
      %2970 = vmatpush1.bf16.msra.mxu0 0
      %2971 = vmatprep.subr.bf16.mxu0 0
      %2972 = vmatpush1.bf16.msra.mxu0 0
      %2973 = vmatprep.subr.bf16.mxu0 0
      %2974 = vmatpush1.bf16.msra.mxu0 0
      %2975 = vmatprep.subr.bf16.mxu0 0
      %2976 = vmatpush1.bf16.msra.mxu0 0
      %2977 = vmatprep.subr.bf16.mxu0 0
      %2978 = vmatpush1.bf16.msra.mxu0 0
      %2979 = vmatprep.subr.bf16.mxu0 0
      %2980 = vmatpush1.bf16.msra.mxu0 0
      %2981 = vmatprep.subr.bf16.mxu0 0
      %2982 = vmatpush1.bf16.msra.mxu0 0
      %2983 = vmatprep.subr.bf16.mxu0 0
      %2984 = vmatpush1.bf16.msra.mxu0 0
      %2985 = vmatprep.subr.bf16.mxu0 0
      %2986 = vmatpush1.bf16.msra.mxu0 0
      %2987 = vmatprep.subr.bf16.mxu0 0
      %2988 = vmatpush1.bf16.msra.mxu0 0
      %2989 = vmatprep.subr.bf16.mxu0 0
      %2990 = vmatpush1.bf16.msra.mxu0 0
      %2991 = vmatprep.subr.bf16.mxu0 0
      %2992 = vmatpush1.bf16.msra.mxu0 0
      %2993 = vmatprep.mubr.bf16.mxu0 0
      %2994 = vmatmul.mubr.bf16.gmra.mrb[0].mxu0 %v2853
      %v2995 = vpop.f32.mrb[0].mxu0
      %v2996 = vadd.f32 0.0, %v2995
      %v2997 = vpop.f32.mrb[0].mxu0
      %v2998 = vadd.f32 0.0, %v2997
      %v2999 = vpop.f32.mrb[0].mxu0
      %v3000 = vpop.f32.mrb[0].mxu0
      %3001 = vdwg.mxu0
      %3002 = vmatprep.subr.bf16.mxu0 %v2877
      %3003 = vmatpush1.bf16.msra.mxu0 %v2874
      %3004 = vmatprep.subr.bf16.mxu0 0
      %3005 = vmatpush1.bf16.msra.mxu0 0
      %3006 = vmatprep.subr.bf16.mxu0 0
      %3007 = vmatpush1.bf16.msra.mxu0 0
      %3008 = vmatprep.subr.bf16.mxu0 0
      %3009 = vmatpush1.bf16.msra.mxu0 0
      %3010 = vmatprep.subr.bf16.mxu0 0
      %3011 = vmatpush1.bf16.msra.mxu0 0
      %3012 = vmatprep.subr.bf16.mxu0 0
      %3013 = vmatpush1.bf16.msra.mxu0 0
      %3014 = vmatprep.subr.bf16.mxu0 0
      %3015 = vmatpush1.bf16.msra.mxu0 0
      %3016 = vmatprep.subr.bf16.mxu0 0
      %3017 = vmatpush1.bf16.msra.mxu0 0
      %3018 = vmatprep.subr.bf16.mxu0 0
      %3019 = vmatpush1.bf16.msra.mxu0 0
      %3020 = vmatprep.subr.bf16.mxu0 0
      %3021 = vmatpush1.bf16.msra.mxu0 0
      %3022 = vmatprep.subr.bf16.mxu0 0
      %3023 = vmatpush1.bf16.msra.mxu0 0
      %3024 = vmatprep.subr.bf16.mxu0 0
      %3025 = vmatpush1.bf16.msra.mxu0 0
      %3026 = vmatprep.subr.bf16.mxu0 0
      %3027 = vmatpush1.bf16.msra.mxu0 0
      %3028 = vmatprep.subr.bf16.mxu0 0
      %3029 = vmatpush1.bf16.msra.mxu0 0
      %3030 = vmatprep.subr.bf16.mxu0 0
      %3031 = vmatpush1.bf16.msra.mxu0 0
      %3032 = vmatprep.subr.bf16.mxu0 0
      %3033 = vmatpush1.bf16.msra.mxu0 0
      %3034 = vmatprep.mubr.bf16.mxu0 0
      %3035 = vmatmul.mubr.bf16.gmra.mrb[0].mxu0 %v2853
      %v3036 = vpop.f32.mrb[0].mxu0
      %v3037 = vadd.f32 0.0, %v3036
      %v3038 = vpop.f32.mrb[0].mxu0
      %v3039 = vadd.f32 0.0, %v3038
      %v3040 = vpop.f32.mrb[0].mxu0
      %v3041 = vpop.f32.mrb[0].mxu0
      %3042 = vdwg.mxu0
      %v3044 = vsel %vm665, %v2795, 0
      %v3047 = vsel %vm669, %v2817, 0
      %v3050 = vsel %vm669, %v2818, 0
      %v3053 = vsel %vm669, %v2819, 0
      %v3056 = vsel %vm669, %v2820, 0
      %v3059 = vsel %vm669, %v2821, 0
      %v3062 = vsel %vm669, %v2822, 0
      %v3065 = vsel %vm669, %v2823, 0
      %v3068 = vsel %vm669, %v2824, 0
      %3070 = vmatprep.subr.bf16.mxu0 %v3050
      %3071 = vmatpush1.bf16.msra.mxu0 %v3047
      %3072 = vmatprep.subr.bf16.mxu0 0
      %3073 = vmatpush1.bf16.msra.mxu0 0
      %3074 = vmatprep.subr.bf16.mxu0 0
      %3075 = vmatpush1.bf16.msra.mxu0 0
      %3076 = vmatprep.subr.bf16.mxu0 0
      %3077 = vmatpush1.bf16.msra.mxu0 0
      %3078 = vmatprep.subr.bf16.mxu0 0
      %3079 = vmatpush1.bf16.msra.mxu0 0
      %3080 = vmatprep.subr.bf16.mxu0 0
      %3081 = vmatpush1.bf16.msra.mxu0 0
      %3082 = vmatprep.subr.bf16.mxu0 0
      %3083 = vmatpush1.bf16.msra.mxu0 0
      %3084 = vmatprep.subr.bf16.mxu0 0
      %3085 = vmatpush1.bf16.msra.mxu0 0
      %3086 = vmatprep.subr.bf16.mxu0 0
      %3087 = vmatpush1.bf16.msra.mxu0 0
      %3088 = vmatprep.subr.bf16.mxu0 0
      %3089 = vmatpush1.bf16.msra.mxu0 0
      %3090 = vmatprep.subr.bf16.mxu0 0
      %3091 = vmatpush1.bf16.msra.mxu0 0
      %3092 = vmatprep.subr.bf16.mxu0 0
      %3093 = vmatpush1.bf16.msra.mxu0 0
      %3094 = vmatprep.subr.bf16.mxu0 0
      %3095 = vmatpush1.bf16.msra.mxu0 0
      %3096 = vmatprep.subr.bf16.mxu0 0
      %3097 = vmatpush1.bf16.msra.mxu0 0
      %3098 = vmatprep.subr.bf16.mxu0 0
      %3099 = vmatpush1.bf16.msra.mxu0 0
      %3100 = vmatprep.subr.bf16.mxu0 0
      %3101 = vmatpush1.bf16.msra.mxu0 0
      %3102 = vmatprep.mubr.bf16.mxu0 0
      %3103 = vmatmul.mubr.bf16.gmra.mrb[0].mxu0 %v3044
      %v3104 = vpop.f32.mrb[0].mxu0
      %v3105 = vadd.f32 %v2914, %v3104
      %v3106 = vpop.f32.mrb[0].mxu0
      %v3107 = vadd.f32 %v2916, %v3106
      %v3108 = vpop.f32.mrb[0].mxu0
      %v3109 = vpop.f32.mrb[0].mxu0
      %3110 = vdwg.mxu0
      %3111 = vmatprep.subr.bf16.mxu0 %v3056
      %3112 = vmatpush1.bf16.msra.mxu0 %v3053
      %3113 = vmatprep.subr.bf16.mxu0 0
      %3114 = vmatpush1.bf16.msra.mxu0 0
      %3115 = vmatprep.subr.bf16.mxu0 0
      %3116 = vmatpush1.bf16.msra.mxu0 0
      %3117 = vmatprep.subr.bf16.mxu0 0
      %3118 = vmatpush1.bf16.msra.mxu0 0
      %3119 = vmatprep.subr.bf16.mxu0 0
      %3120 = vmatpush1.bf16.msra.mxu0 0
      %3121 = vmatprep.subr.bf16.mxu0 0
      %3122 = vmatpush1.bf16.msra.mxu0 0
      %3123 = vmatprep.subr.bf16.mxu0 0
      %3124 = vmatpush1.bf16.msra.mxu0 0
      %3125 = vmatprep.subr.bf16.mxu0 0
      %3126 = vmatpush1.bf16.msra.mxu0 0
      %3127 = vmatprep.subr.bf16.mxu0 0
      %3128 = vmatpush1.bf16.msra.mxu0 0
      %3129 = vmatprep.subr.bf16.mxu0 0
      %3130 = vmatpush1.bf16.msra.mxu0 0
      %3131 = vmatprep.subr.bf16.mxu0 0
      %3132 = vmatpush1.bf16.msra.mxu0 0
      %3133 = vmatprep.subr.bf16.mxu0 0
      %3134 = vmatpush1.bf16.msra.mxu0 0
      %3135 = vmatprep.subr.bf16.mxu0 0
      %3136 = vmatpush1.bf16.msra.mxu0 0
      %3137 = vmatprep.subr.bf16.mxu0 0
      %3138 = vmatpush1.bf16.msra.mxu0 0
      %3139 = vmatprep.subr.bf16.mxu0 0
      %3140 = vmatpush1.bf16.msra.mxu0 0
      %3141 = vmatprep.subr.bf16.mxu0 0
      %3142 = vmatpush1.bf16.msra.mxu0 0
      %3143 = vmatprep.mubr.bf16.mxu0 0
      %3144 = vmatmul.mubr.bf16.gmra.mrb[0].mxu0 %v3044
      %v3145 = vpop.f32.mrb[0].mxu0
      %v3146 = vadd.f32 %v2955, %v3145
      %v3147 = vpop.f32.mrb[0].mxu0
      %v3148 = vadd.f32 %v2957, %v3147
      %v3149 = vpop.f32.mrb[0].mxu0
      %v3150 = vpop.f32.mrb[0].mxu0
      %3151 = vdwg.mxu0
      %3152 = vmatprep.subr.bf16.mxu0 %v3062
      %3153 = vmatpush1.bf16.msra.mxu0 %v3059
      %3154 = vmatprep.subr.bf16.mxu0 0
      %3155 = vmatpush1.bf16.msra.mxu0 0
      %3156 = vmatprep.subr.bf16.mxu0 0
      %3157 = vmatpush1.bf16.msra.mxu0 0
      %3158 = vmatprep.subr.bf16.mxu0 0
      %3159 = vmatpush1.bf16.msra.mxu0 0
      %3160 = vmatprep.subr.bf16.mxu0 0
      %3161 = vmatpush1.bf16.msra.mxu0 0
      %3162 = vmatprep.subr.bf16.mxu0 0
      %3163 = vmatpush1.bf16.msra.mxu0 0
      %3164 = vmatprep.subr.bf16.mxu0 0
      %3165 = vmatpush1.bf16.msra.mxu0 0
      %3166 = vmatprep.subr.bf16.mxu0 0
      %3167 = vmatpush1.bf16.msra.mxu0 0
      %3168 = vmatprep.subr.bf16.mxu0 0
      %3169 = vmatpush1.bf16.msra.mxu0 0
      %3170 = vmatprep.subr.bf16.mxu0 0
      %3171 = vmatpush1.bf16.msra.mxu0 0
      %3172 = vmatprep.subr.bf16.mxu0 0
      %3173 = vmatpush1.bf16.msra.mxu0 0
      %3174 = vmatprep.subr.bf16.mxu0 0
      %3175 = vmatpush1.bf16.msra.mxu0 0
      %3176 = vmatprep.subr.bf16.mxu0 0
      %3177 = vmatpush1.bf16.msra.mxu0 0
      %3178 = vmatprep.subr.bf16.mxu0 0
      %3179 = vmatpush1.bf16.msra.mxu0 0
      %3180 = vmatprep.subr.bf16.mxu0 0
      %3181 = vmatpush1.bf16.msra.mxu0 0
      %3182 = vmatprep.subr.bf16.mxu0 0
      %3183 = vmatpush1.bf16.msra.mxu0 0
      %3184 = vmatprep.mubr.bf16.mxu0 0
      %3185 = vmatmul.mubr.bf16.gmra.mrb[0].mxu0 %v3044
      %v3186 = vpop.f32.mrb[0].mxu0
      %v3187 = vadd.f32 %v2996, %v3186
      %v3188 = vpop.f32.mrb[0].mxu0
      %v3189 = vadd.f32 %v2998, %v3188
      %v3190 = vpop.f32.mrb[0].mxu0
      %v3191 = vpop.f32.mrb[0].mxu0
      %3192 = vdwg.mxu0
      %3193 = vmatprep.subr.bf16.mxu0 %v3068
      %3194 = vmatpush1.bf16.msra.mxu0 %v3065
      %3195 = vmatprep.subr.bf16.mxu0 0
      %3196 = vmatpush1.bf16.msra.mxu0 0
      %3197 = vmatprep.subr.bf16.mxu0 0
      %3198 = vmatpush1.bf16.msra.mxu0 0
      %3199 = vmatprep.subr.bf16.mxu0 0
      %3200 = vmatpush1.bf16.msra.mxu0 0
      %3201 = vmatprep.subr.bf16.mxu0 0
      %3202 = vmatpush1.bf16.msra.mxu0 0
      %3203 = vmatprep.subr.bf16.mxu0 0
      %3204 = vmatpush1.bf16.msra.mxu0 0
      %3205 = vmatprep.subr.bf16.mxu0 0
      %3206 = vmatpush1.bf16.msra.mxu0 0
      %3207 = vmatprep.subr.bf16.mxu0 0
      %3208 = vmatpush1.bf16.msra.mxu0 0
      %3209 = vmatprep.subr.bf16.mxu0 0
      %3210 = vmatpush1.bf16.msra.mxu0 0
      %3211 = vmatprep.subr.bf16.mxu0 0
      %3212 = vmatpush1.bf16.msra.mxu0 0
      %3213 = vmatprep.subr.bf16.mxu0 0
      %3214 = vmatpush1.bf16.msra.mxu0 0
      %3215 = vmatprep.subr.bf16.mxu0 0
      %3216 = vmatpush1.bf16.msra.mxu0 0
      %3217 = vmatprep.subr.bf16.mxu0 0
      %3218 = vmatpush1.bf16.msra.mxu0 0
      %3219 = vmatprep.subr.bf16.mxu0 0
      %3220 = vmatpush1.bf16.msra.mxu0 0
      %3221 = vmatprep.subr.bf16.mxu0 0
      %3222 = vmatpush1.bf16.msra.mxu0 0
      %3223 = vmatprep.subr.bf16.mxu0 0
      %3224 = vmatpush1.bf16.msra.mxu0 0
      %3225 = vmatprep.mubr.bf16.mxu0 0
      %3226 = vmatmul.mubr.bf16.gmra.mrb[0].mxu0 %v3044
      %v3227 = vpop.f32.mrb[0].mxu0
      %v3228 = vadd.f32 %v3037, %v3227
      %v3229 = vpop.f32.mrb[0].mxu0
      %v3230 = vadd.f32 %v3039, %v3229
      %v3231 = vpop.f32.mrb[0].mxu0
      %v3232 = vpop.f32.mrb[0].mxu0
      %3233 = vdwg.mxu0
      %s3234 = scalar_lea.vmem %s1, 8
      %v3235 = vld [vmem:[%s3234] sm:$0xf]
      %3236 = vrot.lane.b32.xlu0 %v2817, 126
      %v3237 = vpop.permute.xlu0 %3236
      %3238 = vrot.lane.b32.xlu0 %v2818, 126
      %v3239 = vpop.permute.xlu0 %3238
      %3240 = vrot.lane.b32.xlu0 %v2819, 126
      %v3241 = vpop.permute.xlu0 %3240
      %3242 = vrot.lane.b32.xlu0 %v2820, 126
      %v3243 = vpop.permute.xlu0 %3242
      %3244 = vrot.lane.b32.xlu0 %v2821, 126
      %v3245 = vpop.permute.xlu0 %3244
      %3246 = vrot.lane.b32.xlu0 %v2822, 126
      %v3247 = vpop.permute.xlu0 %3246
      %3248 = vrot.lane.b32.xlu0 %v2823, 126
      %v3249 = vpop.permute.xlu0 %3248
      %3250 = vrot.lane.b32.xlu0 %v2824, 126
      %v3251 = vpop.permute.xlu0 %3250
      %3252 = vrot.lane.b32.xlu0 %v2825, 126
      %v3253 = vpop.permute.xlu0 %3252
      %v3254 = vsel %vm1069, %v3237, %v3239
      %v3255 = vsel %vm1069, %v3239, %v3241
      %v3256 = vsel %vm1069, %v3241, %v3243
      %v3257 = vsel %vm1069, %v3243, %v3245
      %v3258 = vsel %vm1069, %v3245, %v3247
      %v3259 = vsel %vm1069, %v3247, %v3249
      %v3260 = vsel %vm1069, %v3249, %v3251
      %v3261 = vsel %vm1069, %v3251, %v3253
      %v3263 = vsel %vm665, %v3235, 0
      %v3266 = vsel %vm669, %v3254, 0
      %v3269 = vsel %vm669, %v3255, 0
      %v3272 = vsel %vm669, %v3256, 0
      %v3275 = vsel %vm669, %v3257, 0
      %v3278 = vsel %vm669, %v3258, 0
      %v3281 = vsel %vm669, %v3259, 0
      %v3284 = vsel %vm669, %v3260, 0
      %v3287 = vsel %vm669, %v3261, 0
      %3289 = vmatprep.subr.bf16.mxu0 %v3269
      %3290 = vmatpush1.bf16.msra.mxu0 %v3266
      %3291 = vmatprep.subr.bf16.mxu0 0
      %3292 = vmatpush1.bf16.msra.mxu0 0
      %3293 = vmatprep.subr.bf16.mxu0 0
      %3294 = vmatpush1.bf16.msra.mxu0 0
      %3295 = vmatprep.subr.bf16.mxu0 0
      %3296 = vmatpush1.bf16.msra.mxu0 0
      %3297 = vmatprep.subr.bf16.mxu0 0
      %3298 = vmatpush1.bf16.msra.mxu0 0
      %3299 = vmatprep.subr.bf16.mxu0 0
      %3300 = vmatpush1.bf16.msra.mxu0 0
      %3301 = vmatprep.subr.bf16.mxu0 0
      %3302 = vmatpush1.bf16.msra.mxu0 0
      %3303 = vmatprep.subr.bf16.mxu0 0
      %3304 = vmatpush1.bf16.msra.mxu0 0
      %3305 = vmatprep.subr.bf16.mxu0 0
      %3306 = vmatpush1.bf16.msra.mxu0 0
      %3307 = vmatprep.subr.bf16.mxu0 0
      %3308 = vmatpush1.bf16.msra.mxu0 0
      %3309 = vmatprep.subr.bf16.mxu0 0
      %3310 = vmatpush1.bf16.msra.mxu0 0
      %3311 = vmatprep.subr.bf16.mxu0 0
      %3312 = vmatpush1.bf16.msra.mxu0 0
      %3313 = vmatprep.subr.bf16.mxu0 0
      %3314 = vmatpush1.bf16.msra.mxu0 0
      %3315 = vmatprep.subr.bf16.mxu0 0
      %3316 = vmatpush1.bf16.msra.mxu0 0
      %3317 = vmatprep.subr.bf16.mxu0 0
      %3318 = vmatpush1.bf16.msra.mxu0 0
      %3319 = vmatprep.subr.bf16.mxu0 0
      %3320 = vmatpush1.bf16.msra.mxu0 0
      %3321 = vmatprep.mubr.bf16.mxu0 0
      %3322 = vmatmul.mubr.bf16.gmra.mrb[0].mxu0 %v3263
      %v3323 = vpop.f32.mrb[0].mxu0
      %v3324 = vadd.f32 0.0, %v3323
      %v3325 = vpop.f32.mrb[0].mxu0
      %v3326 = vadd.f32 0.0, %v3325
      %v3327 = vpop.f32.mrb[0].mxu0
      %v3328 = vpop.f32.mrb[0].mxu0
      %3329 = vdwg.mxu0
      %3330 = vmatprep.subr.bf16.mxu0 %v3275
      %3331 = vmatpush1.bf16.msra.mxu0 %v3272
      %3332 = vmatprep.subr.bf16.mxu0 0
      %3333 = vmatpush1.bf16.msra.mxu0 0
      %3334 = vmatprep.subr.bf16.mxu0 0
      %3335 = vmatpush1.bf16.msra.mxu0 0
      %3336 = vmatprep.subr.bf16.mxu0 0
      %3337 = vmatpush1.bf16.msra.mxu0 0
      %3338 = vmatprep.subr.bf16.mxu0 0
      %3339 = vmatpush1.bf16.msra.mxu0 0
      %3340 = vmatprep.subr.bf16.mxu0 0
      %3341 = vmatpush1.bf16.msra.mxu0 0
      %3342 = vmatprep.subr.bf16.mxu0 0
      %3343 = vmatpush1.bf16.msra.mxu0 0
      %3344 = vmatprep.subr.bf16.mxu0 0
      %3345 = vmatpush1.bf16.msra.mxu0 0
      %3346 = vmatprep.subr.bf16.mxu0 0
      %3347 = vmatpush1.bf16.msra.mxu0 0
      %3348 = vmatprep.subr.bf16.mxu0 0
      %3349 = vmatpush1.bf16.msra.mxu0 0
      %3350 = vmatprep.subr.bf16.mxu0 0
      %3351 = vmatpush1.bf16.msra.mxu0 0
      %3352 = vmatprep.subr.bf16.mxu0 0
      %3353 = vmatpush1.bf16.msra.mxu0 0
      %3354 = vmatprep.subr.bf16.mxu0 0
      %3355 = vmatpush1.bf16.msra.mxu0 0
      %3356 = vmatprep.subr.bf16.mxu0 0
      %3357 = vmatpush1.bf16.msra.mxu0 0
      %3358 = vmatprep.subr.bf16.mxu0 0
      %3359 = vmatpush1.bf16.msra.mxu0 0
      %3360 = vmatprep.subr.bf16.mxu0 0
      %3361 = vmatpush1.bf16.msra.mxu0 0
      %3362 = vmatprep.mubr.bf16.mxu0 0
      %3363 = vmatmul.mubr.bf16.gmra.mrb[0].mxu0 %v3263
      %v3364 = vpop.f32.mrb[0].mxu0
      %v3365 = vadd.f32 0.0, %v3364
      %v3366 = vpop.f32.mrb[0].mxu0
      %v3367 = vadd.f32 0.0, %v3366
      %v3368 = vpop.f32.mrb[0].mxu0
      %v3369 = vpop.f32.mrb[0].mxu0
      %3370 = vdwg.mxu0
      %3371 = vmatprep.subr.bf16.mxu0 %v3281
      %3372 = vmatpush1.bf16.msra.mxu0 %v3278
      %3373 = vmatprep.subr.bf16.mxu0 0
      %3374 = vmatpush1.bf16.msra.mxu0 0
      %3375 = vmatprep.subr.bf16.mxu0 0
      %3376 = vmatpush1.bf16.msra.mxu0 0
      %3377 = vmatprep.subr.bf16.mxu0 0
      %3378 = vmatpush1.bf16.msra.mxu0 0
      %3379 = vmatprep.subr.bf16.mxu0 0
      %3380 = vmatpush1.bf16.msra.mxu0 0
      %3381 = vmatprep.subr.bf16.mxu0 0
      %3382 = vmatpush1.bf16.msra.mxu0 0
      %3383 = vmatprep.subr.bf16.mxu0 0
      %3384 = vmatpush1.bf16.msra.mxu0 0
      %3385 = vmatprep.subr.bf16.mxu0 0
      %3386 = vmatpush1.bf16.msra.mxu0 0
      %3387 = vmatprep.subr.bf16.mxu0 0
      %3388 = vmatpush1.bf16.msra.mxu0 0
      %3389 = vmatprep.subr.bf16.mxu0 0
      %3390 = vmatpush1.bf16.msra.mxu0 0
      %3391 = vmatprep.subr.bf16.mxu0 0
      %3392 = vmatpush1.bf16.msra.mxu0 0
      %3393 = vmatprep.subr.bf16.mxu0 0
      %3394 = vmatpush1.bf16.msra.mxu0 0
      %3395 = vmatprep.subr.bf16.mxu0 0
      %3396 = vmatpush1.bf16.msra.mxu0 0
      %3397 = vmatprep.subr.bf16.mxu0 0
      %3398 = vmatpush1.bf16.msra.mxu0 0
      %3399 = vmatprep.subr.bf16.mxu0 0
      %3400 = vmatpush1.bf16.msra.mxu0 0
      %3401 = vmatprep.subr.bf16.mxu0 0
      %3402 = vmatpush1.bf16.msra.mxu0 0
      %3403 = vmatprep.mubr.bf16.mxu0 0
      %3404 = vmatmul.mubr.bf16.gmra.mrb[0].mxu0 %v3263
      %v3405 = vpop.f32.mrb[0].mxu0
      %v3406 = vadd.f32 0.0, %v3405
      %v3407 = vpop.f32.mrb[0].mxu0
      %v3408 = vadd.f32 0.0, %v3407
      %v3409 = vpop.f32.mrb[0].mxu0
      %v3410 = vpop.f32.mrb[0].mxu0
      %3411 = vdwg.mxu0
      %3412 = vmatprep.subr.bf16.mxu0 %v3287
      %3413 = vmatpush1.bf16.msra.mxu0 %v3284
      %3414 = vmatprep.subr.bf16.mxu0 0
      %3415 = vmatpush1.bf16.msra.mxu0 0
      %3416 = vmatprep.subr.bf16.mxu0 0
      %3417 = vmatpush1.bf16.msra.mxu0 0
      %3418 = vmatprep.subr.bf16.mxu0 0
      %3419 = vmatpush1.bf16.msra.mxu0 0
      %3420 = vmatprep.subr.bf16.mxu0 0
      %3421 = vmatpush1.bf16.msra.mxu0 0
      %3422 = vmatprep.subr.bf16.mxu0 0
      %3423 = vmatpush1.bf16.msra.mxu0 0
      %3424 = vmatprep.subr.bf16.mxu0 0
      %3425 = vmatpush1.bf16.msra.mxu0 0
      %3426 = vmatprep.subr.bf16.mxu0 0
      %3427 = vmatpush1.bf16.msra.mxu0 0
      %3428 = vmatprep.subr.bf16.mxu0 0
      %3429 = vmatpush1.bf16.msra.mxu0 0
      %3430 = vmatprep.subr.bf16.mxu0 0
      %3431 = vmatpush1.bf16.msra.mxu0 0
      %3432 = vmatprep.subr.bf16.mxu0 0
      %3433 = vmatpush1.bf16.msra.mxu0 0
      %3434 = vmatprep.subr.bf16.mxu0 0
      %3435 = vmatpush1.bf16.msra.mxu0 0
      %3436 = vmatprep.subr.bf16.mxu0 0
      %3437 = vmatpush1.bf16.msra.mxu0 0
      %3438 = vmatprep.subr.bf16.mxu0 0
      %3439 = vmatpush1.bf16.msra.mxu0 0
      %3440 = vmatprep.subr.bf16.mxu0 0
      %3441 = vmatpush1.bf16.msra.mxu0 0
      %3442 = vmatprep.subr.bf16.mxu0 0
      %3443 = vmatpush1.bf16.msra.mxu0 0
      %3444 = vmatprep.mubr.bf16.mxu0 0
      %3445 = vmatmul.mubr.bf16.gmra.mrb[0].mxu0 %v3263
      %v3446 = vpop.f32.mrb[0].mxu0
      %v3447 = vadd.f32 0.0, %v3446
      %v3448 = vpop.f32.mrb[0].mxu0
      %v3449 = vadd.f32 0.0, %v3448
      %v3450 = vpop.f32.mrb[0].mxu0
      %v3451 = vpop.f32.mrb[0].mxu0
      %3452 = vdwg.mxu0
      %v3453 = vadd.f32 %v3105, %v3324
      %v3454 = vadd.f32 %v3107, %v3326
      %v3455 = vadd.f32 %v3146, %v3365
      %v3456 = vadd.f32 %v3148, %v3367
      %v3457 = vadd.f32 %v3187, %v3406
      %v3458 = vadd.f32 %v3189, %v3408
      %v3459 = vadd.f32 %v3228, %v3447
      %v3460 = vadd.f32 %v3230, %v3449
      %s3461 = scalar_lea.vmem %s1, 12
      %v3462 = vld [vmem:[%s3461] sm:$0xf]
      %3463 = vrot.lane.b32.xlu0 %v2817, 118
      %v3464 = vpop.permute.xlu0 %3463
      %3465 = vrot.lane.b32.xlu0 %v2818, 118
      %v3466 = vpop.permute.xlu0 %3465
      %3467 = vrot.lane.b32.xlu0 %v2819, 118
      %v3468 = vpop.permute.xlu0 %3467
      %3469 = vrot.lane.b32.xlu0 %v2820, 118
      %v3470 = vpop.permute.xlu0 %3469
      %3471 = vrot.lane.b32.xlu0 %v2821, 118
      %v3472 = vpop.permute.xlu0 %3471
      %3473 = vrot.lane.b32.xlu0 %v2822, 118
      %v3474 = vpop.permute.xlu0 %3473
      %3475 = vrot.lane.b32.xlu0 %v2823, 118
      %v3476 = vpop.permute.xlu0 %3475
      %3477 = vrot.lane.b32.xlu0 %v2824, 118
      %v3478 = vpop.permute.xlu0 %3477
      %3479 = vrot.lane.b32.xlu0 %v2825, 118
      %v3480 = vpop.permute.xlu0 %3479
      %vm3481 = vcmask 965632
      %v3482 = vsel %vm3481, %v3464, %v3466
      %v3483 = vsel %vm3481, %v3466, %v3468
      %v3484 = vsel %vm3481, %v3468, %v3470
      %v3485 = vsel %vm3481, %v3470, %v3472
      %v3486 = vsel %vm3481, %v3472, %v3474
      %v3487 = vsel %vm3481, %v3474, %v3476
      %v3488 = vsel %vm3481, %v3476, %v3478
      %v3489 = vsel %vm3481, %v3478, %v3480
      %v3491 = vsel %vm665, %v3462, 0
      %v3494 = vsel %vm669, %v3482, 0
      %v3497 = vsel %vm669, %v3483, 0
      %v3500 = vsel %vm669, %v3484, 0
      %v3503 = vsel %vm669, %v3485, 0
      %v3506 = vsel %vm669, %v3486, 0
      %v3509 = vsel %vm669, %v3487, 0
      %v3512 = vsel %vm669, %v3488, 0
      %v3515 = vsel %vm669, %v3489, 0
      %3517 = vmatprep.subr.bf16.mxu0 %v3497
      %3518 = vmatpush1.bf16.msra.mxu0 %v3494
      %3519 = vmatprep.subr.bf16.mxu0 0
      %3520 = vmatpush1.bf16.msra.mxu0 0
      %3521 = vmatprep.subr.bf16.mxu0 0
      %3522 = vmatpush1.bf16.msra.mxu0 0
      %3523 = vmatprep.subr.bf16.mxu0 0
      %3524 = vmatpush1.bf16.msra.mxu0 0
      %3525 = vmatprep.subr.bf16.mxu0 0
      %3526 = vmatpush1.bf16.msra.mxu0 0
      %3527 = vmatprep.subr.bf16.mxu0 0
      %3528 = vmatpush1.bf16.msra.mxu0 0
      %3529 = vmatprep.subr.bf16.mxu0 0
      %3530 = vmatpush1.bf16.msra.mxu0 0
      %3531 = vmatprep.subr.bf16.mxu0 0
      %3532 = vmatpush1.bf16.msra.mxu0 0
      %3533 = vmatprep.subr.bf16.mxu0 0
      %3534 = vmatpush1.bf16.msra.mxu0 0
      %3535 = vmatprep.subr.bf16.mxu0 0
      %3536 = vmatpush1.bf16.msra.mxu0 0
      %3537 = vmatprep.subr.bf16.mxu0 0
      %3538 = vmatpush1.bf16.msra.mxu0 0
      %3539 = vmatprep.subr.bf16.mxu0 0
      %3540 = vmatpush1.bf16.msra.mxu0 0
      %3541 = vmatprep.subr.bf16.mxu0 0
      %3542 = vmatpush1.bf16.msra.mxu0 0
      %3543 = vmatprep.subr.bf16.mxu0 0
      %3544 = vmatpush1.bf16.msra.mxu0 0
      %3545 = vmatprep.subr.bf16.mxu0 0
      %3546 = vmatpush1.bf16.msra.mxu0 0
      %3547 = vmatprep.subr.bf16.mxu0 0
      %3548 = vmatpush1.bf16.msra.mxu0 0
      %3549 = vmatprep.mubr.bf16.mxu0 0
      %3550 = vmatmul.mubr.bf16.gmra.mrb[0].mxu0 %v3491
      %v3551 = vpop.f32.mrb[0].mxu0
      %v3552 = vadd.f32 0.0, %v3551
      %v3553 = vpop.f32.mrb[0].mxu0
      %v3554 = vadd.f32 0.0, %v3553
      %v3555 = vpop.f32.mrb[0].mxu0
      %v3556 = vpop.f32.mrb[0].mxu0
      %3557 = vdwg.mxu0
      %3558 = vmatprep.subr.bf16.mxu0 %v3503
      %3559 = vmatpush1.bf16.msra.mxu0 %v3500
      %3560 = vmatprep.subr.bf16.mxu0 0
      %3561 = vmatpush1.bf16.msra.mxu0 0
      %3562 = vmatprep.subr.bf16.mxu0 0
      %3563 = vmatpush1.bf16.msra.mxu0 0
      %3564 = vmatprep.subr.bf16.mxu0 0
      %3565 = vmatpush1.bf16.msra.mxu0 0
      %3566 = vmatprep.subr.bf16.mxu0 0
      %3567 = vmatpush1.bf16.msra.mxu0 0
      %3568 = vmatprep.subr.bf16.mxu0 0
      %3569 = vmatpush1.bf16.msra.mxu0 0
      %3570 = vmatprep.subr.bf16.mxu0 0
      %3571 = vmatpush1.bf16.msra.mxu0 0
      %3572 = vmatprep.subr.bf16.mxu0 0
      %3573 = vmatpush1.bf16.msra.mxu0 0
      %3574 = vmatprep.subr.bf16.mxu0 0
      %3575 = vmatpush1.bf16.msra.mxu0 0
      %3576 = vmatprep.subr.bf16.mxu0 0
      %3577 = vmatpush1.bf16.msra.mxu0 0
      %3578 = vmatprep.subr.bf16.mxu0 0
      %3579 = vmatpush1.bf16.msra.mxu0 0
      %3580 = vmatprep.subr.bf16.mxu0 0
      %3581 = vmatpush1.bf16.msra.mxu0 0
      %3582 = vmatprep.subr.bf16.mxu0 0
      %3583 = vmatpush1.bf16.msra.mxu0 0
      %3584 = vmatprep.subr.bf16.mxu0 0
      %3585 = vmatpush1.bf16.msra.mxu0 0
      %3586 = vmatprep.subr.bf16.mxu0 0
      %3587 = vmatpush1.bf16.msra.mxu0 0
      %3588 = vmatprep.subr.bf16.mxu0 0
      %3589 = vmatpush1.bf16.msra.mxu0 0
      %3590 = vmatprep.mubr.bf16.mxu0 0
      %3591 = vmatmul.mubr.bf16.gmra.mrb[0].mxu0 %v3491
      %v3592 = vpop.f32.mrb[0].mxu0
      %v3593 = vadd.f32 0.0, %v3592
      %v3594 = vpop.f32.mrb[0].mxu0
      %v3595 = vadd.f32 0.0, %v3594
      %v3596 = vpop.f32.mrb[0].mxu0
      %v3597 = vpop.f32.mrb[0].mxu0
      %3598 = vdwg.mxu0
      %3599 = vmatprep.subr.bf16.mxu0 %v3509
      %3600 = vmatpush1.bf16.msra.mxu0 %v3506
      %3601 = vmatprep.subr.bf16.mxu0 0
      %3602 = vmatpush1.bf16.msra.mxu0 0
      %3603 = vmatprep.subr.bf16.mxu0 0
      %3604 = vmatpush1.bf16.msra.mxu0 0
      %3605 = vmatprep.subr.bf16.mxu0 0
      %3606 = vmatpush1.bf16.msra.mxu0 0
      %3607 = vmatprep.subr.bf16.mxu0 0
      %3608 = vmatpush1.bf16.msra.mxu0 0
      %3609 = vmatprep.subr.bf16.mxu0 0
      %3610 = vmatpush1.bf16.msra.mxu0 0
      %3611 = vmatprep.subr.bf16.mxu0 0
      %3612 = vmatpush1.bf16.msra.mxu0 0
      %3613 = vmatprep.subr.bf16.mxu0 0
      %3614 = vmatpush1.bf16.msra.mxu0 0
      %3615 = vmatprep.subr.bf16.mxu0 0
      %3616 = vmatpush1.bf16.msra.mxu0 0
      %3617 = vmatprep.subr.bf16.mxu0 0
      %3618 = vmatpush1.bf16.msra.mxu0 0
      %3619 = vmatprep.subr.bf16.mxu0 0
      %3620 = vmatpush1.bf16.msra.mxu0 0
      %3621 = vmatprep.subr.bf16.mxu0 0
      %3622 = vmatpush1.bf16.msra.mxu0 0
      %3623 = vmatprep.subr.bf16.mxu0 0
      %3624 = vmatpush1.bf16.msra.mxu0 0
      %3625 = vmatprep.subr.bf16.mxu0 0
      %3626 = vmatpush1.bf16.msra.mxu0 0
      %3627 = vmatprep.subr.bf16.mxu0 0
      %3628 = vmatpush1.bf16.msra.mxu0 0
      %3629 = vmatprep.subr.bf16.mxu0 0
      %3630 = vmatpush1.bf16.msra.mxu0 0
      %3631 = vmatprep.mubr.bf16.mxu0 0
      %3632 = vmatmul.mubr.bf16.gmra.mrb[0].mxu0 %v3491
      %v3633 = vpop.f32.mrb[0].mxu0
      %v3634 = vadd.f32 0.0, %v3633
      %v3635 = vpop.f32.mrb[0].mxu0
      %v3636 = vadd.f32 0.0, %v3635
      %v3637 = vpop.f32.mrb[0].mxu0
      %v3638 = vpop.f32.mrb[0].mxu0
      %3639 = vdwg.mxu0
      %3640 = vmatprep.subr.bf16.mxu0 %v3515
      %3641 = vmatpush1.bf16.msra.mxu0 %v3512
      %3642 = vmatprep.subr.bf16.mxu0 0
      %3643 = vmatpush1.bf16.msra.mxu0 0
      %3644 = vmatprep.subr.bf16.mxu0 0
      %3645 = vmatpush1.bf16.msra.mxu0 0
      %3646 = vmatprep.subr.bf16.mxu0 0
      %3647 = vmatpush1.bf16.msra.mxu0 0
      %3648 = vmatprep.subr.bf16.mxu0 0
      %3649 = vmatpush1.bf16.msra.mxu0 0
      %3650 = vmatprep.subr.bf16.mxu0 0
      %3651 = vmatpush1.bf16.msra.mxu0 0
      %3652 = vmatprep.subr.bf16.mxu0 0
      %3653 = vmatpush1.bf16.msra.mxu0 0
      %3654 = vmatprep.subr.bf16.mxu0 0
      %3655 = vmatpush1.bf16.msra.mxu0 0
      %3656 = vmatprep.subr.bf16.mxu0 0
      %3657 = vmatpush1.bf16.msra.mxu0 0
      %3658 = vmatprep.subr.bf16.mxu0 0
      %3659 = vmatpush1.bf16.msra.mxu0 0
      %3660 = vmatprep.subr.bf16.mxu0 0
      %3661 = vmatpush1.bf16.msra.mxu0 0
      %3662 = vmatprep.subr.bf16.mxu0 0
      %3663 = vmatpush1.bf16.msra.mxu0 0
      %3664 = vmatprep.subr.bf16.mxu0 0
      %3665 = vmatpush1.bf16.msra.mxu0 0
      %3666 = vmatprep.subr.bf16.mxu0 0
      %3667 = vmatpush1.bf16.msra.mxu0 0
      %3668 = vmatprep.subr.bf16.mxu0 0
      %3669 = vmatpush1.bf16.msra.mxu0 0
      %3670 = vmatprep.subr.bf16.mxu0 0
      %3671 = vmatpush1.bf16.msra.mxu0 0
      %3672 = vmatprep.mubr.bf16.mxu0 0
      %3673 = vmatmul.mubr.bf16.gmra.mrb[0].mxu0 %v3491
      %v3674 = vpop.f32.mrb[0].mxu0
      %v3675 = vadd.f32 0.0, %v3674
      %v3676 = vpop.f32.mrb[0].mxu0
      %v3677 = vadd.f32 0.0, %v3676
      %v3678 = vpop.f32.mrb[0].mxu0
      %v3679 = vpop.f32.mrb[0].mxu0
      %3680 = vdwg.mxu0
      %v3681 = vadd.f32 %v3453, %v3552
      %v3682 = vadd.f32 %v3454, %v3554
      %v3683 = vadd.f32 %v3455, %v3593
      %v3684 = vadd.f32 %v3456, %v3595
      %v3685 = vadd.f32 %v3457, %v3634
      %v3686 = vadd.f32 %v3458, %v3636
      %v3687 = vadd.f32 %v3459, %v3675
      %v3688 = vadd.f32 %v3460, %v3677
      %s3689 = scalar_lea.vmem %s1, 16
      %v3690 = vld [vmem:[%s3689] sm:$0xf]
      %3691 = vrot.lane.b32.xlu0 %v2817, 117
      %v3692 = vpop.permute.xlu0 %3691
      %3693 = vrot.lane.b32.xlu0 %v2818, 117
      %v3694 = vpop.permute.xlu0 %3693
      %3695 = vrot.lane.b32.xlu0 %v2819, 117
      %v3696 = vpop.permute.xlu0 %3695
      %3697 = vrot.lane.b32.xlu0 %v2820, 117
      %v3698 = vpop.permute.xlu0 %3697
      %3699 = vrot.lane.b32.xlu0 %v2821, 117
      %v3700 = vpop.permute.xlu0 %3699
      %3701 = vrot.lane.b32.xlu0 %v2822, 117
      %v3702 = vpop.permute.xlu0 %3701
      %3703 = vrot.lane.b32.xlu0 %v2823, 117
      %v3704 = vpop.permute.xlu0 %3703
      %3705 = vrot.lane.b32.xlu0 %v2824, 117
      %v3706 = vpop.permute.xlu0 %3705
      %3707 = vrot.lane.b32.xlu0 %v2825, 117
      %v3708 = vpop.permute.xlu0 %3707
      %vm3709 = vcmask 957440
      %v3710 = vsel %vm3709, %v3692, %v3694
      %v3711 = vsel %vm3709, %v3694, %v3696
      %v3712 = vsel %vm3709, %v3696, %v3698
      %v3713 = vsel %vm3709, %v3698, %v3700
      %v3714 = vsel %vm3709, %v3700, %v3702
      %v3715 = vsel %vm3709, %v3702, %v3704
      %v3716 = vsel %vm3709, %v3704, %v3706
      %v3717 = vsel %vm3709, %v3706, %v3708
      %v3719 = vsel %vm665, %v3690, 0
      %v3722 = vsel %vm669, %v3710, 0
      %v3725 = vsel %vm669, %v3711, 0
      %v3728 = vsel %vm669, %v3712, 0
      %v3731 = vsel %vm669, %v3713, 0
      %v3734 = vsel %vm669, %v3714, 0
      %v3737 = vsel %vm669, %v3715, 0
      %v3740 = vsel %vm669, %v3716, 0
      %v3743 = vsel %vm669, %v3717, 0
      %3745 = vmatprep.subr.bf16.mxu0 %v3725
      %3746 = vmatpush1.bf16.msra.mxu0 %v3722
      %3747 = vmatprep.subr.bf16.mxu0 0
      %3748 = vmatpush1.bf16.msra.mxu0 0
      %3749 = vmatprep.subr.bf16.mxu0 0
      %3750 = vmatpush1.bf16.msra.mxu0 0
      %3751 = vmatprep.subr.bf16.mxu0 0
      %3752 = vmatpush1.bf16.msra.mxu0 0
      %3753 = vmatprep.subr.bf16.mxu0 0
      %3754 = vmatpush1.bf16.msra.mxu0 0
      %3755 = vmatprep.subr.bf16.mxu0 0
      %3756 = vmatpush1.bf16.msra.mxu0 0
      %3757 = vmatprep.subr.bf16.mxu0 0
      %3758 = vmatpush1.bf16.msra.mxu0 0
      %3759 = vmatprep.subr.bf16.mxu0 0
      %3760 = vmatpush1.bf16.msra.mxu0 0
      %3761 = vmatprep.subr.bf16.mxu0 0
      %3762 = vmatpush1.bf16.msra.mxu0 0
      %3763 = vmatprep.subr.bf16.mxu0 0
      %3764 = vmatpush1.bf16.msra.mxu0 0
      %3765 = vmatprep.subr.bf16.mxu0 0
      %3766 = vmatpush1.bf16.msra.mxu0 0
      %3767 = vmatprep.subr.bf16.mxu0 0
      %3768 = vmatpush1.bf16.msra.mxu0 0
      %3769 = vmatprep.subr.bf16.mxu0 0
      %3770 = vmatpush1.bf16.msra.mxu0 0
      %3771 = vmatprep.subr.bf16.mxu0 0
      %3772 = vmatpush1.bf16.msra.mxu0 0
      %3773 = vmatprep.subr.bf16.mxu0 0
      %3774 = vmatpush1.bf16.msra.mxu0 0
      %3775 = vmatprep.subr.bf16.mxu0 0
      %3776 = vmatpush1.bf16.msra.mxu0 0
      %3777 = vmatprep.mubr.bf16.mxu0 0
      %3778 = vmatmul.mubr.bf16.gmra.mrb[0].mxu0 %v3719
      %v3779 = vpop.f32.mrb[0].mxu0
      %v3780 = vadd.f32 0.0, %v3779
      %v3781 = vpop.f32.mrb[0].mxu0
      %v3782 = vadd.f32 0.0, %v3781
      %v3783 = vpop.f32.mrb[0].mxu0
      %v3784 = vpop.f32.mrb[0].mxu0
      %3785 = vdwg.mxu0
      %3786 = vmatprep.subr.bf16.mxu0 %v3731
      %3787 = vmatpush1.bf16.msra.mxu0 %v3728
      %3788 = vmatprep.subr.bf16.mxu0 0
      %3789 = vmatpush1.bf16.msra.mxu0 0
      %3790 = vmatprep.subr.bf16.mxu0 0
      %3791 = vmatpush1.bf16.msra.mxu0 0
      %3792 = vmatprep.subr.bf16.mxu0 0
      %3793 = vmatpush1.bf16.msra.mxu0 0
      %3794 = vmatprep.subr.bf16.mxu0 0
      %3795 = vmatpush1.bf16.msra.mxu0 0
      %3796 = vmatprep.subr.bf16.mxu0 0
      %3797 = vmatpush1.bf16.msra.mxu0 0
      %3798 = vmatprep.subr.bf16.mxu0 0
      %3799 = vmatpush1.bf16.msra.mxu0 0
      %3800 = vmatprep.subr.bf16.mxu0 0
      %3801 = vmatpush1.bf16.msra.mxu0 0
      %3802 = vmatprep.subr.bf16.mxu0 0
      %3803 = vmatpush1.bf16.msra.mxu0 0
      %3804 = vmatprep.subr.bf16.mxu0 0
      %3805 = vmatpush1.bf16.msra.mxu0 0
      %3806 = vmatprep.subr.bf16.mxu0 0
      %3807 = vmatpush1.bf16.msra.mxu0 0
      %3808 = vmatprep.subr.bf16.mxu0 0
      %3809 = vmatpush1.bf16.msra.mxu0 0
      %3810 = vmatprep.subr.bf16.mxu0 0
      %3811 = vmatpush1.bf16.msra.mxu0 0
      %3812 = vmatprep.subr.bf16.mxu0 0
      %3813 = vmatpush1.bf16.msra.mxu0 0
      %3814 = vmatprep.subr.bf16.mxu0 0
      %3815 = vmatpush1.bf16.msra.mxu0 0
      %3816 = vmatprep.subr.bf16.mxu0 0
      %3817 = vmatpush1.bf16.msra.mxu0 0
      %3818 = vmatprep.mubr.bf16.mxu0 0
      %3819 = vmatmul.mubr.bf16.gmra.mrb[0].mxu0 %v3719
      %v3820 = vpop.f32.mrb[0].mxu0
      %v3821 = vadd.f32 0.0, %v3820
      %v3822 = vpop.f32.mrb[0].mxu0
      %v3823 = vadd.f32 0.0, %v3822
      %v3824 = vpop.f32.mrb[0].mxu0
      %v3825 = vpop.f32.mrb[0].mxu0
      %3826 = vdwg.mxu0
      %3827 = vmatprep.subr.bf16.mxu0 %v3737
      %3828 = vmatpush1.bf16.msra.mxu0 %v3734
      %3829 = vmatprep.subr.bf16.mxu0 0
      %3830 = vmatpush1.bf16.msra.mxu0 0
      %3831 = vmatprep.subr.bf16.mxu0 0
      %3832 = vmatpush1.bf16.msra.mxu0 0
      %3833 = vmatprep.subr.bf16.mxu0 0
      %3834 = vmatpush1.bf16.msra.mxu0 0
      %3835 = vmatprep.subr.bf16.mxu0 0
      %3836 = vmatpush1.bf16.msra.mxu0 0
      %3837 = vmatprep.subr.bf16.mxu0 0
      %3838 = vmatpush1.bf16.msra.mxu0 0
      %3839 = vmatprep.subr.bf16.mxu0 0
      %3840 = vmatpush1.bf16.msra.mxu0 0
      %3841 = vmatprep.subr.bf16.mxu0 0
      %3842 = vmatpush1.bf16.msra.mxu0 0
      %3843 = vmatprep.subr.bf16.mxu0 0
      %3844 = vmatpush1.bf16.msra.mxu0 0
      %3845 = vmatprep.subr.bf16.mxu0 0
      %3846 = vmatpush1.bf16.msra.mxu0 0
      %3847 = vmatprep.subr.bf16.mxu0 0
      %3848 = vmatpush1.bf16.msra.mxu0 0
      %3849 = vmatprep.subr.bf16.mxu0 0
      %3850 = vmatpush1.bf16.msra.mxu0 0
      %3851 = vmatprep.subr.bf16.mxu0 0
      %3852 = vmatpush1.bf16.msra.mxu0 0
      %3853 = vmatprep.subr.bf16.mxu0 0
      %3854 = vmatpush1.bf16.msra.mxu0 0
      %3855 = vmatprep.subr.bf16.mxu0 0
      %3856 = vmatpush1.bf16.msra.mxu0 0
      %3857 = vmatprep.subr.bf16.mxu0 0
      %3858 = vmatpush1.bf16.msra.mxu0 0
      %3859 = vmatprep.mubr.bf16.mxu0 0
      %3860 = vmatmul.mubr.bf16.gmra.mrb[0].mxu0 %v3719
      %v3861 = vpop.f32.mrb[0].mxu0
      %v3862 = vadd.f32 0.0, %v3861
      %v3863 = vpop.f32.mrb[0].mxu0
      %v3864 = vadd.f32 0.0, %v3863
      %v3865 = vpop.f32.mrb[0].mxu0
      %v3866 = vpop.f32.mrb[0].mxu0
      %3867 = vdwg.mxu0
      %3868 = vmatprep.subr.bf16.mxu0 %v3743
      %3869 = vmatpush1.bf16.msra.mxu0 %v3740
      %3870 = vmatprep.subr.bf16.mxu0 0
      %3871 = vmatpush1.bf16.msra.mxu0 0
      %3872 = vmatprep.subr.bf16.mxu0 0
      %3873 = vmatpush1.bf16.msra.mxu0 0
      %3874 = vmatprep.subr.bf16.mxu0 0
      %3875 = vmatpush1.bf16.msra.mxu0 0
      %3876 = vmatprep.subr.bf16.mxu0 0
      %3877 = vmatpush1.bf16.msra.mxu0 0
      %3878 = vmatprep.subr.bf16.mxu0 0
      %3879 = vmatpush1.bf16.msra.mxu0 0
      %3880 = vmatprep.subr.bf16.mxu0 0
      %3881 = vmatpush1.bf16.msra.mxu0 0
      %3882 = vmatprep.subr.bf16.mxu0 0
      %3883 = vmatpush1.bf16.msra.mxu0 0
      %3884 = vmatprep.subr.bf16.mxu0 0
      %3885 = vmatpush1.bf16.msra.mxu0 0
      %3886 = vmatprep.subr.bf16.mxu0 0
      %3887 = vmatpush1.bf16.msra.mxu0 0
      %3888 = vmatprep.subr.bf16.mxu0 0
      %3889 = vmatpush1.bf16.msra.mxu0 0
      %3890 = vmatprep.subr.bf16.mxu0 0
      %3891 = vmatpush1.bf16.msra.mxu0 0
      %3892 = vmatprep.subr.bf16.mxu0 0
      %3893 = vmatpush1.bf16.msra.mxu0 0
      %3894 = vmatprep.subr.bf16.mxu0 0
      %3895 = vmatpush1.bf16.msra.mxu0 0
      %3896 = vmatprep.subr.bf16.mxu0 0
      %3897 = vmatpush1.bf16.msra.mxu0 0
      %3898 = vmatprep.subr.bf16.mxu0 0
      %3899 = vmatpush1.bf16.msra.mxu0 0
      %3900 = vmatprep.mubr.bf16.mxu0 0
      %3901 = vmatmul.mubr.bf16.gmra.mrb[0].mxu0 %v3719
      %v3902 = vpop.f32.mrb[0].mxu0
      %v3903 = vadd.f32 0.0, %v3902
      %v3904 = vpop.f32.mrb[0].mxu0
      %v3905 = vadd.f32 0.0, %v3904
      %v3906 = vpop.f32.mrb[0].mxu0
      %v3907 = vpop.f32.mrb[0].mxu0
      %3908 = vdwg.mxu0
      %v3909 = vadd.f32 %v3681, %v3780
      %v3910 = vadd.f32 %v3682, %v3782
      %v3911 = vadd.f32 %v3683, %v3821
      %v3912 = vadd.f32 %v3684, %v3823
      %v3913 = vadd.f32 %v3685, %v3862
      %v3914 = vadd.f32 %v3686, %v3864
      %v3915 = vadd.f32 %v3687, %v3903
      %v3916 = vadd.f32 %v3688, %v3905
      %s3917 = scalar_lea.vmem %s1, 20
      %v3918 = vld [vmem:[%s3917] sm:$0xf]
      %3919 = vrot.lane.b32.xlu0 %v2817, 116
      %v3920 = vpop.permute.xlu0 %3919
      %3921 = vrot.lane.b32.xlu0 %v2818, 116
      %v3922 = vpop.permute.xlu0 %3921
      %3923 = vrot.lane.b32.xlu0 %v2819, 116
      %v3924 = vpop.permute.xlu0 %3923
      %3925 = vrot.lane.b32.xlu0 %v2820, 116
      %v3926 = vpop.permute.xlu0 %3925
      %3927 = vrot.lane.b32.xlu0 %v2821, 116
      %v3928 = vpop.permute.xlu0 %3927
      %3929 = vrot.lane.b32.xlu0 %v2822, 116
      %v3930 = vpop.permute.xlu0 %3929
      %3931 = vrot.lane.b32.xlu0 %v2823, 116
      %v3932 = vpop.permute.xlu0 %3931
      %3933 = vrot.lane.b32.xlu0 %v2824, 116
      %v3934 = vpop.permute.xlu0 %3933
      %3935 = vrot.lane.b32.xlu0 %v2825, 116
      %v3936 = vpop.permute.xlu0 %3935
      %vm3937 = vcmask 949248
      %v3938 = vsel %vm3937, %v3920, %v3922
      %v3939 = vsel %vm3937, %v3922, %v3924
      %v3940 = vsel %vm3937, %v3924, %v3926
      %v3941 = vsel %vm3937, %v3926, %v3928
      %v3942 = vsel %vm3937, %v3928, %v3930
      %v3943 = vsel %vm3937, %v3930, %v3932
      %v3944 = vsel %vm3937, %v3932, %v3934
      %v3945 = vsel %vm3937, %v3934, %v3936
      %v3947 = vsel %vm665, %v3918, 0
      %v3950 = vsel %vm669, %v3938, 0
      %v3953 = vsel %vm669, %v3939, 0
      %v3956 = vsel %vm669, %v3940, 0
      %v3959 = vsel %vm669, %v3941, 0
      %v3962 = vsel %vm669, %v3942, 0
      %v3965 = vsel %vm669, %v3943, 0
      %v3968 = vsel %vm669, %v3944, 0
      %v3971 = vsel %vm669, %v3945, 0
      %3973 = vmatprep.subr.bf16.mxu0 %v3953
      %3974 = vmatpush1.bf16.msra.mxu0 %v3950
      %3975 = vmatprep.subr.bf16.mxu0 0
      %3976 = vmatpush1.bf16.msra.mxu0 0
      %3977 = vmatprep.subr.bf16.mxu0 0
      %3978 = vmatpush1.bf16.msra.mxu0 0
      %3979 = vmatprep.subr.bf16.mxu0 0
      %3980 = vmatpush1.bf16.msra.mxu0 0
      %3981 = vmatprep.subr.bf16.mxu0 0
      %3982 = vmatpush1.bf16.msra.mxu0 0
      %3983 = vmatprep.subr.bf16.mxu0 0
      %3984 = vmatpush1.bf16.msra.mxu0 0
      %3985 = vmatprep.subr.bf16.mxu0 0
      %3986 = vmatpush1.bf16.msra.mxu0 0
      %3987 = vmatprep.subr.bf16.mxu0 0
      %3988 = vmatpush1.bf16.msra.mxu0 0
      %3989 = vmatprep.subr.bf16.mxu0 0
      %3990 = vmatpush1.bf16.msra.mxu0 0
      %3991 = vmatprep.subr.bf16.mxu0 0
      %3992 = vmatpush1.bf16.msra.mxu0 0
      %3993 = vmatprep.subr.bf16.mxu0 0
      %3994 = vmatpush1.bf16.msra.mxu0 0
      %3995 = vmatprep.subr.bf16.mxu0 0
      %3996 = vmatpush1.bf16.msra.mxu0 0
      %3997 = vmatprep.subr.bf16.mxu0 0
      %3998 = vmatpush1.bf16.msra.mxu0 0
      %3999 = vmatprep.subr.bf16.mxu0 0
      %4000 = vmatpush1.bf16.msra.mxu0 0
      %4001 = vmatprep.subr.bf16.mxu0 0
      %4002 = vmatpush1.bf16.msra.mxu0 0
      %4003 = vmatprep.subr.bf16.mxu0 0
      %4004 = vmatpush1.bf16.msra.mxu0 0
      %4005 = vmatprep.mubr.bf16.mxu0 0
      %4006 = vmatmul.mubr.bf16.gmra.mrb[0].mxu0 %v3947
      %v4007 = vpop.f32.mrb[0].mxu0
      %v4008 = vadd.f32 0.0, %v4007
      %v4009 = vpop.f32.mrb[0].mxu0
      %v4010 = vadd.f32 0.0, %v4009
      %v4011 = vpop.f32.mrb[0].mxu0
      %v4012 = vpop.f32.mrb[0].mxu0
      %4013 = vdwg.mxu0
      %4014 = vmatprep.subr.bf16.mxu0 %v3959
      %4015 = vmatpush1.bf16.msra.mxu0 %v3956
      %4016 = vmatprep.subr.bf16.mxu0 0
      %4017 = vmatpush1.bf16.msra.mxu0 0
      %4018 = vmatprep.subr.bf16.mxu0 0
      %4019 = vmatpush1.bf16.msra.mxu0 0
      %4020 = vmatprep.subr.bf16.mxu0 0
      %4021 = vmatpush1.bf16.msra.mxu0 0
      %4022 = vmatprep.subr.bf16.mxu0 0
      %4023 = vmatpush1.bf16.msra.mxu0 0
      %4024 = vmatprep.subr.bf16.mxu0 0
      %4025 = vmatpush1.bf16.msra.mxu0 0
      %4026 = vmatprep.subr.bf16.mxu0 0
      %4027 = vmatpush1.bf16.msra.mxu0 0
      %4028 = vmatprep.subr.bf16.mxu0 0
      %4029 = vmatpush1.bf16.msra.mxu0 0
      %4030 = vmatprep.subr.bf16.mxu0 0
      %4031 = vmatpush1.bf16.msra.mxu0 0
      %4032 = vmatprep.subr.bf16.mxu0 0
      %4033 = vmatpush1.bf16.msra.mxu0 0
      %4034 = vmatprep.subr.bf16.mxu0 0
      %4035 = vmatpush1.bf16.msra.mxu0 0
      %4036 = vmatprep.subr.bf16.mxu0 0
      %4037 = vmatpush1.bf16.msra.mxu0 0
      %4038 = vmatprep.subr.bf16.mxu0 0
      %4039 = vmatpush1.bf16.msra.mxu0 0
      %4040 = vmatprep.subr.bf16.mxu0 0
      %4041 = vmatpush1.bf16.msra.mxu0 0
      %4042 = vmatprep.subr.bf16.mxu0 0
      %4043 = vmatpush1.bf16.msra.mxu0 0
      %4044 = vmatprep.subr.bf16.mxu0 0
      %4045 = vmatpush1.bf16.msra.mxu0 0
      %4046 = vmatprep.mubr.bf16.mxu0 0
      %4047 = vmatmul.mubr.bf16.gmra.mrb[0].mxu0 %v3947
      %v4048 = vpop.f32.mrb[0].mxu0
      %v4049 = vadd.f32 0.0, %v4048
      %v4050 = vpop.f32.mrb[0].mxu0
      %v4051 = vadd.f32 0.0, %v4050
      %v4052 = vpop.f32.mrb[0].mxu0
      %v4053 = vpop.f32.mrb[0].mxu0
      %4054 = vdwg.mxu0
      %4055 = vmatprep.subr.bf16.mxu0 %v3965
      %4056 = vmatpush1.bf16.msra.mxu0 %v3962
      %4057 = vmatprep.subr.bf16.mxu0 0
      %4058 = vmatpush1.bf16.msra.mxu0 0
      %4059 = vmatprep.subr.bf16.mxu0 0
      %4060 = vmatpush1.bf16.msra.mxu0 0
      %4061 = vmatprep.subr.bf16.mxu0 0
      %4062 = vmatpush1.bf16.msra.mxu0 0
      %4063 = vmatprep.subr.bf16.mxu0 0
      %4064 = vmatpush1.bf16.msra.mxu0 0
      %4065 = vmatprep.subr.bf16.mxu0 0
      %4066 = vmatpush1.bf16.msra.mxu0 0
      %4067 = vmatprep.subr.bf16.mxu0 0
      %4068 = vmatpush1.bf16.msra.mxu0 0
      %4069 = vmatprep.subr.bf16.mxu0 0
      %4070 = vmatpush1.bf16.msra.mxu0 0
      %4071 = vmatprep.subr.bf16.mxu0 0
      %4072 = vmatpush1.bf16.msra.mxu0 0
      %4073 = vmatprep.subr.bf16.mxu0 0
      %4074 = vmatpush1.bf16.msra.mxu0 0
      %4075 = vmatprep.subr.bf16.mxu0 0
      %4076 = vmatpush1.bf16.msra.mxu0 0
      %4077 = vmatprep.subr.bf16.mxu0 0
      %4078 = vmatpush1.bf16.msra.mxu0 0
      %4079 = vmatprep.subr.bf16.mxu0 0
      %4080 = vmatpush1.bf16.msra.mxu0 0
      %4081 = vmatprep.subr.bf16.mxu0 0
      %4082 = vmatpush1.bf16.msra.mxu0 0
      %4083 = vmatprep.subr.bf16.mxu0 0
      %4084 = vmatpush1.bf16.msra.mxu0 0
      %4085 = vmatprep.subr.bf16.mxu0 0
      %4086 = vmatpush1.bf16.msra.mxu0 0
      %4087 = vmatprep.mubr.bf16.mxu0 0
      %4088 = vmatmul.mubr.bf16.gmra.mrb[0].mxu0 %v3947
      %v4089 = vpop.f32.mrb[0].mxu0
      %v4090 = vadd.f32 0.0, %v4089
      %v4091 = vpop.f32.mrb[0].mxu0
      %v4092 = vadd.f32 0.0, %v4091
      %v4093 = vpop.f32.mrb[0].mxu0
      %v4094 = vpop.f32.mrb[0].mxu0
      %4095 = vdwg.mxu0
      %4096 = vmatprep.subr.bf16.mxu0 %v3971
      %4097 = vmatpush1.bf16.msra.mxu0 %v3968
      %4098 = vmatprep.subr.bf16.mxu0 0
      %4099 = vmatpush1.bf16.msra.mxu0 0
      %4100 = vmatprep.subr.bf16.mxu0 0
      %4101 = vmatpush1.bf16.msra.mxu0 0
      %4102 = vmatprep.subr.bf16.mxu0 0
      %4103 = vmatpush1.bf16.msra.mxu0 0
      %4104 = vmatprep.subr.bf16.mxu0 0
      %4105 = vmatpush1.bf16.msra.mxu0 0
      %4106 = vmatprep.subr.bf16.mxu0 0
      %4107 = vmatpush1.bf16.msra.mxu0 0
      %4108 = vmatprep.subr.bf16.mxu0 0
      %4109 = vmatpush1.bf16.msra.mxu0 0
      %4110 = vmatprep.subr.bf16.mxu0 0
      %4111 = vmatpush1.bf16.msra.mxu0 0
      %4112 = vmatprep.subr.bf16.mxu0 0
      %4113 = vmatpush1.bf16.msra.mxu0 0
      %4114 = vmatprep.subr.bf16.mxu0 0
      %4115 = vmatpush1.bf16.msra.mxu0 0
      %4116 = vmatprep.subr.bf16.mxu0 0
      %4117 = vmatpush1.bf16.msra.mxu0 0
      %4118 = vmatprep.subr.bf16.mxu0 0
      %4119 = vmatpush1.bf16.msra.mxu0 0
      %4120 = vmatprep.subr.bf16.mxu0 0
      %4121 = vmatpush1.bf16.msra.mxu0 0
      %4122 = vmatprep.subr.bf16.mxu0 0
      %4123 = vmatpush1.bf16.msra.mxu0 0
      %4124 = vmatprep.subr.bf16.mxu0 0
      %4125 = vmatpush1.bf16.msra.mxu0 0
      %4126 = vmatprep.subr.bf16.mxu0 0
      %4127 = vmatpush1.bf16.msra.mxu0 0
      %4128 = vmatprep.mubr.bf16.mxu0 0
      %4129 = vmatmul.mubr.bf16.gmra.mrb[0].mxu0 %v3947
      %v4130 = vpop.f32.mrb[0].mxu0
      %v4131 = vadd.f32 0.0, %v4130
      %v4132 = vpop.f32.mrb[0].mxu0
      %v4133 = vadd.f32 0.0, %v4132
      %v4134 = vpop.f32.mrb[0].mxu0
      %v4135 = vpop.f32.mrb[0].mxu0
      %4136 = vdwg.mxu0
      %v4137 = vadd.f32 %v3909, %v4008
      %v4138 = vadd.f32 %v3910, %v4010
      %v4139 = vadd.f32 %v3911, %v4049
      %v4140 = vadd.f32 %v3912, %v4051
      %v4141 = vadd.f32 %v3913, %v4090
      %v4142 = vadd.f32 %v3914, %v4092
      %v4143 = vadd.f32 %v3915, %v4131
      %v4144 = vadd.f32 %v3916, %v4133
      %s4145 = scalar_lea.vmem %s1, 24
      %v4146 = vld [vmem:[%s4145] sm:$0xf]
      %4147 = vrot.lane.b32.xlu0 %v2817, 108
      %v4148 = vpop.permute.xlu0 %4147
      %4149 = vrot.lane.b32.xlu0 %v2818, 108
      %v4150 = vpop.permute.xlu0 %4149
      %4151 = vrot.lane.b32.xlu0 %v2819, 108
      %v4152 = vpop.permute.xlu0 %4151
      %4153 = vrot.lane.b32.xlu0 %v2820, 108
      %v4154 = vpop.permute.xlu0 %4153
      %4155 = vrot.lane.b32.xlu0 %v2821, 108
      %v4156 = vpop.permute.xlu0 %4155
      %4157 = vrot.lane.b32.xlu0 %v2822, 108
      %v4158 = vpop.permute.xlu0 %4157
      %4159 = vrot.lane.b32.xlu0 %v2823, 108
      %v4160 = vpop.permute.xlu0 %4159
      %4161 = vrot.lane.b32.xlu0 %v2824, 108
      %v4162 = vpop.permute.xlu0 %4161
      %4163 = vrot.lane.b32.xlu0 %v2825, 108
      %v4164 = vpop.permute.xlu0 %4163
      %vm4165 = vcmask 883712
      %v4166 = vsel %vm4165, %v4148, %v4150
      %v4167 = vsel %vm4165, %v4150, %v4152
      %v4168 = vsel %vm4165, %v4152, %v4154
      %v4169 = vsel %vm4165, %v4154, %v4156
      %v4170 = vsel %vm4165, %v4156, %v4158
      %v4171 = vsel %vm4165, %v4158, %v4160
      %v4172 = vsel %vm4165, %v4160, %v4162
      %v4173 = vsel %vm4165, %v4162, %v4164
      %v4175 = vsel %vm665, %v4146, 0
      %v4178 = vsel %vm669, %v4166, 0
      %v4181 = vsel %vm669, %v4167, 0
      %v4184 = vsel %vm669, %v4168, 0
      %v4187 = vsel %vm669, %v4169, 0
      %v4190 = vsel %vm669, %v4170, 0
      %v4193 = vsel %vm669, %v4171, 0
      %v4196 = vsel %vm669, %v4172, 0
      %v4199 = vsel %vm669, %v4173, 0
      %4201 = vmatprep.subr.bf16.mxu0 %v4181
      %4202 = vmatpush1.bf16.msra.mxu0 %v4178
      %4203 = vmatprep.subr.bf16.mxu0 0
      %4204 = vmatpush1.bf16.msra.mxu0 0
      %4205 = vmatprep.subr.bf16.mxu0 0
      %4206 = vmatpush1.bf16.msra.mxu0 0
      %4207 = vmatprep.subr.bf16.mxu0 0
      %4208 = vmatpush1.bf16.msra.mxu0 0
      %4209 = vmatprep.subr.bf16.mxu0 0
      %4210 = vmatpush1.bf16.msra.mxu0 0
      %4211 = vmatprep.subr.bf16.mxu0 0
      %4212 = vmatpush1.bf16.msra.mxu0 0
      %4213 = vmatprep.subr.bf16.mxu0 0
      %4214 = vmatpush1.bf16.msra.mxu0 0
      %4215 = vmatprep.subr.bf16.mxu0 0
      %4216 = vmatpush1.bf16.msra.mxu0 0
      %4217 = vmatprep.subr.bf16.mxu0 0
      %4218 = vmatpush1.bf16.msra.mxu0 0
      %4219 = vmatprep.subr.bf16.mxu0 0
      %4220 = vmatpush1.bf16.msra.mxu0 0
      %4221 = vmatprep.subr.bf16.mxu0 0
      %4222 = vmatpush1.bf16.msra.mxu0 0
      %4223 = vmatprep.subr.bf16.mxu0 0
      %4224 = vmatpush1.bf16.msra.mxu0 0
      %4225 = vmatprep.subr.bf16.mxu0 0
      %4226 = vmatpush1.bf16.msra.mxu0 0
      %4227 = vmatprep.subr.bf16.mxu0 0
      %4228 = vmatpush1.bf16.msra.mxu0 0
      %4229 = vmatprep.subr.bf16.mxu0 0
      %4230 = vmatpush1.bf16.msra.mxu0 0
      %4231 = vmatprep.subr.bf16.mxu0 0
      %4232 = vmatpush1.bf16.msra.mxu0 0
      %4233 = vmatprep.mubr.bf16.mxu0 0
      %4234 = vmatmul.mubr.bf16.gmra.mrb[0].mxu0 %v4175
      %v4235 = vpop.f32.mrb[0].mxu0
      %v4236 = vadd.f32 0.0, %v4235
      %v4237 = vpop.f32.mrb[0].mxu0
      %v4238 = vadd.f32 0.0, %v4237
      %v4239 = vpop.f32.mrb[0].mxu0
      %v4240 = vpop.f32.mrb[0].mxu0
      %4241 = vdwg.mxu0
      %4242 = vmatprep.subr.bf16.mxu0 %v4187
      %4243 = vmatpush1.bf16.msra.mxu0 %v4184
      %4244 = vmatprep.subr.bf16.mxu0 0
      %4245 = vmatpush1.bf16.msra.mxu0 0
      %4246 = vmatprep.subr.bf16.mxu0 0
      %4247 = vmatpush1.bf16.msra.mxu0 0
      %4248 = vmatprep.subr.bf16.mxu0 0
      %4249 = vmatpush1.bf16.msra.mxu0 0
      %4250 = vmatprep.subr.bf16.mxu0 0
      %4251 = vmatpush1.bf16.msra.mxu0 0
      %4252 = vmatprep.subr.bf16.mxu0 0
      %4253 = vmatpush1.bf16.msra.mxu0 0
      %4254 = vmatprep.subr.bf16.mxu0 0
      %4255 = vmatpush1.bf16.msra.mxu0 0
      %4256 = vmatprep.subr.bf16.mxu0 0
      %4257 = vmatpush1.bf16.msra.mxu0 0
      %4258 = vmatprep.subr.bf16.mxu0 0
      %4259 = vmatpush1.bf16.msra.mxu0 0
      %4260 = vmatprep.subr.bf16.mxu0 0
      %4261 = vmatpush1.bf16.msra.mxu0 0
      %4262 = vmatprep.subr.bf16.mxu0 0
      %4263 = vmatpush1.bf16.msra.mxu0 0
      %4264 = vmatprep.subr.bf16.mxu0 0
      %4265 = vmatpush1.bf16.msra.mxu0 0
      %4266 = vmatprep.subr.bf16.mxu0 0
      %4267 = vmatpush1.bf16.msra.mxu0 0
      %4268 = vmatprep.subr.bf16.mxu0 0
      %4269 = vmatpush1.bf16.msra.mxu0 0
      %4270 = vmatprep.subr.bf16.mxu0 0
      %4271 = vmatpush1.bf16.msra.mxu0 0
      %4272 = vmatprep.subr.bf16.mxu0 0
      %4273 = vmatpush1.bf16.msra.mxu0 0
      %4274 = vmatprep.mubr.bf16.mxu0 0
      %4275 = vmatmul.mubr.bf16.gmra.mrb[0].mxu0 %v4175
      %v4276 = vpop.f32.mrb[0].mxu0
      %v4277 = vadd.f32 0.0, %v4276
      %v4278 = vpop.f32.mrb[0].mxu0
      %v4279 = vadd.f32 0.0, %v4278
      %v4280 = vpop.f32.mrb[0].mxu0
      %v4281 = vpop.f32.mrb[0].mxu0
      %4282 = vdwg.mxu0
      %4283 = vmatprep.subr.bf16.mxu0 %v4193
      %4284 = vmatpush1.bf16.msra.mxu0 %v4190
      %4285 = vmatprep.subr.bf16.mxu0 0
      %4286 = vmatpush1.bf16.msra.mxu0 0
      %4287 = vmatprep.subr.bf16.mxu0 0
      %4288 = vmatpush1.bf16.msra.mxu0 0
      %4289 = vmatprep.subr.bf16.mxu0 0
      %4290 = vmatpush1.bf16.msra.mxu0 0
      %4291 = vmatprep.subr.bf16.mxu0 0
      %4292 = vmatpush1.bf16.msra.mxu0 0
      %4293 = vmatprep.subr.bf16.mxu0 0
      %4294 = vmatpush1.bf16.msra.mxu0 0
      %4295 = vmatprep.subr.bf16.mxu0 0
      %4296 = vmatpush1.bf16.msra.mxu0 0
      %4297 = vmatprep.subr.bf16.mxu0 0
      %4298 = vmatpush1.bf16.msra.mxu0 0
      %4299 = vmatprep.subr.bf16.mxu0 0
      %4300 = vmatpush1.bf16.msra.mxu0 0
      %4301 = vmatprep.subr.bf16.mxu0 0
      %4302 = vmatpush1.bf16.msra.mxu0 0
      %4303 = vmatprep.subr.bf16.mxu0 0
      %4304 = vmatpush1.bf16.msra.mxu0 0
      %4305 = vmatprep.subr.bf16.mxu0 0
      %4306 = vmatpush1.bf16.msra.mxu0 0
      %4307 = vmatprep.subr.bf16.mxu0 0
      %4308 = vmatpush1.bf16.msra.mxu0 0
      %4309 = vmatprep.subr.bf16.mxu0 0
      %4310 = vmatpush1.bf16.msra.mxu0 0
      %4311 = vmatprep.subr.bf16.mxu0 0
      %4312 = vmatpush1.bf16.msra.mxu0 0
      %4313 = vmatprep.subr.bf16.mxu0 0
      %4314 = vmatpush1.bf16.msra.mxu0 0
      %4315 = vmatprep.mubr.bf16.mxu0 0
      %4316 = vmatmul.mubr.bf16.gmra.mrb[0].mxu0 %v4175
      %v4317 = vpop.f32.mrb[0].mxu0
      %v4318 = vadd.f32 0.0, %v4317
      %v4319 = vpop.f32.mrb[0].mxu0
      %v4320 = vadd.f32 0.0, %v4319
      %v4321 = vpop.f32.mrb[0].mxu0
      %v4322 = vpop.f32.mrb[0].mxu0
      %4323 = vdwg.mxu0
      %4324 = vmatprep.subr.bf16.mxu0 %v4199
      %4325 = vmatpush1.bf16.msra.mxu0 %v4196
      %4326 = vmatprep.subr.bf16.mxu0 0
      %4327 = vmatpush1.bf16.msra.mxu0 0
      %4328 = vmatprep.subr.bf16.mxu0 0
      %4329 = vmatpush1.bf16.msra.mxu0 0
      %4330 = vmatprep.subr.bf16.mxu0 0
      %4331 = vmatpush1.bf16.msra.mxu0 0
      %4332 = vmatprep.subr.bf16.mxu0 0
      %4333 = vmatpush1.bf16.msra.mxu0 0
      %4334 = vmatprep.subr.bf16.mxu0 0
      %4335 = vmatpush1.bf16.msra.mxu0 0
      %4336 = vmatprep.subr.bf16.mxu0 0
      %4337 = vmatpush1.bf16.msra.mxu0 0
      %4338 = vmatprep.subr.bf16.mxu0 0
      %4339 = vmatpush1.bf16.msra.mxu0 0
      %4340 = vmatprep.subr.bf16.mxu0 0
      %4341 = vmatpush1.bf16.msra.mxu0 0
      %4342 = vmatprep.subr.bf16.mxu0 0
      %4343 = vmatpush1.bf16.msra.mxu0 0
      %4344 = vmatprep.subr.bf16.mxu0 0
      %4345 = vmatpush1.bf16.msra.mxu0 0
      %4346 = vmatprep.subr.bf16.mxu0 0
      %4347 = vmatpush1.bf16.msra.mxu0 0
      %4348 = vmatprep.subr.bf16.mxu0 0
      %4349 = vmatpush1.bf16.msra.mxu0 0
      %4350 = vmatprep.subr.bf16.mxu0 0
      %4351 = vmatpush1.bf16.msra.mxu0 0
      %4352 = vmatprep.subr.bf16.mxu0 0
      %4353 = vmatpush1.bf16.msra.mxu0 0
      %4354 = vmatprep.subr.bf16.mxu0 0
      %4355 = vmatpush1.bf16.msra.mxu0 0
      %4356 = vmatprep.mubr.bf16.mxu0 0
      %4357 = vmatmul.mubr.bf16.gmra.mrb[0].mxu0 %v4175
      %v4358 = vpop.f32.mrb[0].mxu0
      %v4359 = vadd.f32 0.0, %v4358
      %v4360 = vpop.f32.mrb[0].mxu0
      %v4361 = vadd.f32 0.0, %v4360
      %v4362 = vpop.f32.mrb[0].mxu0
      %v4363 = vpop.f32.mrb[0].mxu0
      %4364 = vdwg.mxu0
      %v4365 = vadd.f32 %v4137, %v4236
      %v4366 = vadd.f32 %v4138, %v4238
      %v4367 = vadd.f32 %v4139, %v4277
      %v4368 = vadd.f32 %v4140, %v4279
      %v4369 = vadd.f32 %v4141, %v4318
      %v4370 = vadd.f32 %v4142, %v4320
      %v4371 = vadd.f32 %v4143, %v4359
      %v4372 = vadd.f32 %v4144, %v4361
      %s4373 = scalar_lea.vmem %s1, 28
      %v4374 = vld [vmem:[%s4373] sm:$0xf]
      %4375 = vrot.lane.b32.xlu0 %v2817, 107
      %v4376 = vpop.permute.xlu0 %4375
      %4377 = vrot.lane.b32.xlu0 %v2818, 107
      %v4378 = vpop.permute.xlu0 %4377
      %4379 = vrot.lane.b32.xlu0 %v2819, 107
      %v4380 = vpop.permute.xlu0 %4379
      %4381 = vrot.lane.b32.xlu0 %v2820, 107
      %v4382 = vpop.permute.xlu0 %4381
      %4383 = vrot.lane.b32.xlu0 %v2821, 107
      %v4384 = vpop.permute.xlu0 %4383
      %4385 = vrot.lane.b32.xlu0 %v2822, 107
      %v4386 = vpop.permute.xlu0 %4385
      %4387 = vrot.lane.b32.xlu0 %v2823, 107
      %v4388 = vpop.permute.xlu0 %4387
      %4389 = vrot.lane.b32.xlu0 %v2824, 107
      %v4390 = vpop.permute.xlu0 %4389
      %4391 = vrot.lane.b32.xlu0 %v2825, 107
      %v4392 = vpop.permute.xlu0 %4391
      %vm4393 = vcmask 875520
      %v4394 = vsel %vm4393, %v4376, %v4378
      %v4395 = vsel %vm4393, %v4378, %v4380
      %v4396 = vsel %vm4393, %v4380, %v4382
      %v4397 = vsel %vm4393, %v4382, %v4384
      %v4398 = vsel %vm4393, %v4384, %v4386
      %v4399 = vsel %vm4393, %v4386, %v4388
      %v4400 = vsel %vm4393, %v4388, %v4390
      %v4401 = vsel %vm4393, %v4390, %v4392
      %v4403 = vsel %vm665, %v4374, 0
      %v4406 = vsel %vm669, %v4394, 0
      %v4409 = vsel %vm669, %v4395, 0
      %v4412 = vsel %vm669, %v4396, 0
      %v4415 = vsel %vm669, %v4397, 0
      %v4418 = vsel %vm669, %v4398, 0
      %v4421 = vsel %vm669, %v4399, 0
      %v4424 = vsel %vm669, %v4400, 0
      %v4427 = vsel %vm669, %v4401, 0
      %4429 = vmatprep.subr.bf16.mxu0 %v4409
      %4430 = vmatpush1.bf16.msra.mxu0 %v4406
      %4431 = vmatprep.subr.bf16.mxu0 0
      %4432 = vmatpush1.bf16.msra.mxu0 0
      %4433 = vmatprep.subr.bf16.mxu0 0
      %4434 = vmatpush1.bf16.msra.mxu0 0
      %4435 = vmatprep.subr.bf16.mxu0 0
      %4436 = vmatpush1.bf16.msra.mxu0 0
      %4437 = vmatprep.subr.bf16.mxu0 0
      %4438 = vmatpush1.bf16.msra.mxu0 0
      %4439 = vmatprep.subr.bf16.mxu0 0
      %4440 = vmatpush1.bf16.msra.mxu0 0
      %4441 = vmatprep.subr.bf16.mxu0 0
      %4442 = vmatpush1.bf16.msra.mxu0 0
      %4443 = vmatprep.subr.bf16.mxu0 0
      %4444 = vmatpush1.bf16.msra.mxu0 0
      %4445 = vmatprep.subr.bf16.mxu0 0
      %4446 = vmatpush1.bf16.msra.mxu0 0
      %4447 = vmatprep.subr.bf16.mxu0 0
      %4448 = vmatpush1.bf16.msra.mxu0 0
      %4449 = vmatprep.subr.bf16.mxu0 0
      %4450 = vmatpush1.bf16.msra.mxu0 0
      %4451 = vmatprep.subr.bf16.mxu0 0
      %4452 = vmatpush1.bf16.msra.mxu0 0
      %4453 = vmatprep.subr.bf16.mxu0 0
      %4454 = vmatpush1.bf16.msra.mxu0 0
      %4455 = vmatprep.subr.bf16.mxu0 0
      %4456 = vmatpush1.bf16.msra.mxu0 0
      %4457 = vmatprep.subr.bf16.mxu0 0
      %4458 = vmatpush1.bf16.msra.mxu0 0
      %4459 = vmatprep.subr.bf16.mxu0 0
      %4460 = vmatpush1.bf16.msra.mxu0 0
      %4461 = vmatprep.mubr.bf16.mxu0 0
      %4462 = vmatmul.mubr.bf16.gmra.mrb[0].mxu0 %v4403
      %v4463 = vpop.f32.mrb[0].mxu0
      %v4464 = vadd.f32 0.0, %v4463
      %v4465 = vpop.f32.mrb[0].mxu0
      %v4466 = vadd.f32 0.0, %v4465
      %v4467 = vpop.f32.mrb[0].mxu0
      %v4468 = vpop.f32.mrb[0].mxu0
      %4469 = vdwg.mxu0
      %4470 = vmatprep.subr.bf16.mxu0 %v4415
      %4471 = vmatpush1.bf16.msra.mxu0 %v4412
      %4472 = vmatprep.subr.bf16.mxu0 0
      %4473 = vmatpush1.bf16.msra.mxu0 0
      %4474 = vmatprep.subr.bf16.mxu0 0
      %4475 = vmatpush1.bf16.msra.mxu0 0
      %4476 = vmatprep.subr.bf16.mxu0 0
      %4477 = vmatpush1.bf16.msra.mxu0 0
      %4478 = vmatprep.subr.bf16.mxu0 0
      %4479 = vmatpush1.bf16.msra.mxu0 0
      %4480 = vmatprep.subr.bf16.mxu0 0
      %4481 = vmatpush1.bf16.msra.mxu0 0
      %4482 = vmatprep.subr.bf16.mxu0 0
      %4483 = vmatpush1.bf16.msra.mxu0 0
      %4484 = vmatprep.subr.bf16.mxu0 0
      %4485 = vmatpush1.bf16.msra.mxu0 0
      %4486 = vmatprep.subr.bf16.mxu0 0
      %4487 = vmatpush1.bf16.msra.mxu0 0
      %4488 = vmatprep.subr.bf16.mxu0 0
      %4489 = vmatpush1.bf16.msra.mxu0 0
      %4490 = vmatprep.subr.bf16.mxu0 0
      %4491 = vmatpush1.bf16.msra.mxu0 0
      %4492 = vmatprep.subr.bf16.mxu0 0
      %4493 = vmatpush1.bf16.msra.mxu0 0
      %4494 = vmatprep.subr.bf16.mxu0 0
      %4495 = vmatpush1.bf16.msra.mxu0 0
      %4496 = vmatprep.subr.bf16.mxu0 0
      %4497 = vmatpush1.bf16.msra.mxu0 0
      %4498 = vmatprep.subr.bf16.mxu0 0
      %4499 = vmatpush1.bf16.msra.mxu0 0
      %4500 = vmatprep.subr.bf16.mxu0 0
      %4501 = vmatpush1.bf16.msra.mxu0 0
      %4502 = vmatprep.mubr.bf16.mxu0 0
      %4503 = vmatmul.mubr.bf16.gmra.mrb[0].mxu0 %v4403
      %v4504 = vpop.f32.mrb[0].mxu0
      %v4505 = vadd.f32 0.0, %v4504
      %v4506 = vpop.f32.mrb[0].mxu0
      %v4507 = vadd.f32 0.0, %v4506
      %v4508 = vpop.f32.mrb[0].mxu0
      %v4509 = vpop.f32.mrb[0].mxu0
      %4510 = vdwg.mxu0
      %4511 = vmatprep.subr.bf16.mxu0 %v4421
      %4512 = vmatpush1.bf16.msra.mxu0 %v4418
      %4513 = vmatprep.subr.bf16.mxu0 0
      %4514 = vmatpush1.bf16.msra.mxu0 0
      %4515 = vmatprep.subr.bf16.mxu0 0
      %4516 = vmatpush1.bf16.msra.mxu0 0
      %4517 = vmatprep.subr.bf16.mxu0 0
      %4518 = vmatpush1.bf16.msra.mxu0 0
      %4519 = vmatprep.subr.bf16.mxu0 0
      %4520 = vmatpush1.bf16.msra.mxu0 0
      %4521 = vmatprep.subr.bf16.mxu0 0
      %4522 = vmatpush1.bf16.msra.mxu0 0
      %4523 = vmatprep.subr.bf16.mxu0 0
      %4524 = vmatpush1.bf16.msra.mxu0 0
      %4525 = vmatprep.subr.bf16.mxu0 0
      %4526 = vmatpush1.bf16.msra.mxu0 0
      %4527 = vmatprep.subr.bf16.mxu0 0
      %4528 = vmatpush1.bf16.msra.mxu0 0
      %4529 = vmatprep.subr.bf16.mxu0 0
      %4530 = vmatpush1.bf16.msra.mxu0 0
      %4531 = vmatprep.subr.bf16.mxu0 0
      %4532 = vmatpush1.bf16.msra.mxu0 0
      %4533 = vmatprep.subr.bf16.mxu0 0
      %4534 = vmatpush1.bf16.msra.mxu0 0
      %4535 = vmatprep.subr.bf16.mxu0 0
      %4536 = vmatpush1.bf16.msra.mxu0 0
      %4537 = vmatprep.subr.bf16.mxu0 0
      %4538 = vmatpush1.bf16.msra.mxu0 0
      %4539 = vmatprep.subr.bf16.mxu0 0
      %4540 = vmatpush1.bf16.msra.mxu0 0
      %4541 = vmatprep.subr.bf16.mxu0 0
      %4542 = vmatpush1.bf16.msra.mxu0 0
      %4543 = vmatprep.mubr.bf16.mxu0 0
      %4544 = vmatmul.mubr.bf16.gmra.mrb[0].mxu0 %v4403
      %v4545 = vpop.f32.mrb[0].mxu0
      %v4546 = vadd.f32 0.0, %v4545
      %v4547 = vpop.f32.mrb[0].mxu0
      %v4548 = vadd.f32 0.0, %v4547
      %v4549 = vpop.f32.mrb[0].mxu0
      %v4550 = vpop.f32.mrb[0].mxu0
      %4551 = vdwg.mxu0
      %4552 = vmatprep.subr.bf16.mxu0 %v4427
      %4553 = vmatpush1.bf16.msra.mxu0 %v4424
      %4554 = vmatprep.subr.bf16.mxu0 0
      %4555 = vmatpush1.bf16.msra.mxu0 0
      %4556 = vmatprep.subr.bf16.mxu0 0
      %4557 = vmatpush1.bf16.msra.mxu0 0
      %4558 = vmatprep.subr.bf16.mxu0 0
      %4559 = vmatpush1.bf16.msra.mxu0 0
      %4560 = vmatprep.subr.bf16.mxu0 0
      %4561 = vmatpush1.bf16.msra.mxu0 0
      %4562 = vmatprep.subr.bf16.mxu0 0
      %4563 = vmatpush1.bf16.msra.mxu0 0
      %4564 = vmatprep.subr.bf16.mxu0 0
      %4565 = vmatpush1.bf16.msra.mxu0 0
      %4566 = vmatprep.subr.bf16.mxu0 0
      %4567 = vmatpush1.bf16.msra.mxu0 0
      %4568 = vmatprep.subr.bf16.mxu0 0
      %4569 = vmatpush1.bf16.msra.mxu0 0
      %4570 = vmatprep.subr.bf16.mxu0 0
      %4571 = vmatpush1.bf16.msra.mxu0 0
      %4572 = vmatprep.subr.bf16.mxu0 0
      %4573 = vmatpush1.bf16.msra.mxu0 0
      %4574 = vmatprep.subr.bf16.mxu0 0
      %4575 = vmatpush1.bf16.msra.mxu0 0
      %4576 = vmatprep.subr.bf16.mxu0 0
      %4577 = vmatpush1.bf16.msra.mxu0 0
      %4578 = vmatprep.subr.bf16.mxu0 0
      %4579 = vmatpush1.bf16.msra.mxu0 0
      %4580 = vmatprep.subr.bf16.mxu0 0
      %4581 = vmatpush1.bf16.msra.mxu0 0
      %4582 = vmatprep.subr.bf16.mxu0 0
      %4583 = vmatpush1.bf16.msra.mxu0 0
      %4584 = vmatprep.mubr.bf16.mxu0 0
      %4585 = vmatmul.mubr.bf16.gmra.mrb[0].mxu0 %v4403
      %v4586 = vpop.f32.mrb[0].mxu0
      %v4587 = vadd.f32 0.0, %v4586
      %v4588 = vpop.f32.mrb[0].mxu0
      %v4589 = vadd.f32 0.0, %v4588
      %v4590 = vpop.f32.mrb[0].mxu0
      %v4591 = vpop.f32.mrb[0].mxu0
      %4592 = vdwg.mxu0
      %v4593 = vadd.f32 %v4365, %v4464
      %v4594 = vadd.f32 %v4366, %v4466
      %v4595 = vadd.f32 %v4367, %v4505
      %v4596 = vadd.f32 %v4368, %v4507
      %v4597 = vadd.f32 %v4369, %v4546
      %v4598 = vadd.f32 %v4370, %v4548
      %v4599 = vadd.f32 %v4371, %v4587
      %v4600 = vadd.f32 %v4372, %v4589
      %s4601 = scalar_lea.vmem %s1, 32
      %v4602 = vld [vmem:[%s4601] sm:$0xf]
      %4603 = vrot.lane.b32.xlu0 %v2817, 106
      %v4604 = vpop.permute.xlu0 %4603
      %4605 = vrot.lane.b32.xlu0 %v2818, 106
      %v4606 = vpop.permute.xlu0 %4605
      %4607 = vrot.lane.b32.xlu0 %v2819, 106
      %v4608 = vpop.permute.xlu0 %4607
      %4609 = vrot.lane.b32.xlu0 %v2820, 106
      %v4610 = vpop.permute.xlu0 %4609
      %4611 = vrot.lane.b32.xlu0 %v2821, 106
      %v4612 = vpop.permute.xlu0 %4611
      %4613 = vrot.lane.b32.xlu0 %v2822, 106
      %v4614 = vpop.permute.xlu0 %4613
      %4615 = vrot.lane.b32.xlu0 %v2823, 106
      %v4616 = vpop.permute.xlu0 %4615
      %4617 = vrot.lane.b32.xlu0 %v2824, 106
      %v4618 = vpop.permute.xlu0 %4617
      %4619 = vrot.lane.b32.xlu0 %v2825, 106
      %v4620 = vpop.permute.xlu0 %4619
      %vm4621 = vcmask 867328
      %v4622 = vsel %vm4621, %v4604, %v4606
      %v4623 = vsel %vm4621, %v4606, %v4608
      %v4624 = vsel %vm4621, %v4608, %v4610
      %v4625 = vsel %vm4621, %v4610, %v4612
      %v4626 = vsel %vm4621, %v4612, %v4614
      %v4627 = vsel %vm4621, %v4614, %v4616
      %v4628 = vsel %vm4621, %v4616, %v4618
      %v4629 = vsel %vm4621, %v4618, %v4620
      %v4631 = vsel %vm665, %v4602, 0
      %v4634 = vsel %vm669, %v4622, 0
      %v4637 = vsel %vm669, %v4623, 0
      %v4640 = vsel %vm669, %v4624, 0
      %v4643 = vsel %vm669, %v4625, 0
      %v4646 = vsel %vm669, %v4626, 0
      %v4649 = vsel %vm669, %v4627, 0
      %v4652 = vsel %vm669, %v4628, 0
      %v4655 = vsel %vm669, %v4629, 0
      %4657 = vmatprep.subr.bf16.mxu0 %v4637
      %4658 = vmatpush1.bf16.msra.mxu0 %v4634
      %4659 = vmatprep.subr.bf16.mxu0 0
      %4660 = vmatpush1.bf16.msra.mxu0 0
      %4661 = vmatprep.subr.bf16.mxu0 0
      %4662 = vmatpush1.bf16.msra.mxu0 0
      %4663 = vmatprep.subr.bf16.mxu0 0
      %4664 = vmatpush1.bf16.msra.mxu0 0
      %4665 = vmatprep.subr.bf16.mxu0 0
      %4666 = vmatpush1.bf16.msra.mxu0 0
      %4667 = vmatprep.subr.bf16.mxu0 0
      %4668 = vmatpush1.bf16.msra.mxu0 0
      %4669 = vmatprep.subr.bf16.mxu0 0
      %4670 = vmatpush1.bf16.msra.mxu0 0
      %4671 = vmatprep.subr.bf16.mxu0 0
      %4672 = vmatpush1.bf16.msra.mxu0 0
      %4673 = vmatprep.subr.bf16.mxu0 0
      %4674 = vmatpush1.bf16.msra.mxu0 0
      %4675 = vmatprep.subr.bf16.mxu0 0
      %4676 = vmatpush1.bf16.msra.mxu0 0
      %4677 = vmatprep.subr.bf16.mxu0 0
      %4678 = vmatpush1.bf16.msra.mxu0 0
      %4679 = vmatprep.subr.bf16.mxu0 0
      %4680 = vmatpush1.bf16.msra.mxu0 0
      %4681 = vmatprep.subr.bf16.mxu0 0
      %4682 = vmatpush1.bf16.msra.mxu0 0
      %4683 = vmatprep.subr.bf16.mxu0 0
      %4684 = vmatpush1.bf16.msra.mxu0 0
      %4685 = vmatprep.subr.bf16.mxu0 0
      %4686 = vmatpush1.bf16.msra.mxu0 0
      %4687 = vmatprep.subr.bf16.mxu0 0
      %4688 = vmatpush1.bf16.msra.mxu0 0
      %4689 = vmatprep.mubr.bf16.mxu0 0
      %4690 = vmatmul.mubr.bf16.gmra.mrb[0].mxu0 %v4631
      %v4691 = vpop.f32.mrb[0].mxu0
      %v4692 = vadd.f32 0.0, %v4691
      %v4693 = vpop.f32.mrb[0].mxu0
      %v4694 = vadd.f32 0.0, %v4693
      %v4695 = vpop.f32.mrb[0].mxu0
      %v4696 = vpop.f32.mrb[0].mxu0
      %4697 = vdwg.mxu0
      %4698 = vmatprep.subr.bf16.mxu0 %v4643
      %4699 = vmatpush1.bf16.msra.mxu0 %v4640
      %4700 = vmatprep.subr.bf16.mxu0 0
      %4701 = vmatpush1.bf16.msra.mxu0 0
      %4702 = vmatprep.subr.bf16.mxu0 0
      %4703 = vmatpush1.bf16.msra.mxu0 0
      %4704 = vmatprep.subr.bf16.mxu0 0
      %4705 = vmatpush1.bf16.msra.mxu0 0
      %4706 = vmatprep.subr.bf16.mxu0 0
      %4707 = vmatpush1.bf16.msra.mxu0 0
      %4708 = vmatprep.subr.bf16.mxu0 0
      %4709 = vmatpush1.bf16.msra.mxu0 0
      %4710 = vmatprep.subr.bf16.mxu0 0
      %4711 = vmatpush1.bf16.msra.mxu0 0
      %4712 = vmatprep.subr.bf16.mxu0 0
      %4713 = vmatpush1.bf16.msra.mxu0 0
      %4714 = vmatprep.subr.bf16.mxu0 0
      %4715 = vmatpush1.bf16.msra.mxu0 0
      %4716 = vmatprep.subr.bf16.mxu0 0
      %4717 = vmatpush1.bf16.msra.mxu0 0
      %4718 = vmatprep.subr.bf16.mxu0 0
      %4719 = vmatpush1.bf16.msra.mxu0 0
      %4720 = vmatprep.subr.bf16.mxu0 0
      %4721 = vmatpush1.bf16.msra.mxu0 0
      %4722 = vmatprep.subr.bf16.mxu0 0
      %4723 = vmatpush1.bf16.msra.mxu0 0
      %4724 = vmatprep.subr.bf16.mxu0 0
      %4725 = vmatpush1.bf16.msra.mxu0 0
      %4726 = vmatprep.subr.bf16.mxu0 0
      %4727 = vmatpush1.bf16.msra.mxu0 0
      %4728 = vmatprep.subr.bf16.mxu0 0
      %4729 = vmatpush1.bf16.msra.mxu0 0
      %4730 = vmatprep.mubr.bf16.mxu0 0
      %4731 = vmatmul.mubr.bf16.gmra.mrb[0].mxu0 %v4631
      %v4732 = vpop.f32.mrb[0].mxu0
      %v4733 = vadd.f32 0.0, %v4732
      %v4734 = vpop.f32.mrb[0].mxu0
      %v4735 = vadd.f32 0.0, %v4734
      %v4736 = vpop.f32.mrb[0].mxu0
      %v4737 = vpop.f32.mrb[0].mxu0
      %4738 = vdwg.mxu0
      %4739 = vmatprep.subr.bf16.mxu0 %v4649
      %4740 = vmatpush1.bf16.msra.mxu0 %v4646
      %4741 = vmatprep.subr.bf16.mxu0 0
      %4742 = vmatpush1.bf16.msra.mxu0 0
      %4743 = vmatprep.subr.bf16.mxu0 0
      %4744 = vmatpush1.bf16.msra.mxu0 0
      %4745 = vmatprep.subr.bf16.mxu0 0
      %4746 = vmatpush1.bf16.msra.mxu0 0
      %4747 = vmatprep.subr.bf16.mxu0 0
      %4748 = vmatpush1.bf16.msra.mxu0 0
      %4749 = vmatprep.subr.bf16.mxu0 0
      %4750 = vmatpush1.bf16.msra.mxu0 0
      %4751 = vmatprep.subr.bf16.mxu0 0
      %4752 = vmatpush1.bf16.msra.mxu0 0
      %4753 = vmatprep.subr.bf16.mxu0 0
      %4754 = vmatpush1.bf16.msra.mxu0 0
      %4755 = vmatprep.subr.bf16.mxu0 0
      %4756 = vmatpush1.bf16.msra.mxu0 0
      %4757 = vmatprep.subr.bf16.mxu0 0
      %4758 = vmatpush1.bf16.msra.mxu0 0
      %4759 = vmatprep.subr.bf16.mxu0 0
      %4760 = vmatpush1.bf16.msra.mxu0 0
      %4761 = vmatprep.subr.bf16.mxu0 0
      %4762 = vmatpush1.bf16.msra.mxu0 0
      %4763 = vmatprep.subr.bf16.mxu0 0
      %4764 = vmatpush1.bf16.msra.mxu0 0
      %4765 = vmatprep.subr.bf16.mxu0 0
      %4766 = vmatpush1.bf16.msra.mxu0 0
      %4767 = vmatprep.subr.bf16.mxu0 0
      %4768 = vmatpush1.bf16.msra.mxu0 0
      %4769 = vmatprep.subr.bf16.mxu0 0
      %4770 = vmatpush1.bf16.msra.mxu0 0
      %4771 = vmatprep.mubr.bf16.mxu0 0
      %4772 = vmatmul.mubr.bf16.gmra.mrb[0].mxu0 %v4631
      %v4773 = vpop.f32.mrb[0].mxu0
      %v4774 = vadd.f32 0.0, %v4773
      %v4775 = vpop.f32.mrb[0].mxu0
      %v4776 = vadd.f32 0.0, %v4775
      %v4777 = vpop.f32.mrb[0].mxu0
      %v4778 = vpop.f32.mrb[0].mxu0
      %4779 = vdwg.mxu0
      %4780 = vmatprep.subr.bf16.mxu0 %v4655
      %4781 = vmatpush1.bf16.msra.mxu0 %v4652
      %4782 = vmatprep.subr.bf16.mxu0 0
      %4783 = vmatpush1.bf16.msra.mxu0 0
      %4784 = vmatprep.subr.bf16.mxu0 0
      %4785 = vmatpush1.bf16.msra.mxu0 0
      %4786 = vmatprep.subr.bf16.mxu0 0
      %4787 = vmatpush1.bf16.msra.mxu0 0
      %4788 = vmatprep.subr.bf16.mxu0 0
      %4789 = vmatpush1.bf16.msra.mxu0 0
      %4790 = vmatprep.subr.bf16.mxu0 0
      %4791 = vmatpush1.bf16.msra.mxu0 0
      %4792 = vmatprep.subr.bf16.mxu0 0
      %4793 = vmatpush1.bf16.msra.mxu0 0
      %4794 = vmatprep.subr.bf16.mxu0 0
      %4795 = vmatpush1.bf16.msra.mxu0 0
      %4796 = vmatprep.subr.bf16.mxu0 0
      %4797 = vmatpush1.bf16.msra.mxu0 0
      %4798 = vmatprep.subr.bf16.mxu0 0
      %4799 = vmatpush1.bf16.msra.mxu0 0
      %4800 = vmatprep.subr.bf16.mxu0 0
      %4801 = vmatpush1.bf16.msra.mxu0 0
      %4802 = vmatprep.subr.bf16.mxu0 0
      %4803 = vmatpush1.bf16.msra.mxu0 0
      %4804 = vmatprep.subr.bf16.mxu0 0
      %4805 = vmatpush1.bf16.msra.mxu0 0
      %4806 = vmatprep.subr.bf16.mxu0 0
      %4807 = vmatpush1.bf16.msra.mxu0 0
      %4808 = vmatprep.subr.bf16.mxu0 0
      %4809 = vmatpush1.bf16.msra.mxu0 0
      %4810 = vmatprep.subr.bf16.mxu0 0
      %4811 = vmatpush1.bf16.msra.mxu0 0
      %4812 = vmatprep.mubr.bf16.mxu0 0
      %4813 = vmatmul.mubr.bf16.gmra.mrb[0].mxu0 %v4631
      %v4814 = vpop.f32.mrb[0].mxu0
      %v4815 = vadd.f32 0.0, %v4814
      %v4816 = vpop.f32.mrb[0].mxu0
      %v4817 = vadd.f32 0.0, %v4816
      %v4818 = vpop.f32.mrb[0].mxu0
      %v4819 = vpop.f32.mrb[0].mxu0
      %4820 = vdwg.mxu0
      %v4821 = vadd.f32 %v4593, %v4692
      %v4822 = vadd.f32 %v4594, %v4694
      %v4823 = vadd.f32 %v4595, %v4733
      %v4824 = vadd.f32 %v4596, %v4735
      %v4825 = vadd.f32 %v4597, %v4774
      %v4826 = vadd.f32 %v4598, %v4776
      %v4827 = vadd.f32 %v4599, %v4815
      %v4828 = vadd.f32 %v4600, %v4817
      %vm4829 = vcmp.ge.f32.partialorder %v4821, 0.0
      %vm4830 = vcmp.ge.f32.partialorder %v4822, 0.0
      %vm4831 = vcmp.ge.f32.partialorder %v4823, 0.0
      %vm4832 = vcmp.ge.f32.partialorder %v4824, 0.0
      %vm4833 = vcmp.ge.f32.partialorder %v4825, 0.0
      %vm4834 = vcmp.ge.f32.partialorder %v4826, 0.0
      %vm4835 = vcmp.ge.f32.partialorder %v4827, 0.0
      %vm4836 = vcmp.ge.f32.partialorder %v4828, 0.0
      %v4837 = vmul.f32 %v4821, 0.01
      %v4838 = vmul.f32 %v4822, 0.01
      %v4839 = vmul.f32 %v4823, 0.01
      %v4840 = vmul.f32 %v4824, 0.01
      %v4841 = vmul.f32 %v4825, 0.01
      %v4842 = vmul.f32 %v4826, 0.01
      %v4843 = vmul.f32 %v4827, 0.01
      %v4844 = vmul.f32 %v4828, 0.01
      %v4845 = vsel %vm4829, %v4821, %v4837
      %v4846 = vsel %vm4830, %v4822, %v4838
      %v4847 = vsel %vm4831, %v4823, %v4839
      %v4848 = vsel %vm4832, %v4824, %v4840
      %v4849 = vsel %vm4833, %v4825, %v4841
      %v4850 = vsel %vm4834, %v4826, %v4842
      %v4851 = vsel %vm4835, %v4827, %v4843
      %v4852 = vsel %vm4836, %v4828, %v4844
      %4853 = vst [vmem:[%s586] sm:$0xff] %v4845
      %4854 = vst [vmem:[%s586 + $0x8] sm:$0xff] %v4846
      %4855 = vst [vmem:[%s586 + $0x10] sm:$0xff] %v4847
      %4856 = vst [vmem:[%s586 + $0x18] sm:$0xff] %v4848
      %4857 = vst [vmem:[%s586 + $0x20] sm:$0xff] %v4849
      %4858 = vst [vmem:[%s586 + $0x28] sm:$0xff] %v4850
      %4859 = vst [vmem:[%s586 + $0x30] sm:$0xff] %v4851
      %4860 = vst [vmem:[%s586 + $0x38] sm:$0xff] %v4852
      %v4861 = vld [vmem:[%s574] sm:$0xff]
      %v4863 = vlaneseq
      %v4864 = vshrl.u32 %v4863, 7
      %v4865 = vsub.s32 0, %v4864
      %v4866 = vrot.slane %v4861, %v4865
      %v4867 = vlaneseq
      %v4868 = vshrl.u32 %v4867, 7
      %v4869 = vsub.s32 1, %v4868
      %v4870 = vrot.slane %v4861, %v4869
      %v4871 = vlaneseq
      %v4872 = vshrl.u32 %v4871, 7
      %v4873 = vsub.s32 2, %v4872
      %v4874 = vrot.slane %v4861, %v4873
      %v4875 = vlaneseq
      %v4876 = vshrl.u32 %v4875, 7
      %v4877 = vsub.s32 3, %v4876
      %v4878 = vrot.slane %v4861, %v4877
      %v4879 = vlaneseq
      %v4880 = vshrl.u32 %v4879, 7
      %v4881 = vsub.s32 4, %v4880
      %v4882 = vrot.slane %v4861, %v4881
      %v4883 = vlaneseq
      %v4884 = vshrl.u32 %v4883, 7
      %v4885 = vsub.s32 5, %v4884
      %v4886 = vrot.slane %v4861, %v4885
      %v4887 = vlaneseq
      %v4888 = vshrl.u32 %v4887, 7
      %v4889 = vsub.s32 6, %v4888
      %v4890 = vrot.slane %v4861, %v4889
      %v4891 = vlaneseq
      %v4892 = vshrl.u32 %v4891, 7
      %v4893 = vsub.s32 7, %v4892
      %v4894 = vrot.slane %v4861, %v4893
      %v4903 = vmul.f32 %v4845, %v4866
      %v4904 = vmul.f32 %v4846, %v4870
      %v4905 = vmul.f32 %v4847, %v4874
      %v4906 = vmul.f32 %v4848, %v4878
      %v4907 = vmul.f32 %v4849, %v4882
      %v4908 = vmul.f32 %v4850, %v4886
      %v4909 = vmul.f32 %v4851, %v4890
      %v4910 = vmul.f32 %v4852, %v4894
      %v4911 = vadd.f32 %v4903, %v4904
      %v4912 = vadd.f32 %v4911, %v4905
      %v4913 = vadd.f32 %v4912, %v4906
      %v4914 = vadd.f32 %v4913, %v4907
      %v4915 = vadd.f32 %v4914, %v4908
      %v4916 = vadd.f32 %v4915, %v4909
      %v4917 = vadd.f32 %v4916, %v4910
      %4918 = vadd.xlane.f32.xlu0 %v4917
      %v4919 = vpop.xlane.xlu0 %4918
      %v4920 = vmul.f32 %v4903, %v4845
      %v4921 = vmul.f32 %v4904, %v4846
      %v4922 = vmul.f32 %v4905, %v4847
      %v4923 = vmul.f32 %v4906, %v4848
      %v4924 = vmul.f32 %v4907, %v4849
      %v4925 = vmul.f32 %v4908, %v4850
      %v4926 = vmul.f32 %v4909, %v4851
      %v4927 = vmul.f32 %v4910, %v4852
      %v4928 = vadd.f32 %v4920, %v4921
      %v4929 = vadd.f32 %v4928, %v4922
      %v4930 = vadd.f32 %v4929, %v4923
      %v4931 = vadd.f32 %v4930, %v4924
      %v4932 = vadd.f32 %v4931, %v4925
      %v4933 = vadd.f32 %v4932, %v4926
      %v4934 = vadd.f32 %v4933, %v4927
      %4935 = vadd.xlane.f32.xlu0 %v4934
      %v4936 = vpop.xlane.xlu0 %4935
      %v4937 = vsel %vm2781, %v4919, %v4936
      %4938 = vst.msk [vmem:[%s595] sm:$0xff] %vm2783, %v4937
      %s4939 = smul.u32 8, %s23
      %p4940 = scmp.lt.s32.totalorder %s4939, 15
      %s4941 = scalar_select %p4940, %s4939, 15
      %s4942 = smul.addr %s4941, 8
      %s4943 = scalar_lea.vmem %s8, %s4942
      %s4944 = smul.u32 8, %s23
      %p4945 = scmp.lt.s32.totalorder %s4944, 15
      %s4946 = scalar_select %p4945, %s4944, 15
      %s4947 = smul.addr %s4946, 8
      %s4948 = scalar_lea.vmem %s9, %s4947
      %p4949 = scmp.lt.s32.totalorder %s23, 1
      %s4950 = scalar_select %p4949, %s23, 1
      %s4951 = smul.addr %s4950, 8
      %s4952 = scalar_lea.vmem %s10, %s4951
      %p4953 = scmp.lt.s32.totalorder %s23, 1
      %s4954 = scalar_select %p4953, %s23, 1
      %s4955 = smul.addr %s4954, 8
      %s4956 = scalar_lea.vmem %s11, %s4955
      // Predicated region
      $region53: #{res_context_block.3} parent=51 // pred_check
        %p4957 = pneg %p247
      $region54: #{res_context_block.3} parent=51 // pred_check_branch
        %4959 = sbr.rel (%p4957) target = $region56
      $region55: #{res_context_block.3} parent=51 // pred_region
        %s4960 = smul.u32 8, %s23
      $region56: #{res_context_block.3} parent=51 // pred_fallthru
        _
      // Predicated region
      $region57: #{res_context_block.3} parent=51 // pred_check
        %p4961 = pneg %p273
      $region58: #{res_context_block.3} parent=51 // pred_check_branch
        %4963 = sbr.rel (%p4961) target = $region60
      $region59: #{res_context_block.3} parent=51 // pred_region
        %s4964 = smul.u32 8, %s23
      $region60: #{res_context_block.3} parent=51 // pred_fallthru
        _
      // Predicated region
      $region61: #{res_context_block.3} parent=51 // pred_check
        %p4965 = pneg %p299
      $region62: #{res_context_block.3} parent=51 // pred_check_branch
        %4967 = sbr.rel (%p4965) target = $region64
      $region63: #{res_context_block.3} parent=51 // pred_region
        _
      $region64: #{res_context_block.3} parent=51 // pred_fallthru
        _
      // Predicated region
      $region65: #{res_context_block.3} parent=51 // pred_check
        %p4968 = pneg %p325
      $region66: #{res_context_block.3} parent=51 // pred_check_branch
        %4970 = sbr.rel (%p4968) target = $region68
      $region67: #{res_context_block.3} parent=51 // pred_region
        _
      $region68: #{res_context_block.3} parent=51 // pred_fallthru
        _
    $region52: #{res_context_block.3} parent=5 // pred_fallthru
      _
    %p4971 = scmp.le.s32.totalorder 2, %s18
    // Predicated region
    $region69: #{res_context_block.3} parent=5 // pred_check
      %p4972 = pneg %p4971
    $region70: #{res_context_block.3} parent=5 // pred_check_branch
      %4974 = sbr.rel (%p4972) target = $region72
    $region71: #{res_context_block.3} parent=5 // pred_region
      %s4975 = ssub.s32 %s18, 2
      // Predicated region
      $region73: #{res_context_block.3} parent=71 // pred_check
        %p4976 = pneg %p253
      $region74: #{res_context_block.3} parent=71 // pred_check_branch
        %4978 = sbr.rel (%p4976) target = $region76
      $region75: #{res_context_block.3} parent=71 // pred_region
        %s4979 = smul.u32 8, %s24
        %p4980 = scmp.lt.s32.totalorder %s4979, 15
        %s4981 = scalar_select %p4980, %s4979, 15
        %s4982 = smul.addr %s4981, 8
        %s4983 = scalar_lea.vmem %s8, %s4982
      $region76: #{res_context_block.3} parent=71 // pred_fallthru
        _
      // Predicated region
      $region77: #{res_context_block.3} parent=71 // pred_check
        %p4984 = pneg %p279
      $region78: #{res_context_block.3} parent=71 // pred_check_branch
        %4986 = sbr.rel (%p4984) target = $region80
      $region79: #{res_context_block.3} parent=71 // pred_region
        %s4987 = smul.u32 8, %s24
        %p4988 = scmp.lt.s32.totalorder %s4987, 15
        %s4989 = scalar_select %p4988, %s4987, 15
        %s4990 = smul.addr %s4989, 8
        %s4991 = scalar_lea.vmem %s9, %s4990
      $region80: #{res_context_block.3} parent=71 // pred_fallthru
        _
      // Predicated region
      $region81: #{res_context_block.3} parent=71 // pred_check
        %p4992 = pneg %p305
      $region82: #{res_context_block.3} parent=71 // pred_check_branch
        %4994 = sbr.rel (%p4992) target = $region84
      $region83: #{res_context_block.3} parent=71 // pred_region
        %p4995 = scmp.lt.s32.totalorder %s24, 1
        %s4996 = scalar_select %p4995, %s24, 1
        %s4997 = smul.addr %s4996, 8
        %s4998 = scalar_lea.vmem %s10, %s4997
      $region84: #{res_context_block.3} parent=71 // pred_fallthru
        _
      // Predicated region
      $region85: #{res_context_block.3} parent=71 // pred_check
        %p4999 = pneg %p331
      $region86: #{res_context_block.3} parent=71 // pred_check_branch
        %5001 = sbr.rel (%p4999) target = $region88
      $region87: #{res_context_block.3} parent=71 // pred_region
        %p5002 = scmp.lt.s32.totalorder %s24, 1
        %s5003 = scalar_select %p5002, %s24, 1
        %s5004 = smul.addr %s5003, 8
        %s5005 = scalar_lea.vmem %s11, %s5004
      $region88: #{res_context_block.3} parent=71 // pred_fallthru
        _
    $region72: #{res_context_block.3} parent=5 // pred_fallthru
      _
  $region6: #{res_context_block.3} parent=0 // loop_footer
    %s22 = sadd.s32 1, %s18
  $region7: #{res_context_block.3} parent=0 // loop_footer_branch
    %17 = sbr.rel target = $region3
  $region8: #{res_context_block.3} parent=0 // loop_exit
    _

</llo_original>
